<compile_context>
chip_gen: v7x
topology: tpu7x:2x2x1
jax: 0.10.0
libtpu: 0.0.40
codegen_flags: <defaults>
</compile_context>

<pallas_src>
import functools

import numpy as np
import jax
import jax.numpy as jnp
from jax.experimental import pallas as pl
from jax.experimental.pallas import tpu as pltpu

BN_EPS = 1e-5
_BATCH_TILE = 128  # batch rows per grid step (multiple of 8)


# ----------------------------------------------------------------------------
# One-time weight preparation (host-side; turns convs into dense GEMM weights)
# ----------------------------------------------------------------------------
def _conv_toeplitz(w_oihw, h, w, stride, pad):
    """Dense [H*W*Cin, Ho*Wo*Cout] matrix T so that conv(x) == x_flat @ T.

    Activations are flattened NHWC: flat_index = (row*W + col)*C + c.
    Zero padding is folded in by skipping out-of-range taps.
    """
    w_oihw = np.asarray(w_oihw, np.float32)
    c_out, c_in, kh, kw = w_oihw.shape
    ho = (h + 2 * pad - kh) // stride + 1
    wo = (w + 2 * pad - kw) // stride + 1
    t = np.zeros((h * w * c_in, ho * wo * c_out), np.float32)
    for oy in range(ho):
        for ox in range(wo):
            col0 = (oy * wo + ox) * c_out
            for ky in range(kh):
                iy = oy * stride + ky - pad
                if iy < 0 or iy >= h:
                    continue
                for kx in range(kw):
                    ix = ox * stride + kx - pad
                    if ix < 0 or ix >= w:
                        continue
                    row0 = (iy * w + ix) * c_in
                    t[row0:row0 + c_in, col0:col0 + c_out] += w_oihw[:, :, ky, kx].T
    return t


def init_torch_params(key, encoded_space_dim):
    """Parameters in native PyTorch layouts (conv OIHW, linear [out, in])."""
    ks = jax.random.split(key, 10)

    def u(k, shape, fan_in):
        bound = 1.0 / np.sqrt(fan_in)
        return jax.random.uniform(k, shape, jnp.float32, -bound, bound)

    p = {}
    p["w1"] = u(ks[0], (8, 1, 3, 3), 9)
    p["b1"] = u(ks[1], (8,), 9)
    p["w2"] = u(ks[2], (16, 8, 3, 3), 72)
    p["b2"] = u(ks[3], (16,), 72)
    p["gamma"] = jnp.ones((16,), jnp.float32)     # BatchNorm2d defaults
    p["beta"] = jnp.zeros((16,), jnp.float32)
    p["w3"] = u(ks[4], (32, 16, 3, 3), 144)
    p["b3"] = u(ks[5], (32,), 144)
    p["wl1"] = u(ks[6], (128, 288), 288)
    p["bl1"] = u(ks[7], (128,), 288)
    p["wl2"] = u(ks[8], (encoded_space_dim, 128), 128)
    p["bl2"] = u(ks[9], (encoded_space_dim,), 128)
    return p


def prepare_kernel_params(tp):
    """Convert PyTorch-layout params into the GEMM-chain layout used by the kernels."""
    kp = {}
    kp["w1"] = jnp.asarray(_conv_toeplitz(tp["w1"], 28, 28, 2, 1))   # [784, 1568]
    kp["b1"] = jnp.tile(tp["b1"], 14 * 14).reshape(1, 1568)
    kp["w2"] = jnp.asarray(_conv_toeplitz(tp["w2"], 14, 14, 2, 1))   # [1568, 784]
    # conv2 bias intentionally dropped: batch-stat BN cancels it exactly.
    kp["gamma"] = jnp.asarray(tp["gamma"])
    kp["beta"] = jnp.asarray(tp["beta"])
    kp["w3"] = jnp.asarray(_conv_toeplitz(tp["w3"], 7, 7, 2, 0))     # [784, 288]
    kp["b3"] = jnp.tile(tp["b3"], 3 * 3).reshape(1, 288)

    # Fold the NCHW flatten permutation into wl1 (one-time weight-side permute).
    # our conv3 flat index j = (h*3 + w)*32 + c ; torch flatten k = c*9 + h*3 + w
    j = np.arange(3 * 3 * 32)
    c, pos = j % 32, j // 32
    k_of_j = c * 9 + (pos // 3) * 3 + (pos % 3)
    kp["wl1"] = jnp.asarray(np.asarray(tp["wl1"]).T[k_of_j, :])      # [288, 128]
    kp["bl1"] = jnp.asarray(tp["bl1"]).reshape(1, 128)
    kp["wl2"] = jnp.asarray(np.asarray(tp["wl2"]).T)                 # [128, D]
    kp["bl2"] = jnp.asarray(tp["bl2"]).reshape(1, -1)
    return kp


# ----------------------------------------------------------------------------
# Pallas kernels
# ----------------------------------------------------------------------------
def _stage1_kernel(x_ref, w1_ref, b1_ref, w2_ref,
                   y2_ref, ssum_ref, ssq_ref, *, batch, block_b):
    """relu(conv1) -> conv2 pre-BN; emit per-tile sum / sum-of-squares for BN."""
    h1 = jnp.dot(x_ref[...], w1_ref[...], preferred_element_type=jnp.float32)
    h1 = jnp.maximum(h1 + b1_ref[...], 0.0)
    y2 = jnp.dot(h1, w2_ref[...], preferred_element_type=jnp.float32)

    # Mask batch-padding rows so they do not pollute the BN statistics.
    row = jax.lax.broadcasted_iota(jnp.int32, (block_b, 1), 0)
    valid = (pl.program_id(0) * block_b + row) < batch
    y2 = jnp.where(valid, y2, 0.0)

    y2_ref[...] = y2
    ssum_ref[...] = jnp.sum(y2, axis=0, keepdims=True)
    ssq_ref[...] = jnp.sum(y2 * y2, axis=0, keepdims=True)


def _stage2_kernel(y2_ref, scale_ref, shift_ref, w3_ref, b3_ref,
                   wl1_ref, bl1_ref, wl2_ref, bl2_ref, out_ref):
    """BN (folded scale/shift) + ReLU -> conv3+ReLU -> linear1+ReLU -> linear2."""
    y = jnp.maximum(y2_ref[...] * scale_ref[...] + shift_ref[...], 0.0)
    h3 = jnp.dot(y, w3_ref[...], preferred_element_type=jnp.float32) + b3_ref[...]
    h3 = jnp.maximum(h3, 0.0)
    h4 = jnp.dot(h3, wl1_ref[...], preferred_element_type=jnp.float32) + bl1_ref[...]
    h4 = jnp.maximum(h4, 0.0)
    out = jnp.dot(h4, wl2_ref[...], preferred_element_type=jnp.float32) + bl2_ref[...]
    out_ref[...] = out


# ----------------------------------------------------------------------------
# Forward pass
# ----------------------------------------------------------------------------
@functools.partial(jax.jit, static_argnames=("block_b",))
def encoder_forward(kp, x_nchw, block_b=_BATCH_TILE):
    b = x_nchw.shape[0]
    d = kp["wl2"].shape[1]
    # C=1, so NCHW flatten == NHWC flatten: a pure reshape, no transpose glue.
    x = x_nchw.reshape(b, 28 * 28).astype(jnp.float32)

    if b <= block_b:
        bt, m_pad = b, b
    else:
        bt = block_b
        m_pad = ((b + bt - 1) // bt) * bt
        x = jnp.pad(x, ((0, m_pad - b), (0, 0)))
    n_tiles = m_pad // bt

    cparams = pltpu.CompilerParams(
        dimension_semantics=("parallel",),            # megacore-shardable on v7x
        vmem_limit_bytes=48 * 1024 * 1024,            # sized for v7x's 64 MiB VMEM
    )
    full = lambda i: (0, 0)
    tile = lambda i: (i, 0)

    # --- Stage 1: conv1+ReLU -> conv2 (pre-BN) + BN partial statistics --------
    y2, ssum, ssq = pl.pallas_call(
        functools.partial(_stage1_kernel, batch=b, block_b=bt),
        grid=(n_tiles,),
        in_specs=[
            pl.BlockSpec((bt, 784), tile),        # x
            pl.BlockSpec((784, 1568), full),      # conv1 Toeplitz
            pl.BlockSpec((1, 1568), full),        # conv1 bias (position-broadcast)
            pl.BlockSpec((1568, 784), full),      # conv2 Toeplitz
        ],
        out_specs=(
            pl.BlockSpec((bt, 784), tile),        # pre-BN conv2 activations
            pl.BlockSpec((1, 784), tile),         # per-tile position sums
            pl.BlockSpec((1, 784), tile),         # per-tile position sum-of-squares
        ),
        out_shape=(
            jax.ShapeDtypeStruct((m_pad, 784), jnp.float32),
            jax.ShapeDtypeStruct((n_tiles, 784), jnp.float32),
            jax.ShapeDtypeStruct((n_tiles, 784), jnp.float32),
        ),
        compiler_params=cparams,
    )(x, kp["w1"], kp["b1"], kp["w2"])

    # --- Finalize batch-norm statistics (tiny [16]-vector math) ---------------
    count = float(b * 49)
    sum_c = ssum.sum(axis=0).reshape(49, 16).sum(axis=0)
    sq_c = ssq.sum(axis=0).reshape(49, 16).sum(axis=0)
    mean = sum_c / count
    var = jnp.maximum(sq_c / count - mean * mean, 0.0)    # biased, like nn.BatchNorm2d
    scale = kp["gamma"] * jax.lax.rsqrt(var + BN_EPS)
    shift = kp["beta"] - mean * scale
    scale_vec = jnp.tile(scale, 49).reshape(1, 784)
    shift_vec = jnp.tile(shift, 49).reshape(1, 784)
    # TODO(synk): nn.BatchNorm2d's running_mean / running_var buffer updates
    # (a training-time side effect) are not reproduced here.

    # --- Stage 2: BN+ReLU -> conv3+ReLU -> flatten(folded) -> linear1+ReLU -> linear2
    out = pl.pallas_call(
        _stage2_kernel,
        grid=(n_tiles,),
        in_specs=[
            pl.BlockSpec((bt, 784), tile),        # pre-BN conv2 activations
            pl.BlockSpec((1, 784), full),         # BN scale (position-broadcast)
            pl.BlockSpec((1, 784), full),         # BN shift
            pl.BlockSpec((784, 288), full),       # conv3 Toeplitz
            pl.BlockSpec((1, 288), full),         # conv3 bias
            pl.BlockSpec((288, 128), full),       # linear1 (flatten-permuted)
            pl.BlockSpec((1, 128), full),
            pl.BlockSpec((128, d), full),         # linear2
            pl.BlockSpec((1, d), full),
        ],
        out_specs=pl.BlockSpec((bt, d), tile),
        out_shape=jax.ShapeDtypeStruct((m_pad, d), jnp.float32),
        compiler_params=cparams,
    )(y2, scale_vec, shift_vec, kp["w3"], kp["b3"],
      kp["wl1"], kp["bl1"], kp["wl2"], kp["bl2"])

    return out[:b]


# ----------------------------------------------------------------------------
# Pure-JAX reference of the PyTorch module (for a correctness check)
# ----------------------------------------------------------------------------
def reference_forward(tp, x_nchw):
    hi = jax.lax.Precision.HIGHEST

    def conv(x, w, bias, stride, pad):
        y = jax.lax.conv_general_dilated(
            x, w, window_strides=(stride, stride),
            padding=[(pad, pad), (pad, pad)],
            dimension_numbers=("NCHW", "OIHW", "NCHW"), precision=hi)
        return y + bias[None, :, None, None]

    y = jax.nn.relu(conv(x_nchw, tp["w1"], tp["b1"], 2, 1))
    y = conv(y, tp["w2"], tp["b2"], 2, 1)
    mean = jnp.mean(y, axis=(0, 2, 3), keepdims=True)
    var = jnp.var(y, axis=(0, 2, 3), keepdims=True)         # biased
    y = (y - mean) * jax.lax.rsqrt(var + BN_EPS)
    y = y * tp["gamma"][None, :, None, None] + tp["beta"][None, :, None, None]
    y = jax.nn.relu(y)
    y = jax.nn.relu(conv(y, tp["w3"], tp["b3"], 2, 0))
    y = y.reshape(y.shape[0], -1)                           # NCHW flatten
    y = jax.nn.relu(jnp.dot(y, tp["wl1"].T, precision=hi) + tp["bl1"])
    return jnp.dot(y, tp["wl2"].T, precision=hi) + tp["bl2"]


if __name__ == "__main__":
    encoded_space_dim = 16
    key = jax.random.PRNGKey(0)
    k_param, k_x = jax.random.split(key)

    torch_params = init_torch_params(k_param, encoded_space_dim)
    kernel_params = prepare_kernel_params(torch_params)

    # PyTorch-style NCHW input; 28x28 is required by the 3*3*32 flatten size.
    x = jax.random.normal(k_x, (2, 1, 28, 28), dtype=jnp.float32)

    out = encoder_forward(kernel_params, x)
    out = jax.block_until_ready(out)
    assert out.shape == (2, encoded_space_dim), out.shape
    assert bool(jnp.all(jnp.isfinite(out)))

    ref = reference_forward(torch_params, x)
    err = float(jnp.max(jnp.abs(out - ref)))
    assert err < 3e-3, f"mismatch vs reference: max abs err {err}"

    print("KERNEL_OK")
</pallas_src>

<mosaic_0001>
module attributes {stable_mosaic.version = 11 : i64} {
  func.func @_stage1_kernel(%arg0: i32, %arg1: memref<2x784xf32, #tpu.memory_space<vmem>>, %arg2: memref<784x1568xf32, #tpu.memory_space<vmem>>, %arg3: memref<1x1568xf32, #tpu.memory_space<vmem>>, %arg4: memref<1568x784xf32, #tpu.memory_space<vmem>>, %arg5: memref<2x784xf32, #tpu.memory_space<vmem>>, %arg6: memref<1x784xf32, #tpu.memory_space<vmem>>, %arg7: memref<1x784xf32, #tpu.memory_space<vmem>>) attributes {dimension_semantics = [#tpu.dimension_semantics<parallel>], iteration_bounds = array<i64: 1>, scalar_prefetch = 0 : i64, scratch_operands = 0 : i64, tpu.core_type = #tpu.core_type<tc>, window_params = [{transform_indices = @transform_0, window_bounds = array<i64: 2, 784>}, {pipeline_mode = #tpu.pipeline_mode<synchronous>, transform_indices = @transform_1, window_bounds = array<i64: 784, 1568>}, {pipeline_mode = #tpu.pipeline_mode<synchronous>, transform_indices = @transform_2, window_bounds = array<i64: 1, 1568>}, {pipeline_mode = #tpu.pipeline_mode<synchronous>, transform_indices = @transform_3, window_bounds = array<i64: 1568, 784>}, {transform_indices = @transform_4, window_bounds = array<i64: 2, 784>}, {transform_indices = @transform_5, window_bounds = array<i64: 1, 784>}, {transform_indices = @transform_6, window_bounds = array<i64: 1, 784>}]} {
    %c0 = arith.constant 0 : index
    %c0_0 = arith.constant 0 : index
    %0 = vector.load %arg1[%c0, %c0_0] : memref<2x784xf32, #tpu.memory_space<vmem>>, vector<2x784xf32>
    %c0_1 = arith.constant 0 : index
    %c0_2 = arith.constant 0 : index
    %1 = vector.load %arg2[%c0_1, %c0_2] : memref<784x1568xf32, #tpu.memory_space<vmem>>, vector<784x1568xf32>
    %cst = arith.constant dense<0.000000e+00> : vector<2x1568xf32>
    %2 = tpu.matmul %0, %1, %cst {dimension_numbers = #tpu.dot_dimension_numbers<[1], [0], [0], [1], [0, 0, 1, 1], [], []>} : vector<2x784xf32>, vector<784x1568xf32>, vector<2x1568xf32> -> vector<2x1568xf32>
    %c0_3 = arith.constant 0 : index
    %c0_4 = arith.constant 0 : index
    %3 = vector.load %arg3[%c0_3, %c0_4] : memref<1x1568xf32, #tpu.memory_space<vmem>>, vector<1x1568xf32>
    %4 = vector.broadcast %3 : vector<1x1568xf32> to vector<2x1568xf32>
    %5 = arith.addf %2, %4 : vector<2x1568xf32>
    %cst_5 = arith.constant 0.000000e+00 : f32
    %6 = vector.broadcast %cst_5 : f32 to vector<2x1568xf32>
    %7 = arith.maximumf %5, %6 : vector<2x1568xf32>
    %c0_6 = arith.constant 0 : index
    %c0_7 = arith.constant 0 : index
    %8 = vector.load %arg4[%c0_6, %c0_7] : memref<1568x784xf32, #tpu.memory_space<vmem>>, vector<1568x784xf32>
    %cst_8 = arith.constant dense<0.000000e+00> : vector<2x784xf32>
    %9 = tpu.matmul %7, %8, %cst_8 {dimension_numbers = #tpu.dot_dimension_numbers<[1], [0], [0], [1], [0, 0, 1, 1], [], []>} : vector<2x1568xf32>, vector<1568x784xf32>, vector<2x784xf32> -> vector<2x784xf32>
    %10 = tpu.iota {dimensions = array<i32: 0>} : vector<2x1xi32>
    %c2_i32 = arith.constant 2 : i32
    %11 = arith.muli %arg0, %c2_i32 : i32
    %12 = vector.broadcast %11 : i32 to vector<2x1xi32>
    %13 = arith.addi %12, %10 : vector<2x1xi32>
    %c2_i32_9 = arith.constant 2 : i32
    %14 = vector.broadcast %c2_i32_9 : i32 to vector<2x1xi32>
    %15 = arith.cmpi slt, %13, %14 : vector<2x1xi32>
    %cst_10 = arith.constant 0.000000e+00 : f32
    %16 = vector.shape_cast %15 : vector<2x1xi1> to vector<2x1xi1>
    %17 = vector.broadcast %16 : vector<2x1xi1> to vector<2x784xi1>
    %18 = vector.broadcast %cst_10 : f32 to vector<2x784xf32>
    %19 = arith.select %17, %9, %18 : vector<2x784xi1>, vector<2x784xf32>
    %c0_11 = arith.constant 0 : index
    %c0_12 = arith.constant 0 : index
    %20 = vector.load %arg5[%c0_11, %c0_12] : memref<2x784xf32, #tpu.memory_space<vmem>>, vector<2x784xf32>
    tpu.vector_store %arg5[%c0_11, %c0_12], %19 {strides = array<i32>} : memref<2x784xf32, #tpu.memory_space<vmem>>, vector<2x784xf32>,
    %cst_13 = arith.constant dense<0.000000e+00> : vector<784xf32>
    %21 = vector.multi_reduction <add>, %19, %cst_13 [0] : vector<2x784xf32> to vector<784xf32>
    %22 = vector.shape_cast %21 : vector<784xf32> to vector<1x784xf32>
    %c0_14 = arith.constant 0 : index
    %c0_15 = arith.constant 0 : index
    %23 = vector.load %arg6[%c0_14, %c0_15] : memref<1x784xf32, #tpu.memory_space<vmem>>, vector<1x784xf32>
    tpu.vector_store %arg6[%c0_14, %c0_15], %22 {strides = array<i32>} : memref<1x784xf32, #tpu.memory_space<vmem>>, vector<1x784xf32>,
    %24 = arith.mulf %19, %19 : vector<2x784xf32>
    %cst_16 = arith.constant dense<0.000000e+00> : vector<784xf32>
    %25 = vector.multi_reduction <add>, %24, %cst_16 [0] : vector<2x784xf32> to vector<784xf32>
    %26 = vector.shape_cast %25 : vector<784xf32> to vector<1x784xf32>
    %c0_17 = arith.constant 0 : index
    %c0_18 = arith.constant 0 : index
    %27 = vector.load %arg7[%c0_17, %c0_18] : memref<1x784xf32, #tpu.memory_space<vmem>>, vector<1x784xf32>
    tpu.vector_store %arg7[%c0_17, %c0_18], %26 {strides = array<i32>} : memref<1x784xf32, #tpu.memory_space<vmem>>, vector<1x784xf32>,
    return
  }
  func.func @transform_0(%arg0: i32) -> (i32, i32) {
    %c0_i32 = arith.constant 0 : i32
    %c0_i32_0 = arith.constant 0 : i32
    return %arg0, %c0_i32 : i32, i32
  }
  func.func @transform_1(%arg0: i32) -> (i32, i32) {
    %c0_i32 = arith.constant 0 : i32
    %c0_i32_0 = arith.constant 0 : i32
    %c0_i32_1 = arith.constant 0 : i32
    return %c0_i32, %c0_i32_0 : i32, i32
  }
  func.func @transform_2(%arg0: i32) -> (i32, i32) {
    %c0_i32 = arith.constant 0 : i32
    %c0_i32_0 = arith.constant 0 : i32
    %c0_i32_1 = arith.constant 0 : i32
    return %c0_i32, %c0_i32_0 : i32, i32
  }
  func.func @transform_3(%arg0: i32) -> (i32, i32) {
    %c0_i32 = arith.constant 0 : i32
    %c0_i32_0 = arith.constant 0 : i32
    %c0_i32_1 = arith.constant 0 : i32
    return %c0_i32, %c0_i32_0 : i32, i32
  }
  func.func @transform_4(%arg0: i32) -> (i32, i32) {
    %c0_i32 = arith.constant 0 : i32
    %c0_i32_0 = arith.constant 0 : i32
    return %arg0, %c0_i32 : i32, i32
  }
  func.func @transform_5(%arg0: i32) -> (i32, i32) {
    %c0_i32 = arith.constant 0 : i32
    %c0_i32_0 = arith.constant 0 : i32
    return %arg0, %c0_i32 : i32, i32
  }
  func.func @transform_6(%arg0: i32) -> (i32, i32) {
    %c0_i32 = arith.constant 0 : i32
    %c0_i32_0 = arith.constant 0 : i32
    return %arg0, %c0_i32 : i32, i32
  }
}

module attributes {stable_mosaic.version = 11 : i64} {
  func.func @_stage2_kernel(%arg0: i32, %arg1: memref<2x784xf32, #tpu.memory_space<vmem>>, %arg2: memref<1x784xf32, #tpu.memory_space<vmem>>, %arg3: memref<1x784xf32, #tpu.memory_space<vmem>>, %arg4: memref<784x288xf32, #tpu.memory_space<vmem>>, %arg5: memref<1x288xf32, #tpu.memory_space<vmem>>, %arg6: memref<288x128xf32, #tpu.memory_space<vmem>>, %arg7: memref<1x128xf32, #tpu.memory_space<vmem>>, %arg8: memref<128x16xf32, #tpu.memory_space<vmem>>, %arg9: memref<1x16xf32, #tpu.memory_space<vmem>>, %arg10: memref<2x16xf32, #tpu.memory_space<vmem>>) attributes {dimension_semantics = [#tpu.dimension_semantics<parallel>], iteration_bounds = array<i64: 1>, scalar_prefetch = 0 : i64, scratch_operands = 0 : i64, tpu.core_type = #tpu.core_type<tc>, window_params = [{transform_indices = @transform_0, window_bounds = array<i64: 2, 784>}, {pipeline_mode = #tpu.pipeline_mode<synchronous>, transform_indices = @transform_1, window_bounds = array<i64: 1, 784>}, {pipeline_mode = #tpu.pipeline_mode<synchronous>, transform_indices = @transform_2, window_bounds = array<i64: 1, 784>}, {pipeline_mode = #tpu.pipeline_mode<synchronous>, transform_indices = @transform_3, window_bounds = array<i64: 784, 288>}, {pipeline_mode = #tpu.pipeline_mode<synchronous>, transform_indices = @transform_4, window_bounds = array<i64: 1, 288>}, {pipeline_mode = #tpu.pipeline_mode<synchronous>, transform_indices = @transform_5, window_bounds = array<i64: 288, 128>}, {pipeline_mode = #tpu.pipeline_mode<synchronous>, transform_indices = @transform_6, window_bounds = array<i64: 1, 128>}, {pipeline_mode = #tpu.pipeline_mode<synchronous>, transform_indices = @transform_7, window_bounds = array<i64: 128, 16>}, {pipeline_mode = #tpu.pipeline_mode<synchronous>, transform_indices = @transform_8, window_bounds = array<i64: 1, 16>}, {transform_indices = @transform_9, window_bounds = array<i64: 2, 16>}]} {
    %c0 = arith.constant 0 : index
    %c0_0 = arith.constant 0 : index
    %0 = vector.load %arg1[%c0, %c0_0] : memref<2x784xf32, #tpu.memory_space<vmem>>, vector<2x784xf32>
    %c0_1 = arith.constant 0 : index
    %c0_2 = arith.constant 0 : index
    %1 = vector.load %arg2[%c0_1, %c0_2] : memref<1x784xf32, #tpu.memory_space<vmem>>, vector<1x784xf32>
    %2 = vector.broadcast %1 : vector<1x784xf32> to vector<2x784xf32>
    %3 = arith.mulf %0, %2 : vector<2x784xf32>
    %c0_3 = arith.constant 0 : index
    %c0_4 = arith.constant 0 : index
    %4 = vector.load %arg3[%c0_3, %c0_4] : memref<1x784xf32, #tpu.memory_space<vmem>>, vector<1x784xf32>
    %5 = vector.broadcast %4 : vector<1x784xf32> to vector<2x784xf32>
    %6 = arith.addf %3, %5 : vector<2x784xf32>
    %cst = arith.constant 0.000000e+00 : f32
    %7 = vector.broadcast %cst : f32 to vector<2x784xf32>
    %8 = arith.maximumf %6, %7 : vector<2x784xf32>
    %c0_5 = arith.constant 0 : index
    %c0_6 = arith.constant 0 : index
    %9 = vector.load %arg4[%c0_5, %c0_6] : memref<784x288xf32, #tpu.memory_space<vmem>>, vector<784x288xf32>
    %cst_7 = arith.constant dense<0.000000e+00> : vector<2x288xf32>
    %10 = tpu.matmul %8, %9, %cst_7 {dimension_numbers = #tpu.dot_dimension_numbers<[1], [0], [0], [1], [0, 0, 1, 1], [], []>} : vector<2x784xf32>, vector<784x288xf32>, vector<2x288xf32> -> vector<2x288xf32>
    %c0_8 = arith.constant 0 : index
    %c0_9 = arith.constant 0 : index
    %11 = vector.load %arg5[%c0_8, %c0_9] : memref<1x288xf32, #tpu.memory_space<vmem>>, vector<1x288xf32>
    %12 = vector.broadcast %11 : vector<1x288xf32> to vector<2x288xf32>
    %13 = arith.addf %10, %12 : vector<2x288xf32>
    %cst_10 = arith.constant 0.000000e+00 : f32
    %14 = vector.broadcast %cst_10 : f32 to vector<2x288xf32>
    %15 = arith.maximumf %13, %14 : vector<2x288xf32>
    %c0_11 = arith.constant 0 : index
    %c0_12 = arith.constant 0 : index
    %16 = vector.load %arg6[%c0_11, %c0_12] : memref<288x128xf32, #tpu.memory_space<vmem>>, vector<288x128xf32>
    %cst_13 = arith.constant dense<0.000000e+00> : vector<2x128xf32>
    %17 = tpu.matmul %15, %16, %cst_13 {dimension_numbers = #tpu.dot_dimension_numbers<[1], [0], [0], [1], [0, 0, 1, 1], [], []>} : vector<2x288xf32>, vector<288x128xf32>, vector<2x128xf32> -> vector<2x128xf32>
    %c0_14 = arith.constant 0 : index
    %c0_15 = arith.constant 0 : index
    %18 = vector.load %arg7[%c0_14, %c0_15] : memref<1x128xf32, #tpu.memory_space<vmem>>, vector<1x128xf32>
    %19 = vector.broadcast %18 : vector<1x128xf32> to vector<2x128xf32>
    %20 = arith.addf %17, %19 : vector<2x128xf32>
    %cst_16 = arith.constant 0.000000e+00 : f32
    %21 = vector.broadcast %cst_16 : f32 to vector<2x128xf32>
    %22 = arith.maximumf %20, %21 : vector<2x128xf32>
    %c0_17 = arith.constant 0 : index
    %c0_18 = arith.constant 0 : index
    %23 = vector.load %arg8[%c0_17, %c0_18] : memref<128x16xf32, #tpu.memory_space<vmem>>, vector<128x16xf32>
    %cst_19 = arith.constant dense<0.000000e+00> : vector<2x16xf32>
    %24 = tpu.matmul %22, %23, %cst_19 {dimension_numbers = #tpu.dot_dimension_numbers<[1], [0], [0], [1], [0, 0, 1, 1], [], []>} : vector<2x128xf32>, vector<128x16xf32>, vector<2x16xf32> -> vector<2x16xf32>
    %c0_20 = arith.constant 0 : index
    %c0_21 = arith.constant 0 : index
    %25 = vector.load %arg9[%c0_20, %c0_21] : memref<1x16xf32, #tpu.memory_space<vmem>>, vector<1x16xf32>
    %26 = vector.broadcast %25 : vector<1x16xf32> to vector<2x16xf32>
    %27 = arith.addf %24, %26 : vector<2x16xf32>
    %c0_22 = arith.constant 0 : index
    %c0_23 = arith.constant 0 : index
    %28 = vector.load %arg10[%c0_22, %c0_23] : memref<2x16xf32, #tpu.memory_space<vmem>>, vector<2x16xf32>
    tpu.vector_store %arg10[%c0_22, %c0_23], %27 {strides = array<i32>} : memref<2x16xf32, #tpu.memory_space<vmem>>, vector<2x16xf32>,
    return
  }
  func.func @transform_0(%arg0: i32) -> (i32, i32) {
    %c0_i32 = arith.constant 0 : i32
    %c0_i32_0 = arith.constant 0 : i32
    return %arg0, %c0_i32 : i32, i32
  }
  func.func @transform_1(%arg0: i32) -> (i32, i32) {
    %c0_i32 = arith.constant 0 : i32
    %c0_i32_0 = arith.constant 0 : i32
    %c0_i32_1 = arith.constant 0 : i32
    return %c0_i32, %c0_i32_0 : i32, i32
  }
  func.func @transform_2(%arg0: i32) -> (i32, i32) {
    %c0_i32 = arith.constant 0 : i32
    %c0_i32_0 = arith.constant 0 : i32
    %c0_i32_1 = arith.constant 0 : i32
    return %c0_i32, %c0_i32_0 : i32, i32
  }
  func.func @transform_3(%arg0: i32) -> (i32, i32) {
    %c0_i32 = arith.constant 0 : i32
    %c0_i32_0 = arith.constant 0 : i32
    %c0_i32_1 = arith.constant 0 : i32
    return %c0_i32, %c0_i32_0 : i32, i32
  }
  func.func @transform_4(%arg0: i32) -> (i32, i32) {
    %c0_i32 = arith.constant 0 : i32
    %c0_i32_0 = arith.constant 0 : i32
    %c0_i32_1 = arith.constant 0 : i32
    return %c0_i32, %c0_i32_0 : i32, i32
  }
  func.func @transform_5(%arg0: i32) -> (i32, i32) {
    %c0_i32 = arith.constant 0 : i32
    %c0_i32_0 = arith.constant 0 : i32
    %c0_i32_1 = arith.constant 0 : i32
    return %c0_i32, %c0_i32_0 : i32, i32
  }
  func.func @transform_6(%arg0: i32) -> (i32, i32) {
    %c0_i32 = arith.constant 0 : i32
    %c0_i32_0 = arith.constant 0 : i32
    %c0_i32_1 = arith.constant 0 : i32
    return %c0_i32, %c0_i32_0 : i32, i32
  }
  func.func @transform_7(%arg0: i32) -> (i32, i32) {
    %c0_i32 = arith.constant 0 : i32
    %c0_i32_0 = arith.constant 0 : i32
    %c0_i32_1 = arith.constant 0 : i32
    return %c0_i32, %c0_i32_0 : i32, i32
  }
  func.func @transform_8(%arg0: i32) -> (i32, i32) {
    %c0_i32 = arith.constant 0 : i32
    %c0_i32_0 = arith.constant 0 : i32
    %c0_i32_1 = arith.constant 0 : i32
    return %c0_i32, %c0_i32_0 : i32, i32
  }
  func.func @transform_9(%arg0: i32) -> (i32, i32) {
    %c0_i32 = arith.constant 0 : i32
    %c0_i32_0 = arith.constant 0 : i32
    return %arg0, %c0_i32 : i32, i32
  }
}

</mosaic_0001>

<llo_original>
// kernel: tile.13
$region0: #{tile.13}
  #allocation0 [shape = 's32[1]{0}', space=sflag, size = 0x4, scoped, tag = 'scoped memory for tile.13']
  %s0 = inlined_call_operand.vmem [shape: f32[16], index: 0, kind: input, shape index: {}]
  %s1 = inlined_call_operand.vmem [shape: f32[49,16], index: 1, kind: output, shape index: {}]
  // Predicated region
  $region2: #{tile.13} parent=0 // pred_check
    _
  $region3: #{tile.13} parent=0 // pred_check_branch
    %3 = sbr.rel (0) target = $region5
  $region4: #{tile.13} parent=0 // pred_region
    _
  $region5: #{tile.13} parent=0 // pred_fallthru
    _
  %v4 = vld [vmem:[%s0] ss:$0 sm:$0xff]
  %5 = vst [vmem:[%s1] sm:$0xff] %v4
  %s6 = scalar_lea.vmem %s1, 8
  %7 = vst [vmem:[%s6] sm:$0xff] %v4
  %s8 = scalar_lea.vmem %s1, 16
  %9 = vst [vmem:[%s8] sm:$0xff] %v4
  %s10 = scalar_lea.vmem %s1, 24
  %11 = vst [vmem:[%s10] sm:$0xff] %v4
  %s12 = scalar_lea.vmem %s1, 32
  %13 = vst [vmem:[%s12] sm:$0xff] %v4
  %s14 = scalar_lea.vmem %s1, 40
  %15 = vst [vmem:[%s14] sm:$0xff] %v4
  %s16 = scalar_lea.vmem %s1, 48
  %17 = vst [vmem:[%s16] sm:$0xff] %v4

// kernel: tile.14
$region0: #{tile.14}
  %s0 = inlined_call_operand.vmem [shape: f32[49,16], index: 0, kind: input, shape index: {}]
  %s1 = inlined_call_operand.vmem [shape: f32[1,784], index: 1, kind: output, shape index: {}]
  $region1: #{tile.14} parent=0
    #allocation0 [shape = 'u8[28672]{0}', space=vmem, size = 0x7000, scoped, tag = 'scoped mem for output reshape']
    %v2 = vld [vmem:[%s0] ss:$8 sm:$0xf]
    %v3 = vld [vmem:[%s0] ss:$8 sm:$0x70]
    %vm4 = vcmask 1046532
    %v5 = vsel %vm4, %v3, %v2
    %vm6 = vcmask 130048
    %7 = vst.msk [vmem:[#allocation0] ss:$8 sm:$0xf] %vm6, %v5
    %8 = vst.msk [vmem:[#allocation0] ss:$8 sm:$0x70] %vm6, %v5
    %s9 = scalar_lea.vmem %s0, 7
    %v10 = vld [vmem:[%s9] ss:$8 sm:$0xf]
    %s11 = scalar_lea.vmem %s0, 7
    %s12 = smov 48
    %v13 = vld [vmem:[%s11] ss:$8 sm:%s12]
    %vm14 = vcmask 1045508
    %v15 = vsel %vm14, %v13, %v10
    %16 = vrot.lane.b32.xlu0 %v15, 112
    %v17 = vpop.permute.xlu0 %16
    %vm18 = vcmask 1048448
    %19 = vst.msk [vmem:[#allocation0] ss:$8 sm:$0xf] %vm18, %v17
    %20 = vst.msk [vmem:[#allocation0] ss:$8 sm:$0x30] %vm18, %v17
    %s21 = scalar_lea.vmem %s0, 6
    %v22 = vld [vmem:[%s21] ss:$8 sm:$0xf]
    %s23 = scalar_lea.vmem %s0, 6
    %s24 = smov 48
    %v25 = vld [vmem:[%s23] ss:$8 sm:%s24]
    %vm26 = vcmask 1045508
    %v27 = vsel %vm26, %v25, %v22
    %28 = vrot.lane.b32.xlu0 %v27, 96
    %v29 = vpop.permute.xlu0 %28
    %vm30 = vcmask 917248
    %31 = vst.msk [vmem:[#allocation0] ss:$8 sm:$0xf] %vm30, %v29
    %32 = vst.msk [vmem:[#allocation0] ss:$8 sm:$0x30] %vm30, %v29
    %s33 = scalar_lea.vmem %s0, 5
    %v34 = vld [vmem:[%s33] ss:$8 sm:$0xf]
    %s35 = scalar_lea.vmem %s0, 5
    %s36 = smov 48
    %v37 = vld [vmem:[%s35] ss:$8 sm:%s36]
    %vm38 = vcmask 1045508
    %v39 = vsel %vm38, %v37, %v34
    %40 = vrot.lane.b32.xlu0 %v39, 80
    %v41 = vpop.permute.xlu0 %40
    %vm42 = vcmask 786048
    %43 = vst.msk [vmem:[#allocation0] ss:$8 sm:$0xf] %vm42, %v41
    %44 = vst.msk [vmem:[#allocation0] ss:$8 sm:$0x30] %vm42, %v41
    %s45 = scalar_lea.vmem %s0, 4
    %v46 = vld [vmem:[%s45] ss:$8 sm:$0xf]
    %s47 = scalar_lea.vmem %s0, 4
    %s48 = smov 48
    %v49 = vld [vmem:[%s47] ss:$8 sm:%s48]
    %vm50 = vcmask 1045508
    %v51 = vsel %vm50, %v49, %v46
    %52 = vrot.lane.b32.xlu0 %v51, 64
    %v53 = vpop.permute.xlu0 %52
    %vm54 = vcmask 654848
    %55 = vst.msk [vmem:[#allocation0] ss:$8 sm:$0xf] %vm54, %v53
    %56 = vst.msk [vmem:[#allocation0] ss:$8 sm:$0x30] %vm54, %v53
    %s57 = scalar_lea.vmem %s0, 3
    %v58 = vld [vmem:[%s57] ss:$8 sm:$0xf]
    %s59 = scalar_lea.vmem %s0, 3
    %s60 = smov 48
    %v61 = vld [vmem:[%s59] ss:$8 sm:%s60]
    %vm62 = vcmask 1045508
    %v63 = vsel %vm62, %v61, %v58
    %64 = vrot.lane.b32.xlu0 %v63, 48
    %v65 = vpop.permute.xlu0 %64
    %vm66 = vcmask 523648
    %67 = vst.msk [vmem:[#allocation0] ss:$8 sm:$0xf] %vm66, %v65
    %68 = vst.msk [vmem:[#allocation0] ss:$8 sm:$0x30] %vm66, %v65
    %s69 = scalar_lea.vmem %s0, 2
    %v70 = vld [vmem:[%s69] ss:$8 sm:$0xf]
    %s71 = scalar_lea.vmem %s0, 2
    %s72 = smov 48
    %v73 = vld [vmem:[%s71] ss:$8 sm:%s72]
    %vm74 = vcmask 1045508
    %v75 = vsel %vm74, %v73, %v70
    %76 = vrot.lane.b32.xlu0 %v75, 32
    %v77 = vpop.permute.xlu0 %76
    %vm78 = vcmask 392448
    %79 = vst.msk [vmem:[#allocation0] ss:$8 sm:$0xf] %vm78, %v77
    %80 = vst.msk [vmem:[#allocation0] ss:$8 sm:$0x30] %vm78, %v77
    %s81 = scalar_lea.vmem %s0, 1
    %v82 = vld [vmem:[%s81] ss:$8 sm:$0xf]
    %s83 = scalar_lea.vmem %s0, 1
    %s84 = smov 48
    %v85 = vld [vmem:[%s83] ss:$8 sm:%s84]
    %vm86 = vcmask 1045508
    %v87 = vsel %vm86, %v85, %v82
    %88 = vrot.lane.b32.xlu0 %v87, 16
    %v89 = vpop.permute.xlu0 %88
    %vm90 = vcmask 261248
    %91 = vst.msk [vmem:[#allocation0] ss:$8 sm:$0xf] %vm90, %v89
    %92 = vst.msk [vmem:[#allocation0] ss:$8 sm:$0x30] %vm90, %v89
    %s94 = sshllo.u32 0, 1
    %v96 = vld [vmem:[#allocation0] sm:%s94]
    %s97 = sshllo.u32 0, 1
    %98 = vst [vmem:[%s1] sm:%s97] %v96
    %s99 = scalar_lea.vmem [#allocation0], 8
    %v100 = vld [vmem:[%s99] sm:%s94]
    %s101 = sshllo.u32 0, 1
    %s102 = scalar_lea.vmem %s1, 1
    %103 = vst [vmem:[%s102] sm:%s101] %v100
    %s104 = scalar_lea.vmem [#allocation0], 16
    %v105 = vld [vmem:[%s104] sm:%s94]
    %s106 = sshllo.u32 0, 1
    %s107 = smul.addr 1, 2
    %s108 = scalar_lea.vmem %s1, %s107
    %109 = vst [vmem:[%s108] sm:%s106] %v105
    %s110 = scalar_lea.vmem [#allocation0], 24
    %v111 = vld [vmem:[%s110] sm:%s94]
    %s112 = sshllo.u32 0, 1
    %s113 = smul.addr 1, 3
    %s114 = scalar_lea.vmem %s1, %s113
    %115 = vst [vmem:[%s114] sm:%s112] %v111
    %s116 = scalar_lea.vmem [#allocation0], 32
    %v117 = vld [vmem:[%s116] sm:%s94]
    %s118 = sshllo.u32 0, 1
    %s119 = smul.addr 1, 4
    %s120 = scalar_lea.vmem %s1, %s119
    %121 = vst [vmem:[%s120] sm:%s118] %v117
    %s122 = scalar_lea.vmem [#allocation0], 40
    %v123 = vld [vmem:[%s122] sm:%s94]
    %s124 = sshllo.u32 0, 1
    %s125 = smul.addr 1, 5
    %s126 = scalar_lea.vmem %s1, %s125
    %127 = vst [vmem:[%s126] sm:%s124] %v123
    %s128 = scalar_lea.vmem [#allocation0], 48
    %v129 = vld [vmem:[%s128] sm:%s94]
    %s130 = sshllo.u32 0, 1
    %s131 = smul.addr 1, 6
    %s132 = scalar_lea.vmem %s1, %s131
    %133 = vst [vmem:[%s132] sm:%s130] %v129

// kernel: encoder_forward.3
$region0: #{encoder_forward.3}
  #allocation0 [shape = 'u32[]', space=smem, size = 0x4, offset = 0x4, fixed_abs, tag = 'smem constant byte address 0x4 - core index']
  #allocation1 [shape = 'u32[144,128]{1,0:T(1,128)}', space=vmem, size = 0x12000, scoped, tag = 'internal scratch']
  %s0 = inlined_call_operand.vmem [shape: f32[2,784], index: 0, kind: input, shape index: {}]
  %s1 = inlined_call_operand.vmem [shape: f32[1,784], index: 1, kind: input, shape index: {}]
  %s2 = inlined_call_operand.vmem [shape: f32[1,784], index: 2, kind: input, shape index: {}]
  %s3 = inlined_call_operand.vmem [shape: f32[784,288], index: 3, kind: input, shape index: {}]
  %s4 = inlined_call_operand.vmem [shape: f32[1,288], index: 4, kind: input, shape index: {}]
  %s5 = inlined_call_operand.vmem [shape: f32[288,128], index: 5, kind: input, shape index: {}]
  %s6 = inlined_call_operand.vmem [shape: f32[1,128], index: 6, kind: input, shape index: {}]
  %s7 = inlined_call_operand.vmem [shape: f32[128,16], index: 7, kind: input, shape index: {}]
  %s8 = inlined_call_operand.vmem [shape: f32[1,16], index: 8, kind: input, shape index: {}]
  %s9 = inlined_call_operand.hbm [shape: f32[2,16], index: 9, kind: output, shape index: {}]
  %s10 = sld [smem:[#allocation0]]
  $region46: #{encoder_forward.3} parent=0
    _
  %s12 = ssub.s32 1, %s10
  %s13 = scalar_select 0, %s12, %s10
  $region1: #{encoder_forward.3} parent=0
    #allocation2 [shape = 'u8[1024]{0}', space=vmem, size = 0x400, scoped, tag = 'output window, operand 0, single buffered']
    #allocation3 [shape = 's32[1]{0}', space=sflag, size = 0x4, scoped, tag = 'scoped memory for encoder_forward.3']
    %14 = vsyncpa [#allocation3], 0
    // Predicated region
    $region2: #{encoder_forward.3} parent=1 // pred_check
      _
    $region3: #{encoder_forward.3} parent=1 // pred_check_branch
      %16 = sbr.rel (0) target = $region5
    $region4: #{encoder_forward.3} parent=1 // pred_region
      _
    $region5: #{encoder_forward.3} parent=1 // pred_fallthru
      _
    // Predicated region
    $region6: #{encoder_forward.3} parent=1 // pred_check
      _
    $region7: #{encoder_forward.3} parent=1 // pred_check_branch
      %18 = sbr.rel (0) target = $region9
    $region8: #{encoder_forward.3} parent=1 // pred_region
      _
    $region9: #{encoder_forward.3} parent=1 // pred_fallthru
      _
    // Predicated region
    $region10: #{encoder_forward.3} parent=1 // pred_check
      _
    $region11: #{encoder_forward.3} parent=1 // pred_check_branch
      %20 = sbr.rel (0) target = $region13
    $region12: #{encoder_forward.3} parent=1 // pred_region
      _
    $region13: #{encoder_forward.3} parent=1 // pred_fallthru
      _
    // Predicated region
    $region14: #{encoder_forward.3} parent=1 // pred_check
      _
    $region15: #{encoder_forward.3} parent=1 // pred_check_branch
      %22 = sbr.rel (0) target = $region17
    $region16: #{encoder_forward.3} parent=1 // pred_region
      _
    $region17: #{encoder_forward.3} parent=1 // pred_fallthru
      _
    // Predicated region
    $region18: #{encoder_forward.3} parent=1 // pred_check
      _
    $region19: #{encoder_forward.3} parent=1 // pred_check_branch
      %24 = sbr.rel (0) target = $region21
    $region20: #{encoder_forward.3} parent=1 // pred_region
      _
    $region21: #{encoder_forward.3} parent=1 // pred_fallthru
      _
    // Predicated region
    $region22: #{encoder_forward.3} parent=1 // pred_check
      _
    $region23: #{encoder_forward.3} parent=1 // pred_check_branch
      %26 = sbr.rel (0) target = $region25
    $region24: #{encoder_forward.3} parent=1 // pred_region
      _
    $region25: #{encoder_forward.3} parent=1 // pred_fallthru
      _
    // Predicated region
    $region26: #{encoder_forward.3} parent=1 // pred_check
      _
    $region27: #{encoder_forward.3} parent=1 // pred_check_branch
      %28 = sbr.rel (0) target = $region29
    $region28: #{encoder_forward.3} parent=1 // pred_region
      _
    $region29: #{encoder_forward.3} parent=1 // pred_fallthru
      _
    // Predicated region
    $region30: #{encoder_forward.3} parent=1 // pred_check
      _
    $region31: #{encoder_forward.3} parent=1 // pred_check_branch
      %30 = sbr.rel (0) target = $region33
    $region32: #{encoder_forward.3} parent=1 // pred_region
      _
    $region33: #{encoder_forward.3} parent=1 // pred_fallthru
      _
    // Predicated region
    $region34: #{encoder_forward.3} parent=1 // pred_check
      _
    $region35: #{encoder_forward.3} parent=1 // pred_check_branch
      %32 = sbr.rel (0) target = $region37
    $region36: #{encoder_forward.3} parent=1 // pred_region
      _
    $region37: #{encoder_forward.3} parent=1 // pred_fallthru
      _
    %v33 = vld [vmem:[%s0] sm:$0xff]
    %v34 = vld [vmem:[%s0 + $0x8] sm:$0x3f]
    %v35 = vld [vmem:[%s1] sm:$0x7f]
    %v37 = vlaneseq
    %v38 = vshrl.u32 %v37, 7
    %v39 = vsub.s32 0, %v38
    %v40 = vrot.slane %v35, %v39
    %v41 = vlaneseq
    %v42 = vshrl.u32 %v41, 7
    %v43 = vsub.s32 1, %v42
    %v44 = vrot.slane %v35, %v43
    %v45 = vlaneseq
    %v46 = vshrl.u32 %v45, 7
    %v47 = vsub.s32 2, %v46
    %v48 = vrot.slane %v35, %v47
    %v49 = vlaneseq
    %v50 = vshrl.u32 %v49, 7
    %v51 = vsub.s32 3, %v50
    %v52 = vrot.slane %v35, %v51
    %v53 = vlaneseq
    %v54 = vshrl.u32 %v53, 7
    %v55 = vsub.s32 4, %v54
    %v56 = vrot.slane %v35, %v55
    %v57 = vlaneseq
    %v58 = vshrl.u32 %v57, 7
    %v59 = vsub.s32 5, %v58
    %v60 = vrot.slane %v35, %v59
    %v61 = vlaneseq
    %v62 = vshrl.u32 %v61, 7
    %v63 = vsub.s32 6, %v62
    %v64 = vrot.slane %v35, %v63
    %v65 = vcombine.low %v40, %v44
    %v66 = vcombine.low %v48, %v52
    %v68 = vunpack.c.l.s4 1983009808
    %v69 = vunpack.c.0.s8 %v68
    %v70 = vlaneseq
    %v71 = vshrl.u32 %v70, 7
    %v72 = vsub.s32 %v69, %v71
    %v73 = vrot.slane %v65, %v72
    %v75 = vunpack.c.l.s4 1983009808
    %v76 = vunpack.c.0.s8 %v75
    %v77 = vlaneseq
    %v78 = vshrl.u32 %v77, 7
    %v79 = vsub.s32 %v76, %v78
    %v80 = vrot.slane %v66, %v79
    %v81 = vcombine.low %v73, %v80
    %v82 = vcombine.low %v56, %v60
    %v84 = vunpack.c.l.s4 1983009808
    %v85 = vunpack.c.0.s8 %v84
    %v86 = vlaneseq
    %v87 = vshrl.u32 %v86, 7
    %v88 = vsub.s32 %v85, %v87
    %v89 = vrot.slane %v82, %v88
    %v91 = vunpack.c.l.s4 1983009808
    %v92 = vunpack.c.0.s8 %v91
    %v93 = vlaneseq
    %v94 = vshrl.u32 %v93, 7
    %v95 = vsub.s32 %v92, %v94
    %v96 = vrot.slane %v64, %v95
    %v97 = vcombine.low %v89, %v96
    %v100 = vmul.f32 %v33, %v81
    %v101 = vmul.f32 %v34, %v97
    %v102 = vld [vmem:[%s2] sm:$0x7f]
    %v104 = vlaneseq
    %v105 = vshrl.u32 %v104, 7
    %v106 = vsub.s32 0, %v105
    %v107 = vrot.slane %v102, %v106
    %v108 = vlaneseq
    %v109 = vshrl.u32 %v108, 7
    %v110 = vsub.s32 1, %v109
    %v111 = vrot.slane %v102, %v110
    %v112 = vlaneseq
    %v113 = vshrl.u32 %v112, 7
    %v114 = vsub.s32 2, %v113
    %v115 = vrot.slane %v102, %v114
    %v116 = vlaneseq
    %v117 = vshrl.u32 %v116, 7
    %v118 = vsub.s32 3, %v117
    %v119 = vrot.slane %v102, %v118
    %v120 = vlaneseq
    %v121 = vshrl.u32 %v120, 7
    %v122 = vsub.s32 4, %v121
    %v123 = vrot.slane %v102, %v122
    %v124 = vlaneseq
    %v125 = vshrl.u32 %v124, 7
    %v126 = vsub.s32 5, %v125
    %v127 = vrot.slane %v102, %v126
    %v128 = vlaneseq
    %v129 = vshrl.u32 %v128, 7
    %v130 = vsub.s32 6, %v129
    %v131 = vrot.slane %v102, %v130
    %v132 = vcombine.low %v107, %v111
    %v133 = vcombine.low %v115, %v119
    %v135 = vunpack.c.l.s4 1983009808
    %v136 = vunpack.c.0.s8 %v135
    %v137 = vlaneseq
    %v138 = vshrl.u32 %v137, 7
    %v139 = vsub.s32 %v136, %v138
    %v140 = vrot.slane %v132, %v139
    %v142 = vunpack.c.l.s4 1983009808
    %v143 = vunpack.c.0.s8 %v142
    %v144 = vlaneseq
    %v145 = vshrl.u32 %v144, 7
    %v146 = vsub.s32 %v143, %v145
    %v147 = vrot.slane %v133, %v146
    %v148 = vcombine.low %v140, %v147
    %v149 = vcombine.low %v123, %v127
    %v151 = vunpack.c.l.s4 1983009808
    %v152 = vunpack.c.0.s8 %v151
    %v153 = vlaneseq
    %v154 = vshrl.u32 %v153, 7
    %v155 = vsub.s32 %v152, %v154
    %v156 = vrot.slane %v149, %v155
    %v158 = vunpack.c.l.s4 1983009808
    %v159 = vunpack.c.0.s8 %v158
    %v160 = vlaneseq
    %v161 = vshrl.u32 %v160, 7
    %v162 = vsub.s32 %v159, %v161
    %v163 = vrot.slane %v131, %v162
    %v164 = vcombine.low %v156, %v163
    %v167 = vadd.f32 %v100, %v148
    %v168 = vadd.f32 %v101, %v164
    %v169 = vmax.f32 %v167, 0.0
    %v170 = vmax.f32 %v168, 0.0
    %v171 = vld [vmem:[%s3] sm:$0xff]
    %v172 = vld [vmem:[%s3 + $0x8] sm:$0xff]
    %v173 = vld [vmem:[%s3 + $0x10] sm:$0xff]
    %v174 = vld [vmem:[%s3 + $0x18] sm:$0xff]
    %v175 = vld [vmem:[%s3 + $0x20] sm:$0xff]
    %v176 = vld [vmem:[%s3 + $0x28] sm:$0xff]
    %v177 = vld [vmem:[%s3 + $0x30] sm:$0xff]
    %v178 = vld [vmem:[%s3 + $0x38] sm:$0xff]
    %v179 = vld [vmem:[%s3 + $0x40] sm:$0xff]
    %v180 = vld [vmem:[%s3 + $0x48] sm:$0xff]
    %v181 = vld [vmem:[%s3 + $0x50] sm:$0xff]
    %v182 = vld [vmem:[%s3 + $0x58] sm:$0xff]
    %v183 = vld [vmem:[%s3 + $0x60] sm:$0xff]
    %v184 = vld [vmem:[%s3 + $0x68] sm:$0xff]
    %v185 = vld [vmem:[%s3 + $0x70] sm:$0xff]
    %v186 = vld [vmem:[%s3 + $0x78] sm:$0xff]
    %v187 = vld [vmem:[%s3 + $0x80] sm:$0xff]
    %v188 = vld [vmem:[%s3 + $0x88] sm:$0xff]
    %v189 = vld [vmem:[%s3 + $0x90] sm:$0xff]
    %v190 = vld [vmem:[%s3 + $0x98] sm:$0xff]
    %v191 = vld [vmem:[%s3 + $0xa0] sm:$0xff]
    %v192 = vld [vmem:[%s3 + $0xa8] sm:$0xff]
    %v193 = vld [vmem:[%s3 + $0xb0] sm:$0xff]
    %v194 = vld [vmem:[%s3 + $0xb8] sm:$0xff]
    %v195 = vld [vmem:[%s3 + $0xc0] sm:$0xff]
    %v196 = vld [vmem:[%s3 + $0xc8] sm:$0xff]
    %v197 = vld [vmem:[%s3 + $0xd0] sm:$0xff]
    %v198 = vld [vmem:[%s3 + $0xd8] sm:$0xff]
    %v199 = vld [vmem:[%s3 + $0xe0] sm:$0xff]
    %v200 = vld [vmem:[%s3 + $0xe8] sm:$0xff]
    %v201 = vld [vmem:[%s3 + $0xf0] sm:$0xff]
    %v202 = vld [vmem:[%s3 + $0xf8] sm:$0xff]
    %v203 = vld [vmem:[%s3 + $0x100] sm:$0xff]
    %v204 = vld [vmem:[%s3 + $0x108] sm:$0xff]
    %v205 = vld [vmem:[%s3 + $0x110] sm:$0xff]
    %v206 = vld [vmem:[%s3 + $0x118] sm:$0xff]
    %v207 = vld [vmem:[%s3 + $0x120] sm:$0xff]
    %v208 = vld [vmem:[%s3 + $0x128] sm:$0xff]
    %v209 = vld [vmem:[%s3 + $0x130] sm:$0xff]
    %v210 = vld [vmem:[%s3 + $0x138] sm:$0xff]
    %v211 = vld [vmem:[%s3 + $0x140] sm:$0xff]
    %v212 = vld [vmem:[%s3 + $0x148] sm:$0xff]
    %v213 = vld [vmem:[%s3 + $0x150] sm:$0xff]
    %v214 = vld [vmem:[%s3 + $0x158] sm:$0xff]
    %v215 = vld [vmem:[%s3 + $0x160] sm:$0xff]
    %v216 = vld [vmem:[%s3 + $0x168] sm:$0xff]
    %v217 = vld [vmem:[%s3 + $0x170] sm:$0xff]
    %v218 = vld [vmem:[%s3 + $0x178] sm:$0xff]
    %v219 = vld [vmem:[%s3 + $0x180] sm:$0xff]
    %v220 = vld [vmem:[%s3 + $0x188] sm:$0xff]
    %v221 = vld [vmem:[%s3 + $0x190] sm:$0xff]
    %v222 = vld [vmem:[%s3 + $0x198] sm:$0xff]
    %v223 = vld [vmem:[%s3 + $0x1a0] sm:$0xff]
    %v224 = vld [vmem:[%s3 + $0x1a8] sm:$0xff]
    %v225 = vld [vmem:[%s3 + $0x1b0] sm:$0xff]
    %v226 = vld [vmem:[%s3 + $0x1b8] sm:$0xff]
    %v227 = vld [vmem:[%s3 + $0x1c0] sm:$0xff]
    %v228 = vld [vmem:[%s3 + $0x1c8] sm:$0xff]
    %v229 = vld [vmem:[%s3 + $0x1d0] sm:$0xff]
    %v230 = vld [vmem:[%s3 + $0x1d8] sm:$0xff]
    %v231 = vld [vmem:[%s3 + $0x1e0] sm:$0xff]
    %v232 = vld [vmem:[%s3 + $0x1e8] sm:$0xff]
    %v233 = vld [vmem:[%s3 + $0x1f0] sm:$0xff]
    %v234 = vld [vmem:[%s3 + $0x1f8] sm:$0xff]
    %v235 = vld [vmem:[%s3 + $0x200] sm:$0xff]
    %v236 = vld [vmem:[%s3 + $0x208] sm:$0xff]
    %v237 = vld [vmem:[%s3 + $0x210] sm:$0xff]
    %v238 = vld [vmem:[%s3 + $0x218] sm:$0xff]
    %v239 = vld [vmem:[%s3 + $0x220] sm:$0xff]
    %v240 = vld [vmem:[%s3 + $0x228] sm:$0xff]
    %v241 = vld [vmem:[%s3 + $0x230] sm:$0xff]
    %v242 = vld [vmem:[%s3 + $0x238] sm:$0xff]
    %v243 = vld [vmem:[%s3 + $0x240] sm:$0xff]
    %v244 = vld [vmem:[%s3 + $0x248] sm:$0xff]
    %v245 = vld [vmem:[%s3 + $0x250] sm:$0xff]
    %v246 = vld [vmem:[%s3 + $0x258] sm:$0xff]
    %v247 = vld [vmem:[%s3 + $0x260] sm:$0xff]
    %v248 = vld [vmem:[%s3 + $0x268] sm:$0xff]
    %v249 = vld [vmem:[%s3 + $0x270] sm:$0xff]
    %v250 = vld [vmem:[%s3 + $0x278] sm:$0xff]
    %v251 = vld [vmem:[%s3 + $0x280] sm:$0xff]
    %v252 = vld [vmem:[%s3 + $0x288] sm:$0xff]
    %v253 = vld [vmem:[%s3 + $0x290] sm:$0xff]
    %v254 = vld [vmem:[%s3 + $0x298] sm:$0xff]
    %v255 = vld [vmem:[%s3 + $0x2a0] sm:$0xff]
    %v256 = vld [vmem:[%s3 + $0x2a8] sm:$0xff]
    %v257 = vld [vmem:[%s3 + $0x2b0] sm:$0xff]
    %v258 = vld [vmem:[%s3 + $0x2b8] sm:$0xff]
    %v259 = vld [vmem:[%s3 + $0x2c0] sm:$0xff]
    %v260 = vld [vmem:[%s3 + $0x2c8] sm:$0xff]
    %v261 = vld [vmem:[%s3 + $0x2d0] sm:$0xff]
    %v262 = vld [vmem:[%s3 + $0x2d8] sm:$0xff]
    %v263 = vld [vmem:[%s3 + $0x2e0] sm:$0xff]
    %v264 = vld [vmem:[%s3 + $0x2e8] sm:$0xff]
    %v265 = vld [vmem:[%s3 + $0x2f0] sm:$0xff]
    %v266 = vld [vmem:[%s3 + $0x2f8] sm:$0xff]
    %v267 = vld [vmem:[%s3 + $0x300] sm:$0xff]
    %v268 = vld [vmem:[%s3 + $0x308] sm:$0xff]
    %v269 = vld [vmem:[%s3 + $0x310] sm:$0xff]
    %v270 = vld [vmem:[%s3 + $0x318] sm:$0xff]
    %v271 = vld [vmem:[%s3 + $0x320] sm:$0xff]
    %v272 = vld [vmem:[%s3 + $0x328] sm:$0xff]
    %v273 = vld [vmem:[%s3 + $0x330] sm:$0xff]
    %v274 = vld [vmem:[%s3 + $0x338] sm:$0xff]
    %v275 = vld [vmem:[%s3 + $0x340] sm:$0xff]
    %v276 = vld [vmem:[%s3 + $0x348] sm:$0xff]
    %v277 = vld [vmem:[%s3 + $0x350] sm:$0xff]
    %v278 = vld [vmem:[%s3 + $0x358] sm:$0xff]
    %v279 = vld [vmem:[%s3 + $0x360] sm:$0xff]
    %v280 = vld [vmem:[%s3 + $0x368] sm:$0xff]
    %v281 = vld [vmem:[%s3 + $0x370] sm:$0xff]
    %v282 = vld [vmem:[%s3 + $0x378] sm:$0xff]
    %v283 = vld [vmem:[%s3 + $0x380] sm:$0xff]
    %v284 = vld [vmem:[%s3 + $0x388] sm:$0xff]
    %v285 = vld [vmem:[%s3 + $0x390] sm:$0xff]
    %v286 = vld [vmem:[%s3 + $0x398] sm:$0xff]
    %v287 = vld [vmem:[%s3 + $0x3a0] sm:$0xff]
    %v288 = vld [vmem:[%s3 + $0x3a8] sm:$0xff]
    %v289 = vld [vmem:[%s3 + $0x3b0] sm:$0xff]
    %v290 = vld [vmem:[%s3 + $0x3b8] sm:$0xff]
    %v291 = vld [vmem:[%s3 + $0x3c0] sm:$0xff]
    %v292 = vld [vmem:[%s3 + $0x3c8] sm:$0xff]
    %v293 = vld [vmem:[%s3 + $0x3d0] sm:$0xff]
    %v294 = vld [vmem:[%s3 + $0x3d8] sm:$0xff]
    %v295 = vld [vmem:[%s3 + $0x3e0] sm:$0xff]
    %v296 = vld [vmem:[%s3 + $0x3e8] sm:$0xff]
    %v297 = vld [vmem:[%s3 + $0x3f0] sm:$0xff]
    %v298 = vld [vmem:[%s3 + $0x3f8] sm:$0xff]
    %v299 = vld [vmem:[%s3 + $0x400] sm:$0xff]
    %v300 = vld [vmem:[%s3 + $0x408] sm:$0xff]
    %v301 = vld [vmem:[%s3 + $0x410] sm:$0xff]
    %v302 = vld [vmem:[%s3 + $0x418] sm:$0xff]
    %v303 = vld [vmem:[%s3 + $0x420] sm:$0xff]
    %v304 = vld [vmem:[%s3 + $0x428] sm:$0xff]
    %v305 = vld [vmem:[%s3 + $0x430] sm:$0xff]
    %v306 = vld [vmem:[%s3 + $0x438] sm:$0xff]
    %v307 = vld [vmem:[%s3 + $0x440] sm:$0xff]
    %v308 = vld [vmem:[%s3 + $0x448] sm:$0xff]
    %v309 = vld [vmem:[%s3 + $0x450] sm:$0xff]
    %v310 = vld [vmem:[%s3 + $0x458] sm:$0xff]
    %v311 = vld [vmem:[%s3 + $0x460] sm:$0xff]
    %v312 = vld [vmem:[%s3 + $0x468] sm:$0xff]
    %v313 = vld [vmem:[%s3 + $0x470] sm:$0xff]
    %v314 = vld [vmem:[%s3 + $0x478] sm:$0xff]
    %v315 = vld [vmem:[%s3 + $0x480] sm:$0xff]
    %v316 = vld [vmem:[%s3 + $0x488] sm:$0xff]
    %v317 = vld [vmem:[%s3 + $0x490] sm:$0xff]
    %v318 = vld [vmem:[%s3 + $0x498] sm:$0xff]
    %v319 = vld [vmem:[%s3 + $0x4a0] sm:$0xff]
    %v320 = vld [vmem:[%s3 + $0x4a8] sm:$0xff]
    %v321 = vld [vmem:[%s3 + $0x4b0] sm:$0xff]
    %v322 = vld [vmem:[%s3 + $0x4b8] sm:$0xff]
    %v323 = vld [vmem:[%s3 + $0x4c0] sm:$0xff]
    %v324 = vld [vmem:[%s3 + $0x4c8] sm:$0xff]
    %v325 = vld [vmem:[%s3 + $0x4d0] sm:$0xff]
    %v326 = vld [vmem:[%s3 + $0x4d8] sm:$0xff]
    %v327 = vld [vmem:[%s3 + $0x4e0] sm:$0xff]
    %v328 = vld [vmem:[%s3 + $0x4e8] sm:$0xff]
    %v329 = vld [vmem:[%s3 + $0x4f0] sm:$0xff]
    %v330 = vld [vmem:[%s3 + $0x4f8] sm:$0xff]
    %v331 = vld [vmem:[%s3 + $0x500] sm:$0xff]
    %v332 = vld [vmem:[%s3 + $0x508] sm:$0xff]
    %v333 = vld [vmem:[%s3 + $0x510] sm:$0xff]
    %v334 = vld [vmem:[%s3 + $0x518] sm:$0xff]
    %v335 = vld [vmem:[%s3 + $0x520] sm:$0xff]
    %v336 = vld [vmem:[%s3 + $0x528] sm:$0xff]
    %v337 = vld [vmem:[%s3 + $0x530] sm:$0xff]
    %v338 = vld [vmem:[%s3 + $0x538] sm:$0xff]
    %v339 = vld [vmem:[%s3 + $0x540] sm:$0xff]
    %v340 = vld [vmem:[%s3 + $0x548] sm:$0xff]
    %v341 = vld [vmem:[%s3 + $0x550] sm:$0xff]
    %v342 = vld [vmem:[%s3 + $0x558] sm:$0xff]
    %v343 = vld [vmem:[%s3 + $0x560] sm:$0xff]
    %v344 = vld [vmem:[%s3 + $0x568] sm:$0xff]
    %v345 = vld [vmem:[%s3 + $0x570] sm:$0xff]
    %v346 = vld [vmem:[%s3 + $0x578] sm:$0xff]
    %v347 = vld [vmem:[%s3 + $0x580] sm:$0xff]
    %v348 = vld [vmem:[%s3 + $0x588] sm:$0xff]
    %v349 = vld [vmem:[%s3 + $0x590] sm:$0xff]
    %v350 = vld [vmem:[%s3 + $0x598] sm:$0xff]
    %v351 = vld [vmem:[%s3 + $0x5a0] sm:$0xff]
    %v352 = vld [vmem:[%s3 + $0x5a8] sm:$0xff]
    %v353 = vld [vmem:[%s3 + $0x5b0] sm:$0xff]
    %v354 = vld [vmem:[%s3 + $0x5b8] sm:$0xff]
    %v355 = vld [vmem:[%s3 + $0x5c0] sm:$0xff]
    %v356 = vld [vmem:[%s3 + $0x5c8] sm:$0xff]
    %v357 = vld [vmem:[%s3 + $0x5d0] sm:$0xff]
    %v358 = vld [vmem:[%s3 + $0x5d8] sm:$0xff]
    %v359 = vld [vmem:[%s3 + $0x5e0] sm:$0xff]
    %v360 = vld [vmem:[%s3 + $0x5e8] sm:$0xff]
    %v361 = vld [vmem:[%s3 + $0x5f0] sm:$0xff]
    %v362 = vld [vmem:[%s3 + $0x5f8] sm:$0xff]
    %v363 = vld [vmem:[%s3 + $0x600] sm:$0xff]
    %v364 = vld [vmem:[%s3 + $0x608] sm:$0xff]
    %v365 = vld [vmem:[%s3 + $0x610] sm:$0xff]
    %v366 = vld [vmem:[%s3 + $0x618] sm:$0xff]
    %v367 = vld [vmem:[%s3 + $0x620] sm:$0xff]
    %v368 = vld [vmem:[%s3 + $0x628] sm:$0xff]
    %v369 = vld [vmem:[%s3 + $0x630] sm:$0xff]
    %v370 = vld [vmem:[%s3 + $0x638] sm:$0xff]
    %v371 = vld [vmem:[%s3 + $0x640] sm:$0xff]
    %v372 = vld [vmem:[%s3 + $0x648] sm:$0xff]
    %v373 = vld [vmem:[%s3 + $0x650] sm:$0xff]
    %v374 = vld [vmem:[%s3 + $0x658] sm:$0xff]
    %v375 = vld [vmem:[%s3 + $0x660] sm:$0xff]
    %v376 = vld [vmem:[%s3 + $0x668] sm:$0xff]
    %v377 = vld [vmem:[%s3 + $0x670] sm:$0xff]
    %v378 = vld [vmem:[%s3 + $0x678] sm:$0xff]
    %v379 = vld [vmem:[%s3 + $0x680] sm:$0xff]
    %v380 = vld [vmem:[%s3 + $0x688] sm:$0xff]
    %v381 = vld [vmem:[%s3 + $0x690] sm:$0xff]
    %v382 = vld [vmem:[%s3 + $0x698] sm:$0xff]
    %v383 = vld [vmem:[%s3 + $0x6a0] sm:$0xff]
    %v384 = vld [vmem:[%s3 + $0x6a8] sm:$0xff]
    %v385 = vld [vmem:[%s3 + $0x6b0] sm:$0xff]
    %v386 = vld [vmem:[%s3 + $0x6b8] sm:$0xff]
    %v387 = vld [vmem:[%s3 + $0x6c0] sm:$0xff]
    %v388 = vld [vmem:[%s3 + $0x6c8] sm:$0xff]
    %v389 = vld [vmem:[%s3 + $0x6d0] sm:$0xff]
    %v390 = vld [vmem:[%s3 + $0x6d8] sm:$0xff]
    %v391 = vld [vmem:[%s3 + $0x6e0] sm:$0xff]
    %v392 = vld [vmem:[%s3 + $0x6e8] sm:$0xff]
    %v393 = vld [vmem:[%s3 + $0x6f0] sm:$0xff]
    %v394 = vld [vmem:[%s3 + $0x6f8] sm:$0xff]
    %v395 = vld [vmem:[%s3 + $0x700] sm:$0xff]
    %v396 = vld [vmem:[%s3 + $0x708] sm:$0xff]
    %v397 = vld [vmem:[%s3 + $0x710] sm:$0xff]
    %v398 = vld [vmem:[%s3 + $0x718] sm:$0xff]
    %v399 = vld [vmem:[%s3 + $0x720] sm:$0xff]
    %v400 = vld [vmem:[%s3 + $0x728] sm:$0xff]
    %v401 = vld [vmem:[%s3 + $0x730] sm:$0xff]
    %v402 = vld [vmem:[%s3 + $0x738] sm:$0xff]
    %v403 = vld [vmem:[%s3 + $0x740] sm:$0xff]
    %v404 = vld [vmem:[%s3 + $0x748] sm:$0xff]
    %v405 = vld [vmem:[%s3 + $0x750] sm:$0xff]
    %v406 = vld [vmem:[%s3 + $0x758] sm:$0xff]
    %v407 = vld [vmem:[%s3 + $0x760] sm:$0xff]
    %v408 = vld [vmem:[%s3 + $0x768] sm:$0xff]
    %v409 = vld [vmem:[%s3 + $0x770] sm:$0xff]
    %v410 = vld [vmem:[%s3 + $0x778] sm:$0xff]
    %v411 = vld [vmem:[%s3 + $0x780] sm:$0xff]
    %v412 = vld [vmem:[%s3 + $0x788] sm:$0xff]
    %v413 = vld [vmem:[%s3 + $0x790] sm:$0xff]
    %v414 = vld [vmem:[%s3 + $0x798] sm:$0xff]
    %v415 = vld [vmem:[%s3 + $0x7a0] sm:$0xff]
    %v416 = vld [vmem:[%s3 + $0x7a8] sm:$0xff]
    %v417 = vld [vmem:[%s3 + $0x7b0] sm:$0xff]
    %v418 = vld [vmem:[%s3 + $0x7b8] sm:$0xff]
    %v419 = vld [vmem:[%s3 + $0x7c0] sm:$0xff]
    %v420 = vld [vmem:[%s3 + $0x7c8] sm:$0xff]
    %v421 = vld [vmem:[%s3 + $0x7d0] sm:$0xff]
    %v422 = vld [vmem:[%s3 + $0x7d8] sm:$0xff]
    %v423 = vld [vmem:[%s3 + $0x7e0] sm:$0xff]
    %v424 = vld [vmem:[%s3 + $0x7e8] sm:$0xff]
    %v425 = vld [vmem:[%s3 + $0x7f0] sm:$0xff]
    %v426 = vld [vmem:[%s3 + $0x7f8] sm:$0xff]
    %v427 = vld [vmem:[%s3 + $0x800] sm:$0xff]
    %v428 = vld [vmem:[%s3 + $0x808] sm:$0xff]
    %v429 = vld [vmem:[%s3 + $0x810] sm:$0xff]
    %v430 = vld [vmem:[%s3 + $0x818] sm:$0xff]
    %v431 = vld [vmem:[%s3 + $0x820] sm:$0xff]
    %v432 = vld [vmem:[%s3 + $0x828] sm:$0xff]
    %v433 = vld [vmem:[%s3 + $0x830] sm:$0xff]
    %v434 = vld [vmem:[%s3 + $0x838] sm:$0xff]
    %v435 = vld [vmem:[%s3 + $0x840] sm:$0xff]
    %v436 = vld [vmem:[%s3 + $0x848] sm:$0xff]
    %v437 = vld [vmem:[%s3 + $0x850] sm:$0xff]
    %v438 = vld [vmem:[%s3 + $0x858] sm:$0xff]
    %v439 = vld [vmem:[%s3 + $0x860] sm:$0xff]
    %v440 = vld [vmem:[%s3 + $0x868] sm:$0xff]
    %v441 = vld [vmem:[%s3 + $0x870] sm:$0xff]
    %v442 = vld [vmem:[%s3 + $0x878] sm:$0xff]
    %v443 = vld [vmem:[%s3 + $0x880] sm:$0xff]
    %v444 = vld [vmem:[%s3 + $0x888] sm:$0xff]
    %v445 = vld [vmem:[%s3 + $0x890] sm:$0xff]
    %v446 = vld [vmem:[%s3 + $0x898] sm:$0xff]
    %v447 = vld [vmem:[%s3 + $0x8a0] sm:$0xff]
    %v448 = vld [vmem:[%s3 + $0x8a8] sm:$0xff]
    %v449 = vld [vmem:[%s3 + $0x8b0] sm:$0xff]
    %v450 = vld [vmem:[%s3 + $0x8b8] sm:$0xff]
    %v451 = vld [vmem:[%s3 + $0x8c0] sm:$0xff]
    %v452 = vld [vmem:[%s3 + $0x8c8] sm:$0xff]
    %v453 = vld [vmem:[%s3 + $0x8d0] sm:$0xff]
    %v454 = vld [vmem:[%s3 + $0x8d8] sm:$0xff]
    %v455 = vld [vmem:[%s3 + $0x8e0] sm:$0xff]
    %v456 = vld [vmem:[%s3 + $0x8e8] sm:$0xff]
    %v457 = vld [vmem:[%s3 + $0x8f0] sm:$0xff]
    %v458 = vld [vmem:[%s3 + $0x8f8] sm:$0xff]
    %v459 = vld [vmem:[%s3 + $0x900] sm:$0xff]
    %v460 = vld [vmem:[%s3 + $0x908] sm:$0xff]
    %v461 = vld [vmem:[%s3 + $0x910] sm:$0xff]
    %v462 = vld [vmem:[%s3 + $0x918] sm:$0xff]
    %v463 = vld [vmem:[%s3 + $0x920] sm:$0xff]
    %v464 = vld [vmem:[%s3 + $0x928] sm:$0xff]
    %v465 = vld [vmem:[%s4] sm:$0x7]
    %v467 = vlaneseq
    %v468 = vshrl.u32 %v467, 7
    %v469 = vsub.s32 0, %v468
    %v470 = vrot.slane %v465, %v469
    %v471 = vlaneseq
    %v472 = vshrl.u32 %v471, 7
    %v473 = vsub.s32 1, %v472
    %v474 = vrot.slane %v465, %v473
    %v475 = vlaneseq
    %v476 = vshrl.u32 %v475, 7
    %v477 = vsub.s32 2, %v476
    %v478 = vrot.slane %v465, %v477
    %v484 = vcombine.high %v169, %v169
    %v486 = vunpack.c.l.s4 1983009808
    %v487 = vunpack.c.0.s8 %v486
    %v488 = vlaneseq
    %v489 = vshrl.u32 %v488, 7
    %v490 = vsub.s32 %v487, %v489
    %v491 = vrot.slane %v169, %v490
    %v493 = vunpack.c.l.s4 1983009808
    %v494 = vunpack.c.0.s8 %v493
    %v495 = vlaneseq
    %v496 = vshrl.u32 %v495, 7
    %v497 = vsub.s32 %v494, %v496
    %v498 = vrot.slane %v484, %v497
    %v499 = vcombine.high %v491, %v491
    %v500 = vcombine.high %v498, %v498
    %v501 = vcombine.high %v170, %v170
    %v503 = vunpack.c.l.s4 1983009808
    %v504 = vunpack.c.0.s8 %v503
    %v505 = vlaneseq
    %v506 = vshrl.u32 %v505, 7
    %v507 = vsub.s32 %v504, %v506
    %v508 = vrot.slane %v170, %v507
    %v510 = vunpack.c.l.s4 1983009808
    %v511 = vunpack.c.0.s8 %v510
    %v512 = vlaneseq
    %v513 = vshrl.u32 %v512, 7
    %v514 = vsub.s32 %v511, %v513
    %v515 = vrot.slane %v501, %v514
    %v516 = vcombine.high %v508, %v508
    %vm523 = vcmask 130048
    %v524 = vsel %vm523, %v515, 0
    %526 = vmatprep.subr.mxu0 %v172
    %527 = vmatpush1.msra.mxu0 %v171
    %528 = vmatprep.subr.mxu0 %v175
    %529 = vmatpush1.msra.mxu0 %v174
    %530 = vmatprep.subr.mxu0 %v178
    %531 = vmatpush1.msra.mxu0 %v177
    %532 = vmatprep.subr.mxu0 %v181
    %533 = vmatpush1.msra.mxu0 %v180
    %534 = vmatprep.subr.mxu0 %v184
    %535 = vmatpush1.msra.mxu0 %v183
    %536 = vmatprep.subr.mxu0 %v187
    %537 = vmatpush1.msra.mxu0 %v186
    %538 = vmatprep.subr.mxu0 %v190
    %539 = vmatpush1.msra.mxu0 %v189
    %540 = vmatprep.subr.mxu0 %v193
    %541 = vmatpush1.msra.mxu0 %v192
    %542 = vmatprep.subr.mxu0 %v196
    %543 = vmatpush1.msra.mxu0 %v195
    %544 = vmatprep.subr.mxu0 %v199
    %545 = vmatpush1.msra.mxu0 %v198
    %546 = vmatprep.subr.mxu0 %v202
    %547 = vmatpush1.msra.mxu0 %v201
    %548 = vmatprep.subr.mxu0 %v205
    %549 = vmatpush1.msra.mxu0 %v204
    %550 = vmatprep.subr.mxu0 %v208
    %551 = vmatpush1.msra.mxu0 %v207
    %552 = vmatprep.subr.mxu0 %v211
    %553 = vmatpush1.msra.mxu0 %v210
    %554 = vmatprep.subr.mxu0 %v214
    %555 = vmatpush1.msra.mxu0 %v213
    %556 = vmatprep.subr.mxu0 %v217
    %557 = vmatpush1.msra.mxu0 %v216
    %558 = vmatprep.subr.mxu0 %v220
    %559 = vmatpush1.msra.mxu0 %v219
    %560 = vmatprep.subr.mxu0 %v223
    %561 = vmatpush1.msra.mxu0 %v222
    %562 = vmatprep.subr.mxu0 %v226
    %563 = vmatpush1.msra.mxu0 %v225
    %564 = vmatprep.subr.mxu0 %v229
    %565 = vmatpush1.msra.mxu0 %v228
    %566 = vmatprep.subr.mxu0 %v232
    %567 = vmatpush1.msra.mxu0 %v231
    %568 = vmatprep.subr.mxu0 %v235
    %569 = vmatpush1.msra.mxu0 %v234
    %570 = vmatprep.subr.mxu0 %v238
    %571 = vmatpush1.msra.mxu0 %v237
    %572 = vmatprep.subr.mxu0 %v241
    %573 = vmatpush1.msra.mxu0 %v240
    %574 = vmatprep.subr.mxu0 %v244
    %575 = vmatpush1.msra.mxu0 %v243
    %576 = vmatprep.subr.mxu0 %v247
    %577 = vmatpush1.msra.mxu0 %v246
    %578 = vmatprep.subr.mxu0 %v250
    %579 = vmatpush1.msra.mxu0 %v249
    %580 = vmatprep.subr.mxu0 %v253
    %581 = vmatpush1.msra.mxu0 %v252
    %582 = vmatprep.subr.mxu0 %v256
    %583 = vmatpush1.msra.mxu0 %v255
    %584 = vmatprep.subr.mxu0 %v259
    %585 = vmatpush1.msra.mxu0 %v258
    %586 = vmatprep.subr.mxu0 %v262
    %587 = vmatpush1.msra.mxu0 %v261
    %588 = vmatprep.subr.mxu0 %v265
    %589 = vmatpush1.msra.mxu0 %v264
    %590 = vmatprep.mubr.f32.mxu0 %v499
    %591 = vmatmul.mubr.f32.gmra.mrb[0].mxu0 %v491
    %v592 = vpop.f32.mrb[0].mxu0
    %v593 = vadd.f32 %v470, %v592
    %v594 = vpop.f32.mrb[0].mxu0
    %v595 = vadd.f32 %v474, %v594
    %596 = vdwg.mxu0
    %597 = vmatprep.subr.mxu0 %v268
    %598 = vmatpush1.msra.mxu0 %v267
    %599 = vmatprep.subr.mxu0 %v271
    %600 = vmatpush1.msra.mxu0 %v270
    %601 = vmatprep.subr.mxu0 %v274
    %602 = vmatpush1.msra.mxu0 %v273
    %603 = vmatprep.subr.mxu0 %v277
    %604 = vmatpush1.msra.mxu0 %v276
    %605 = vmatprep.subr.mxu0 %v280
    %606 = vmatpush1.msra.mxu0 %v279
    %607 = vmatprep.subr.mxu0 %v283
    %608 = vmatpush1.msra.mxu0 %v282
    %609 = vmatprep.subr.mxu0 %v286
    %610 = vmatpush1.msra.mxu0 %v285
    %611 = vmatprep.subr.mxu0 %v289
    %612 = vmatpush1.msra.mxu0 %v288
    %613 = vmatprep.subr.mxu0 %v292
    %614 = vmatpush1.msra.mxu0 %v291
    %615 = vmatprep.subr.mxu0 %v295
    %616 = vmatpush1.msra.mxu0 %v294
    %617 = vmatprep.subr.mxu0 %v298
    %618 = vmatpush1.msra.mxu0 %v297
    %619 = vmatprep.subr.mxu0 %v301
    %620 = vmatpush1.msra.mxu0 %v300
    %621 = vmatprep.subr.mxu0 %v304
    %622 = vmatpush1.msra.mxu0 %v303
    %623 = vmatprep.subr.mxu0 %v307
    %624 = vmatpush1.msra.mxu0 %v306
    %625 = vmatprep.subr.mxu0 %v310
    %626 = vmatpush1.msra.mxu0 %v309
    %627 = vmatprep.subr.mxu0 %v313
    %628 = vmatpush1.msra.mxu0 %v312
    %629 = vmatprep.subr.mxu0 %v316
    %630 = vmatpush1.msra.mxu0 %v315
    %631 = vmatprep.subr.mxu0 %v319
    %632 = vmatpush1.msra.mxu0 %v318
    %633 = vmatprep.subr.mxu0 %v322
    %634 = vmatpush1.msra.mxu0 %v321
    %635 = vmatprep.subr.mxu0 %v325
    %636 = vmatpush1.msra.mxu0 %v324
    %637 = vmatprep.subr.mxu0 %v328
    %638 = vmatpush1.msra.mxu0 %v327
    %639 = vmatprep.subr.mxu0 %v331
    %640 = vmatpush1.msra.mxu0 %v330
    %641 = vmatprep.subr.mxu0 %v334
    %642 = vmatpush1.msra.mxu0 %v333
    %643 = vmatprep.subr.mxu0 %v337
    %644 = vmatpush1.msra.mxu0 %v336
    %645 = vmatprep.subr.mxu0 %v340
    %646 = vmatpush1.msra.mxu0 %v339
    %647 = vmatprep.subr.mxu0 %v343
    %648 = vmatpush1.msra.mxu0 %v342
    %649 = vmatprep.subr.mxu0 %v346
    %650 = vmatpush1.msra.mxu0 %v345
    %651 = vmatprep.subr.mxu0 %v349
    %652 = vmatpush1.msra.mxu0 %v348
    %653 = vmatprep.subr.mxu0 %v352
    %654 = vmatpush1.msra.mxu0 %v351
    %655 = vmatprep.subr.mxu0 %v355
    %656 = vmatpush1.msra.mxu0 %v354
    %657 = vmatprep.subr.mxu0 %v358
    %658 = vmatpush1.msra.mxu0 %v357
    %659 = vmatprep.subr.mxu0 %v361
    %660 = vmatpush1.msra.mxu0 %v360
    %661 = vmatprep.mubr.f32.mxu0 %v500
    %662 = vmatmul.mubr.f32.gmra.mrb[0].mxu0 %v498
    %v663 = vpop.f32.mrb[0].mxu0
    %v664 = vadd.f32 %v593, %v663
    %v665 = vpop.f32.mrb[0].mxu0
    %v666 = vadd.f32 %v595, %v665
    %667 = vdwg.mxu0
    %668 = vmatprep.subr.mxu0 %v364
    %669 = vmatpush1.msra.mxu0 %v363
    %670 = vmatprep.subr.mxu0 %v367
    %671 = vmatpush1.msra.mxu0 %v366
    %672 = vmatprep.subr.mxu0 %v370
    %673 = vmatpush1.msra.mxu0 %v369
    %674 = vmatprep.subr.mxu0 %v373
    %675 = vmatpush1.msra.mxu0 %v372
    %676 = vmatprep.subr.mxu0 %v376
    %677 = vmatpush1.msra.mxu0 %v375
    %678 = vmatprep.subr.mxu0 %v379
    %679 = vmatpush1.msra.mxu0 %v378
    %680 = vmatprep.subr.mxu0 %v382
    %681 = vmatpush1.msra.mxu0 %v381
    %682 = vmatprep.subr.mxu0 %v385
    %683 = vmatpush1.msra.mxu0 %v384
    %684 = vmatprep.subr.mxu0 %v388
    %685 = vmatpush1.msra.mxu0 %v387
    %686 = vmatprep.subr.mxu0 %v391
    %687 = vmatpush1.msra.mxu0 %v390
    %688 = vmatprep.subr.mxu0 %v394
    %689 = vmatpush1.msra.mxu0 %v393
    %690 = vmatprep.subr.mxu0 %v397
    %691 = vmatpush1.msra.mxu0 %v396
    %692 = vmatprep.subr.mxu0 %v400
    %693 = vmatpush1.msra.mxu0 %v399
    %694 = vmatprep.subr.mxu0 %v403
    %695 = vmatpush1.msra.mxu0 %v402
    %696 = vmatprep.subr.mxu0 %v406
    %697 = vmatpush1.msra.mxu0 %v405
    %698 = vmatprep.subr.mxu0 %v409
    %699 = vmatpush1.msra.mxu0 %v408
    %700 = vmatprep.subr.mxu0 %v412
    %701 = vmatpush1.msra.mxu0 %v411
    %702 = vmatprep.subr.mxu0 %v415
    %703 = vmatpush1.msra.mxu0 %v414
    %704 = vmatprep.subr.mxu0 %v418
    %705 = vmatpush1.msra.mxu0 %v417
    %706 = vmatprep.subr.mxu0 %v421
    %707 = vmatpush1.msra.mxu0 %v420
    %708 = vmatprep.subr.mxu0 %v424
    %709 = vmatpush1.msra.mxu0 %v423
    %710 = vmatprep.subr.mxu0 %v427
    %711 = vmatpush1.msra.mxu0 %v426
    %712 = vmatprep.subr.mxu0 %v430
    %713 = vmatpush1.msra.mxu0 %v429
    %714 = vmatprep.subr.mxu0 %v433
    %715 = vmatpush1.msra.mxu0 %v432
    %716 = vmatprep.subr.mxu0 %v436
    %717 = vmatpush1.msra.mxu0 %v435
    %718 = vmatprep.subr.mxu0 %v439
    %719 = vmatpush1.msra.mxu0 %v438
    %720 = vmatprep.subr.mxu0 %v442
    %721 = vmatpush1.msra.mxu0 %v441
    %722 = vmatprep.subr.mxu0 %v445
    %723 = vmatpush1.msra.mxu0 %v444
    %724 = vmatprep.subr.mxu0 %v448
    %725 = vmatpush1.msra.mxu0 %v447
    %726 = vmatprep.subr.mxu0 %v451
    %727 = vmatpush1.msra.mxu0 %v450
    %728 = vmatprep.subr.mxu0 %v454
    %729 = vmatpush1.msra.mxu0 %v453
    %730 = vmatprep.subr.mxu0 %v457
    %731 = vmatpush1.msra.mxu0 %v456
    %732 = vmatprep.mubr.f32.mxu0 %v516
    %733 = vmatmul.mubr.f32.gmra.mrb[0].mxu0 %v508
    %v734 = vpop.f32.mrb[0].mxu0
    %v735 = vadd.f32 %v664, %v734
    %v736 = vpop.f32.mrb[0].mxu0
    %v737 = vadd.f32 %v666, %v736
    %738 = vdwg.mxu0
    %739 = vmatprep.subr.mxu0 %v460
    %740 = vmatpush1.msra.mxu0 %v459
    %741 = vmatprep.subr.mxu0 %v463
    %742 = vmatpush1.msra.mxu0 %v462
    %743 = vmatprep.subr.mxu0 0.0
    %744 = vmatpush1.msra.mxu0 0.0
    %745 = vmatprep.subr.mxu0 0.0
    %746 = vmatpush1.msra.mxu0 0.0
    %747 = vmatprep.subr.mxu0 0.0
    %748 = vmatpush1.msra.mxu0 0.0
    %749 = vmatprep.subr.mxu0 0.0
    %750 = vmatpush1.msra.mxu0 0.0
    %751 = vmatprep.subr.mxu0 0.0
    %752 = vmatpush1.msra.mxu0 0.0
    %753 = vmatprep.subr.mxu0 0.0
    %754 = vmatpush1.msra.mxu0 0.0
    %755 = vmatprep.subr.mxu0 0.0
    %756 = vmatpush1.msra.mxu0 0.0
    %757 = vmatprep.subr.mxu0 0.0
    %758 = vmatpush1.msra.mxu0 0.0
    %759 = vmatprep.subr.mxu0 0.0
    %760 = vmatpush1.msra.mxu0 0.0
    %761 = vmatprep.subr.mxu0 0.0
    %762 = vmatpush1.msra.mxu0 0.0
    %763 = vmatprep.subr.mxu0 0.0
    %764 = vmatpush1.msra.mxu0 0.0
    %765 = vmatprep.subr.mxu0 0.0
    %766 = vmatpush1.msra.mxu0 0.0
    %767 = vmatprep.subr.mxu0 0.0
    %768 = vmatpush1.msra.mxu0 0.0
    %769 = vmatprep.subr.mxu0 0.0
    %770 = vmatpush1.msra.mxu0 0.0
    %771 = vmatprep.subr.mxu0 0.0
    %772 = vmatpush1.msra.mxu0 0.0
    %773 = vmatprep.subr.mxu0 0.0
    %774 = vmatpush1.msra.mxu0 0.0
    %775 = vmatprep.subr.mxu0 0.0
    %776 = vmatpush1.msra.mxu0 0.0
    %777 = vmatprep.subr.mxu0 0.0
    %778 = vmatpush1.msra.mxu0 0.0
    %779 = vmatprep.subr.mxu0 0.0
    %780 = vmatpush1.msra.mxu0 0.0
    %781 = vmatprep.subr.mxu0 0.0
    %782 = vmatpush1.msra.mxu0 0.0
    %783 = vmatprep.subr.mxu0 0.0
    %784 = vmatpush1.msra.mxu0 0.0
    %785 = vmatprep.subr.mxu0 0.0
    %786 = vmatpush1.msra.mxu0 0.0
    %787 = vmatprep.subr.mxu0 0.0
    %788 = vmatpush1.msra.mxu0 0.0
    %789 = vmatprep.subr.mxu0 0.0
    %790 = vmatpush1.msra.mxu0 0.0
    %791 = vmatprep.subr.mxu0 0.0
    %792 = vmatpush1.msra.mxu0 0.0
    %793 = vmatprep.subr.mxu0 0.0
    %794 = vmatpush1.msra.mxu0 0.0
    %795 = vmatprep.subr.mxu0 0.0
    %796 = vmatpush1.msra.mxu0 0.0
    %797 = vmatprep.subr.mxu0 0.0
    %798 = vmatpush1.msra.mxu0 0.0
    %799 = vmatprep.subr.mxu0 0.0
    %800 = vmatpush1.msra.mxu0 0.0
    %801 = vmatprep.subr.mxu0 0.0
    %802 = vmatpush1.msra.mxu0 0.0
    %803 = vmatprep.mubr.f32.mxu0 0.0
    %804 = vmatmul.mubr.f32.gmra.mrb[0].mxu0 %v524
    %v805 = vpop.f32.mrb[0].mxu0
    %v806 = vadd.f32 %v735, %v805
    %v807 = vpop.f32.mrb[0].mxu0
    %v808 = vadd.f32 %v737, %v807
    %809 = vdwg.mxu0
    %810 = vmatprep.subr.mxu0 0.0
    %811 = vmatpush1.msra.mxu0 %v173
    %812 = vmatprep.subr.mxu0 0.0
    %813 = vmatpush1.msra.mxu0 %v176
    %814 = vmatprep.subr.mxu0 0.0
    %815 = vmatpush1.msra.mxu0 %v179
    %816 = vmatprep.subr.mxu0 0.0
    %817 = vmatpush1.msra.mxu0 %v182
    %818 = vmatprep.subr.mxu0 0.0
    %819 = vmatpush1.msra.mxu0 %v185
    %820 = vmatprep.subr.mxu0 0.0
    %821 = vmatpush1.msra.mxu0 %v188
    %822 = vmatprep.subr.mxu0 0.0
    %823 = vmatpush1.msra.mxu0 %v191
    %824 = vmatprep.subr.mxu0 0.0
    %825 = vmatpush1.msra.mxu0 %v194
    %826 = vmatprep.subr.mxu0 0.0
    %827 = vmatpush1.msra.mxu0 %v197
    %828 = vmatprep.subr.mxu0 0.0
    %829 = vmatpush1.msra.mxu0 %v200
    %830 = vmatprep.subr.mxu0 0.0
    %831 = vmatpush1.msra.mxu0 %v203
    %832 = vmatprep.subr.mxu0 0.0
    %833 = vmatpush1.msra.mxu0 %v206
    %834 = vmatprep.subr.mxu0 0.0
    %835 = vmatpush1.msra.mxu0 %v209
    %836 = vmatprep.subr.mxu0 0.0
    %837 = vmatpush1.msra.mxu0 %v212
    %838 = vmatprep.subr.mxu0 0.0
    %839 = vmatpush1.msra.mxu0 %v215
    %840 = vmatprep.subr.mxu0 0.0
    %841 = vmatpush1.msra.mxu0 %v218
    %842 = vmatprep.subr.mxu0 0.0
    %843 = vmatpush1.msra.mxu0 %v221
    %844 = vmatprep.subr.mxu0 0.0
    %845 = vmatpush1.msra.mxu0 %v224
    %846 = vmatprep.subr.mxu0 0.0
    %847 = vmatpush1.msra.mxu0 %v227
    %848 = vmatprep.subr.mxu0 0.0
    %849 = vmatpush1.msra.mxu0 %v230
    %850 = vmatprep.subr.mxu0 0.0
    %851 = vmatpush1.msra.mxu0 %v233
    %852 = vmatprep.subr.mxu0 0.0
    %853 = vmatpush1.msra.mxu0 %v236
    %854 = vmatprep.subr.mxu0 0.0
    %855 = vmatpush1.msra.mxu0 %v239
    %856 = vmatprep.subr.mxu0 0.0
    %857 = vmatpush1.msra.mxu0 %v242
    %858 = vmatprep.subr.mxu0 0.0
    %859 = vmatpush1.msra.mxu0 %v245
    %860 = vmatprep.subr.mxu0 0.0
    %861 = vmatpush1.msra.mxu0 %v248
    %862 = vmatprep.subr.mxu0 0.0
    %863 = vmatpush1.msra.mxu0 %v251
    %864 = vmatprep.subr.mxu0 0.0
    %865 = vmatpush1.msra.mxu0 %v254
    %866 = vmatprep.subr.mxu0 0.0
    %867 = vmatpush1.msra.mxu0 %v257
    %868 = vmatprep.subr.mxu0 0.0
    %869 = vmatpush1.msra.mxu0 %v260
    %870 = vmatprep.subr.mxu0 0.0
    %871 = vmatpush1.msra.mxu0 %v263
    %872 = vmatprep.subr.mxu0 0.0
    %873 = vmatpush1.msra.mxu0 %v266
    %874 = vmatprep.mubr.f32.mxu0 %v499
    %875 = vmatmul.mubr.f32.gmra.mrb[0].mxu0 %v491
    %v876 = vpop.f32.mrb[0].mxu0
    %v877 = vadd.f32 %v478, %v876
    %v878 = vpop.f32.mrb[0].mxu0
    %879 = vdwg.mxu0
    %880 = vmatprep.subr.mxu0 0.0
    %881 = vmatpush1.msra.mxu0 %v269
    %882 = vmatprep.subr.mxu0 0.0
    %883 = vmatpush1.msra.mxu0 %v272
    %884 = vmatprep.subr.mxu0 0.0
    %885 = vmatpush1.msra.mxu0 %v275
    %886 = vmatprep.subr.mxu0 0.0
    %887 = vmatpush1.msra.mxu0 %v278
    %888 = vmatprep.subr.mxu0 0.0
    %889 = vmatpush1.msra.mxu0 %v281
    %890 = vmatprep.subr.mxu0 0.0
    %891 = vmatpush1.msra.mxu0 %v284
    %892 = vmatprep.subr.mxu0 0.0
    %893 = vmatpush1.msra.mxu0 %v287
    %894 = vmatprep.subr.mxu0 0.0
    %895 = vmatpush1.msra.mxu0 %v290
    %896 = vmatprep.subr.mxu0 0.0
    %897 = vmatpush1.msra.mxu0 %v293
    %898 = vmatprep.subr.mxu0 0.0
    %899 = vmatpush1.msra.mxu0 %v296
    %900 = vmatprep.subr.mxu0 0.0
    %901 = vmatpush1.msra.mxu0 %v299
    %902 = vmatprep.subr.mxu0 0.0
    %903 = vmatpush1.msra.mxu0 %v302
    %904 = vmatprep.subr.mxu0 0.0
    %905 = vmatpush1.msra.mxu0 %v305
    %906 = vmatprep.subr.mxu0 0.0
    %907 = vmatpush1.msra.mxu0 %v308
    %908 = vmatprep.subr.mxu0 0.0
    %909 = vmatpush1.msra.mxu0 %v311
    %910 = vmatprep.subr.mxu0 0.0
    %911 = vmatpush1.msra.mxu0 %v314
    %912 = vmatprep.subr.mxu0 0.0
    %913 = vmatpush1.msra.mxu0 %v317
    %914 = vmatprep.subr.mxu0 0.0
    %915 = vmatpush1.msra.mxu0 %v320
    %916 = vmatprep.subr.mxu0 0.0
    %917 = vmatpush1.msra.mxu0 %v323
    %918 = vmatprep.subr.mxu0 0.0
    %919 = vmatpush1.msra.mxu0 %v326
    %920 = vmatprep.subr.mxu0 0.0
    %921 = vmatpush1.msra.mxu0 %v329
    %922 = vmatprep.subr.mxu0 0.0
    %923 = vmatpush1.msra.mxu0 %v332
    %924 = vmatprep.subr.mxu0 0.0
    %925 = vmatpush1.msra.mxu0 %v335
    %926 = vmatprep.subr.mxu0 0.0
    %927 = vmatpush1.msra.mxu0 %v338
    %928 = vmatprep.subr.mxu0 0.0
    %929 = vmatpush1.msra.mxu0 %v341
    %930 = vmatprep.subr.mxu0 0.0
    %931 = vmatpush1.msra.mxu0 %v344
    %932 = vmatprep.subr.mxu0 0.0
    %933 = vmatpush1.msra.mxu0 %v347
    %934 = vmatprep.subr.mxu0 0.0
    %935 = vmatpush1.msra.mxu0 %v350
    %936 = vmatprep.subr.mxu0 0.0
    %937 = vmatpush1.msra.mxu0 %v353
    %938 = vmatprep.subr.mxu0 0.0
    %939 = vmatpush1.msra.mxu0 %v356
    %940 = vmatprep.subr.mxu0 0.0
    %941 = vmatpush1.msra.mxu0 %v359
    %942 = vmatprep.subr.mxu0 0.0
    %943 = vmatpush1.msra.mxu0 %v362
    %944 = vmatprep.mubr.f32.mxu0 %v500
    %945 = vmatmul.mubr.f32.gmra.mrb[0].mxu0 %v498
    %v946 = vpop.f32.mrb[0].mxu0
    %v947 = vadd.f32 %v877, %v946
    %v948 = vpop.f32.mrb[0].mxu0
    %949 = vdwg.mxu0
    %950 = vmatprep.subr.mxu0 0.0
    %951 = vmatpush1.msra.mxu0 %v365
    %952 = vmatprep.subr.mxu0 0.0
    %953 = vmatpush1.msra.mxu0 %v368
    %954 = vmatprep.subr.mxu0 0.0
    %955 = vmatpush1.msra.mxu0 %v371
    %956 = vmatprep.subr.mxu0 0.0
    %957 = vmatpush1.msra.mxu0 %v374
    %958 = vmatprep.subr.mxu0 0.0
    %959 = vmatpush1.msra.mxu0 %v377
    %960 = vmatprep.subr.mxu0 0.0
    %961 = vmatpush1.msra.mxu0 %v380
    %962 = vmatprep.subr.mxu0 0.0
    %963 = vmatpush1.msra.mxu0 %v383
    %964 = vmatprep.subr.mxu0 0.0
    %965 = vmatpush1.msra.mxu0 %v386
    %966 = vmatprep.subr.mxu0 0.0
    %967 = vmatpush1.msra.mxu0 %v389
    %968 = vmatprep.subr.mxu0 0.0
    %969 = vmatpush1.msra.mxu0 %v392
    %970 = vmatprep.subr.mxu0 0.0
    %971 = vmatpush1.msra.mxu0 %v395
    %972 = vmatprep.subr.mxu0 0.0
    %973 = vmatpush1.msra.mxu0 %v398
    %974 = vmatprep.subr.mxu0 0.0
    %975 = vmatpush1.msra.mxu0 %v401
    %976 = vmatprep.subr.mxu0 0.0
    %977 = vmatpush1.msra.mxu0 %v404
    %978 = vmatprep.subr.mxu0 0.0
    %979 = vmatpush1.msra.mxu0 %v407
    %980 = vmatprep.subr.mxu0 0.0
    %981 = vmatpush1.msra.mxu0 %v410
    %982 = vmatprep.subr.mxu0 0.0
    %983 = vmatpush1.msra.mxu0 %v413
    %984 = vmatprep.subr.mxu0 0.0
    %985 = vmatpush1.msra.mxu0 %v416
    %986 = vmatprep.subr.mxu0 0.0
    %987 = vmatpush1.msra.mxu0 %v419
    %988 = vmatprep.subr.mxu0 0.0
    %989 = vmatpush1.msra.mxu0 %v422
    %990 = vmatprep.subr.mxu0 0.0
    %991 = vmatpush1.msra.mxu0 %v425
    %992 = vmatprep.subr.mxu0 0.0
    %993 = vmatpush1.msra.mxu0 %v428
    %994 = vmatprep.subr.mxu0 0.0
    %995 = vmatpush1.msra.mxu0 %v431
    %996 = vmatprep.subr.mxu0 0.0
    %997 = vmatpush1.msra.mxu0 %v434
    %998 = vmatprep.subr.mxu0 0.0
    %999 = vmatpush1.msra.mxu0 %v437
    %1000 = vmatprep.subr.mxu0 0.0
    %1001 = vmatpush1.msra.mxu0 %v440
    %1002 = vmatprep.subr.mxu0 0.0
    %1003 = vmatpush1.msra.mxu0 %v443
    %1004 = vmatprep.subr.mxu0 0.0
    %1005 = vmatpush1.msra.mxu0 %v446
    %1006 = vmatprep.subr.mxu0 0.0
    %1007 = vmatpush1.msra.mxu0 %v449
    %1008 = vmatprep.subr.mxu0 0.0
    %1009 = vmatpush1.msra.mxu0 %v452
    %1010 = vmatprep.subr.mxu0 0.0
    %1011 = vmatpush1.msra.mxu0 %v455
    %1012 = vmatprep.subr.mxu0 0.0
    %1013 = vmatpush1.msra.mxu0 %v458
    %1014 = vmatprep.mubr.f32.mxu0 %v516
    %1015 = vmatmul.mubr.f32.gmra.mrb[0].mxu0 %v508
    %v1016 = vpop.f32.mrb[0].mxu0
    %v1017 = vadd.f32 %v947, %v1016
    %v1018 = vpop.f32.mrb[0].mxu0
    %1019 = vdwg.mxu0
    %1020 = vmatprep.subr.mxu0 0.0
    %1021 = vmatpush1.msra.mxu0 %v461
    %1022 = vmatprep.subr.mxu0 0.0
    %1023 = vmatpush1.msra.mxu0 %v464
    %1024 = vmatprep.subr.mxu0 0.0
    %1025 = vmatpush1.msra.mxu0 0.0
    %1026 = vmatprep.subr.mxu0 0.0
    %1027 = vmatpush1.msra.mxu0 0.0
    %1028 = vmatprep.subr.mxu0 0.0
    %1029 = vmatpush1.msra.mxu0 0.0
    %1030 = vmatprep.subr.mxu0 0.0
    %1031 = vmatpush1.msra.mxu0 0.0
    %1032 = vmatprep.subr.mxu0 0.0
    %1033 = vmatpush1.msra.mxu0 0.0
    %1034 = vmatprep.subr.mxu0 0.0
    %1035 = vmatpush1.msra.mxu0 0.0
    %1036 = vmatprep.subr.mxu0 0.0
    %1037 = vmatpush1.msra.mxu0 0.0
    %1038 = vmatprep.subr.mxu0 0.0
    %1039 = vmatpush1.msra.mxu0 0.0
    %1040 = vmatprep.subr.mxu0 0.0
    %1041 = vmatpush1.msra.mxu0 0.0
    %1042 = vmatprep.subr.mxu0 0.0
    %1043 = vmatpush1.msra.mxu0 0.0
    %1044 = vmatprep.subr.mxu0 0.0
    %1045 = vmatpush1.msra.mxu0 0.0
    %1046 = vmatprep.subr.mxu0 0.0
    %1047 = vmatpush1.msra.mxu0 0.0
    %1048 = vmatprep.subr.mxu0 0.0
    %1049 = vmatpush1.msra.mxu0 0.0
    %1050 = vmatprep.subr.mxu0 0.0
    %1051 = vmatpush1.msra.mxu0 0.0
    %1052 = vmatprep.subr.mxu0 0.0
    %1053 = vmatpush1.msra.mxu0 0.0
    %1054 = vmatprep.subr.mxu0 0.0
    %1055 = vmatpush1.msra.mxu0 0.0
    %1056 = vmatprep.subr.mxu0 0.0
    %1057 = vmatpush1.msra.mxu0 0.0
    %1058 = vmatprep.subr.mxu0 0.0
    %1059 = vmatpush1.msra.mxu0 0.0
    %1060 = vmatprep.subr.mxu0 0.0
    %1061 = vmatpush1.msra.mxu0 0.0
    %1062 = vmatprep.subr.mxu0 0.0
    %1063 = vmatpush1.msra.mxu0 0.0
    %1064 = vmatprep.subr.mxu0 0.0
    %1065 = vmatpush1.msra.mxu0 0.0
    %1066 = vmatprep.subr.mxu0 0.0
    %1067 = vmatpush1.msra.mxu0 0.0
    %1068 = vmatprep.subr.mxu0 0.0
    %1069 = vmatpush1.msra.mxu0 0.0
    %1070 = vmatprep.subr.mxu0 0.0
    %1071 = vmatpush1.msra.mxu0 0.0
    %1072 = vmatprep.subr.mxu0 0.0
    %1073 = vmatpush1.msra.mxu0 0.0
    %1074 = vmatprep.subr.mxu0 0.0
    %1075 = vmatpush1.msra.mxu0 0.0
    %1076 = vmatprep.subr.mxu0 0.0
    %1077 = vmatpush1.msra.mxu0 0.0
    %1078 = vmatprep.subr.mxu0 0.0
    %1079 = vmatpush1.msra.mxu0 0.0
    %1080 = vmatprep.subr.mxu0 0.0
    %1081 = vmatpush1.msra.mxu0 0.0
    %1082 = vmatprep.subr.mxu0 0.0
    %1083 = vmatpush1.msra.mxu0 0.0
    %1084 = vmatprep.mubr.f32.mxu0 0.0
    %1085 = vmatmul.mubr.f32.gmra.mrb[0].mxu0 %v524
    %v1086 = vpop.f32.mrb[0].mxu0
    %v1087 = vadd.f32 %v1017, %v1086
    %v1088 = vpop.f32.mrb[0].mxu0
    %1089 = vdwg.mxu0
    %v1090 = vmax.f32 %v806, 0.0
    %v1091 = vmax.f32 %v808, 0.0
    %v1092 = vmax.f32 %v1087, 0.0
    %v1093 = vld [vmem:[%s5] sm:$0xff]
    %v1094 = vld [vmem:[%s5 + $0x8] sm:$0xff]
    %v1095 = vld [vmem:[%s5 + $0x10] sm:$0xff]
    %v1096 = vld [vmem:[%s5 + $0x18] sm:$0xff]
    %v1097 = vld [vmem:[%s5 + $0x20] sm:$0xff]
    %v1098 = vld [vmem:[%s5 + $0x28] sm:$0xff]
    %v1099 = vld [vmem:[%s5 + $0x30] sm:$0xff]
    %v1100 = vld [vmem:[%s5 + $0x38] sm:$0xff]
    %v1101 = vld [vmem:[%s5 + $0x40] sm:$0xff]
    %v1102 = vld [vmem:[%s5 + $0x48] sm:$0xff]
    %v1103 = vld [vmem:[%s5 + $0x50] sm:$0xff]
    %v1104 = vld [vmem:[%s5 + $0x58] sm:$0xff]
    %v1105 = vld [vmem:[%s5 + $0x60] sm:$0xff]
    %v1106 = vld [vmem:[%s5 + $0x68] sm:$0xff]
    %v1107 = vld [vmem:[%s5 + $0x70] sm:$0xff]
    %v1108 = vld [vmem:[%s5 + $0x78] sm:$0xff]
    %v1109 = vld [vmem:[%s5 + $0x80] sm:$0xff]
    %v1110 = vld [vmem:[%s5 + $0x88] sm:$0xff]
    %v1111 = vld [vmem:[%s5 + $0x90] sm:$0xff]
    %v1112 = vld [vmem:[%s5 + $0x98] sm:$0xff]
    %v1113 = vld [vmem:[%s5 + $0xa0] sm:$0xff]
    %v1114 = vld [vmem:[%s5 + $0xa8] sm:$0xff]
    %v1115 = vld [vmem:[%s5 + $0xb0] sm:$0xff]
    %v1116 = vld [vmem:[%s5 + $0xb8] sm:$0xff]
    %v1117 = vld [vmem:[%s5 + $0xc0] sm:$0xff]
    %v1118 = vld [vmem:[%s5 + $0xc8] sm:$0xff]
    %v1119 = vld [vmem:[%s5 + $0xd0] sm:$0xff]
    %v1120 = vld [vmem:[%s5 + $0xd8] sm:$0xff]
    %v1121 = vld [vmem:[%s5 + $0xe0] sm:$0xff]
    %v1122 = vld [vmem:[%s5 + $0xe8] sm:$0xff]
    %v1123 = vld [vmem:[%s5 + $0xf0] sm:$0xff]
    %v1124 = vld [vmem:[%s5 + $0xf8] sm:$0xff]
    %v1125 = vld [vmem:[%s5 + $0x100] sm:$0xff]
    %v1126 = vld [vmem:[%s5 + $0x108] sm:$0xff]
    %v1127 = vld [vmem:[%s5 + $0x110] sm:$0xff]
    %v1128 = vld [vmem:[%s5 + $0x118] sm:$0xff]
    %v1129 = vld [vmem:[%s6] sm:$0x1]
    %v1131 = vlaneseq
    %v1132 = vshrl.u32 %v1131, 7
    %v1133 = vsub.s32 0, %v1132
    %v1134 = vrot.slane %v1129, %v1133
    %vm1136 = vcmask 261120
    %v1138 = vsel %vm1136, %v1092, 0
    %1140 = vmatprep.subr.mxu0 0.0
    %1141 = vmatpush1.msra.mxu0 %v1093
    %1142 = vmatprep.subr.mxu0 0.0
    %1143 = vmatpush1.msra.mxu0 %v1094
    %1144 = vmatprep.subr.mxu0 0.0
    %1145 = vmatpush1.msra.mxu0 %v1095
    %1146 = vmatprep.subr.mxu0 0.0
    %1147 = vmatpush1.msra.mxu0 %v1096
    %1148 = vmatprep.subr.mxu0 0.0
    %1149 = vmatpush1.msra.mxu0 %v1097
    %1150 = vmatprep.subr.mxu0 0.0
    %1151 = vmatpush1.msra.mxu0 %v1098
    %1152 = vmatprep.subr.mxu0 0.0
    %1153 = vmatpush1.msra.mxu0 %v1099
    %1154 = vmatprep.subr.mxu0 0.0
    %1155 = vmatpush1.msra.mxu0 %v1100
    %1156 = vmatprep.subr.mxu0 0.0
    %1157 = vmatpush1.msra.mxu0 %v1101
    %1158 = vmatprep.subr.mxu0 0.0
    %1159 = vmatpush1.msra.mxu0 %v1102
    %1160 = vmatprep.subr.mxu0 0.0
    %1161 = vmatpush1.msra.mxu0 %v1103
    %1162 = vmatprep.subr.mxu0 0.0
    %1163 = vmatpush1.msra.mxu0 %v1104
    %1164 = vmatprep.subr.mxu0 0.0
    %1165 = vmatpush1.msra.mxu0 %v1105
    %1166 = vmatprep.subr.mxu0 0.0
    %1167 = vmatpush1.msra.mxu0 %v1106
    %1168 = vmatprep.subr.mxu0 0.0
    %1169 = vmatpush1.msra.mxu0 %v1107
    %1170 = vmatprep.subr.mxu0 0.0
    %1171 = vmatpush1.msra.mxu0 %v1108
    %1172 = vmatprep.subr.mxu0 0.0
    %1173 = vmatpush1.msra.mxu0 %v1109
    %1174 = vmatprep.subr.mxu0 0.0
    %1175 = vmatpush1.msra.mxu0 %v1110
    %1176 = vmatprep.subr.mxu0 0.0
    %1177 = vmatpush1.msra.mxu0 %v1111
    %1178 = vmatprep.subr.mxu0 0.0
    %1179 = vmatpush1.msra.mxu0 %v1112
    %1180 = vmatprep.subr.mxu0 0.0
    %1181 = vmatpush1.msra.mxu0 %v1113
    %1182 = vmatprep.subr.mxu0 0.0
    %1183 = vmatpush1.msra.mxu0 %v1114
    %1184 = vmatprep.subr.mxu0 0.0
    %1185 = vmatpush1.msra.mxu0 %v1115
    %1186 = vmatprep.subr.mxu0 0.0
    %1187 = vmatpush1.msra.mxu0 %v1116
    %1188 = vmatprep.subr.mxu0 0.0
    %1189 = vmatpush1.msra.mxu0 %v1117
    %1190 = vmatprep.subr.mxu0 0.0
    %1191 = vmatpush1.msra.mxu0 %v1118
    %1192 = vmatprep.subr.mxu0 0.0
    %1193 = vmatpush1.msra.mxu0 %v1119
    %1194 = vmatprep.subr.mxu0 0.0
    %1195 = vmatpush1.msra.mxu0 %v1120
    %1196 = vmatprep.subr.mxu0 0.0
    %1197 = vmatpush1.msra.mxu0 %v1121
    %1198 = vmatprep.subr.mxu0 0.0
    %1199 = vmatpush1.msra.mxu0 %v1122
    %1200 = vmatprep.subr.mxu0 0.0
    %1201 = vmatpush1.msra.mxu0 %v1123
    %1202 = vmatprep.subr.mxu0 0.0
    %1203 = vmatpush1.msra.mxu0 %v1124
    %1204 = vmatprep.mubr.f32.mxu0 %v1091
    %1205 = vmatmul.mubr.f32.gmra.mrb[0].mxu0 %v1090
    %v1206 = vpop.f32.mrb[0].mxu0
    %v1207 = vadd.f32 %v1134, %v1206
    %v1208 = vpop.f32.mrb[0].mxu0
    %1209 = vdwg.mxu0
    %1210 = vmatprep.subr.mxu0 0.0
    %1211 = vmatpush1.msra.mxu0 %v1125
    %1212 = vmatprep.subr.mxu0 0.0
    %1213 = vmatpush1.msra.mxu0 %v1126
    %1214 = vmatprep.subr.mxu0 0.0
    %1215 = vmatpush1.msra.mxu0 %v1127
    %1216 = vmatprep.subr.mxu0 0.0
    %1217 = vmatpush1.msra.mxu0 %v1128
    %1218 = vmatprep.subr.mxu0 0.0
    %1219 = vmatpush1.msra.mxu0 0.0
    %1220 = vmatprep.subr.mxu0 0.0
    %1221 = vmatpush1.msra.mxu0 0.0
    %1222 = vmatprep.subr.mxu0 0.0
    %1223 = vmatpush1.msra.mxu0 0.0
    %1224 = vmatprep.subr.mxu0 0.0
    %1225 = vmatpush1.msra.mxu0 0.0
    %1226 = vmatprep.subr.mxu0 0.0
    %1227 = vmatpush1.msra.mxu0 0.0
    %1228 = vmatprep.subr.mxu0 0.0
    %1229 = vmatpush1.msra.mxu0 0.0
    %1230 = vmatprep.subr.mxu0 0.0
    %1231 = vmatpush1.msra.mxu0 0.0
    %1232 = vmatprep.subr.mxu0 0.0
    %1233 = vmatpush1.msra.mxu0 0.0
    %1234 = vmatprep.subr.mxu0 0.0
    %1235 = vmatpush1.msra.mxu0 0.0
    %1236 = vmatprep.subr.mxu0 0.0
    %1237 = vmatpush1.msra.mxu0 0.0
    %1238 = vmatprep.subr.mxu0 0.0
    %1239 = vmatpush1.msra.mxu0 0.0
    %1240 = vmatprep.subr.mxu0 0.0
    %1241 = vmatpush1.msra.mxu0 0.0
    %1242 = vmatprep.subr.mxu0 0.0
    %1243 = vmatpush1.msra.mxu0 0.0
    %1244 = vmatprep.subr.mxu0 0.0
    %1245 = vmatpush1.msra.mxu0 0.0
    %1246 = vmatprep.subr.mxu0 0.0
    %1247 = vmatpush1.msra.mxu0 0.0
    %1248 = vmatprep.subr.mxu0 0.0
    %1249 = vmatpush1.msra.mxu0 0.0
    %1250 = vmatprep.subr.mxu0 0.0
    %1251 = vmatpush1.msra.mxu0 0.0
    %1252 = vmatprep.subr.mxu0 0.0
    %1253 = vmatpush1.msra.mxu0 0.0
    %1254 = vmatprep.subr.mxu0 0.0
    %1255 = vmatpush1.msra.mxu0 0.0
    %1256 = vmatprep.subr.mxu0 0.0
    %1257 = vmatpush1.msra.mxu0 0.0
    %1258 = vmatprep.subr.mxu0 0.0
    %1259 = vmatpush1.msra.mxu0 0.0
    %1260 = vmatprep.subr.mxu0 0.0
    %1261 = vmatpush1.msra.mxu0 0.0
    %1262 = vmatprep.subr.mxu0 0.0
    %1263 = vmatpush1.msra.mxu0 0.0
    %1264 = vmatprep.subr.mxu0 0.0
    %1265 = vmatpush1.msra.mxu0 0.0
    %1266 = vmatprep.subr.mxu0 0.0
    %1267 = vmatpush1.msra.mxu0 0.0
    %1268 = vmatprep.subr.mxu0 0.0
    %1269 = vmatpush1.msra.mxu0 0.0
    %1270 = vmatprep.subr.mxu0 0.0
    %1271 = vmatpush1.msra.mxu0 0.0
    %1272 = vmatprep.subr.mxu0 0.0
    %1273 = vmatpush1.msra.mxu0 0.0
    %1274 = vmatprep.mubr.f32.mxu0 0.0
    %1275 = vmatmul.mubr.f32.gmra.mrb[0].mxu0 %v1138
    %v1276 = vpop.f32.mrb[0].mxu0
    %v1277 = vadd.f32 %v1207, %v1276
    %v1278 = vpop.f32.mrb[0].mxu0
    %1279 = vdwg.mxu0
    %v1280 = vmax.f32 %v1277, 0.0
    %v1281 = vld [vmem:[%s7] sm:$0xff]
    %v1282 = vld [vmem:[%s7 + $0x8] sm:$0xff]
    %v1283 = vld [vmem:[%s7 + $0x10] sm:$0xff]
    %v1284 = vld [vmem:[%s7 + $0x18] sm:$0xff]
    %v1285 = vld [vmem:[%s7 + $0x20] sm:$0xff]
    %v1286 = vld [vmem:[%s7 + $0x28] sm:$0xff]
    %v1287 = vld [vmem:[%s7 + $0x30] sm:$0xff]
    %v1288 = vld [vmem:[%s7 + $0x38] sm:$0xff]
    %v1289 = vld [vmem:[%s7 + $0x40] sm:$0xff]
    %v1290 = vld [vmem:[%s7 + $0x48] sm:$0xff]
    %v1291 = vld [vmem:[%s7 + $0x50] sm:$0xff]
    %v1292 = vld [vmem:[%s7 + $0x58] sm:$0xff]
    %v1293 = vld [vmem:[%s7 + $0x60] sm:$0xff]
    %v1294 = vld [vmem:[%s7 + $0x68] sm:$0xff]
    %v1295 = vld [vmem:[%s7 + $0x70] sm:$0xff]
    %v1296 = vld [vmem:[%s7 + $0x78] sm:$0xff]
    %v1297 = vld [vmem:[%s8] sm:$0x1]
    %v1299 = vlaneseq
    %v1300 = vshrl.u32 %v1299, 7
    %v1301 = vsub.s32 0, %v1300
    %v1302 = vrot.slane %v1297, %v1301
    %1304 = vmatprep.subr.mxu0 0.0
    %1305 = vmatpush1.msra.mxu0 %v1281
    %1306 = vmatprep.subr.mxu0 0.0
    %1307 = vmatpush1.msra.mxu0 %v1282
    %1308 = vmatprep.subr.mxu0 0.0
    %1309 = vmatpush1.msra.mxu0 %v1283
    %1310 = vmatprep.subr.mxu0 0.0
    %1311 = vmatpush1.msra.mxu0 %v1284
    %1312 = vmatprep.subr.mxu0 0.0
    %1313 = vmatpush1.msra.mxu0 %v1285
    %1314 = vmatprep.subr.mxu0 0.0
    %1315 = vmatpush1.msra.mxu0 %v1286
    %1316 = vmatprep.subr.mxu0 0.0
    %1317 = vmatpush1.msra.mxu0 %v1287
    %1318 = vmatprep.subr.mxu0 0.0
    %1319 = vmatpush1.msra.mxu0 %v1288
    %1320 = vmatprep.subr.mxu0 0.0
    %1321 = vmatpush1.msra.mxu0 %v1289
    %1322 = vmatprep.subr.mxu0 0.0
    %1323 = vmatpush1.msra.mxu0 %v1290
    %1324 = vmatprep.subr.mxu0 0.0
    %1325 = vmatpush1.msra.mxu0 %v1291
    %1326 = vmatprep.subr.mxu0 0.0
    %1327 = vmatpush1.msra.mxu0 %v1292
    %1328 = vmatprep.subr.mxu0 0.0
    %1329 = vmatpush1.msra.mxu0 %v1293
    %1330 = vmatprep.subr.mxu0 0.0
    %1331 = vmatpush1.msra.mxu0 %v1294
    %1332 = vmatprep.subr.mxu0 0.0
    %1333 = vmatpush1.msra.mxu0 %v1295
    %1334 = vmatprep.subr.mxu0 0.0
    %1335 = vmatpush1.msra.mxu0 %v1296
    %1336 = vmatprep.subr.mxu0 0.0
    %1337 = vmatpush1.msra.mxu0 0.0
    %1338 = vmatprep.subr.mxu0 0.0
    %1339 = vmatpush1.msra.mxu0 0.0
    %1340 = vmatprep.subr.mxu0 0.0
    %1341 = vmatpush1.msra.mxu0 0.0
    %1342 = vmatprep.subr.mxu0 0.0
    %1343 = vmatpush1.msra.mxu0 0.0
    %1344 = vmatprep.subr.mxu0 0.0
    %1345 = vmatpush1.msra.mxu0 0.0
    %1346 = vmatprep.subr.mxu0 0.0
    %1347 = vmatpush1.msra.mxu0 0.0
    %1348 = vmatprep.subr.mxu0 0.0
    %1349 = vmatpush1.msra.mxu0 0.0
    %1350 = vmatprep.subr.mxu0 0.0
    %1351 = vmatpush1.msra.mxu0 0.0
    %1352 = vmatprep.subr.mxu0 0.0
    %1353 = vmatpush1.msra.mxu0 0.0
    %1354 = vmatprep.subr.mxu0 0.0
    %1355 = vmatpush1.msra.mxu0 0.0
    %1356 = vmatprep.subr.mxu0 0.0
    %1357 = vmatpush1.msra.mxu0 0.0
    %1358 = vmatprep.subr.mxu0 0.0
    %1359 = vmatpush1.msra.mxu0 0.0
    %1360 = vmatprep.subr.mxu0 0.0
    %1361 = vmatpush1.msra.mxu0 0.0
    %1362 = vmatprep.subr.mxu0 0.0
    %1363 = vmatpush1.msra.mxu0 0.0
    %1364 = vmatprep.subr.mxu0 0.0
    %1365 = vmatpush1.msra.mxu0 0.0
    %1366 = vmatprep.subr.mxu0 0.0
    %1367 = vmatpush1.msra.mxu0 0.0
    %1368 = vmatprep.mubr.f32.mxu0 0.0
    %1369 = vmatmul.mubr.f32.gmra.mrb[0].mxu0 %v1280
    %v1370 = vpop.f32.mrb[0].mxu0
    %v1371 = vadd.f32 %v1302, %v1370
    %v1372 = vpop.f32.mrb[0].mxu0
    %1373 = vdwg.mxu0
    %vm1374 = vcmask 123904
    %1375 = vst.msk [vmem:[#allocation2] sm:$0x3] %vm1374, %v1371
    // Predicated region
    $region38: #{encoder_forward.3} parent=1 // pred_check
      _
    $region39: #{encoder_forward.3} parent=1 // pred_check_branch
      %1377 = sbr.rel (0) target = $region41
    $region40: #{encoder_forward.3} parent=1 // pred_region
      %s1379 = ssub.s32 32, 32
      %1380 = vsyncadd [#allocation3], %s1379
      %s1382 = sshll.u32 [#allocation2], 4
      %s1383 = int_to_ptr.vmem [resolvable:$true] %s1382
      %1385 = dma.vmem_to_hbm [thread:$0]  %s1383, 32, %s9, [#allocation3]
    $region41: #{encoder_forward.3} parent=1 // pred_fallthru
      _
    // Predicated region
    $region42: #{encoder_forward.3} parent=1 // pred_check
      _
    $region43: #{encoder_forward.3} parent=1 // pred_check_branch
      %1387 = sbr.rel (0) target = $region45
    $region44: #{encoder_forward.3} parent=1 // pred_region
      %1388 = dma.done [#allocation3], 32
    $region45: #{encoder_forward.3} parent=1 // pred_fallthru
      _
    %1389 = vsyncpa [#allocation3], 1

// kernel: encoder_forward.2
$region0: #{encoder_forward.2}
  #allocation0 [shape = 'u32[]', space=smem, size = 0x4, offset = 0x4, fixed_abs, tag = 'smem constant byte address 0x4 - core index']
  #allocation1 [shape = 'u32[144,128]{1,0:T(1,128)}', space=vmem, size = 0x12000, scoped, tag = 'internal scratch']
  %s0 = inlined_call_operand.vmem [shape: f32[2,784], index: 0, kind: input, shape index: {}]
  %s1 = inlined_call_operand.vmem [shape: f32[784,1568], index: 1, kind: input, shape index: {}]
  %s2 = inlined_call_operand.vmem [shape: f32[1,1568], index: 2, kind: input, shape index: {}]
  %s3 = inlined_call_operand.vmem [shape: f32[1568,784], index: 3, kind: input, shape index: {}]
  %s4 = inlined_call_operand.vmem [shape: f32[2,784], index: 4, kind: output, shape index: {0}]
  %s5 = inlined_call_operand.vmem [shape: f32[1,784], index: 5, kind: output, shape index: {1}]
  %s6 = inlined_call_operand.vmem [shape: f32[1,784], index: 6, kind: output, shape index: {2}]
  %7 = xla_tuple %s4, %s5, %s6
  %s8 = sld [smem:[#allocation0]]
  $region42: #{encoder_forward.2} parent=0
    _
  %s10 = ssub.s32 1, %s8
  %s11 = scalar_select 0, %s10, %s8
  // Predicated region
  $region2: #{encoder_forward.2} parent=0 // pred_check
    _
  $region3: #{encoder_forward.2} parent=0 // pred_check_branch
    %13 = sbr.rel (0) target = $region5
  $region4: #{encoder_forward.2} parent=0 // pred_region
    _
  $region5: #{encoder_forward.2} parent=0 // pred_fallthru
    _
  // Predicated region
  $region6: #{encoder_forward.2} parent=0 // pred_check
    _
  $region7: #{encoder_forward.2} parent=0 // pred_check_branch
    %15 = sbr.rel (0) target = $region9
  $region8: #{encoder_forward.2} parent=0 // pred_region
    _
  $region9: #{encoder_forward.2} parent=0 // pred_fallthru
    _
  // Predicated region
  $region10: #{encoder_forward.2} parent=0 // pred_check
    _
  $region11: #{encoder_forward.2} parent=0 // pred_check_branch
    %17 = sbr.rel (0) target = $region13
  $region12: #{encoder_forward.2} parent=0 // pred_region
    _
  $region13: #{encoder_forward.2} parent=0 // pred_fallthru
    _
  // Predicated region
  $region14: #{encoder_forward.2} parent=0 // pred_check
    _
  $region15: #{encoder_forward.2} parent=0 // pred_check_branch
    %19 = sbr.rel (0) target = $region17
  $region16: #{encoder_forward.2} parent=0 // pred_region
    _
  $region17: #{encoder_forward.2} parent=0 // pred_fallthru
    _
  %v20 = vld [vmem:[%s0] sm:$0xff]
  %v21 = vld [vmem:[%s0 + $0x8] sm:$0x3f]
  %v22 = vld [vmem:[%s1] sm:$0xff]
  %v23 = vld [vmem:[%s1 + $0x8] sm:$0xff]
  %v24 = vld [vmem:[%s1 + $0x10] sm:$0xff]
  %v25 = vld [vmem:[%s1 + $0x18] sm:$0xff]
  %v26 = vld [vmem:[%s1 + $0x20] sm:$0xff]
  %v27 = vld [vmem:[%s1 + $0x28] sm:$0xff]
  %v28 = vld [vmem:[%s1 + $0x30] sm:$0xff]
  %v29 = vld [vmem:[%s1 + $0x38] sm:$0xff]
  %v30 = vld [vmem:[%s1 + $0x40] sm:$0xff]
  %v31 = vld [vmem:[%s1 + $0x48] sm:$0xff]
  %v32 = vld [vmem:[%s1 + $0x50] sm:$0xff]
  %v33 = vld [vmem:[%s1 + $0x58] sm:$0xff]
  %v34 = vld [vmem:[%s1 + $0x60] sm:$0xff]
  %v35 = vld [vmem:[%s1 + $0x68] sm:$0xff]
  %v36 = vld [vmem:[%s1 + $0x70] sm:$0xff]
  %v37 = vld [vmem:[%s1 + $0x78] sm:$0xff]
  %v38 = vld [vmem:[%s1 + $0x80] sm:$0xff]
  %v39 = vld [vmem:[%s1 + $0x88] sm:$0xff]
  %v40 = vld [vmem:[%s1 + $0x90] sm:$0xff]
  %v41 = vld [vmem:[%s1 + $0x98] sm:$0xff]
  %v42 = vld [vmem:[%s1 + $0xa0] sm:$0xff]
  %v43 = vld [vmem:[%s1 + $0xa8] sm:$0xff]
  %v44 = vld [vmem:[%s1 + $0xb0] sm:$0xff]
  %v45 = vld [vmem:[%s1 + $0xb8] sm:$0xff]
  %v46 = vld [vmem:[%s1 + $0xc0] sm:$0xff]
  %v47 = vld [vmem:[%s1 + $0xc8] sm:$0xff]
  %v48 = vld [vmem:[%s1 + $0xd0] sm:$0xff]
  %v49 = vld [vmem:[%s1 + $0xd8] sm:$0xff]
  %v50 = vld [vmem:[%s1 + $0xe0] sm:$0xff]
  %v51 = vld [vmem:[%s1 + $0xe8] sm:$0xff]
  %v52 = vld [vmem:[%s1 + $0xf0] sm:$0xff]
  %v53 = vld [vmem:[%s1 + $0xf8] sm:$0xff]
  %v54 = vld [vmem:[%s1 + $0x100] sm:$0xff]
  %v55 = vld [vmem:[%s1 + $0x108] sm:$0xff]
  %v56 = vld [vmem:[%s1 + $0x110] sm:$0xff]
  %v57 = vld [vmem:[%s1 + $0x118] sm:$0xff]
  %v58 = vld [vmem:[%s1 + $0x120] sm:$0xff]
  %v59 = vld [vmem:[%s1 + $0x128] sm:$0xff]
  %v60 = vld [vmem:[%s1 + $0x130] sm:$0xff]
  %v61 = vld [vmem:[%s1 + $0x138] sm:$0xff]
  %v62 = vld [vmem:[%s1 + $0x140] sm:$0xff]
  %v63 = vld [vmem:[%s1 + $0x148] sm:$0xff]
  %v64 = vld [vmem:[%s1 + $0x150] sm:$0xff]
  %v65 = vld [vmem:[%s1 + $0x158] sm:$0xff]
  %v66 = vld [vmem:[%s1 + $0x160] sm:$0xff]
  %v67 = vld [vmem:[%s1 + $0x168] sm:$0xff]
  %v68 = vld [vmem:[%s1 + $0x170] sm:$0xff]
  %v69 = vld [vmem:[%s1 + $0x178] sm:$0xff]
  %v70 = vld [vmem:[%s1 + $0x180] sm:$0xff]
  %v71 = vld [vmem:[%s1 + $0x188] sm:$0xff]
  %v72 = vld [vmem:[%s1 + $0x190] sm:$0xff]
  %v73 = vld [vmem:[%s1 + $0x198] sm:$0xff]
  %v74 = vld [vmem:[%s1 + $0x1a0] sm:$0xff]
  %v75 = vld [vmem:[%s1 + $0x1a8] sm:$0xff]
  %v76 = vld [vmem:[%s1 + $0x1b0] sm:$0xff]
  %v77 = vld [vmem:[%s1 + $0x1b8] sm:$0xff]
  %v78 = vld [vmem:[%s1 + $0x1c0] sm:$0xff]
  %v79 = vld [vmem:[%s1 + $0x1c8] sm:$0xff]
  %v80 = vld [vmem:[%s1 + $0x1d0] sm:$0xff]
  %v81 = vld [vmem:[%s1 + $0x1d8] sm:$0xff]
  %v82 = vld [vmem:[%s1 + $0x1e0] sm:$0xff]
  %v83 = vld [vmem:[%s1 + $0x1e8] sm:$0xff]
  %v84 = vld [vmem:[%s1 + $0x1f0] sm:$0xff]
  %v85 = vld [vmem:[%s1 + $0x1f8] sm:$0xff]
  %v86 = vld [vmem:[%s1 + $0x200] sm:$0xff]
  %v87 = vld [vmem:[%s1 + $0x208] sm:$0xff]
  %v88 = vld [vmem:[%s1 + $0x210] sm:$0xff]
  %v89 = vld [vmem:[%s1 + $0x218] sm:$0xff]
  %v90 = vld [vmem:[%s1 + $0x220] sm:$0xff]
  %v91 = vld [vmem:[%s1 + $0x228] sm:$0xff]
  %v92 = vld [vmem:[%s1 + $0x230] sm:$0xff]
  %v93 = vld [vmem:[%s1 + $0x238] sm:$0xff]
  %v94 = vld [vmem:[%s1 + $0x240] sm:$0xff]
  %v95 = vld [vmem:[%s1 + $0x248] sm:$0xff]
  %v96 = vld [vmem:[%s1 + $0x250] sm:$0xff]
  %v97 = vld [vmem:[%s1 + $0x258] sm:$0xff]
  %v98 = vld [vmem:[%s1 + $0x260] sm:$0xff]
  %v99 = vld [vmem:[%s1 + $0x268] sm:$0xff]
  %v100 = vld [vmem:[%s1 + $0x270] sm:$0xff]
  %v101 = vld [vmem:[%s1 + $0x278] sm:$0xff]
  %v102 = vld [vmem:[%s1 + $0x280] sm:$0xff]
  %v103 = vld [vmem:[%s1 + $0x288] sm:$0xff]
  %v104 = vld [vmem:[%s1 + $0x290] sm:$0xff]
  %v105 = vld [vmem:[%s1 + $0x298] sm:$0xff]
  %v106 = vld [vmem:[%s1 + $0x2a0] sm:$0xff]
  %v107 = vld [vmem:[%s1 + $0x2a8] sm:$0xff]
  %v108 = vld [vmem:[%s1 + $0x2b0] sm:$0xff]
  %v109 = vld [vmem:[%s1 + $0x2b8] sm:$0xff]
  %v110 = vld [vmem:[%s1 + $0x2c0] sm:$0xff]
  %v111 = vld [vmem:[%s1 + $0x2c8] sm:$0xff]
  %v112 = vld [vmem:[%s1 + $0x2d0] sm:$0xff]
  %v113 = vld [vmem:[%s1 + $0x2d8] sm:$0xff]
  %v114 = vld [vmem:[%s1 + $0x2e0] sm:$0xff]
  %v115 = vld [vmem:[%s1 + $0x2e8] sm:$0xff]
  %v116 = vld [vmem:[%s1 + $0x2f0] sm:$0xff]
  %v117 = vld [vmem:[%s1 + $0x2f8] sm:$0xff]
  %v118 = vld [vmem:[%s1 + $0x300] sm:$0xff]
  %v119 = vld [vmem:[%s1 + $0x308] sm:$0xff]
  %v120 = vld [vmem:[%s1 + $0x310] sm:$0xff]
  %v121 = vld [vmem:[%s1 + $0x318] sm:$0xff]
  %v122 = vld [vmem:[%s1 + $0x320] sm:$0xff]
  %v123 = vld [vmem:[%s1 + $0x328] sm:$0xff]
  %v124 = vld [vmem:[%s1 + $0x330] sm:$0xff]
  %v125 = vld [vmem:[%s1 + $0x338] sm:$0xff]
  %v126 = vld [vmem:[%s1 + $0x340] sm:$0xff]
  %v127 = vld [vmem:[%s1 + $0x348] sm:$0xff]
  %v128 = vld [vmem:[%s1 + $0x350] sm:$0xff]
  %v129 = vld [vmem:[%s1 + $0x358] sm:$0xff]
  %v130 = vld [vmem:[%s1 + $0x360] sm:$0xff]
  %v131 = vld [vmem:[%s1 + $0x368] sm:$0xff]
  %v132 = vld [vmem:[%s1 + $0x370] sm:$0xff]
  %v133 = vld [vmem:[%s1 + $0x378] sm:$0xff]
  %v134 = vld [vmem:[%s1 + $0x380] sm:$0xff]
  %v135 = vld [vmem:[%s1 + $0x388] sm:$0xff]
  %v136 = vld [vmem:[%s1 + $0x390] sm:$0xff]
  %v137 = vld [vmem:[%s1 + $0x398] sm:$0xff]
  %v138 = vld [vmem:[%s1 + $0x3a0] sm:$0xff]
  %v139 = vld [vmem:[%s1 + $0x3a8] sm:$0xff]
  %v140 = vld [vmem:[%s1 + $0x3b0] sm:$0xff]
  %v141 = vld [vmem:[%s1 + $0x3b8] sm:$0xff]
  %v142 = vld [vmem:[%s1 + $0x3c0] sm:$0xff]
  %v143 = vld [vmem:[%s1 + $0x3c8] sm:$0xff]
  %v144 = vld [vmem:[%s1 + $0x3d0] sm:$0xff]
  %v145 = vld [vmem:[%s1 + $0x3d8] sm:$0xff]
  %v146 = vld [vmem:[%s1 + $0x3e0] sm:$0xff]
  %v147 = vld [vmem:[%s1 + $0x3e8] sm:$0xff]
  %v148 = vld [vmem:[%s1 + $0x3f0] sm:$0xff]
  %v149 = vld [vmem:[%s1 + $0x3f8] sm:$0xff]
  %v150 = vld [vmem:[%s1 + $0x400] sm:$0xff]
  %v151 = vld [vmem:[%s1 + $0x408] sm:$0xff]
  %v152 = vld [vmem:[%s1 + $0x410] sm:$0xff]
  %v153 = vld [vmem:[%s1 + $0x418] sm:$0xff]
  %v154 = vld [vmem:[%s1 + $0x420] sm:$0xff]
  %v155 = vld [vmem:[%s1 + $0x428] sm:$0xff]
  %v156 = vld [vmem:[%s1 + $0x430] sm:$0xff]
  %v157 = vld [vmem:[%s1 + $0x438] sm:$0xff]
  %v158 = vld [vmem:[%s1 + $0x440] sm:$0xff]
  %v159 = vld [vmem:[%s1 + $0x448] sm:$0xff]
  %v160 = vld [vmem:[%s1 + $0x450] sm:$0xff]
  %v161 = vld [vmem:[%s1 + $0x458] sm:$0xff]
  %v162 = vld [vmem:[%s1 + $0x460] sm:$0xff]
  %v163 = vld [vmem:[%s1 + $0x468] sm:$0xff]
  %v164 = vld [vmem:[%s1 + $0x470] sm:$0xff]
  %v165 = vld [vmem:[%s1 + $0x478] sm:$0xff]
  %v166 = vld [vmem:[%s1 + $0x480] sm:$0xff]
  %v167 = vld [vmem:[%s1 + $0x488] sm:$0xff]
  %v168 = vld [vmem:[%s1 + $0x490] sm:$0xff]
  %v169 = vld [vmem:[%s1 + $0x498] sm:$0xff]
  %v170 = vld [vmem:[%s1 + $0x4a0] sm:$0xff]
  %v171 = vld [vmem:[%s1 + $0x4a8] sm:$0xff]
  %v172 = vld [vmem:[%s1 + $0x4b0] sm:$0xff]
  %v173 = vld [vmem:[%s1 + $0x4b8] sm:$0xff]
  %v174 = vld [vmem:[%s1 + $0x4c0] sm:$0xff]
  %v175 = vld [vmem:[%s1 + $0x4c8] sm:$0xff]
  %v176 = vld [vmem:[%s1 + $0x4d0] sm:$0xff]
  %v177 = vld [vmem:[%s1 + $0x4d8] sm:$0xff]
  %v178 = vld [vmem:[%s1 + $0x4e0] sm:$0xff]
  %v179 = vld [vmem:[%s1 + $0x4e8] sm:$0xff]
  %v180 = vld [vmem:[%s1 + $0x4f0] sm:$0xff]
  %v181 = vld [vmem:[%s1 + $0x4f8] sm:$0xff]
  %v182 = vld [vmem:[%s1 + $0x500] sm:$0xff]
  %v183 = vld [vmem:[%s1 + $0x508] sm:$0xff]
  %v184 = vld [vmem:[%s1 + $0x510] sm:$0xff]
  %v185 = vld [vmem:[%s1 + $0x518] sm:$0xff]
  %v186 = vld [vmem:[%s1 + $0x520] sm:$0xff]
  %v187 = vld [vmem:[%s1 + $0x528] sm:$0xff]
  %v188 = vld [vmem:[%s1 + $0x530] sm:$0xff]
  %v189 = vld [vmem:[%s1 + $0x538] sm:$0xff]
  %v190 = vld [vmem:[%s1 + $0x540] sm:$0xff]
  %v191 = vld [vmem:[%s1 + $0x548] sm:$0xff]
  %v192 = vld [vmem:[%s1 + $0x550] sm:$0xff]
  %v193 = vld [vmem:[%s1 + $0x558] sm:$0xff]
  %v194 = vld [vmem:[%s1 + $0x560] sm:$0xff]
  %v195 = vld [vmem:[%s1 + $0x568] sm:$0xff]
  %v196 = vld [vmem:[%s1 + $0x570] sm:$0xff]
  %v197 = vld [vmem:[%s1 + $0x578] sm:$0xff]
  %v198 = vld [vmem:[%s1 + $0x580] sm:$0xff]
  %v199 = vld [vmem:[%s1 + $0x588] sm:$0xff]
  %v200 = vld [vmem:[%s1 + $0x590] sm:$0xff]
  %v201 = vld [vmem:[%s1 + $0x598] sm:$0xff]
  %v202 = vld [vmem:[%s1 + $0x5a0] sm:$0xff]
  %v203 = vld [vmem:[%s1 + $0x5a8] sm:$0xff]
  %v204 = vld [vmem:[%s1 + $0x5b0] sm:$0xff]
  %v205 = vld [vmem:[%s1 + $0x5b8] sm:$0xff]
  %v206 = vld [vmem:[%s1 + $0x5c0] sm:$0xff]
  %v207 = vld [vmem:[%s1 + $0x5c8] sm:$0xff]
  %v208 = vld [vmem:[%s1 + $0x5d0] sm:$0xff]
  %v209 = vld [vmem:[%s1 + $0x5d8] sm:$0xff]
  %v210 = vld [vmem:[%s1 + $0x5e0] sm:$0xff]
  %v211 = vld [vmem:[%s1 + $0x5e8] sm:$0xff]
  %v212 = vld [vmem:[%s1 + $0x5f0] sm:$0xff]
  %v213 = vld [vmem:[%s1 + $0x5f8] sm:$0xff]
  %v214 = vld [vmem:[%s1 + $0x600] sm:$0xff]
  %v215 = vld [vmem:[%s1 + $0x608] sm:$0xff]
  %v216 = vld [vmem:[%s1 + $0x610] sm:$0xff]
  %v217 = vld [vmem:[%s1 + $0x618] sm:$0xff]
  %v218 = vld [vmem:[%s1 + $0x620] sm:$0xff]
  %v219 = vld [vmem:[%s1 + $0x628] sm:$0xff]
  %v220 = vld [vmem:[%s1 + $0x630] sm:$0xff]
  %v221 = vld [vmem:[%s1 + $0x638] sm:$0xff]
  %v222 = vld [vmem:[%s1 + $0x640] sm:$0xff]
  %v223 = vld [vmem:[%s1 + $0x648] sm:$0xff]
  %v224 = vld [vmem:[%s1 + $0x650] sm:$0xff]
  %v225 = vld [vmem:[%s1 + $0x658] sm:$0xff]
  %v226 = vld [vmem:[%s1 + $0x660] sm:$0xff]
  %v227 = vld [vmem:[%s1 + $0x668] sm:$0xff]
  %v228 = vld [vmem:[%s1 + $0x670] sm:$0xff]
  %v229 = vld [vmem:[%s1 + $0x678] sm:$0xff]
  %v230 = vld [vmem:[%s1 + $0x680] sm:$0xff]
  %v231 = vld [vmem:[%s1 + $0x688] sm:$0xff]
  %v232 = vld [vmem:[%s1 + $0x690] sm:$0xff]
  %v233 = vld [vmem:[%s1 + $0x698] sm:$0xff]
  %v234 = vld [vmem:[%s1 + $0x6a0] sm:$0xff]
  %v235 = vld [vmem:[%s1 + $0x6a8] sm:$0xff]
  %v236 = vld [vmem:[%s1 + $0x6b0] sm:$0xff]
  %v237 = vld [vmem:[%s1 + $0x6b8] sm:$0xff]
  %v238 = vld [vmem:[%s1 + $0x6c0] sm:$0xff]
  %v239 = vld [vmem:[%s1 + $0x6c8] sm:$0xff]
  %v240 = vld [vmem:[%s1 + $0x6d0] sm:$0xff]
  %v241 = vld [vmem:[%s1 + $0x6d8] sm:$0xff]
  %v242 = vld [vmem:[%s1 + $0x6e0] sm:$0xff]
  %v243 = vld [vmem:[%s1 + $0x6e8] sm:$0xff]
  %v244 = vld [vmem:[%s1 + $0x6f0] sm:$0xff]
  %v245 = vld [vmem:[%s1 + $0x6f8] sm:$0xff]
  %v246 = vld [vmem:[%s1 + $0x700] sm:$0xff]
  %v247 = vld [vmem:[%s1 + $0x708] sm:$0xff]
  %v248 = vld [vmem:[%s1 + $0x710] sm:$0xff]
  %v249 = vld [vmem:[%s1 + $0x718] sm:$0xff]
  %v250 = vld [vmem:[%s1 + $0x720] sm:$0xff]
  %v251 = vld [vmem:[%s1 + $0x728] sm:$0xff]
  %v252 = vld [vmem:[%s1 + $0x730] sm:$0xff]
  %v253 = vld [vmem:[%s1 + $0x738] sm:$0xff]
  %v254 = vld [vmem:[%s1 + $0x740] sm:$0xff]
  %v255 = vld [vmem:[%s1 + $0x748] sm:$0xff]
  %v256 = vld [vmem:[%s1 + $0x750] sm:$0xff]
  %v257 = vld [vmem:[%s1 + $0x758] sm:$0xff]
  %v258 = vld [vmem:[%s1 + $0x760] sm:$0xff]
  %v259 = vld [vmem:[%s1 + $0x768] sm:$0xff]
  %v260 = vld [vmem:[%s1 + $0x770] sm:$0xff]
  %v261 = vld [vmem:[%s1 + $0x778] sm:$0xff]
  %v262 = vld [vmem:[%s1 + $0x780] sm:$0xff]
  %v263 = vld [vmem:[%s1 + $0x788] sm:$0xff]
  %v264 = vld [vmem:[%s1 + $0x790] sm:$0xff]
  %v265 = vld [vmem:[%s1 + $0x798] sm:$0xff]
  %v266 = vld [vmem:[%s1 + $0x7a0] sm:$0xff]
  %v267 = vld [vmem:[%s1 + $0x7a8] sm:$0xff]
  %v268 = vld [vmem:[%s1 + $0x7b0] sm:$0xff]
  %v269 = vld [vmem:[%s1 + $0x7b8] sm:$0xff]
  %v270 = vld [vmem:[%s1 + $0x7c0] sm:$0xff]
  %v271 = vld [vmem:[%s1 + $0x7c8] sm:$0xff]
  %v272 = vld [vmem:[%s1 + $0x7d0] sm:$0xff]
  %v273 = vld [vmem:[%s1 + $0x7d8] sm:$0xff]
  %v274 = vld [vmem:[%s1 + $0x7e0] sm:$0xff]
  %v275 = vld [vmem:[%s1 + $0x7e8] sm:$0xff]
  %v276 = vld [vmem:[%s1 + $0x7f0] sm:$0xff]
  %v277 = vld [vmem:[%s1 + $0x7f8] sm:$0xff]
  %v278 = vld [vmem:[%s1 + $0x800] sm:$0xff]
  %v279 = vld [vmem:[%s1 + $0x808] sm:$0xff]
  %v280 = vld [vmem:[%s1 + $0x810] sm:$0xff]
  %v281 = vld [vmem:[%s1 + $0x818] sm:$0xff]
  %v282 = vld [vmem:[%s1 + $0x820] sm:$0xff]
  %v283 = vld [vmem:[%s1 + $0x828] sm:$0xff]
  %v284 = vld [vmem:[%s1 + $0x830] sm:$0xff]
  %v285 = vld [vmem:[%s1 + $0x838] sm:$0xff]
  %v286 = vld [vmem:[%s1 + $0x840] sm:$0xff]
  %v287 = vld [vmem:[%s1 + $0x848] sm:$0xff]
  %v288 = vld [vmem:[%s1 + $0x850] sm:$0xff]
  %v289 = vld [vmem:[%s1 + $0x858] sm:$0xff]
  %v290 = vld [vmem:[%s1 + $0x860] sm:$0xff]
  %v291 = vld [vmem:[%s1 + $0x868] sm:$0xff]
  %v292 = vld [vmem:[%s1 + $0x870] sm:$0xff]
  %v293 = vld [vmem:[%s1 + $0x878] sm:$0xff]
  %v294 = vld [vmem:[%s1 + $0x880] sm:$0xff]
  %v295 = vld [vmem:[%s1 + $0x888] sm:$0xff]
  %v296 = vld [vmem:[%s1 + $0x890] sm:$0xff]
  %v297 = vld [vmem:[%s1 + $0x898] sm:$0xff]
  %v298 = vld [vmem:[%s1 + $0x8a0] sm:$0xff]
  %v299 = vld [vmem:[%s1 + $0x8a8] sm:$0xff]
  %v300 = vld [vmem:[%s1 + $0x8b0] sm:$0xff]
  %v301 = vld [vmem:[%s1 + $0x8b8] sm:$0xff]
  %v302 = vld [vmem:[%s1 + $0x8c0] sm:$0xff]
  %v303 = vld [vmem:[%s1 + $0x8c8] sm:$0xff]
  %v304 = vld [vmem:[%s1 + $0x8d0] sm:$0xff]
  %v305 = vld [vmem:[%s1 + $0x8d8] sm:$0xff]
  %v306 = vld [vmem:[%s1 + $0x8e0] sm:$0xff]
  %v307 = vld [vmem:[%s1 + $0x8e8] sm:$0xff]
  %v308 = vld [vmem:[%s1 + $0x8f0] sm:$0xff]
  %v309 = vld [vmem:[%s1 + $0x8f8] sm:$0xff]
  %v310 = vld [vmem:[%s1 + $0x900] sm:$0xff]
  %v311 = vld [vmem:[%s1 + $0x908] sm:$0xff]
  %v312 = vld [vmem:[%s1 + $0x910] sm:$0xff]
  %v313 = vld [vmem:[%s1 + $0x918] sm:$0xff]
  %v314 = vld [vmem:[%s1 + $0x920] sm:$0xff]
  %v315 = vld [vmem:[%s1 + $0x928] sm:$0xff]
  %v316 = vld [vmem:[%s1 + $0x930] sm:$0xff]
  %v317 = vld [vmem:[%s1 + $0x938] sm:$0xff]
  %v318 = vld [vmem:[%s1 + $0x940] sm:$0xff]
  %v319 = vld [vmem:[%s1 + $0x948] sm:$0xff]
  %v320 = vld [vmem:[%s1 + $0x950] sm:$0xff]
  %v321 = vld [vmem:[%s1 + $0x958] sm:$0xff]
  %v322 = vld [vmem:[%s1 + $0x960] sm:$0xff]
  %v323 = vld [vmem:[%s1 + $0x968] sm:$0xff]
  %v324 = vld [vmem:[%s1 + $0x970] sm:$0xff]
  %v325 = vld [vmem:[%s1 + $0x978] sm:$0xff]
  %v326 = vld [vmem:[%s1 + $0x980] sm:$0xff]
  %v327 = vld [vmem:[%s1 + $0x988] sm:$0xff]
  %v328 = vld [vmem:[%s1 + $0x990] sm:$0xff]
  %v329 = vld [vmem:[%s1 + $0x998] sm:$0xff]
  %v330 = vld [vmem:[%s1 + $0x9a0] sm:$0xff]
  %v331 = vld [vmem:[%s1 + $0x9a8] sm:$0xff]
  %v332 = vld [vmem:[%s1 + $0x9b0] sm:$0xff]
  %v333 = vld [vmem:[%s1 + $0x9b8] sm:$0xff]
  %v334 = vld [vmem:[%s1 + $0x9c0] sm:$0xff]
  %v335 = vld [vmem:[%s1 + $0x9c8] sm:$0xff]
  %v336 = vld [vmem:[%s1 + $0x9d0] sm:$0xff]
  %v337 = vld [vmem:[%s1 + $0x9d8] sm:$0xff]
  %v338 = vld [vmem:[%s1 + $0x9e0] sm:$0xff]
  %v339 = vld [vmem:[%s1 + $0x9e8] sm:$0xff]
  %v340 = vld [vmem:[%s1 + $0x9f0] sm:$0xff]
  %v341 = vld [vmem:[%s1 + $0x9f8] sm:$0xff]
  %v342 = vld [vmem:[%s1 + $0xa00] sm:$0xff]
  %v343 = vld [vmem:[%s1 + $0xa08] sm:$0xff]
  %v344 = vld [vmem:[%s1 + $0xa10] sm:$0xff]
  %v345 = vld [vmem:[%s1 + $0xa18] sm:$0xff]
  %v346 = vld [vmem:[%s1 + $0xa20] sm:$0xff]
  %v347 = vld [vmem:[%s1 + $0xa28] sm:$0xff]
  %v348 = vld [vmem:[%s1 + $0xa30] sm:$0xff]
  %v349 = vld [vmem:[%s1 + $0xa38] sm:$0xff]
  %v350 = vld [vmem:[%s1 + $0xa40] sm:$0xff]
  %v351 = vld [vmem:[%s1 + $0xa48] sm:$0xff]
  %v352 = vld [vmem:[%s1 + $0xa50] sm:$0xff]
  %v353 = vld [vmem:[%s1 + $0xa58] sm:$0xff]
  %v354 = vld [vmem:[%s1 + $0xa60] sm:$0xff]
  %v355 = vld [vmem:[%s1 + $0xa68] sm:$0xff]
  %v356 = vld [vmem:[%s1 + $0xa70] sm:$0xff]
  %v357 = vld [vmem:[%s1 + $0xa78] sm:$0xff]
  %v358 = vld [vmem:[%s1 + $0xa80] sm:$0xff]
  %v359 = vld [vmem:[%s1 + $0xa88] sm:$0xff]
  %v360 = vld [vmem:[%s1 + $0xa90] sm:$0xff]
  %v361 = vld [vmem:[%s1 + $0xa98] sm:$0xff]
  %v362 = vld [vmem:[%s1 + $0xaa0] sm:$0xff]
  %v363 = vld [vmem:[%s1 + $0xaa8] sm:$0xff]
  %v364 = vld [vmem:[%s1 + $0xab0] sm:$0xff]
  %v365 = vld [vmem:[%s1 + $0xab8] sm:$0xff]
  %v366 = vld [vmem:[%s1 + $0xac0] sm:$0xff]
  %v367 = vld [vmem:[%s1 + $0xac8] sm:$0xff]
  %v368 = vld [vmem:[%s1 + $0xad0] sm:$0xff]
  %v369 = vld [vmem:[%s1 + $0xad8] sm:$0xff]
  %v370 = vld [vmem:[%s1 + $0xae0] sm:$0xff]
  %v371 = vld [vmem:[%s1 + $0xae8] sm:$0xff]
  %v372 = vld [vmem:[%s1 + $0xaf0] sm:$0xff]
  %v373 = vld [vmem:[%s1 + $0xaf8] sm:$0xff]
  %v374 = vld [vmem:[%s1 + $0xb00] sm:$0xff]
  %v375 = vld [vmem:[%s1 + $0xb08] sm:$0xff]
  %v376 = vld [vmem:[%s1 + $0xb10] sm:$0xff]
  %v377 = vld [vmem:[%s1 + $0xb18] sm:$0xff]
  %v378 = vld [vmem:[%s1 + $0xb20] sm:$0xff]
  %v379 = vld [vmem:[%s1 + $0xb28] sm:$0xff]
  %v380 = vld [vmem:[%s1 + $0xb30] sm:$0xff]
  %v381 = vld [vmem:[%s1 + $0xb38] sm:$0xff]
  %v382 = vld [vmem:[%s1 + $0xb40] sm:$0xff]
  %v383 = vld [vmem:[%s1 + $0xb48] sm:$0xff]
  %v384 = vld [vmem:[%s1 + $0xb50] sm:$0xff]
  %v385 = vld [vmem:[%s1 + $0xb58] sm:$0xff]
  %v386 = vld [vmem:[%s1 + $0xb60] sm:$0xff]
  %v387 = vld [vmem:[%s1 + $0xb68] sm:$0xff]
  %v388 = vld [vmem:[%s1 + $0xb70] sm:$0xff]
  %v389 = vld [vmem:[%s1 + $0xb78] sm:$0xff]
  %v390 = vld [vmem:[%s1 + $0xb80] sm:$0xff]
  %v391 = vld [vmem:[%s1 + $0xb88] sm:$0xff]
  %v392 = vld [vmem:[%s1 + $0xb90] sm:$0xff]
  %v393 = vld [vmem:[%s1 + $0xb98] sm:$0xff]
  %v394 = vld [vmem:[%s1 + $0xba0] sm:$0xff]
  %v395 = vld [vmem:[%s1 + $0xba8] sm:$0xff]
  %v396 = vld [vmem:[%s1 + $0xbb0] sm:$0xff]
  %v397 = vld [vmem:[%s1 + $0xbb8] sm:$0xff]
  %v398 = vld [vmem:[%s1 + $0xbc0] sm:$0xff]
  %v399 = vld [vmem:[%s1 + $0xbc8] sm:$0xff]
  %v400 = vld [vmem:[%s1 + $0xbd0] sm:$0xff]
  %v401 = vld [vmem:[%s1 + $0xbd8] sm:$0xff]
  %v402 = vld [vmem:[%s1 + $0xbe0] sm:$0xff]
  %v403 = vld [vmem:[%s1 + $0xbe8] sm:$0xff]
  %v404 = vld [vmem:[%s1 + $0xbf0] sm:$0xff]
  %v405 = vld [vmem:[%s1 + $0xbf8] sm:$0xff]
  %v406 = vld [vmem:[%s1 + $0xc00] sm:$0xff]
  %v407 = vld [vmem:[%s1 + $0xc08] sm:$0xff]
  %v408 = vld [vmem:[%s1 + $0xc10] sm:$0xff]
  %v409 = vld [vmem:[%s1 + $0xc18] sm:$0xff]
  %v410 = vld [vmem:[%s1 + $0xc20] sm:$0xff]
  %v411 = vld [vmem:[%s1 + $0xc28] sm:$0xff]
  %v412 = vld [vmem:[%s1 + $0xc30] sm:$0xff]
  %v413 = vld [vmem:[%s1 + $0xc38] sm:$0xff]
  %v414 = vld [vmem:[%s1 + $0xc40] sm:$0xff]
  %v415 = vld [vmem:[%s1 + $0xc48] sm:$0xff]
  %v416 = vld [vmem:[%s1 + $0xc50] sm:$0xff]
  %v417 = vld [vmem:[%s1 + $0xc58] sm:$0xff]
  %v418 = vld [vmem:[%s1 + $0xc60] sm:$0xff]
  %v419 = vld [vmem:[%s1 + $0xc68] sm:$0xff]
  %v420 = vld [vmem:[%s1 + $0xc70] sm:$0xff]
  %v421 = vld [vmem:[%s1 + $0xc78] sm:$0xff]
  %v422 = vld [vmem:[%s1 + $0xc80] sm:$0xff]
  %v423 = vld [vmem:[%s1 + $0xc88] sm:$0xff]
  %v424 = vld [vmem:[%s1 + $0xc90] sm:$0xff]
  %v425 = vld [vmem:[%s1 + $0xc98] sm:$0xff]
  %v426 = vld [vmem:[%s1 + $0xca0] sm:$0xff]
  %v427 = vld [vmem:[%s1 + $0xca8] sm:$0xff]
  %v428 = vld [vmem:[%s1 + $0xcb0] sm:$0xff]
  %v429 = vld [vmem:[%s1 + $0xcb8] sm:$0xff]
  %v430 = vld [vmem:[%s1 + $0xcc0] sm:$0xff]
  %v431 = vld [vmem:[%s1 + $0xcc8] sm:$0xff]
  %v432 = vld [vmem:[%s1 + $0xcd0] sm:$0xff]
  %v433 = vld [vmem:[%s1 + $0xcd8] sm:$0xff]
  %v434 = vld [vmem:[%s1 + $0xce0] sm:$0xff]
  %v435 = vld [vmem:[%s1 + $0xce8] sm:$0xff]
  %v436 = vld [vmem:[%s1 + $0xcf0] sm:$0xff]
  %v437 = vld [vmem:[%s1 + $0xcf8] sm:$0xff]
  %v438 = vld [vmem:[%s1 + $0xd00] sm:$0xff]
  %v439 = vld [vmem:[%s1 + $0xd08] sm:$0xff]
  %v440 = vld [vmem:[%s1 + $0xd10] sm:$0xff]
  %v441 = vld [vmem:[%s1 + $0xd18] sm:$0xff]
  %v442 = vld [vmem:[%s1 + $0xd20] sm:$0xff]
  %v443 = vld [vmem:[%s1 + $0xd28] sm:$0xff]
  %v444 = vld [vmem:[%s1 + $0xd30] sm:$0xff]
  %v445 = vld [vmem:[%s1 + $0xd38] sm:$0xff]
  %v446 = vld [vmem:[%s1 + $0xd40] sm:$0xff]
  %v447 = vld [vmem:[%s1 + $0xd48] sm:$0xff]
  %v448 = vld [vmem:[%s1 + $0xd50] sm:$0xff]
  %v449 = vld [vmem:[%s1 + $0xd58] sm:$0xff]
  %v450 = vld [vmem:[%s1 + $0xd60] sm:$0xff]
  %v451 = vld [vmem:[%s1 + $0xd68] sm:$0xff]
  %v452 = vld [vmem:[%s1 + $0xd70] sm:$0xff]
  %v453 = vld [vmem:[%s1 + $0xd78] sm:$0xff]
  %v454 = vld [vmem:[%s1 + $0xd80] sm:$0xff]
  %v455 = vld [vmem:[%s1 + $0xd88] sm:$0xff]
  %v456 = vld [vmem:[%s1 + $0xd90] sm:$0xff]
  %v457 = vld [vmem:[%s1 + $0xd98] sm:$0xff]
  %v458 = vld [vmem:[%s1 + $0xda0] sm:$0xff]
  %v459 = vld [vmem:[%s1 + $0xda8] sm:$0xff]
  %v460 = vld [vmem:[%s1 + $0xdb0] sm:$0xff]
  %v461 = vld [vmem:[%s1 + $0xdb8] sm:$0xff]
  %v462 = vld [vmem:[%s1 + $0xdc0] sm:$0xff]
  %v463 = vld [vmem:[%s1 + $0xdc8] sm:$0xff]
  %v464 = vld [vmem:[%s1 + $0xdd0] sm:$0xff]
  %v465 = vld [vmem:[%s1 + $0xdd8] sm:$0xff]
  %v466 = vld [vmem:[%s1 + $0xde0] sm:$0xff]
  %v467 = vld [vmem:[%s1 + $0xde8] sm:$0xff]
  %v468 = vld [vmem:[%s1 + $0xdf0] sm:$0xff]
  %v469 = vld [vmem:[%s1 + $0xdf8] sm:$0xff]
  %v470 = vld [vmem:[%s1 + $0xe00] sm:$0xff]
  %v471 = vld [vmem:[%s1 + $0xe08] sm:$0xff]
  %v472 = vld [vmem:[%s1 + $0xe10] sm:$0xff]
  %v473 = vld [vmem:[%s1 + $0xe18] sm:$0xff]
  %v474 = vld [vmem:[%s1 + $0xe20] sm:$0xff]
  %v475 = vld [vmem:[%s1 + $0xe28] sm:$0xff]
  %v476 = vld [vmem:[%s1 + $0xe30] sm:$0xff]
  %v477 = vld [vmem:[%s1 + $0xe38] sm:$0xff]
  %v478 = vld [vmem:[%s1 + $0xe40] sm:$0xff]
  %v479 = vld [vmem:[%s1 + $0xe48] sm:$0xff]
  %v480 = vld [vmem:[%s1 + $0xe50] sm:$0xff]
  %v481 = vld [vmem:[%s1 + $0xe58] sm:$0xff]
  %v482 = vld [vmem:[%s1 + $0xe60] sm:$0xff]
  %v483 = vld [vmem:[%s1 + $0xe68] sm:$0xff]
  %v484 = vld [vmem:[%s1 + $0xe70] sm:$0xff]
  %v485 = vld [vmem:[%s1 + $0xe78] sm:$0xff]
  %v486 = vld [vmem:[%s1 + $0xe80] sm:$0xff]
  %v487 = vld [vmem:[%s1 + $0xe88] sm:$0xff]
  %v488 = vld [vmem:[%s1 + $0xe90] sm:$0xff]
  %v489 = vld [vmem:[%s1 + $0xe98] sm:$0xff]
  %v490 = vld [vmem:[%s1 + $0xea0] sm:$0xff]
  %v491 = vld [vmem:[%s1 + $0xea8] sm:$0xff]
  %v492 = vld [vmem:[%s1 + $0xeb0] sm:$0xff]
  %v493 = vld [vmem:[%s1 + $0xeb8] sm:$0xff]
  %v494 = vld [vmem:[%s1 + $0xec0] sm:$0xff]
  %v495 = vld [vmem:[%s1 + $0xec8] sm:$0xff]
  %v496 = vld [vmem:[%s1 + $0xed0] sm:$0xff]
  %v497 = vld [vmem:[%s1 + $0xed8] sm:$0xff]
  %v498 = vld [vmem:[%s1 + $0xee0] sm:$0xff]
  %v499 = vld [vmem:[%s1 + $0xee8] sm:$0xff]
  %v500 = vld [vmem:[%s1 + $0xef0] sm:$0xff]
  %v501 = vld [vmem:[%s1 + $0xef8] sm:$0xff]
  %v502 = vld [vmem:[%s1 + $0xf00] sm:$0xff]
  %v503 = vld [vmem:[%s1 + $0xf08] sm:$0xff]
  %v504 = vld [vmem:[%s1 + $0xf10] sm:$0xff]
  %v505 = vld [vmem:[%s1 + $0xf18] sm:$0xff]
  %v506 = vld [vmem:[%s1 + $0xf20] sm:$0xff]
  %v507 = vld [vmem:[%s1 + $0xf28] sm:$0xff]
  %v508 = vld [vmem:[%s1 + $0xf30] sm:$0xff]
  %v509 = vld [vmem:[%s1 + $0xf38] sm:$0xff]
  %v510 = vld [vmem:[%s1 + $0xf40] sm:$0xff]
  %v511 = vld [vmem:[%s1 + $0xf48] sm:$0xff]
  %v512 = vld [vmem:[%s1 + $0xf50] sm:$0xff]
  %v513 = vld [vmem:[%s1 + $0xf58] sm:$0xff]
  %v514 = vld [vmem:[%s1 + $0xf60] sm:$0xff]
  %v515 = vld [vmem:[%s1 + $0xf68] sm:$0xff]
  %v516 = vld [vmem:[%s1 + $0xf70] sm:$0xff]
  %v517 = vld [vmem:[%s1 + $0xf78] sm:$0xff]
  %v518 = vld [vmem:[%s1 + $0xf80] sm:$0xff]
  %v519 = vld [vmem:[%s1 + $0xf88] sm:$0xff]
  %v520 = vld [vmem:[%s1 + $0xf90] sm:$0xff]
  %v521 = vld [vmem:[%s1 + $0xf98] sm:$0xff]
  %v522 = vld [vmem:[%s1 + $0xfa0] sm:$0xff]
  %v523 = vld [vmem:[%s1 + $0xfa8] sm:$0xff]
  %v524 = vld [vmem:[%s1 + $0xfb0] sm:$0xff]
  %v525 = vld [vmem:[%s1 + $0xfb8] sm:$0xff]
  %v526 = vld [vmem:[%s1 + $0xfc0] sm:$0xff]
  %v527 = vld [vmem:[%s1 + $0xfc8] sm:$0xff]
  %v528 = vld [vmem:[%s1 + $0xfd0] sm:$0xff]
  %v529 = vld [vmem:[%s1 + $0xfd8] sm:$0xff]
  %v530 = vld [vmem:[%s1 + $0xfe0] sm:$0xff]
  %v531 = vld [vmem:[%s1 + $0xfe8] sm:$0xff]
  %v532 = vld [vmem:[%s1 + $0xff0] sm:$0xff]
  %v533 = vld [vmem:[%s1 + $0xff8] sm:$0xff]
  %v534 = vld [vmem:[%s1 + $0x1000] sm:$0xff]
  %v535 = vld [vmem:[%s1 + $0x1008] sm:$0xff]
  %v536 = vld [vmem:[%s1 + $0x1010] sm:$0xff]
  %v537 = vld [vmem:[%s1 + $0x1018] sm:$0xff]
  %v538 = vld [vmem:[%s1 + $0x1020] sm:$0xff]
  %v539 = vld [vmem:[%s1 + $0x1028] sm:$0xff]
  %v540 = vld [vmem:[%s1 + $0x1030] sm:$0xff]
  %v541 = vld [vmem:[%s1 + $0x1038] sm:$0xff]
  %v542 = vld [vmem:[%s1 + $0x1040] sm:$0xff]
  %v543 = vld [vmem:[%s1 + $0x1048] sm:$0xff]
  %v544 = vld [vmem:[%s1 + $0x1050] sm:$0xff]
  %v545 = vld [vmem:[%s1 + $0x1058] sm:$0xff]
  %v546 = vld [vmem:[%s1 + $0x1060] sm:$0xff]
  %v547 = vld [vmem:[%s1 + $0x1068] sm:$0xff]
  %v548 = vld [vmem:[%s1 + $0x1070] sm:$0xff]
  %v549 = vld [vmem:[%s1 + $0x1078] sm:$0xff]
  %v550 = vld [vmem:[%s1 + $0x1080] sm:$0xff]
  %v551 = vld [vmem:[%s1 + $0x1088] sm:$0xff]
  %v552 = vld [vmem:[%s1 + $0x1090] sm:$0xff]
  %v553 = vld [vmem:[%s1 + $0x1098] sm:$0xff]
  %v554 = vld [vmem:[%s1 + $0x10a0] sm:$0xff]
  %v555 = vld [vmem:[%s1 + $0x10a8] sm:$0xff]
  %v556 = vld [vmem:[%s1 + $0x10b0] sm:$0xff]
  %v557 = vld [vmem:[%s1 + $0x10b8] sm:$0xff]
  %v558 = vld [vmem:[%s1 + $0x10c0] sm:$0xff]
  %v559 = vld [vmem:[%s1 + $0x10c8] sm:$0xff]
  %v560 = vld [vmem:[%s1 + $0x10d0] sm:$0xff]
  %v561 = vld [vmem:[%s1 + $0x10d8] sm:$0xff]
  %v562 = vld [vmem:[%s1 + $0x10e0] sm:$0xff]
  %v563 = vld [vmem:[%s1 + $0x10e8] sm:$0xff]
  %v564 = vld [vmem:[%s1 + $0x10f0] sm:$0xff]
  %v565 = vld [vmem:[%s1 + $0x10f8] sm:$0xff]
  %v566 = vld [vmem:[%s1 + $0x1100] sm:$0xff]
  %v567 = vld [vmem:[%s1 + $0x1108] sm:$0xff]
  %v568 = vld [vmem:[%s1 + $0x1110] sm:$0xff]
  %v569 = vld [vmem:[%s1 + $0x1118] sm:$0xff]
  %v570 = vld [vmem:[%s1 + $0x1120] sm:$0xff]
  %v571 = vld [vmem:[%s1 + $0x1128] sm:$0xff]
  %v572 = vld [vmem:[%s1 + $0x1130] sm:$0xff]
  %v573 = vld [vmem:[%s1 + $0x1138] sm:$0xff]
  %v574 = vld [vmem:[%s1 + $0x1140] sm:$0xff]
  %v575 = vld [vmem:[%s1 + $0x1148] sm:$0xff]
  %v576 = vld [vmem:[%s1 + $0x1150] sm:$0xff]
  %v577 = vld [vmem:[%s1 + $0x1158] sm:$0xff]
  %v578 = vld [vmem:[%s1 + $0x1160] sm:$0xff]
  %v579 = vld [vmem:[%s1 + $0x1168] sm:$0xff]
  %v580 = vld [vmem:[%s1 + $0x1170] sm:$0xff]
  %v581 = vld [vmem:[%s1 + $0x1178] sm:$0xff]
  %v582 = vld [vmem:[%s1 + $0x1180] sm:$0xff]
  %v583 = vld [vmem:[%s1 + $0x1188] sm:$0xff]
  %v584 = vld [vmem:[%s1 + $0x1190] sm:$0xff]
  %v585 = vld [vmem:[%s1 + $0x1198] sm:$0xff]
  %v586 = vld [vmem:[%s1 + $0x11a0] sm:$0xff]
  %v587 = vld [vmem:[%s1 + $0x11a8] sm:$0xff]
  %v588 = vld [vmem:[%s1 + $0x11b0] sm:$0xff]
  %v589 = vld [vmem:[%s1 + $0x11b8] sm:$0xff]
  %v590 = vld [vmem:[%s1 + $0x11c0] sm:$0xff]
  %v591 = vld [vmem:[%s1 + $0x11c8] sm:$0xff]
  %v592 = vld [vmem:[%s1 + $0x11d0] sm:$0xff]
  %v593 = vld [vmem:[%s1 + $0x11d8] sm:$0xff]
  %v594 = vld [vmem:[%s1 + $0x11e0] sm:$0xff]
  %v595 = vld [vmem:[%s1 + $0x11e8] sm:$0xff]
  %v596 = vld [vmem:[%s1 + $0x11f0] sm:$0xff]
  %v597 = vld [vmem:[%s1 + $0x11f8] sm:$0xff]
  %v598 = vld [vmem:[%s1 + $0x1200] sm:$0xff]
  %v599 = vld [vmem:[%s1 + $0x1208] sm:$0xff]
  %v600 = vld [vmem:[%s1 + $0x1210] sm:$0xff]
  %v601 = vld [vmem:[%s1 + $0x1218] sm:$0xff]
  %v602 = vld [vmem:[%s1 + $0x1220] sm:$0xff]
  %v603 = vld [vmem:[%s1 + $0x1228] sm:$0xff]
  %v604 = vld [vmem:[%s1 + $0x1230] sm:$0xff]
  %v605 = vld [vmem:[%s1 + $0x1238] sm:$0xff]
  %v606 = vld [vmem:[%s1 + $0x1240] sm:$0xff]
  %v607 = vld [vmem:[%s1 + $0x1248] sm:$0xff]
  %v608 = vld [vmem:[%s1 + $0x1250] sm:$0xff]
  %v609 = vld [vmem:[%s1 + $0x1258] sm:$0xff]
  %v610 = vld [vmem:[%s1 + $0x1260] sm:$0xff]
  %v611 = vld [vmem:[%s1 + $0x1268] sm:$0xff]
  %v612 = vld [vmem:[%s1 + $0x1270] sm:$0xff]
  %v613 = vld [vmem:[%s1 + $0x1278] sm:$0xff]
  %v614 = vld [vmem:[%s1 + $0x1280] sm:$0xff]
  %v615 = vld [vmem:[%s1 + $0x1288] sm:$0xff]
  %v616 = vld [vmem:[%s1 + $0x1290] sm:$0xff]
  %v617 = vld [vmem:[%s1 + $0x1298] sm:$0xff]
  %v618 = vld [vmem:[%s1 + $0x12a0] sm:$0xff]
  %v619 = vld [vmem:[%s1 + $0x12a8] sm:$0xff]
  %v620 = vld [vmem:[%s1 + $0x12b0] sm:$0xff]
  %v621 = vld [vmem:[%s1 + $0x12b8] sm:$0xff]
  %v622 = vld [vmem:[%s1 + $0x12c0] sm:$0xff]
  %v623 = vld [vmem:[%s1 + $0x12c8] sm:$0xff]
  %v624 = vld [vmem:[%s1 + $0x12d0] sm:$0xff]
  %v625 = vld [vmem:[%s1 + $0x12d8] sm:$0xff]
  %v626 = vld [vmem:[%s1 + $0x12e0] sm:$0xff]
  %v627 = vld [vmem:[%s1 + $0x12e8] sm:$0xff]
  %v628 = vld [vmem:[%s1 + $0x12f0] sm:$0xff]
  %v629 = vld [vmem:[%s1 + $0x12f8] sm:$0xff]
  %v630 = vld [vmem:[%s1 + $0x1300] sm:$0xff]
  %v631 = vld [vmem:[%s1 + $0x1308] sm:$0xff]
  %v632 = vld [vmem:[%s1 + $0x1310] sm:$0xff]
  %v633 = vld [vmem:[%s1 + $0x1318] sm:$0xff]
  %v634 = vld [vmem:[%s1 + $0x1320] sm:$0xff]
  %v635 = vld [vmem:[%s1 + $0x1328] sm:$0xff]
  %v636 = vld [vmem:[%s1 + $0x1330] sm:$0xff]
  %v637 = vld [vmem:[%s1 + $0x1338] sm:$0xff]
  %v638 = vld [vmem:[%s1 + $0x1340] sm:$0xff]
  %v639 = vld [vmem:[%s1 + $0x1348] sm:$0xff]
  %v640 = vld [vmem:[%s1 + $0x1350] sm:$0xff]
  %v641 = vld [vmem:[%s1 + $0x1358] sm:$0xff]
  %v642 = vld [vmem:[%s1 + $0x1360] sm:$0xff]
  %v643 = vld [vmem:[%s1 + $0x1368] sm:$0xff]
  %v644 = vld [vmem:[%s1 + $0x1370] sm:$0xff]
  %v645 = vld [vmem:[%s1 + $0x1378] sm:$0xff]
  %v646 = vld [vmem:[%s1 + $0x1380] sm:$0xff]
  %v647 = vld [vmem:[%s1 + $0x1388] sm:$0xff]
  %v648 = vld [vmem:[%s1 + $0x1390] sm:$0xff]
  %v649 = vld [vmem:[%s1 + $0x1398] sm:$0xff]
  %v650 = vld [vmem:[%s1 + $0x13a0] sm:$0xff]
  %v651 = vld [vmem:[%s1 + $0x13a8] sm:$0xff]
  %v652 = vld [vmem:[%s1 + $0x13b0] sm:$0xff]
  %v653 = vld [vmem:[%s1 + $0x13b8] sm:$0xff]
  %v654 = vld [vmem:[%s1 + $0x13c0] sm:$0xff]
  %v655 = vld [vmem:[%s1 + $0x13c8] sm:$0xff]
  %v656 = vld [vmem:[%s1 + $0x13d0] sm:$0xff]
  %v657 = vld [vmem:[%s1 + $0x13d8] sm:$0xff]
  %v658 = vld [vmem:[%s1 + $0x13e0] sm:$0xff]
  %v659 = vld [vmem:[%s1 + $0x13e8] sm:$0xff]
  %v660 = vld [vmem:[%s1 + $0x13f0] sm:$0xff]
  %v661 = vld [vmem:[%s1 + $0x13f8] sm:$0xff]
  %v662 = vld [vmem:[%s1 + $0x1400] sm:$0xff]
  %v663 = vld [vmem:[%s1 + $0x1408] sm:$0xff]
  %v664 = vld [vmem:[%s1 + $0x1410] sm:$0xff]
  %v665 = vld [vmem:[%s1 + $0x1418] sm:$0xff]
  %v666 = vld [vmem:[%s1 + $0x1420] sm:$0xff]
  %v667 = vld [vmem:[%s1 + $0x1428] sm:$0xff]
  %v668 = vld [vmem:[%s1 + $0x1430] sm:$0xff]
  %v669 = vld [vmem:[%s1 + $0x1438] sm:$0xff]
  %v670 = vld [vmem:[%s1 + $0x1440] sm:$0xff]
  %v671 = vld [vmem:[%s1 + $0x1448] sm:$0xff]
  %v672 = vld [vmem:[%s1 + $0x1450] sm:$0xff]
  %v673 = vld [vmem:[%s1 + $0x1458] sm:$0xff]
  %v674 = vld [vmem:[%s1 + $0x1460] sm:$0xff]
  %v675 = vld [vmem:[%s1 + $0x1468] sm:$0xff]
  %v676 = vld [vmem:[%s1 + $0x1470] sm:$0xff]
  %v677 = vld [vmem:[%s1 + $0x1478] sm:$0xff]
  %v678 = vld [vmem:[%s1 + $0x1480] sm:$0xff]
  %v679 = vld [vmem:[%s1 + $0x1488] sm:$0xff]
  %v680 = vld [vmem:[%s1 + $0x1490] sm:$0xff]
  %v681 = vld [vmem:[%s1 + $0x1498] sm:$0xff]
  %v682 = vld [vmem:[%s1 + $0x14a0] sm:$0xff]
  %v683 = vld [vmem:[%s1 + $0x14a8] sm:$0xff]
  %v684 = vld [vmem:[%s1 + $0x14b0] sm:$0xff]
  %v685 = vld [vmem:[%s1 + $0x14b8] sm:$0xff]
  %v686 = vld [vmem:[%s1 + $0x14c0] sm:$0xff]
  %v687 = vld [vmem:[%s1 + $0x14c8] sm:$0xff]
  %v688 = vld [vmem:[%s1 + $0x14d0] sm:$0xff]
  %v689 = vld [vmem:[%s1 + $0x14d8] sm:$0xff]
  %v690 = vld [vmem:[%s1 + $0x14e0] sm:$0xff]
  %v691 = vld [vmem:[%s1 + $0x14e8] sm:$0xff]
  %v692 = vld [vmem:[%s1 + $0x14f0] sm:$0xff]
  %v693 = vld [vmem:[%s1 + $0x14f8] sm:$0xff]
  %v694 = vld [vmem:[%s1 + $0x1500] sm:$0xff]
  %v695 = vld [vmem:[%s1 + $0x1508] sm:$0xff]
  %v696 = vld [vmem:[%s1 + $0x1510] sm:$0xff]
  %v697 = vld [vmem:[%s1 + $0x1518] sm:$0xff]
  %v698 = vld [vmem:[%s1 + $0x1520] sm:$0xff]
  %v699 = vld [vmem:[%s1 + $0x1528] sm:$0xff]
  %v700 = vld [vmem:[%s1 + $0x1530] sm:$0xff]
  %v701 = vld [vmem:[%s1 + $0x1538] sm:$0xff]
  %v702 = vld [vmem:[%s1 + $0x1540] sm:$0xff]
  %v703 = vld [vmem:[%s1 + $0x1548] sm:$0xff]
  %v704 = vld [vmem:[%s1 + $0x1550] sm:$0xff]
  %v705 = vld [vmem:[%s1 + $0x1558] sm:$0xff]
  %v706 = vld [vmem:[%s1 + $0x1560] sm:$0xff]
  %v707 = vld [vmem:[%s1 + $0x1568] sm:$0xff]
  %v708 = vld [vmem:[%s1 + $0x1570] sm:$0xff]
  %v709 = vld [vmem:[%s1 + $0x1578] sm:$0xff]
  %v710 = vld [vmem:[%s1 + $0x1580] sm:$0xff]
  %v711 = vld [vmem:[%s1 + $0x1588] sm:$0xff]
  %v712 = vld [vmem:[%s1 + $0x1590] sm:$0xff]
  %v713 = vld [vmem:[%s1 + $0x1598] sm:$0xff]
  %v714 = vld [vmem:[%s1 + $0x15a0] sm:$0xff]
  %v715 = vld [vmem:[%s1 + $0x15a8] sm:$0xff]
  %v716 = vld [vmem:[%s1 + $0x15b0] sm:$0xff]
  %v717 = vld [vmem:[%s1 + $0x15b8] sm:$0xff]
  %v718 = vld [vmem:[%s1 + $0x15c0] sm:$0xff]
  %v719 = vld [vmem:[%s1 + $0x15c8] sm:$0xff]
  %v720 = vld [vmem:[%s1 + $0x15d0] sm:$0xff]
  %v721 = vld [vmem:[%s1 + $0x15d8] sm:$0xff]
  %v722 = vld [vmem:[%s1 + $0x15e0] sm:$0xff]
  %v723 = vld [vmem:[%s1 + $0x15e8] sm:$0xff]
  %v724 = vld [vmem:[%s1 + $0x15f0] sm:$0xff]
  %v725 = vld [vmem:[%s1 + $0x15f8] sm:$0xff]
  %v726 = vld [vmem:[%s1 + $0x1600] sm:$0xff]
  %v727 = vld [vmem:[%s1 + $0x1608] sm:$0xff]
  %v728 = vld [vmem:[%s1 + $0x1610] sm:$0xff]
  %v729 = vld [vmem:[%s1 + $0x1618] sm:$0xff]
  %v730 = vld [vmem:[%s1 + $0x1620] sm:$0xff]
  %v731 = vld [vmem:[%s1 + $0x1628] sm:$0xff]
  %v732 = vld [vmem:[%s1 + $0x1630] sm:$0xff]
  %v733 = vld [vmem:[%s1 + $0x1638] sm:$0xff]
  %v734 = vld [vmem:[%s1 + $0x1640] sm:$0xff]
  %v735 = vld [vmem:[%s1 + $0x1648] sm:$0xff]
  %v736 = vld [vmem:[%s1 + $0x1650] sm:$0xff]
  %v737 = vld [vmem:[%s1 + $0x1658] sm:$0xff]
  %v738 = vld [vmem:[%s1 + $0x1660] sm:$0xff]
  %v739 = vld [vmem:[%s1 + $0x1668] sm:$0xff]
  %v740 = vld [vmem:[%s1 + $0x1670] sm:$0xff]
  %v741 = vld [vmem:[%s1 + $0x1678] sm:$0xff]
  %v742 = vld [vmem:[%s1 + $0x1680] sm:$0xff]
  %v743 = vld [vmem:[%s1 + $0x1688] sm:$0xff]
  %v744 = vld [vmem:[%s1 + $0x1690] sm:$0xff]
  %v745 = vld [vmem:[%s1 + $0x1698] sm:$0xff]
  %v746 = vld [vmem:[%s1 + $0x16a0] sm:$0xff]
  %v747 = vld [vmem:[%s1 + $0x16a8] sm:$0xff]
  %v748 = vld [vmem:[%s1 + $0x16b0] sm:$0xff]
  %v749 = vld [vmem:[%s1 + $0x16b8] sm:$0xff]
  %v750 = vld [vmem:[%s1 + $0x16c0] sm:$0xff]
  %v751 = vld [vmem:[%s1 + $0x16c8] sm:$0xff]
  %v752 = vld [vmem:[%s1 + $0x16d0] sm:$0xff]
  %v753 = vld [vmem:[%s1 + $0x16d8] sm:$0xff]
  %v754 = vld [vmem:[%s1 + $0x16e0] sm:$0xff]
  %v755 = vld [vmem:[%s1 + $0x16e8] sm:$0xff]
  %v756 = vld [vmem:[%s1 + $0x16f0] sm:$0xff]
  %v757 = vld [vmem:[%s1 + $0x16f8] sm:$0xff]
  %v758 = vld [vmem:[%s1 + $0x1700] sm:$0xff]
  %v759 = vld [vmem:[%s1 + $0x1708] sm:$0xff]
  %v760 = vld [vmem:[%s1 + $0x1710] sm:$0xff]
  %v761 = vld [vmem:[%s1 + $0x1718] sm:$0xff]
  %v762 = vld [vmem:[%s1 + $0x1720] sm:$0xff]
  %v763 = vld [vmem:[%s1 + $0x1728] sm:$0xff]
  %v764 = vld [vmem:[%s1 + $0x1730] sm:$0xff]
  %v765 = vld [vmem:[%s1 + $0x1738] sm:$0xff]
  %v766 = vld [vmem:[%s1 + $0x1740] sm:$0xff]
  %v767 = vld [vmem:[%s1 + $0x1748] sm:$0xff]
  %v768 = vld [vmem:[%s1 + $0x1750] sm:$0xff]
  %v769 = vld [vmem:[%s1 + $0x1758] sm:$0xff]
  %v770 = vld [vmem:[%s1 + $0x1760] sm:$0xff]
  %v771 = vld [vmem:[%s1 + $0x1768] sm:$0xff]
  %v772 = vld [vmem:[%s1 + $0x1770] sm:$0xff]
  %v773 = vld [vmem:[%s1 + $0x1778] sm:$0xff]
  %v774 = vld [vmem:[%s1 + $0x1780] sm:$0xff]
  %v775 = vld [vmem:[%s1 + $0x1788] sm:$0xff]
  %v776 = vld [vmem:[%s1 + $0x1790] sm:$0xff]
  %v777 = vld [vmem:[%s1 + $0x1798] sm:$0xff]
  %v778 = vld [vmem:[%s1 + $0x17a0] sm:$0xff]
  %v779 = vld [vmem:[%s1 + $0x17a8] sm:$0xff]
  %v780 = vld [vmem:[%s1 + $0x17b0] sm:$0xff]
  %v781 = vld [vmem:[%s1 + $0x17b8] sm:$0xff]
  %v782 = vld [vmem:[%s1 + $0x17c0] sm:$0xff]
  %v783 = vld [vmem:[%s1 + $0x17c8] sm:$0xff]
  %v784 = vld [vmem:[%s1 + $0x17d0] sm:$0xff]
  %v785 = vld [vmem:[%s1 + $0x17d8] sm:$0xff]
  %v786 = vld [vmem:[%s1 + $0x17e0] sm:$0xff]
  %v787 = vld [vmem:[%s1 + $0x17e8] sm:$0xff]
  %v788 = vld [vmem:[%s1 + $0x17f0] sm:$0xff]
  %v789 = vld [vmem:[%s1 + $0x17f8] sm:$0xff]
  %v790 = vld [vmem:[%s1 + $0x1800] sm:$0xff]
  %v791 = vld [vmem:[%s1 + $0x1808] sm:$0xff]
  %v792 = vld [vmem:[%s1 + $0x1810] sm:$0xff]
  %v793 = vld [vmem:[%s1 + $0x1818] sm:$0xff]
  %v794 = vld [vmem:[%s1 + $0x1820] sm:$0xff]
  %v795 = vld [vmem:[%s1 + $0x1828] sm:$0xff]
  %v796 = vld [vmem:[%s1 + $0x1830] sm:$0xff]
  %v797 = vld [vmem:[%s1 + $0x1838] sm:$0xff]
  %v798 = vld [vmem:[%s1 + $0x1840] sm:$0xff]
  %v799 = vld [vmem:[%s1 + $0x1848] sm:$0xff]
  %v800 = vld [vmem:[%s1 + $0x1850] sm:$0xff]
  %v801 = vld [vmem:[%s1 + $0x1858] sm:$0xff]
  %v802 = vld [vmem:[%s1 + $0x1860] sm:$0xff]
  %v803 = vld [vmem:[%s1 + $0x1868] sm:$0xff]
  %v804 = vld [vmem:[%s1 + $0x1870] sm:$0xff]
  %v805 = vld [vmem:[%s1 + $0x1878] sm:$0xff]
  %v806 = vld [vmem:[%s1 + $0x1880] sm:$0xff]
  %v807 = vld [vmem:[%s1 + $0x1888] sm:$0xff]
  %v808 = vld [vmem:[%s1 + $0x1890] sm:$0xff]
  %v809 = vld [vmem:[%s1 + $0x1898] sm:$0xff]
  %v810 = vld [vmem:[%s1 + $0x18a0] sm:$0xff]
  %v811 = vld [vmem:[%s1 + $0x18a8] sm:$0xff]
  %v812 = vld [vmem:[%s1 + $0x18b0] sm:$0xff]
  %v813 = vld [vmem:[%s1 + $0x18b8] sm:$0xff]
  %v814 = vld [vmem:[%s1 + $0x18c0] sm:$0xff]
  %v815 = vld [vmem:[%s1 + $0x18c8] sm:$0xff]
  %v816 = vld [vmem:[%s1 + $0x18d0] sm:$0xff]
  %v817 = vld [vmem:[%s1 + $0x18d8] sm:$0xff]
  %v818 = vld [vmem:[%s1 + $0x18e0] sm:$0xff]
  %v819 = vld [vmem:[%s1 + $0x18e8] sm:$0xff]
  %v820 = vld [vmem:[%s1 + $0x18f0] sm:$0xff]
  %v821 = vld [vmem:[%s1 + $0x18f8] sm:$0xff]
  %v822 = vld [vmem:[%s1 + $0x1900] sm:$0xff]
  %v823 = vld [vmem:[%s1 + $0x1908] sm:$0xff]
  %v824 = vld [vmem:[%s1 + $0x1910] sm:$0xff]
  %v825 = vld [vmem:[%s1 + $0x1918] sm:$0xff]
  %v826 = vld [vmem:[%s1 + $0x1920] sm:$0xff]
  %v827 = vld [vmem:[%s1 + $0x1928] sm:$0xff]
  %v828 = vld [vmem:[%s1 + $0x1930] sm:$0xff]
  %v829 = vld [vmem:[%s1 + $0x1938] sm:$0xff]
  %v830 = vld [vmem:[%s1 + $0x1940] sm:$0xff]
  %v831 = vld [vmem:[%s1 + $0x1948] sm:$0xff]
  %v832 = vld [vmem:[%s1 + $0x1950] sm:$0xff]
  %v833 = vld [vmem:[%s1 + $0x1958] sm:$0xff]
  %v834 = vld [vmem:[%s1 + $0x1960] sm:$0xff]
  %v835 = vld [vmem:[%s1 + $0x1968] sm:$0xff]
  %v836 = vld [vmem:[%s1 + $0x1970] sm:$0xff]
  %v837 = vld [vmem:[%s1 + $0x1978] sm:$0xff]
  %v838 = vld [vmem:[%s1 + $0x1980] sm:$0xff]
  %v839 = vld [vmem:[%s1 + $0x1988] sm:$0xff]
  %v840 = vld [vmem:[%s1 + $0x1990] sm:$0xff]
  %v841 = vld [vmem:[%s1 + $0x1998] sm:$0xff]
  %v842 = vld [vmem:[%s1 + $0x19a0] sm:$0xff]
  %v843 = vld [vmem:[%s1 + $0x19a8] sm:$0xff]
  %v844 = vld [vmem:[%s1 + $0x19b0] sm:$0xff]
  %v845 = vld [vmem:[%s1 + $0x19b8] sm:$0xff]
  %v846 = vld [vmem:[%s1 + $0x19c0] sm:$0xff]
  %v847 = vld [vmem:[%s1 + $0x19c8] sm:$0xff]
  %v848 = vld [vmem:[%s1 + $0x19d0] sm:$0xff]
  %v849 = vld [vmem:[%s1 + $0x19d8] sm:$0xff]
  %v850 = vld [vmem:[%s1 + $0x19e0] sm:$0xff]
  %v851 = vld [vmem:[%s1 + $0x19e8] sm:$0xff]
  %v852 = vld [vmem:[%s1 + $0x19f0] sm:$0xff]
  %v853 = vld [vmem:[%s1 + $0x19f8] sm:$0xff]
  %v854 = vld [vmem:[%s1 + $0x1a00] sm:$0xff]
  %v855 = vld [vmem:[%s1 + $0x1a08] sm:$0xff]
  %v856 = vld [vmem:[%s1 + $0x1a10] sm:$0xff]
  %v857 = vld [vmem:[%s1 + $0x1a18] sm:$0xff]
  %v858 = vld [vmem:[%s1 + $0x1a20] sm:$0xff]
  %v859 = vld [vmem:[%s1 + $0x1a28] sm:$0xff]
  %v860 = vld [vmem:[%s1 + $0x1a30] sm:$0xff]
  %v861 = vld [vmem:[%s1 + $0x1a38] sm:$0xff]
  %v862 = vld [vmem:[%s1 + $0x1a40] sm:$0xff]
  %v863 = vld [vmem:[%s1 + $0x1a48] sm:$0xff]
  %v864 = vld [vmem:[%s1 + $0x1a50] sm:$0xff]
  %v865 = vld [vmem:[%s1 + $0x1a58] sm:$0xff]
  %v866 = vld [vmem:[%s1 + $0x1a60] sm:$0xff]
  %v867 = vld [vmem:[%s1 + $0x1a68] sm:$0xff]
  %v868 = vld [vmem:[%s1 + $0x1a70] sm:$0xff]
  %v869 = vld [vmem:[%s1 + $0x1a78] sm:$0xff]
  %v870 = vld [vmem:[%s1 + $0x1a80] sm:$0xff]
  %v871 = vld [vmem:[%s1 + $0x1a88] sm:$0xff]
  %v872 = vld [vmem:[%s1 + $0x1a90] sm:$0xff]
  %v873 = vld [vmem:[%s1 + $0x1a98] sm:$0xff]
  %v874 = vld [vmem:[%s1 + $0x1aa0] sm:$0xff]
  %v875 = vld [vmem:[%s1 + $0x1aa8] sm:$0xff]
  %v876 = vld [vmem:[%s1 + $0x1ab0] sm:$0xff]
  %v877 = vld [vmem:[%s1 + $0x1ab8] sm:$0xff]
  %v878 = vld [vmem:[%s1 + $0x1ac0] sm:$0xff]
  %v879 = vld [vmem:[%s1 + $0x1ac8] sm:$0xff]
  %v880 = vld [vmem:[%s1 + $0x1ad0] sm:$0xff]
  %v881 = vld [vmem:[%s1 + $0x1ad8] sm:$0xff]
  %v882 = vld [vmem:[%s1 + $0x1ae0] sm:$0xff]
  %v883 = vld [vmem:[%s1 + $0x1ae8] sm:$0xff]
  %v884 = vld [vmem:[%s1 + $0x1af0] sm:$0xff]
  %v885 = vld [vmem:[%s1 + $0x1af8] sm:$0xff]
  %v886 = vld [vmem:[%s1 + $0x1b00] sm:$0xff]
  %v887 = vld [vmem:[%s1 + $0x1b08] sm:$0xff]
  %v888 = vld [vmem:[%s1 + $0x1b10] sm:$0xff]
  %v889 = vld [vmem:[%s1 + $0x1b18] sm:$0xff]
  %v890 = vld [vmem:[%s1 + $0x1b20] sm:$0xff]
  %v891 = vld [vmem:[%s1 + $0x1b28] sm:$0xff]
  %v892 = vld [vmem:[%s1 + $0x1b30] sm:$0xff]
  %v893 = vld [vmem:[%s1 + $0x1b38] sm:$0xff]
  %v894 = vld [vmem:[%s1 + $0x1b40] sm:$0xff]
  %v895 = vld [vmem:[%s1 + $0x1b48] sm:$0xff]
  %v896 = vld [vmem:[%s1 + $0x1b50] sm:$0xff]
  %v897 = vld [vmem:[%s1 + $0x1b58] sm:$0xff]
  %v898 = vld [vmem:[%s1 + $0x1b60] sm:$0xff]
  %v899 = vld [vmem:[%s1 + $0x1b68] sm:$0xff]
  %v900 = vld [vmem:[%s1 + $0x1b70] sm:$0xff]
  %v901 = vld [vmem:[%s1 + $0x1b78] sm:$0xff]
  %v902 = vld [vmem:[%s1 + $0x1b80] sm:$0xff]
  %v903 = vld [vmem:[%s1 + $0x1b88] sm:$0xff]
  %v904 = vld [vmem:[%s1 + $0x1b90] sm:$0xff]
  %v905 = vld [vmem:[%s1 + $0x1b98] sm:$0xff]
  %v906 = vld [vmem:[%s1 + $0x1ba0] sm:$0xff]
  %v907 = vld [vmem:[%s1 + $0x1ba8] sm:$0xff]
  %v908 = vld [vmem:[%s1 + $0x1bb0] sm:$0xff]
  %v909 = vld [vmem:[%s1 + $0x1bb8] sm:$0xff]
  %v910 = vld [vmem:[%s1 + $0x1bc0] sm:$0xff]
  %v911 = vld [vmem:[%s1 + $0x1bc8] sm:$0xff]
  %v912 = vld [vmem:[%s1 + $0x1bd0] sm:$0xff]
  %v913 = vld [vmem:[%s1 + $0x1bd8] sm:$0xff]
  %v914 = vld [vmem:[%s1 + $0x1be0] sm:$0xff]
  %v915 = vld [vmem:[%s1 + $0x1be8] sm:$0xff]
  %v916 = vld [vmem:[%s1 + $0x1bf0] sm:$0xff]
  %v917 = vld [vmem:[%s1 + $0x1bf8] sm:$0xff]
  %v918 = vld [vmem:[%s1 + $0x1c00] sm:$0xff]
  %v919 = vld [vmem:[%s1 + $0x1c08] sm:$0xff]
  %v920 = vld [vmem:[%s1 + $0x1c10] sm:$0xff]
  %v921 = vld [vmem:[%s1 + $0x1c18] sm:$0xff]
  %v922 = vld [vmem:[%s1 + $0x1c20] sm:$0xff]
  %v923 = vld [vmem:[%s1 + $0x1c28] sm:$0xff]
  %v924 = vld [vmem:[%s1 + $0x1c30] sm:$0xff]
  %v925 = vld [vmem:[%s1 + $0x1c38] sm:$0xff]
  %v926 = vld [vmem:[%s1 + $0x1c40] sm:$0xff]
  %v927 = vld [vmem:[%s1 + $0x1c48] sm:$0xff]
  %v928 = vld [vmem:[%s1 + $0x1c50] sm:$0xff]
  %v929 = vld [vmem:[%s1 + $0x1c58] sm:$0xff]
  %v930 = vld [vmem:[%s1 + $0x1c60] sm:$0xff]
  %v931 = vld [vmem:[%s1 + $0x1c68] sm:$0xff]
  %v932 = vld [vmem:[%s1 + $0x1c70] sm:$0xff]
  %v933 = vld [vmem:[%s1 + $0x1c78] sm:$0xff]
  %v934 = vld [vmem:[%s1 + $0x1c80] sm:$0xff]
  %v935 = vld [vmem:[%s1 + $0x1c88] sm:$0xff]
  %v936 = vld [vmem:[%s1 + $0x1c90] sm:$0xff]
  %v937 = vld [vmem:[%s1 + $0x1c98] sm:$0xff]
  %v938 = vld [vmem:[%s1 + $0x1ca0] sm:$0xff]
  %v939 = vld [vmem:[%s1 + $0x1ca8] sm:$0xff]
  %v940 = vld [vmem:[%s1 + $0x1cb0] sm:$0xff]
  %v941 = vld [vmem:[%s1 + $0x1cb8] sm:$0xff]
  %v942 = vld [vmem:[%s1 + $0x1cc0] sm:$0xff]
  %v943 = vld [vmem:[%s1 + $0x1cc8] sm:$0xff]
  %v944 = vld [vmem:[%s1 + $0x1cd0] sm:$0xff]
  %v945 = vld [vmem:[%s1 + $0x1cd8] sm:$0xff]
  %v946 = vld [vmem:[%s1 + $0x1ce0] sm:$0xff]
  %v947 = vld [vmem:[%s1 + $0x1ce8] sm:$0xff]
  %v948 = vld [vmem:[%s1 + $0x1cf0] sm:$0xff]
  %v949 = vld [vmem:[%s1 + $0x1cf8] sm:$0xff]
  %v950 = vld [vmem:[%s1 + $0x1d00] sm:$0xff]
  %v951 = vld [vmem:[%s1 + $0x1d08] sm:$0xff]
  %v952 = vld [vmem:[%s1 + $0x1d10] sm:$0xff]
  %v953 = vld [vmem:[%s1 + $0x1d18] sm:$0xff]
  %v954 = vld [vmem:[%s1 + $0x1d20] sm:$0xff]
  %v955 = vld [vmem:[%s1 + $0x1d28] sm:$0xff]
  %v956 = vld [vmem:[%s1 + $0x1d30] sm:$0xff]
  %v957 = vld [vmem:[%s1 + $0x1d38] sm:$0xff]
  %v958 = vld [vmem:[%s1 + $0x1d40] sm:$0xff]
  %v959 = vld [vmem:[%s1 + $0x1d48] sm:$0xff]
  %v960 = vld [vmem:[%s1 + $0x1d50] sm:$0xff]
  %v961 = vld [vmem:[%s1 + $0x1d58] sm:$0xff]
  %v962 = vld [vmem:[%s1 + $0x1d60] sm:$0xff]
  %v963 = vld [vmem:[%s1 + $0x1d68] sm:$0xff]
  %v964 = vld [vmem:[%s1 + $0x1d70] sm:$0xff]
  %v965 = vld [vmem:[%s1 + $0x1d78] sm:$0xff]
  %v966 = vld [vmem:[%s1 + $0x1d80] sm:$0xff]
  %v967 = vld [vmem:[%s1 + $0x1d88] sm:$0xff]
  %v968 = vld [vmem:[%s1 + $0x1d90] sm:$0xff]
  %v969 = vld [vmem:[%s1 + $0x1d98] sm:$0xff]
  %v970 = vld [vmem:[%s1 + $0x1da0] sm:$0xff]
  %v971 = vld [vmem:[%s1 + $0x1da8] sm:$0xff]
  %v972 = vld [vmem:[%s1 + $0x1db0] sm:$0xff]
  %v973 = vld [vmem:[%s1 + $0x1db8] sm:$0xff]
  %v974 = vld [vmem:[%s1 + $0x1dc0] sm:$0xff]
  %v975 = vld [vmem:[%s1 + $0x1dc8] sm:$0xff]
  %v976 = vld [vmem:[%s1 + $0x1dd0] sm:$0xff]
  %v977 = vld [vmem:[%s1 + $0x1dd8] sm:$0xff]
  %v978 = vld [vmem:[%s1 + $0x1de0] sm:$0xff]
  %v979 = vld [vmem:[%s1 + $0x1de8] sm:$0xff]
  %v980 = vld [vmem:[%s1 + $0x1df0] sm:$0xff]
  %v981 = vld [vmem:[%s1 + $0x1df8] sm:$0xff]
  %v982 = vld [vmem:[%s1 + $0x1e00] sm:$0xff]
  %v983 = vld [vmem:[%s1 + $0x1e08] sm:$0xff]
  %v984 = vld [vmem:[%s1 + $0x1e10] sm:$0xff]
  %v985 = vld [vmem:[%s1 + $0x1e18] sm:$0xff]
  %v986 = vld [vmem:[%s1 + $0x1e20] sm:$0xff]
  %v987 = vld [vmem:[%s1 + $0x1e28] sm:$0xff]
  %v988 = vld [vmem:[%s1 + $0x1e30] sm:$0xff]
  %v989 = vld [vmem:[%s1 + $0x1e38] sm:$0xff]
  %v990 = vld [vmem:[%s1 + $0x1e40] sm:$0xff]
  %v991 = vld [vmem:[%s1 + $0x1e48] sm:$0xff]
  %v992 = vld [vmem:[%s1 + $0x1e50] sm:$0xff]
  %v993 = vld [vmem:[%s1 + $0x1e58] sm:$0xff]
  %v994 = vld [vmem:[%s1 + $0x1e60] sm:$0xff]
  %v995 = vld [vmem:[%s1 + $0x1e68] sm:$0xff]
  %v996 = vld [vmem:[%s1 + $0x1e70] sm:$0xff]
  %v997 = vld [vmem:[%s1 + $0x1e78] sm:$0xff]
  %v998 = vld [vmem:[%s1 + $0x1e80] sm:$0xff]
  %v999 = vld [vmem:[%s1 + $0x1e88] sm:$0xff]
  %v1000 = vld [vmem:[%s1 + $0x1e90] sm:$0xff]
  %v1001 = vld [vmem:[%s1 + $0x1e98] sm:$0xff]
  %v1002 = vld [vmem:[%s1 + $0x1ea0] sm:$0xff]
  %v1003 = vld [vmem:[%s1 + $0x1ea8] sm:$0xff]
  %v1004 = vld [vmem:[%s1 + $0x1eb0] sm:$0xff]
  %v1005 = vld [vmem:[%s1 + $0x1eb8] sm:$0xff]
  %v1006 = vld [vmem:[%s1 + $0x1ec0] sm:$0xff]
  %v1007 = vld [vmem:[%s1 + $0x1ec8] sm:$0xff]
  %v1008 = vld [vmem:[%s1 + $0x1ed0] sm:$0xff]
  %v1009 = vld [vmem:[%s1 + $0x1ed8] sm:$0xff]
  %v1010 = vld [vmem:[%s1 + $0x1ee0] sm:$0xff]
  %v1011 = vld [vmem:[%s1 + $0x1ee8] sm:$0xff]
  %v1012 = vld [vmem:[%s1 + $0x1ef0] sm:$0xff]
  %v1013 = vld [vmem:[%s1 + $0x1ef8] sm:$0xff]
  %v1014 = vld [vmem:[%s1 + $0x1f00] sm:$0xff]
  %v1015 = vld [vmem:[%s1 + $0x1f08] sm:$0xff]
  %v1016 = vld [vmem:[%s1 + $0x1f10] sm:$0xff]
  %v1017 = vld [vmem:[%s1 + $0x1f18] sm:$0xff]
  %v1018 = vld [vmem:[%s1 + $0x1f20] sm:$0xff]
  %v1019 = vld [vmem:[%s1 + $0x1f28] sm:$0xff]
  %v1020 = vld [vmem:[%s1 + $0x1f30] sm:$0xff]
  %v1021 = vld [vmem:[%s1 + $0x1f38] sm:$0xff]
  %v1022 = vld [vmem:[%s1 + $0x1f40] sm:$0xff]
  %v1023 = vld [vmem:[%s1 + $0x1f48] sm:$0xff]
  %v1024 = vld [vmem:[%s1 + $0x1f50] sm:$0xff]
  %v1025 = vld [vmem:[%s1 + $0x1f58] sm:$0xff]
  %v1026 = vld [vmem:[%s1 + $0x1f60] sm:$0xff]
  %v1027 = vld [vmem:[%s1 + $0x1f68] sm:$0xff]
  %v1028 = vld [vmem:[%s1 + $0x1f70] sm:$0xff]
  %v1029 = vld [vmem:[%s1 + $0x1f78] sm:$0xff]
  %v1030 = vld [vmem:[%s1 + $0x1f80] sm:$0xff]
  %v1031 = vld [vmem:[%s1 + $0x1f88] sm:$0xff]
  %v1032 = vld [vmem:[%s1 + $0x1f90] sm:$0xff]
  %v1033 = vld [vmem:[%s1 + $0x1f98] sm:$0xff]
  %v1034 = vld [vmem:[%s1 + $0x1fa0] sm:$0xff]
  %v1035 = vld [vmem:[%s1 + $0x1fa8] sm:$0xff]
  %v1036 = vld [vmem:[%s1 + $0x1fb0] sm:$0xff]
  %v1037 = vld [vmem:[%s1 + $0x1fb8] sm:$0xff]
  %v1038 = vld [vmem:[%s1 + $0x1fc0] sm:$0xff]
  %v1039 = vld [vmem:[%s1 + $0x1fc8] sm:$0xff]
  %v1040 = vld [vmem:[%s1 + $0x1fd0] sm:$0xff]
  %v1041 = vld [vmem:[%s1 + $0x1fd8] sm:$0xff]
  %v1042 = vld [vmem:[%s1 + $0x1fe0] sm:$0xff]
  %v1043 = vld [vmem:[%s1 + $0x1fe8] sm:$0xff]
  %v1044 = vld [vmem:[%s1 + $0x1ff0] sm:$0xff]
  %v1045 = vld [vmem:[%s1 + $0x1ff8] sm:$0xff]
  %v1046 = vld [vmem:[%s1 + $0x2000] sm:$0xff]
  %v1047 = vld [vmem:[%s1 + $0x2008] sm:$0xff]
  %v1048 = vld [vmem:[%s1 + $0x2010] sm:$0xff]
  %v1049 = vld [vmem:[%s1 + $0x2018] sm:$0xff]
  %v1050 = vld [vmem:[%s1 + $0x2020] sm:$0xff]
  %v1051 = vld [vmem:[%s1 + $0x2028] sm:$0xff]
  %v1052 = vld [vmem:[%s1 + $0x2030] sm:$0xff]
  %v1053 = vld [vmem:[%s1 + $0x2038] sm:$0xff]
  %v1054 = vld [vmem:[%s1 + $0x2040] sm:$0xff]
  %v1055 = vld [vmem:[%s1 + $0x2048] sm:$0xff]
  %v1056 = vld [vmem:[%s1 + $0x2050] sm:$0xff]
  %v1057 = vld [vmem:[%s1 + $0x2058] sm:$0xff]
  %v1058 = vld [vmem:[%s1 + $0x2060] sm:$0xff]
  %v1059 = vld [vmem:[%s1 + $0x2068] sm:$0xff]
  %v1060 = vld [vmem:[%s1 + $0x2070] sm:$0xff]
  %v1061 = vld [vmem:[%s1 + $0x2078] sm:$0xff]
  %v1062 = vld [vmem:[%s1 + $0x2080] sm:$0xff]
  %v1063 = vld [vmem:[%s1 + $0x2088] sm:$0xff]
  %v1064 = vld [vmem:[%s1 + $0x2090] sm:$0xff]
  %v1065 = vld [vmem:[%s1 + $0x2098] sm:$0xff]
  %v1066 = vld [vmem:[%s1 + $0x20a0] sm:$0xff]
  %v1067 = vld [vmem:[%s1 + $0x20a8] sm:$0xff]
  %v1068 = vld [vmem:[%s1 + $0x20b0] sm:$0xff]
  %v1069 = vld [vmem:[%s1 + $0x20b8] sm:$0xff]
  %v1070 = vld [vmem:[%s1 + $0x20c0] sm:$0xff]
  %v1071 = vld [vmem:[%s1 + $0x20c8] sm:$0xff]
  %v1072 = vld [vmem:[%s1 + $0x20d0] sm:$0xff]
  %v1073 = vld [vmem:[%s1 + $0x20d8] sm:$0xff]
  %v1074 = vld [vmem:[%s1 + $0x20e0] sm:$0xff]
  %v1075 = vld [vmem:[%s1 + $0x20e8] sm:$0xff]
  %v1076 = vld [vmem:[%s1 + $0x20f0] sm:$0xff]
  %v1077 = vld [vmem:[%s1 + $0x20f8] sm:$0xff]
  %v1078 = vld [vmem:[%s1 + $0x2100] sm:$0xff]
  %v1079 = vld [vmem:[%s1 + $0x2108] sm:$0xff]
  %v1080 = vld [vmem:[%s1 + $0x2110] sm:$0xff]
  %v1081 = vld [vmem:[%s1 + $0x2118] sm:$0xff]
  %v1082 = vld [vmem:[%s1 + $0x2120] sm:$0xff]
  %v1083 = vld [vmem:[%s1 + $0x2128] sm:$0xff]
  %v1084 = vld [vmem:[%s1 + $0x2130] sm:$0xff]
  %v1085 = vld [vmem:[%s1 + $0x2138] sm:$0xff]
  %v1086 = vld [vmem:[%s1 + $0x2140] sm:$0xff]
  %v1087 = vld [vmem:[%s1 + $0x2148] sm:$0xff]
  %v1088 = vld [vmem:[%s1 + $0x2150] sm:$0xff]
  %v1089 = vld [vmem:[%s1 + $0x2158] sm:$0xff]
  %v1090 = vld [vmem:[%s1 + $0x2160] sm:$0xff]
  %v1091 = vld [vmem:[%s1 + $0x2168] sm:$0xff]
  %v1092 = vld [vmem:[%s1 + $0x2170] sm:$0xff]
  %v1093 = vld [vmem:[%s1 + $0x2178] sm:$0xff]
  %v1094 = vld [vmem:[%s1 + $0x2180] sm:$0xff]
  %v1095 = vld [vmem:[%s1 + $0x2188] sm:$0xff]
  %v1096 = vld [vmem:[%s1 + $0x2190] sm:$0xff]
  %v1097 = vld [vmem:[%s1 + $0x2198] sm:$0xff]
  %v1098 = vld [vmem:[%s1 + $0x21a0] sm:$0xff]
  %v1099 = vld [vmem:[%s1 + $0x21a8] sm:$0xff]
  %v1100 = vld [vmem:[%s1 + $0x21b0] sm:$0xff]
  %v1101 = vld [vmem:[%s1 + $0x21b8] sm:$0xff]
  %v1102 = vld [vmem:[%s1 + $0x21c0] sm:$0xff]
  %v1103 = vld [vmem:[%s1 + $0x21c8] sm:$0xff]
  %v1104 = vld [vmem:[%s1 + $0x21d0] sm:$0xff]
  %v1105 = vld [vmem:[%s1 + $0x21d8] sm:$0xff]
  %v1106 = vld [vmem:[%s1 + $0x21e0] sm:$0xff]
  %v1107 = vld [vmem:[%s1 + $0x21e8] sm:$0xff]
  %v1108 = vld [vmem:[%s1 + $0x21f0] sm:$0xff]
  %v1109 = vld [vmem:[%s1 + $0x21f8] sm:$0xff]
  %v1110 = vld [vmem:[%s1 + $0x2200] sm:$0xff]
  %v1111 = vld [vmem:[%s1 + $0x2208] sm:$0xff]
  %v1112 = vld [vmem:[%s1 + $0x2210] sm:$0xff]
  %v1113 = vld [vmem:[%s1 + $0x2218] sm:$0xff]
  %v1114 = vld [vmem:[%s1 + $0x2220] sm:$0xff]
  %v1115 = vld [vmem:[%s1 + $0x2228] sm:$0xff]
  %v1116 = vld [vmem:[%s1 + $0x2230] sm:$0xff]
  %v1117 = vld [vmem:[%s1 + $0x2238] sm:$0xff]
  %v1118 = vld [vmem:[%s1 + $0x2240] sm:$0xff]
  %v1119 = vld [vmem:[%s1 + $0x2248] sm:$0xff]
  %v1120 = vld [vmem:[%s1 + $0x2250] sm:$0xff]
  %v1121 = vld [vmem:[%s1 + $0x2258] sm:$0xff]
  %v1122 = vld [vmem:[%s1 + $0x2260] sm:$0xff]
  %v1123 = vld [vmem:[%s1 + $0x2268] sm:$0xff]
  %v1124 = vld [vmem:[%s1 + $0x2270] sm:$0xff]
  %v1125 = vld [vmem:[%s1 + $0x2278] sm:$0xff]
  %v1126 = vld [vmem:[%s1 + $0x2280] sm:$0xff]
  %v1127 = vld [vmem:[%s1 + $0x2288] sm:$0xff]
  %v1128 = vld [vmem:[%s1 + $0x2290] sm:$0xff]
  %v1129 = vld [vmem:[%s1 + $0x2298] sm:$0xff]
  %v1130 = vld [vmem:[%s1 + $0x22a0] sm:$0xff]
  %v1131 = vld [vmem:[%s1 + $0x22a8] sm:$0xff]
  %v1132 = vld [vmem:[%s1 + $0x22b0] sm:$0xff]
  %v1133 = vld [vmem:[%s1 + $0x22b8] sm:$0xff]
  %v1134 = vld [vmem:[%s1 + $0x22c0] sm:$0xff]
  %v1135 = vld [vmem:[%s1 + $0x22c8] sm:$0xff]
  %v1136 = vld [vmem:[%s1 + $0x22d0] sm:$0xff]
  %v1137 = vld [vmem:[%s1 + $0x22d8] sm:$0xff]
  %v1138 = vld [vmem:[%s1 + $0x22e0] sm:$0xff]
  %v1139 = vld [vmem:[%s1 + $0x22e8] sm:$0xff]
  %v1140 = vld [vmem:[%s1 + $0x22f0] sm:$0xff]
  %v1141 = vld [vmem:[%s1 + $0x22f8] sm:$0xff]
  %v1142 = vld [vmem:[%s1 + $0x2300] sm:$0xff]
  %v1143 = vld [vmem:[%s1 + $0x2308] sm:$0xff]
  %v1144 = vld [vmem:[%s1 + $0x2310] sm:$0xff]
  %v1145 = vld [vmem:[%s1 + $0x2318] sm:$0xff]
  %v1146 = vld [vmem:[%s1 + $0x2320] sm:$0xff]
  %v1147 = vld [vmem:[%s1 + $0x2328] sm:$0xff]
  %v1148 = vld [vmem:[%s1 + $0x2330] sm:$0xff]
  %v1149 = vld [vmem:[%s1 + $0x2338] sm:$0xff]
  %v1150 = vld [vmem:[%s1 + $0x2340] sm:$0xff]
  %v1151 = vld [vmem:[%s1 + $0x2348] sm:$0xff]
  %v1152 = vld [vmem:[%s1 + $0x2350] sm:$0xff]
  %v1153 = vld [vmem:[%s1 + $0x2358] sm:$0xff]
  %v1154 = vld [vmem:[%s1 + $0x2360] sm:$0xff]
  %v1155 = vld [vmem:[%s1 + $0x2368] sm:$0xff]
  %v1156 = vld [vmem:[%s1 + $0x2370] sm:$0xff]
  %v1157 = vld [vmem:[%s1 + $0x2378] sm:$0xff]
  %v1158 = vld [vmem:[%s1 + $0x2380] sm:$0xff]
  %v1159 = vld [vmem:[%s1 + $0x2388] sm:$0xff]
  %v1160 = vld [vmem:[%s1 + $0x2390] sm:$0xff]
  %v1161 = vld [vmem:[%s1 + $0x2398] sm:$0xff]
  %v1162 = vld [vmem:[%s1 + $0x23a0] sm:$0xff]
  %v1163 = vld [vmem:[%s1 + $0x23a8] sm:$0xff]
  %v1164 = vld [vmem:[%s1 + $0x23b0] sm:$0xff]
  %v1165 = vld [vmem:[%s1 + $0x23b8] sm:$0xff]
  %v1166 = vld [vmem:[%s1 + $0x23c0] sm:$0xff]
  %v1167 = vld [vmem:[%s1 + $0x23c8] sm:$0xff]
  %v1168 = vld [vmem:[%s1 + $0x23d0] sm:$0xff]
  %v1169 = vld [vmem:[%s1 + $0x23d8] sm:$0xff]
  %v1170 = vld [vmem:[%s1 + $0x23e0] sm:$0xff]
  %v1171 = vld [vmem:[%s1 + $0x23e8] sm:$0xff]
  %v1172 = vld [vmem:[%s1 + $0x23f0] sm:$0xff]
  %v1173 = vld [vmem:[%s1 + $0x23f8] sm:$0xff]
  %v1174 = vld [vmem:[%s1 + $0x2400] sm:$0xff]
  %v1175 = vld [vmem:[%s1 + $0x2408] sm:$0xff]
  %v1176 = vld [vmem:[%s1 + $0x2410] sm:$0xff]
  %v1177 = vld [vmem:[%s1 + $0x2418] sm:$0xff]
  %v1178 = vld [vmem:[%s1 + $0x2420] sm:$0xff]
  %v1179 = vld [vmem:[%s1 + $0x2428] sm:$0xff]
  %v1180 = vld [vmem:[%s1 + $0x2430] sm:$0xff]
  %v1181 = vld [vmem:[%s1 + $0x2438] sm:$0xff]
  %v1182 = vld [vmem:[%s1 + $0x2440] sm:$0xff]
  %v1183 = vld [vmem:[%s1 + $0x2448] sm:$0xff]
  %v1184 = vld [vmem:[%s1 + $0x2450] sm:$0xff]
  %v1185 = vld [vmem:[%s1 + $0x2458] sm:$0xff]
  %v1186 = vld [vmem:[%s1 + $0x2460] sm:$0xff]
  %v1187 = vld [vmem:[%s1 + $0x2468] sm:$0xff]
  %v1188 = vld [vmem:[%s1 + $0x2470] sm:$0xff]
  %v1189 = vld [vmem:[%s1 + $0x2478] sm:$0xff]
  %v1190 = vld [vmem:[%s1 + $0x2480] sm:$0xff]
  %v1191 = vld [vmem:[%s1 + $0x2488] sm:$0xff]
  %v1192 = vld [vmem:[%s1 + $0x2490] sm:$0xff]
  %v1193 = vld [vmem:[%s1 + $0x2498] sm:$0xff]
  %v1194 = vld [vmem:[%s1 + $0x24a0] sm:$0xff]
  %v1195 = vld [vmem:[%s1 + $0x24a8] sm:$0xff]
  %v1196 = vld [vmem:[%s1 + $0x24b0] sm:$0xff]
  %v1197 = vld [vmem:[%s1 + $0x24b8] sm:$0xff]
  %v1198 = vld [vmem:[%s1 + $0x24c0] sm:$0xff]
  %v1199 = vld [vmem:[%s1 + $0x24c8] sm:$0xff]
  %v1200 = vld [vmem:[%s1 + $0x24d0] sm:$0xff]
  %v1201 = vld [vmem:[%s1 + $0x24d8] sm:$0xff]
  %v1202 = vld [vmem:[%s1 + $0x24e0] sm:$0xff]
  %v1203 = vld [vmem:[%s1 + $0x24e8] sm:$0xff]
  %v1204 = vld [vmem:[%s1 + $0x24f0] sm:$0xff]
  %v1205 = vld [vmem:[%s1 + $0x24f8] sm:$0xff]
  %v1206 = vld [vmem:[%s1 + $0x2500] sm:$0xff]
  %v1207 = vld [vmem:[%s1 + $0x2508] sm:$0xff]
  %v1208 = vld [vmem:[%s1 + $0x2510] sm:$0xff]
  %v1209 = vld [vmem:[%s1 + $0x2518] sm:$0xff]
  %v1210 = vld [vmem:[%s1 + $0x2520] sm:$0xff]
  %v1211 = vld [vmem:[%s1 + $0x2528] sm:$0xff]
  %v1212 = vld [vmem:[%s1 + $0x2530] sm:$0xff]
  %v1213 = vld [vmem:[%s1 + $0x2538] sm:$0xff]
  %v1214 = vld [vmem:[%s1 + $0x2540] sm:$0xff]
  %v1215 = vld [vmem:[%s1 + $0x2548] sm:$0xff]
  %v1216 = vld [vmem:[%s1 + $0x2550] sm:$0xff]
  %v1217 = vld [vmem:[%s1 + $0x2558] sm:$0xff]
  %v1218 = vld [vmem:[%s1 + $0x2560] sm:$0xff]
  %v1219 = vld [vmem:[%s1 + $0x2568] sm:$0xff]
  %v1220 = vld [vmem:[%s1 + $0x2570] sm:$0xff]
  %v1221 = vld [vmem:[%s1 + $0x2578] sm:$0xff]
  %v1222 = vld [vmem:[%s1 + $0x2580] sm:$0xff]
  %v1223 = vld [vmem:[%s1 + $0x2588] sm:$0xff]
  %v1224 = vld [vmem:[%s1 + $0x2590] sm:$0xff]
  %v1225 = vld [vmem:[%s1 + $0x2598] sm:$0xff]
  %v1226 = vld [vmem:[%s1 + $0x25a0] sm:$0xff]
  %v1227 = vld [vmem:[%s1 + $0x25a8] sm:$0xff]
  %v1228 = vld [vmem:[%s1 + $0x25b0] sm:$0xff]
  %v1229 = vld [vmem:[%s1 + $0x25b8] sm:$0xff]
  %v1230 = vld [vmem:[%s1 + $0x25c0] sm:$0xff]
  %v1231 = vld [vmem:[%s1 + $0x25c8] sm:$0xff]
  %v1232 = vld [vmem:[%s1 + $0x25d0] sm:$0xff]
  %v1233 = vld [vmem:[%s1 + $0x25d8] sm:$0xff]
  %v1234 = vld [vmem:[%s1 + $0x25e0] sm:$0xff]
  %v1235 = vld [vmem:[%s1 + $0x25e8] sm:$0xff]
  %v1236 = vld [vmem:[%s1 + $0x25f0] sm:$0xff]
  %v1237 = vld [vmem:[%s1 + $0x25f8] sm:$0xff]
  %v1238 = vld [vmem:[%s1 + $0x2600] sm:$0xff]
  %v1239 = vld [vmem:[%s1 + $0x2608] sm:$0xff]
  %v1240 = vld [vmem:[%s1 + $0x2610] sm:$0xff]
  %v1241 = vld [vmem:[%s1 + $0x2618] sm:$0xff]
  %v1242 = vld [vmem:[%s1 + $0x2620] sm:$0xff]
  %v1243 = vld [vmem:[%s1 + $0x2628] sm:$0xff]
  %v1244 = vld [vmem:[%s1 + $0x2630] sm:$0xff]
  %v1245 = vld [vmem:[%s1 + $0x2638] sm:$0xff]
  %v1246 = vld [vmem:[%s1 + $0x2640] sm:$0xff]
  %v1247 = vld [vmem:[%s1 + $0x2648] sm:$0xff]
  %v1248 = vld [vmem:[%s1 + $0x2650] sm:$0xff]
  %v1249 = vld [vmem:[%s1 + $0x2658] sm:$0xff]
  %v1250 = vld [vmem:[%s1 + $0x2660] sm:$0xff]
  %v1251 = vld [vmem:[%s1 + $0x2668] sm:$0xff]
  %v1252 = vld [vmem:[%s1 + $0x2670] sm:$0xff]
  %v1253 = vld [vmem:[%s1 + $0x2678] sm:$0xff]
  %v1254 = vld [vmem:[%s1 + $0x2680] sm:$0xff]
  %v1255 = vld [vmem:[%s1 + $0x2688] sm:$0xff]
  %v1256 = vld [vmem:[%s1 + $0x2690] sm:$0xff]
  %v1257 = vld [vmem:[%s1 + $0x2698] sm:$0xff]
  %v1258 = vld [vmem:[%s1 + $0x26a0] sm:$0xff]
  %v1259 = vld [vmem:[%s1 + $0x26a8] sm:$0xff]
  %v1260 = vld [vmem:[%s1 + $0x26b0] sm:$0xff]
  %v1261 = vld [vmem:[%s1 + $0x26b8] sm:$0xff]
  %v1262 = vld [vmem:[%s1 + $0x26c0] sm:$0xff]
  %v1263 = vld [vmem:[%s1 + $0x26c8] sm:$0xff]
  %v1264 = vld [vmem:[%s1 + $0x26d0] sm:$0xff]
  %v1265 = vld [vmem:[%s1 + $0x26d8] sm:$0xff]
  %v1266 = vld [vmem:[%s1 + $0x26e0] sm:$0xff]
  %v1267 = vld [vmem:[%s1 + $0x26e8] sm:$0xff]
  %v1268 = vld [vmem:[%s1 + $0x26f0] sm:$0xff]
  %v1269 = vld [vmem:[%s1 + $0x26f8] sm:$0xff]
  %v1270 = vld [vmem:[%s1 + $0x2700] sm:$0xff]
  %v1271 = vld [vmem:[%s1 + $0x2708] sm:$0xff]
  %v1272 = vld [vmem:[%s1 + $0x2710] sm:$0xff]
  %v1273 = vld [vmem:[%s1 + $0x2718] sm:$0xff]
  %v1274 = vld [vmem:[%s1 + $0x2720] sm:$0xff]
  %v1275 = vld [vmem:[%s1 + $0x2728] sm:$0xff]
  %v1276 = vld [vmem:[%s1 + $0x2730] sm:$0xff]
  %v1277 = vld [vmem:[%s1 + $0x2738] sm:$0xff]
  %v1278 = vld [vmem:[%s1 + $0x2740] sm:$0xff]
  %v1279 = vld [vmem:[%s1 + $0x2748] sm:$0xff]
  %v1280 = vld [vmem:[%s1 + $0x2750] sm:$0xff]
  %v1281 = vld [vmem:[%s1 + $0x2758] sm:$0xff]
  %v1282 = vld [vmem:[%s1 + $0x2760] sm:$0xff]
  %v1283 = vld [vmem:[%s1 + $0x2768] sm:$0xff]
  %v1284 = vld [vmem:[%s1 + $0x2770] sm:$0xff]
  %v1285 = vld [vmem:[%s1 + $0x2778] sm:$0xff]
  %v1286 = vld [vmem:[%s1 + $0x2780] sm:$0xff]
  %v1287 = vld [vmem:[%s1 + $0x2788] sm:$0xff]
  %v1288 = vld [vmem:[%s1 + $0x2790] sm:$0xff]
  %v1289 = vld [vmem:[%s1 + $0x2798] sm:$0xff]
  %v1290 = vld [vmem:[%s1 + $0x27a0] sm:$0xff]
  %v1291 = vld [vmem:[%s1 + $0x27a8] sm:$0xff]
  %v1292 = vld [vmem:[%s1 + $0x27b0] sm:$0xff]
  %v1293 = vld [vmem:[%s1 + $0x27b8] sm:$0xff]
  %v1294 = vld [vmem:[%s1 + $0x27c0] sm:$0xff]
  %v1295 = vld [vmem:[%s1 + $0x27c8] sm:$0xff]
  %v1296 = vld [vmem:[%s2] sm:$0xff]
  %v1297 = vld [vmem:[%s2 + $0x8] sm:$0x1f]
  %v1300 = vlaneseq
  %v1301 = vshrl.u32 %v1300, 7
  %v1302 = vsub.s32 0, %v1301
  %v1303 = vrot.slane %v1296, %v1302
  %v1304 = vlaneseq
  %v1305 = vshrl.u32 %v1304, 7
  %v1306 = vsub.s32 1, %v1305
  %v1307 = vrot.slane %v1296, %v1306
  %v1308 = vlaneseq
  %v1309 = vshrl.u32 %v1308, 7
  %v1310 = vsub.s32 2, %v1309
  %v1311 = vrot.slane %v1296, %v1310
  %v1312 = vlaneseq
  %v1313 = vshrl.u32 %v1312, 7
  %v1314 = vsub.s32 3, %v1313
  %v1315 = vrot.slane %v1296, %v1314
  %v1316 = vlaneseq
  %v1317 = vshrl.u32 %v1316, 7
  %v1318 = vsub.s32 4, %v1317
  %v1319 = vrot.slane %v1296, %v1318
  %v1320 = vlaneseq
  %v1321 = vshrl.u32 %v1320, 7
  %v1322 = vsub.s32 5, %v1321
  %v1323 = vrot.slane %v1296, %v1322
  %v1324 = vlaneseq
  %v1325 = vshrl.u32 %v1324, 7
  %v1326 = vsub.s32 6, %v1325
  %v1327 = vrot.slane %v1296, %v1326
  %v1328 = vlaneseq
  %v1329 = vshrl.u32 %v1328, 7
  %v1330 = vsub.s32 7, %v1329
  %v1331 = vrot.slane %v1296, %v1330
  %v1332 = vlaneseq
  %v1333 = vshrl.u32 %v1332, 7
  %v1334 = vsub.s32 0, %v1333
  %v1335 = vrot.slane %v1297, %v1334
  %v1336 = vlaneseq
  %v1337 = vshrl.u32 %v1336, 7
  %v1338 = vsub.s32 1, %v1337
  %v1339 = vrot.slane %v1297, %v1338
  %v1340 = vlaneseq
  %v1341 = vshrl.u32 %v1340, 7
  %v1342 = vsub.s32 2, %v1341
  %v1343 = vrot.slane %v1297, %v1342
  %v1344 = vlaneseq
  %v1345 = vshrl.u32 %v1344, 7
  %v1346 = vsub.s32 3, %v1345
  %v1347 = vrot.slane %v1297, %v1346
  %v1348 = vlaneseq
  %v1349 = vshrl.u32 %v1348, 7
  %v1350 = vsub.s32 4, %v1349
  %v1351 = vrot.slane %v1297, %v1350
  %v1367 = vcombine.high %v20, %v20
  %v1369 = vunpack.c.l.s4 1983009808
  %v1370 = vunpack.c.0.s8 %v1369
  %v1371 = vlaneseq
  %v1372 = vshrl.u32 %v1371, 7
  %v1373 = vsub.s32 %v1370, %v1372
  %v1374 = vrot.slane %v20, %v1373
  %v1376 = vunpack.c.l.s4 1983009808
  %v1377 = vunpack.c.0.s8 %v1376
  %v1378 = vlaneseq
  %v1379 = vshrl.u32 %v1378, 7
  %v1380 = vsub.s32 %v1377, %v1379
  %v1381 = vrot.slane %v1367, %v1380
  %v1382 = vcombine.high %v1374, %v1374
  %v1383 = vcombine.high %v1381, %v1381
  %v1384 = vcombine.high %v21, %v21
  %v1386 = vunpack.c.l.s4 1983009808
  %v1387 = vunpack.c.0.s8 %v1386
  %v1388 = vlaneseq
  %v1389 = vshrl.u32 %v1388, 7
  %v1390 = vsub.s32 %v1387, %v1389
  %v1391 = vrot.slane %v21, %v1390
  %v1393 = vunpack.c.l.s4 1983009808
  %v1394 = vunpack.c.0.s8 %v1393
  %v1395 = vlaneseq
  %v1396 = vshrl.u32 %v1395, 7
  %v1397 = vsub.s32 %v1394, %v1396
  %v1398 = vrot.slane %v1384, %v1397
  %v1399 = vcombine.high %v1391, %v1391
  %vm1406 = vcmask 130048
  %v1407 = vsel %vm1406, %v1398, 0
  %1409 = vmatprep.subr.mxu0 %v23
  %1410 = vmatpush1.msra.mxu0 %v22
  %1411 = vmatprep.subr.mxu0 %v36
  %1412 = vmatpush1.msra.mxu0 %v35
  %1413 = vmatprep.subr.mxu0 %v49
  %1414 = vmatpush1.msra.mxu0 %v48
  %1415 = vmatprep.subr.mxu0 %v62
  %1416 = vmatpush1.msra.mxu0 %v61
  %1417 = vmatprep.subr.mxu0 %v75
  %1418 = vmatpush1.msra.mxu0 %v74
  %1419 = vmatprep.subr.mxu0 %v88
  %1420 = vmatpush1.msra.mxu0 %v87
  %1421 = vmatprep.subr.mxu0 %v101
  %1422 = vmatpush1.msra.mxu0 %v100
  %1423 = vmatprep.subr.mxu0 %v114
  %1424 = vmatpush1.msra.mxu0 %v113
  %1425 = vmatprep.subr.mxu0 %v127
  %1426 = vmatpush1.msra.mxu0 %v126
  %1427 = vmatprep.subr.mxu0 %v140
  %1428 = vmatpush1.msra.mxu0 %v139
  %1429 = vmatprep.subr.mxu0 %v153
  %1430 = vmatpush1.msra.mxu0 %v152
  %1431 = vmatprep.subr.mxu0 %v166
  %1432 = vmatpush1.msra.mxu0 %v165
  %1433 = vmatprep.subr.mxu0 %v179
  %1434 = vmatpush1.msra.mxu0 %v178
  %1435 = vmatprep.subr.mxu0 %v192
  %1436 = vmatpush1.msra.mxu0 %v191
  %1437 = vmatprep.subr.mxu0 %v205
  %1438 = vmatpush1.msra.mxu0 %v204
  %1439 = vmatprep.subr.mxu0 %v218
  %1440 = vmatpush1.msra.mxu0 %v217
  %1441 = vmatprep.subr.mxu0 %v231
  %1442 = vmatpush1.msra.mxu0 %v230
  %1443 = vmatprep.subr.mxu0 %v244
  %1444 = vmatpush1.msra.mxu0 %v243
  %1445 = vmatprep.subr.mxu0 %v257
  %1446 = vmatpush1.msra.mxu0 %v256
  %1447 = vmatprep.subr.mxu0 %v270
  %1448 = vmatpush1.msra.mxu0 %v269
  %1449 = vmatprep.subr.mxu0 %v283
  %1450 = vmatpush1.msra.mxu0 %v282
  %1451 = vmatprep.subr.mxu0 %v296
  %1452 = vmatpush1.msra.mxu0 %v295
  %1453 = vmatprep.subr.mxu0 %v309
  %1454 = vmatpush1.msra.mxu0 %v308
  %1455 = vmatprep.subr.mxu0 %v322
  %1456 = vmatpush1.msra.mxu0 %v321
  %1457 = vmatprep.subr.mxu0 %v335
  %1458 = vmatpush1.msra.mxu0 %v334
  %1459 = vmatprep.subr.mxu0 %v348
  %1460 = vmatpush1.msra.mxu0 %v347
  %1461 = vmatprep.subr.mxu0 %v361
  %1462 = vmatpush1.msra.mxu0 %v360
  %1463 = vmatprep.subr.mxu0 %v374
  %1464 = vmatpush1.msra.mxu0 %v373
  %1465 = vmatprep.subr.mxu0 %v387
  %1466 = vmatpush1.msra.mxu0 %v386
  %1467 = vmatprep.subr.mxu0 %v400
  %1468 = vmatpush1.msra.mxu0 %v399
  %1469 = vmatprep.subr.mxu0 %v413
  %1470 = vmatpush1.msra.mxu0 %v412
  %1471 = vmatprep.subr.mxu0 %v426
  %1472 = vmatpush1.msra.mxu0 %v425
  %1473 = vmatprep.mubr.f32.mxu0 %v1382
  %1474 = vmatmul.mubr.f32.gmra.mrb[0].mxu0 %v1374
  %v1475 = vpop.f32.mrb[0].mxu0
  %v1476 = vadd.f32 %v1303, %v1475
  %v1477 = vpop.f32.mrb[0].mxu0
  %v1478 = vadd.f32 %v1307, %v1477
  %1479 = vdwg.mxu0
  %1480 = vmatprep.subr.mxu0 %v439
  %1481 = vmatpush1.msra.mxu0 %v438
  %1482 = vmatprep.subr.mxu0 %v452
  %1483 = vmatpush1.msra.mxu0 %v451
  %1484 = vmatprep.subr.mxu0 %v465
  %1485 = vmatpush1.msra.mxu0 %v464
  %1486 = vmatprep.subr.mxu0 %v478
  %1487 = vmatpush1.msra.mxu0 %v477
  %1488 = vmatprep.subr.mxu0 %v491
  %1489 = vmatpush1.msra.mxu0 %v490
  %1490 = vmatprep.subr.mxu0 %v504
  %1491 = vmatpush1.msra.mxu0 %v503
  %1492 = vmatprep.subr.mxu0 %v517
  %1493 = vmatpush1.msra.mxu0 %v516
  %1494 = vmatprep.subr.mxu0 %v530
  %1495 = vmatpush1.msra.mxu0 %v529
  %1496 = vmatprep.subr.mxu0 %v543
  %1497 = vmatpush1.msra.mxu0 %v542
  %1498 = vmatprep.subr.mxu0 %v556
  %1499 = vmatpush1.msra.mxu0 %v555
  %1500 = vmatprep.subr.mxu0 %v569
  %1501 = vmatpush1.msra.mxu0 %v568
  %1502 = vmatprep.subr.mxu0 %v582
  %1503 = vmatpush1.msra.mxu0 %v581
  %1504 = vmatprep.subr.mxu0 %v595
  %1505 = vmatpush1.msra.mxu0 %v594
  %1506 = vmatprep.subr.mxu0 %v608
  %1507 = vmatpush1.msra.mxu0 %v607
  %1508 = vmatprep.subr.mxu0 %v621
  %1509 = vmatpush1.msra.mxu0 %v620
  %1510 = vmatprep.subr.mxu0 %v634
  %1511 = vmatpush1.msra.mxu0 %v633
  %1512 = vmatprep.subr.mxu0 %v647
  %1513 = vmatpush1.msra.mxu0 %v646
  %1514 = vmatprep.subr.mxu0 %v660
  %1515 = vmatpush1.msra.mxu0 %v659
  %1516 = vmatprep.subr.mxu0 %v673
  %1517 = vmatpush1.msra.mxu0 %v672
  %1518 = vmatprep.subr.mxu0 %v686
  %1519 = vmatpush1.msra.mxu0 %v685
  %1520 = vmatprep.subr.mxu0 %v699
  %1521 = vmatpush1.msra.mxu0 %v698
  %1522 = vmatprep.subr.mxu0 %v712
  %1523 = vmatpush1.msra.mxu0 %v711
  %1524 = vmatprep.subr.mxu0 %v725
  %1525 = vmatpush1.msra.mxu0 %v724
  %1526 = vmatprep.subr.mxu0 %v738
  %1527 = vmatpush1.msra.mxu0 %v737
  %1528 = vmatprep.subr.mxu0 %v751
  %1529 = vmatpush1.msra.mxu0 %v750
  %1530 = vmatprep.subr.mxu0 %v764
  %1531 = vmatpush1.msra.mxu0 %v763
  %1532 = vmatprep.subr.mxu0 %v777
  %1533 = vmatpush1.msra.mxu0 %v776
  %1534 = vmatprep.subr.mxu0 %v790
  %1535 = vmatpush1.msra.mxu0 %v789
  %1536 = vmatprep.subr.mxu0 %v803
  %1537 = vmatpush1.msra.mxu0 %v802
  %1538 = vmatprep.subr.mxu0 %v816
  %1539 = vmatpush1.msra.mxu0 %v815
  %1540 = vmatprep.subr.mxu0 %v829
  %1541 = vmatpush1.msra.mxu0 %v828
  %1542 = vmatprep.subr.mxu0 %v842
  %1543 = vmatpush1.msra.mxu0 %v841
  %1544 = vmatprep.mubr.f32.mxu0 %v1383
  %1545 = vmatmul.mubr.f32.gmra.mrb[0].mxu0 %v1381
  %v1546 = vpop.f32.mrb[0].mxu0
  %v1547 = vadd.f32 %v1476, %v1546
  %v1548 = vpop.f32.mrb[0].mxu0
  %v1549 = vadd.f32 %v1478, %v1548
  %1550 = vdwg.mxu0
  %1551 = vmatprep.subr.mxu0 %v855
  %1552 = vmatpush1.msra.mxu0 %v854
  %1553 = vmatprep.subr.mxu0 %v868
  %1554 = vmatpush1.msra.mxu0 %v867
  %1555 = vmatprep.subr.mxu0 %v881
  %1556 = vmatpush1.msra.mxu0 %v880
  %1557 = vmatprep.subr.mxu0 %v894
  %1558 = vmatpush1.msra.mxu0 %v893
  %1559 = vmatprep.subr.mxu0 %v907
  %1560 = vmatpush1.msra.mxu0 %v906
  %1561 = vmatprep.subr.mxu0 %v920
  %1562 = vmatpush1.msra.mxu0 %v919
  %1563 = vmatprep.subr.mxu0 %v933
  %1564 = vmatpush1.msra.mxu0 %v932
  %1565 = vmatprep.subr.mxu0 %v946
  %1566 = vmatpush1.msra.mxu0 %v945
  %1567 = vmatprep.subr.mxu0 %v959
  %1568 = vmatpush1.msra.mxu0 %v958
  %1569 = vmatprep.subr.mxu0 %v972
  %1570 = vmatpush1.msra.mxu0 %v971
  %1571 = vmatprep.subr.mxu0 %v985
  %1572 = vmatpush1.msra.mxu0 %v984
  %1573 = vmatprep.subr.mxu0 %v998
  %1574 = vmatpush1.msra.mxu0 %v997
  %1575 = vmatprep.subr.mxu0 %v1011
  %1576 = vmatpush1.msra.mxu0 %v1010
  %1577 = vmatprep.subr.mxu0 %v1024
  %1578 = vmatpush1.msra.mxu0 %v1023
  %1579 = vmatprep.subr.mxu0 %v1037
  %1580 = vmatpush1.msra.mxu0 %v1036
  %1581 = vmatprep.subr.mxu0 %v1050
  %1582 = vmatpush1.msra.mxu0 %v1049
  %1583 = vmatprep.subr.mxu0 %v1063
  %1584 = vmatpush1.msra.mxu0 %v1062
  %1585 = vmatprep.subr.mxu0 %v1076
  %1586 = vmatpush1.msra.mxu0 %v1075
  %1587 = vmatprep.subr.mxu0 %v1089
  %1588 = vmatpush1.msra.mxu0 %v1088
  %1589 = vmatprep.subr.mxu0 %v1102
  %1590 = vmatpush1.msra.mxu0 %v1101
  %1591 = vmatprep.subr.mxu0 %v1115
  %1592 = vmatpush1.msra.mxu0 %v1114
  %1593 = vmatprep.subr.mxu0 %v1128
  %1594 = vmatpush1.msra.mxu0 %v1127
  %1595 = vmatprep.subr.mxu0 %v1141
  %1596 = vmatpush1.msra.mxu0 %v1140
  %1597 = vmatprep.subr.mxu0 %v1154
  %1598 = vmatpush1.msra.mxu0 %v1153
  %1599 = vmatprep.subr.mxu0 %v1167
  %1600 = vmatpush1.msra.mxu0 %v1166
  %1601 = vmatprep.subr.mxu0 %v1180
  %1602 = vmatpush1.msra.mxu0 %v1179
  %1603 = vmatprep.subr.mxu0 %v1193
  %1604 = vmatpush1.msra.mxu0 %v1192
  %1605 = vmatprep.subr.mxu0 %v1206
  %1606 = vmatpush1.msra.mxu0 %v1205
  %1607 = vmatprep.subr.mxu0 %v1219
  %1608 = vmatpush1.msra.mxu0 %v1218
  %1609 = vmatprep.subr.mxu0 %v1232
  %1610 = vmatpush1.msra.mxu0 %v1231
  %1611 = vmatprep.subr.mxu0 %v1245
  %1612 = vmatpush1.msra.mxu0 %v1244
  %1613 = vmatprep.subr.mxu0 %v1258
  %1614 = vmatpush1.msra.mxu0 %v1257
  %1615 = vmatprep.mubr.f32.mxu0 %v1399
  %1616 = vmatmul.mubr.f32.gmra.mrb[0].mxu0 %v1391
  %v1617 = vpop.f32.mrb[0].mxu0
  %v1618 = vadd.f32 %v1547, %v1617
  %v1619 = vpop.f32.mrb[0].mxu0
  %v1620 = vadd.f32 %v1549, %v1619
  %1621 = vdwg.mxu0
  %1622 = vmatprep.subr.mxu0 %v1271
  %1623 = vmatpush1.msra.mxu0 %v1270
  %1624 = vmatprep.subr.mxu0 %v1284
  %1625 = vmatpush1.msra.mxu0 %v1283
  %1626 = vmatprep.subr.mxu0 0.0
  %1627 = vmatpush1.msra.mxu0 0.0
  %1628 = vmatprep.subr.mxu0 0.0
  %1629 = vmatpush1.msra.mxu0 0.0
  %1630 = vmatprep.subr.mxu0 0.0
  %1631 = vmatpush1.msra.mxu0 0.0
  %1632 = vmatprep.subr.mxu0 0.0
  %1633 = vmatpush1.msra.mxu0 0.0
  %1634 = vmatprep.subr.mxu0 0.0
  %1635 = vmatpush1.msra.mxu0 0.0
  %1636 = vmatprep.subr.mxu0 0.0
  %1637 = vmatpush1.msra.mxu0 0.0
  %1638 = vmatprep.subr.mxu0 0.0
  %1639 = vmatpush1.msra.mxu0 0.0
  %1640 = vmatprep.subr.mxu0 0.0
  %1641 = vmatpush1.msra.mxu0 0.0
  %1642 = vmatprep.subr.mxu0 0.0
  %1643 = vmatpush1.msra.mxu0 0.0
  %1644 = vmatprep.subr.mxu0 0.0
  %1645 = vmatpush1.msra.mxu0 0.0
  %1646 = vmatprep.subr.mxu0 0.0
  %1647 = vmatpush1.msra.mxu0 0.0
  %1648 = vmatprep.subr.mxu0 0.0
  %1649 = vmatpush1.msra.mxu0 0.0
  %1650 = vmatprep.subr.mxu0 0.0
  %1651 = vmatpush1.msra.mxu0 0.0
  %1652 = vmatprep.subr.mxu0 0.0
  %1653 = vmatpush1.msra.mxu0 0.0
  %1654 = vmatprep.subr.mxu0 0.0
  %1655 = vmatpush1.msra.mxu0 0.0
  %1656 = vmatprep.subr.mxu0 0.0
  %1657 = vmatpush1.msra.mxu0 0.0
  %1658 = vmatprep.subr.mxu0 0.0
  %1659 = vmatpush1.msra.mxu0 0.0
  %1660 = vmatprep.subr.mxu0 0.0
  %1661 = vmatpush1.msra.mxu0 0.0
  %1662 = vmatprep.subr.mxu0 0.0
  %1663 = vmatpush1.msra.mxu0 0.0
  %1664 = vmatprep.subr.mxu0 0.0
  %1665 = vmatpush1.msra.mxu0 0.0
  %1666 = vmatprep.subr.mxu0 0.0
  %1667 = vmatpush1.msra.mxu0 0.0
  %1668 = vmatprep.subr.mxu0 0.0
  %1669 = vmatpush1.msra.mxu0 0.0
  %1670 = vmatprep.subr.mxu0 0.0
  %1671 = vmatpush1.msra.mxu0 0.0
  %1672 = vmatprep.subr.mxu0 0.0
  %1673 = vmatpush1.msra.mxu0 0.0
  %1674 = vmatprep.subr.mxu0 0.0
  %1675 = vmatpush1.msra.mxu0 0.0
  %1676 = vmatprep.subr.mxu0 0.0
  %1677 = vmatpush1.msra.mxu0 0.0
  %1678 = vmatprep.subr.mxu0 0.0
  %1679 = vmatpush1.msra.mxu0 0.0
  %1680 = vmatprep.subr.mxu0 0.0
  %1681 = vmatpush1.msra.mxu0 0.0
  %1682 = vmatprep.subr.mxu0 0.0
  %1683 = vmatpush1.msra.mxu0 0.0
  %1684 = vmatprep.subr.mxu0 0.0
  %1685 = vmatpush1.msra.mxu0 0.0
  %1686 = vmatprep.mubr.f32.mxu0 0.0
  %1687 = vmatmul.mubr.f32.gmra.mrb[0].mxu0 %v1407
  %v1688 = vpop.f32.mrb[0].mxu0
  %v1689 = vadd.f32 %v1618, %v1688
  %v1690 = vpop.f32.mrb[0].mxu0
  %v1691 = vadd.f32 %v1620, %v1690
  %1692 = vdwg.mxu0
  %1693 = vmatprep.subr.mxu0 %v25
  %1694 = vmatpush1.msra.mxu0 %v24
  %1695 = vmatprep.subr.mxu0 %v38
  %1696 = vmatpush1.msra.mxu0 %v37
  %1697 = vmatprep.subr.mxu0 %v51
  %1698 = vmatpush1.msra.mxu0 %v50
  %1699 = vmatprep.subr.mxu0 %v64
  %1700 = vmatpush1.msra.mxu0 %v63
  %1701 = vmatprep.subr.mxu0 %v77
  %1702 = vmatpush1.msra.mxu0 %v76
  %1703 = vmatprep.subr.mxu0 %v90
  %1704 = vmatpush1.msra.mxu0 %v89
  %1705 = vmatprep.subr.mxu0 %v103
  %1706 = vmatpush1.msra.mxu0 %v102
  %1707 = vmatprep.subr.mxu0 %v116
  %1708 = vmatpush1.msra.mxu0 %v115
  %1709 = vmatprep.subr.mxu0 %v129
  %1710 = vmatpush1.msra.mxu0 %v128
  %1711 = vmatprep.subr.mxu0 %v142
  %1712 = vmatpush1.msra.mxu0 %v141
  %1713 = vmatprep.subr.mxu0 %v155
  %1714 = vmatpush1.msra.mxu0 %v154
  %1715 = vmatprep.subr.mxu0 %v168
  %1716 = vmatpush1.msra.mxu0 %v167
  %1717 = vmatprep.subr.mxu0 %v181
  %1718 = vmatpush1.msra.mxu0 %v180
  %1719 = vmatprep.subr.mxu0 %v194
  %1720 = vmatpush1.msra.mxu0 %v193
  %1721 = vmatprep.subr.mxu0 %v207
  %1722 = vmatpush1.msra.mxu0 %v206
  %1723 = vmatprep.subr.mxu0 %v220
  %1724 = vmatpush1.msra.mxu0 %v219
  %1725 = vmatprep.subr.mxu0 %v233
  %1726 = vmatpush1.msra.mxu0 %v232
  %1727 = vmatprep.subr.mxu0 %v246
  %1728 = vmatpush1.msra.mxu0 %v245
  %1729 = vmatprep.subr.mxu0 %v259
  %1730 = vmatpush1.msra.mxu0 %v258
  %1731 = vmatprep.subr.mxu0 %v272
  %1732 = vmatpush1.msra.mxu0 %v271
  %1733 = vmatprep.subr.mxu0 %v285
  %1734 = vmatpush1.msra.mxu0 %v284
  %1735 = vmatprep.subr.mxu0 %v298
  %1736 = vmatpush1.msra.mxu0 %v297
  %1737 = vmatprep.subr.mxu0 %v311
  %1738 = vmatpush1.msra.mxu0 %v310
  %1739 = vmatprep.subr.mxu0 %v324
  %1740 = vmatpush1.msra.mxu0 %v323
  %1741 = vmatprep.subr.mxu0 %v337
  %1742 = vmatpush1.msra.mxu0 %v336
  %1743 = vmatprep.subr.mxu0 %v350
  %1744 = vmatpush1.msra.mxu0 %v349
  %1745 = vmatprep.subr.mxu0 %v363
  %1746 = vmatpush1.msra.mxu0 %v362
  %1747 = vmatprep.subr.mxu0 %v376
  %1748 = vmatpush1.msra.mxu0 %v375
  %1749 = vmatprep.subr.mxu0 %v389
  %1750 = vmatpush1.msra.mxu0 %v388
  %1751 = vmatprep.subr.mxu0 %v402
  %1752 = vmatpush1.msra.mxu0 %v401
  %1753 = vmatprep.subr.mxu0 %v415
  %1754 = vmatpush1.msra.mxu0 %v414
  %1755 = vmatprep.subr.mxu0 %v428
  %1756 = vmatpush1.msra.mxu0 %v427
  %1757 = vmatprep.mubr.f32.mxu0 %v1382
  %1758 = vmatmul.mubr.f32.gmra.mrb[0].mxu0 %v1374
  %v1759 = vpop.f32.mrb[0].mxu0
  %v1760 = vadd.f32 %v1311, %v1759
  %v1761 = vpop.f32.mrb[0].mxu0
  %v1762 = vadd.f32 %v1315, %v1761
  %1763 = vdwg.mxu0
  %1764 = vmatprep.subr.mxu0 %v441
  %1765 = vmatpush1.msra.mxu0 %v440
  %1766 = vmatprep.subr.mxu0 %v454
  %1767 = vmatpush1.msra.mxu0 %v453
  %1768 = vmatprep.subr.mxu0 %v467
  %1769 = vmatpush1.msra.mxu0 %v466
  %1770 = vmatprep.subr.mxu0 %v480
  %1771 = vmatpush1.msra.mxu0 %v479
  %1772 = vmatprep.subr.mxu0 %v493
  %1773 = vmatpush1.msra.mxu0 %v492
  %1774 = vmatprep.subr.mxu0 %v506
  %1775 = vmatpush1.msra.mxu0 %v505
  %1776 = vmatprep.subr.mxu0 %v519
  %1777 = vmatpush1.msra.mxu0 %v518
  %1778 = vmatprep.subr.mxu0 %v532
  %1779 = vmatpush1.msra.mxu0 %v531
  %1780 = vmatprep.subr.mxu0 %v545
  %1781 = vmatpush1.msra.mxu0 %v544
  %1782 = vmatprep.subr.mxu0 %v558
  %1783 = vmatpush1.msra.mxu0 %v557
  %1784 = vmatprep.subr.mxu0 %v571
  %1785 = vmatpush1.msra.mxu0 %v570
  %1786 = vmatprep.subr.mxu0 %v584
  %1787 = vmatpush1.msra.mxu0 %v583
  %1788 = vmatprep.subr.mxu0 %v597
  %1789 = vmatpush1.msra.mxu0 %v596
  %1790 = vmatprep.subr.mxu0 %v610
  %1791 = vmatpush1.msra.mxu0 %v609
  %1792 = vmatprep.subr.mxu0 %v623
  %1793 = vmatpush1.msra.mxu0 %v622
  %1794 = vmatprep.subr.mxu0 %v636
  %1795 = vmatpush1.msra.mxu0 %v635
  %1796 = vmatprep.subr.mxu0 %v649
  %1797 = vmatpush1.msra.mxu0 %v648
  %1798 = vmatprep.subr.mxu0 %v662
  %1799 = vmatpush1.msra.mxu0 %v661
  %1800 = vmatprep.subr.mxu0 %v675
  %1801 = vmatpush1.msra.mxu0 %v674
  %1802 = vmatprep.subr.mxu0 %v688
  %1803 = vmatpush1.msra.mxu0 %v687
  %1804 = vmatprep.subr.mxu0 %v701
  %1805 = vmatpush1.msra.mxu0 %v700
  %1806 = vmatprep.subr.mxu0 %v714
  %1807 = vmatpush1.msra.mxu0 %v713
  %1808 = vmatprep.subr.mxu0 %v727
  %1809 = vmatpush1.msra.mxu0 %v726
  %1810 = vmatprep.subr.mxu0 %v740
  %1811 = vmatpush1.msra.mxu0 %v739
  %1812 = vmatprep.subr.mxu0 %v753
  %1813 = vmatpush1.msra.mxu0 %v752
  %1814 = vmatprep.subr.mxu0 %v766
  %1815 = vmatpush1.msra.mxu0 %v765
  %1816 = vmatprep.subr.mxu0 %v779
  %1817 = vmatpush1.msra.mxu0 %v778
  %1818 = vmatprep.subr.mxu0 %v792
  %1819 = vmatpush1.msra.mxu0 %v791
  %1820 = vmatprep.subr.mxu0 %v805
  %1821 = vmatpush1.msra.mxu0 %v804
  %1822 = vmatprep.subr.mxu0 %v818
  %1823 = vmatpush1.msra.mxu0 %v817
  %1824 = vmatprep.subr.mxu0 %v831
  %1825 = vmatpush1.msra.mxu0 %v830
  %1826 = vmatprep.subr.mxu0 %v844
  %1827 = vmatpush1.msra.mxu0 %v843
  %1828 = vmatprep.mubr.f32.mxu0 %v1383
  %1829 = vmatmul.mubr.f32.gmra.mrb[0].mxu0 %v1381
  %v1830 = vpop.f32.mrb[0].mxu0
  %v1831 = vadd.f32 %v1760, %v1830
  %v1832 = vpop.f32.mrb[0].mxu0
  %v1833 = vadd.f32 %v1762, %v1832
  %1834 = vdwg.mxu0
  %1835 = vmatprep.subr.mxu0 %v857
  %1836 = vmatpush1.msra.mxu0 %v856
  %1837 = vmatprep.subr.mxu0 %v870
  %1838 = vmatpush1.msra.mxu0 %v869
  %1839 = vmatprep.subr.mxu0 %v883
  %1840 = vmatpush1.msra.mxu0 %v882
  %1841 = vmatprep.subr.mxu0 %v896
  %1842 = vmatpush1.msra.mxu0 %v895
  %1843 = vmatprep.subr.mxu0 %v909
  %1844 = vmatpush1.msra.mxu0 %v908
  %1845 = vmatprep.subr.mxu0 %v922
  %1846 = vmatpush1.msra.mxu0 %v921
  %1847 = vmatprep.subr.mxu0 %v935
  %1848 = vmatpush1.msra.mxu0 %v934
  %1849 = vmatprep.subr.mxu0 %v948
  %1850 = vmatpush1.msra.mxu0 %v947
  %1851 = vmatprep.subr.mxu0 %v961
  %1852 = vmatpush1.msra.mxu0 %v960
  %1853 = vmatprep.subr.mxu0 %v974
  %1854 = vmatpush1.msra.mxu0 %v973
  %1855 = vmatprep.subr.mxu0 %v987
  %1856 = vmatpush1.msra.mxu0 %v986
  %1857 = vmatprep.subr.mxu0 %v1000
  %1858 = vmatpush1.msra.mxu0 %v999
  %1859 = vmatprep.subr.mxu0 %v1013
  %1860 = vmatpush1.msra.mxu0 %v1012
  %1861 = vmatprep.subr.mxu0 %v1026
  %1862 = vmatpush1.msra.mxu0 %v1025
  %1863 = vmatprep.subr.mxu0 %v1039
  %1864 = vmatpush1.msra.mxu0 %v1038
  %1865 = vmatprep.subr.mxu0 %v1052
  %1866 = vmatpush1.msra.mxu0 %v1051
  %1867 = vmatprep.subr.mxu0 %v1065
  %1868 = vmatpush1.msra.mxu0 %v1064
  %1869 = vmatprep.subr.mxu0 %v1078
  %1870 = vmatpush1.msra.mxu0 %v1077
  %1871 = vmatprep.subr.mxu0 %v1091
  %1872 = vmatpush1.msra.mxu0 %v1090
  %1873 = vmatprep.subr.mxu0 %v1104
  %1874 = vmatpush1.msra.mxu0 %v1103
  %1875 = vmatprep.subr.mxu0 %v1117
  %1876 = vmatpush1.msra.mxu0 %v1116
  %1877 = vmatprep.subr.mxu0 %v1130
  %1878 = vmatpush1.msra.mxu0 %v1129
  %1879 = vmatprep.subr.mxu0 %v1143
  %1880 = vmatpush1.msra.mxu0 %v1142
  %1881 = vmatprep.subr.mxu0 %v1156
  %1882 = vmatpush1.msra.mxu0 %v1155
  %1883 = vmatprep.subr.mxu0 %v1169
  %1884 = vmatpush1.msra.mxu0 %v1168
  %1885 = vmatprep.subr.mxu0 %v1182
  %1886 = vmatpush1.msra.mxu0 %v1181
  %1887 = vmatprep.subr.mxu0 %v1195
  %1888 = vmatpush1.msra.mxu0 %v1194
  %1889 = vmatprep.subr.mxu0 %v1208
  %1890 = vmatpush1.msra.mxu0 %v1207
  %1891 = vmatprep.subr.mxu0 %v1221
  %1892 = vmatpush1.msra.mxu0 %v1220
  %1893 = vmatprep.subr.mxu0 %v1234
  %1894 = vmatpush1.msra.mxu0 %v1233
  %1895 = vmatprep.subr.mxu0 %v1247
  %1896 = vmatpush1.msra.mxu0 %v1246
  %1897 = vmatprep.subr.mxu0 %v1260
  %1898 = vmatpush1.msra.mxu0 %v1259
  %1899 = vmatprep.mubr.f32.mxu0 %v1399
  %1900 = vmatmul.mubr.f32.gmra.mrb[0].mxu0 %v1391
  %v1901 = vpop.f32.mrb[0].mxu0
  %v1902 = vadd.f32 %v1831, %v1901
  %v1903 = vpop.f32.mrb[0].mxu0
  %v1904 = vadd.f32 %v1833, %v1903
  %1905 = vdwg.mxu0
  %1906 = vmatprep.subr.mxu0 %v1273
  %1907 = vmatpush1.msra.mxu0 %v1272
  %1908 = vmatprep.subr.mxu0 %v1286
  %1909 = vmatpush1.msra.mxu0 %v1285
  %1910 = vmatprep.subr.mxu0 0.0
  %1911 = vmatpush1.msra.mxu0 0.0
  %1912 = vmatprep.subr.mxu0 0.0
  %1913 = vmatpush1.msra.mxu0 0.0
  %1914 = vmatprep.subr.mxu0 0.0
  %1915 = vmatpush1.msra.mxu0 0.0
  %1916 = vmatprep.subr.mxu0 0.0
  %1917 = vmatpush1.msra.mxu0 0.0
  %1918 = vmatprep.subr.mxu0 0.0
  %1919 = vmatpush1.msra.mxu0 0.0
  %1920 = vmatprep.subr.mxu0 0.0
  %1921 = vmatpush1.msra.mxu0 0.0
  %1922 = vmatprep.subr.mxu0 0.0
  %1923 = vmatpush1.msra.mxu0 0.0
  %1924 = vmatprep.subr.mxu0 0.0
  %1925 = vmatpush1.msra.mxu0 0.0
  %1926 = vmatprep.subr.mxu0 0.0
  %1927 = vmatpush1.msra.mxu0 0.0
  %1928 = vmatprep.subr.mxu0 0.0
  %1929 = vmatpush1.msra.mxu0 0.0
  %1930 = vmatprep.subr.mxu0 0.0
  %1931 = vmatpush1.msra.mxu0 0.0
  %1932 = vmatprep.subr.mxu0 0.0
  %1933 = vmatpush1.msra.mxu0 0.0
  %1934 = vmatprep.subr.mxu0 0.0
  %1935 = vmatpush1.msra.mxu0 0.0
  %1936 = vmatprep.subr.mxu0 0.0
  %1937 = vmatpush1.msra.mxu0 0.0
  %1938 = vmatprep.subr.mxu0 0.0
  %1939 = vmatpush1.msra.mxu0 0.0
  %1940 = vmatprep.subr.mxu0 0.0
  %1941 = vmatpush1.msra.mxu0 0.0
  %1942 = vmatprep.subr.mxu0 0.0
  %1943 = vmatpush1.msra.mxu0 0.0
  %1944 = vmatprep.subr.mxu0 0.0
  %1945 = vmatpush1.msra.mxu0 0.0
  %1946 = vmatprep.subr.mxu0 0.0
  %1947 = vmatpush1.msra.mxu0 0.0
  %1948 = vmatprep.subr.mxu0 0.0
  %1949 = vmatpush1.msra.mxu0 0.0
  %1950 = vmatprep.subr.mxu0 0.0
  %1951 = vmatpush1.msra.mxu0 0.0
  %1952 = vmatprep.subr.mxu0 0.0
  %1953 = vmatpush1.msra.mxu0 0.0
  %1954 = vmatprep.subr.mxu0 0.0
  %1955 = vmatpush1.msra.mxu0 0.0
  %1956 = vmatprep.subr.mxu0 0.0
  %1957 = vmatpush1.msra.mxu0 0.0
  %1958 = vmatprep.subr.mxu0 0.0
  %1959 = vmatpush1.msra.mxu0 0.0
  %1960 = vmatprep.subr.mxu0 0.0
  %1961 = vmatpush1.msra.mxu0 0.0
  %1962 = vmatprep.subr.mxu0 0.0
  %1963 = vmatpush1.msra.mxu0 0.0
  %1964 = vmatprep.subr.mxu0 0.0
  %1965 = vmatpush1.msra.mxu0 0.0
  %1966 = vmatprep.subr.mxu0 0.0
  %1967 = vmatpush1.msra.mxu0 0.0
  %1968 = vmatprep.subr.mxu0 0.0
  %1969 = vmatpush1.msra.mxu0 0.0
  %1970 = vmatprep.mubr.f32.mxu0 0.0
  %1971 = vmatmul.mubr.f32.gmra.mrb[0].mxu0 %v1407
  %v1972 = vpop.f32.mrb[0].mxu0
  %v1973 = vadd.f32 %v1902, %v1972
  %v1974 = vpop.f32.mrb[0].mxu0
  %v1975 = vadd.f32 %v1904, %v1974
  %1976 = vdwg.mxu0
  %1977 = vmatprep.subr.mxu0 %v27
  %1978 = vmatpush1.msra.mxu0 %v26
  %1979 = vmatprep.subr.mxu0 %v40
  %1980 = vmatpush1.msra.mxu0 %v39
  %1981 = vmatprep.subr.mxu0 %v53
  %1982 = vmatpush1.msra.mxu0 %v52
  %1983 = vmatprep.subr.mxu0 %v66
  %1984 = vmatpush1.msra.mxu0 %v65
  %1985 = vmatprep.subr.mxu0 %v79
  %1986 = vmatpush1.msra.mxu0 %v78
  %1987 = vmatprep.subr.mxu0 %v92
  %1988 = vmatpush1.msra.mxu0 %v91
  %1989 = vmatprep.subr.mxu0 %v105
  %1990 = vmatpush1.msra.mxu0 %v104
  %1991 = vmatprep.subr.mxu0 %v118
  %1992 = vmatpush1.msra.mxu0 %v117
  %1993 = vmatprep.subr.mxu0 %v131
  %1994 = vmatpush1.msra.mxu0 %v130
  %1995 = vmatprep.subr.mxu0 %v144
  %1996 = vmatpush1.msra.mxu0 %v143
  %1997 = vmatprep.subr.mxu0 %v157
  %1998 = vmatpush1.msra.mxu0 %v156
  %1999 = vmatprep.subr.mxu0 %v170
  %2000 = vmatpush1.msra.mxu0 %v169
  %2001 = vmatprep.subr.mxu0 %v183
  %2002 = vmatpush1.msra.mxu0 %v182
  %2003 = vmatprep.subr.mxu0 %v196
  %2004 = vmatpush1.msra.mxu0 %v195
  %2005 = vmatprep.subr.mxu0 %v209
  %2006 = vmatpush1.msra.mxu0 %v208
  %2007 = vmatprep.subr.mxu0 %v222
  %2008 = vmatpush1.msra.mxu0 %v221
  %2009 = vmatprep.subr.mxu0 %v235
  %2010 = vmatpush1.msra.mxu0 %v234
  %2011 = vmatprep.subr.mxu0 %v248
  %2012 = vmatpush1.msra.mxu0 %v247
  %2013 = vmatprep.subr.mxu0 %v261
  %2014 = vmatpush1.msra.mxu0 %v260
  %2015 = vmatprep.subr.mxu0 %v274
  %2016 = vmatpush1.msra.mxu0 %v273
  %2017 = vmatprep.subr.mxu0 %v287
  %2018 = vmatpush1.msra.mxu0 %v286
  %2019 = vmatprep.subr.mxu0 %v300
  %2020 = vmatpush1.msra.mxu0 %v299
  %2021 = vmatprep.subr.mxu0 %v313
  %2022 = vmatpush1.msra.mxu0 %v312
  %2023 = vmatprep.subr.mxu0 %v326
  %2024 = vmatpush1.msra.mxu0 %v325
  %2025 = vmatprep.subr.mxu0 %v339
  %2026 = vmatpush1.msra.mxu0 %v338
  %2027 = vmatprep.subr.mxu0 %v352
  %2028 = vmatpush1.msra.mxu0 %v351
  %2029 = vmatprep.subr.mxu0 %v365
  %2030 = vmatpush1.msra.mxu0 %v364
  %2031 = vmatprep.subr.mxu0 %v378
  %2032 = vmatpush1.msra.mxu0 %v377
  %2033 = vmatprep.subr.mxu0 %v391
  %2034 = vmatpush1.msra.mxu0 %v390
  %2035 = vmatprep.subr.mxu0 %v404
  %2036 = vmatpush1.msra.mxu0 %v403
  %2037 = vmatprep.subr.mxu0 %v417
  %2038 = vmatpush1.msra.mxu0 %v416
  %2039 = vmatprep.subr.mxu0 %v430
  %2040 = vmatpush1.msra.mxu0 %v429
  %2041 = vmatprep.mubr.f32.mxu0 %v1382
  %2042 = vmatmul.mubr.f32.gmra.mrb[0].mxu0 %v1374
  %v2043 = vpop.f32.mrb[0].mxu0
  %v2044 = vadd.f32 %v1319, %v2043
  %v2045 = vpop.f32.mrb[0].mxu0
  %v2046 = vadd.f32 %v1323, %v2045
  %2047 = vdwg.mxu0
  %2048 = vmatprep.subr.mxu0 %v443
  %2049 = vmatpush1.msra.mxu0 %v442
  %2050 = vmatprep.subr.mxu0 %v456
  %2051 = vmatpush1.msra.mxu0 %v455
  %2052 = vmatprep.subr.mxu0 %v469
  %2053 = vmatpush1.msra.mxu0 %v468
  %2054 = vmatprep.subr.mxu0 %v482
  %2055 = vmatpush1.msra.mxu0 %v481
  %2056 = vmatprep.subr.mxu0 %v495
  %2057 = vmatpush1.msra.mxu0 %v494
  %2058 = vmatprep.subr.mxu0 %v508
  %2059 = vmatpush1.msra.mxu0 %v507
  %2060 = vmatprep.subr.mxu0 %v521
  %2061 = vmatpush1.msra.mxu0 %v520
  %2062 = vmatprep.subr.mxu0 %v534
  %2063 = vmatpush1.msra.mxu0 %v533
  %2064 = vmatprep.subr.mxu0 %v547
  %2065 = vmatpush1.msra.mxu0 %v546
  %2066 = vmatprep.subr.mxu0 %v560
  %2067 = vmatpush1.msra.mxu0 %v559
  %2068 = vmatprep.subr.mxu0 %v573
  %2069 = vmatpush1.msra.mxu0 %v572
  %2070 = vmatprep.subr.mxu0 %v586
  %2071 = vmatpush1.msra.mxu0 %v585
  %2072 = vmatprep.subr.mxu0 %v599
  %2073 = vmatpush1.msra.mxu0 %v598
  %2074 = vmatprep.subr.mxu0 %v612
  %2075 = vmatpush1.msra.mxu0 %v611
  %2076 = vmatprep.subr.mxu0 %v625
  %2077 = vmatpush1.msra.mxu0 %v624
  %2078 = vmatprep.subr.mxu0 %v638
  %2079 = vmatpush1.msra.mxu0 %v637
  %2080 = vmatprep.subr.mxu0 %v651
  %2081 = vmatpush1.msra.mxu0 %v650
  %2082 = vmatprep.subr.mxu0 %v664
  %2083 = vmatpush1.msra.mxu0 %v663
  %2084 = vmatprep.subr.mxu0 %v677
  %2085 = vmatpush1.msra.mxu0 %v676
  %2086 = vmatprep.subr.mxu0 %v690
  %2087 = vmatpush1.msra.mxu0 %v689
  %2088 = vmatprep.subr.mxu0 %v703
  %2089 = vmatpush1.msra.mxu0 %v702
  %2090 = vmatprep.subr.mxu0 %v716
  %2091 = vmatpush1.msra.mxu0 %v715
  %2092 = vmatprep.subr.mxu0 %v729
  %2093 = vmatpush1.msra.mxu0 %v728
  %2094 = vmatprep.subr.mxu0 %v742
  %2095 = vmatpush1.msra.mxu0 %v741
  %2096 = vmatprep.subr.mxu0 %v755
  %2097 = vmatpush1.msra.mxu0 %v754
  %2098 = vmatprep.subr.mxu0 %v768
  %2099 = vmatpush1.msra.mxu0 %v767
  %2100 = vmatprep.subr.mxu0 %v781
  %2101 = vmatpush1.msra.mxu0 %v780
  %2102 = vmatprep.subr.mxu0 %v794
  %2103 = vmatpush1.msra.mxu0 %v793
  %2104 = vmatprep.subr.mxu0 %v807
  %2105 = vmatpush1.msra.mxu0 %v806
  %2106 = vmatprep.subr.mxu0 %v820
  %2107 = vmatpush1.msra.mxu0 %v819
  %2108 = vmatprep.subr.mxu0 %v833
  %2109 = vmatpush1.msra.mxu0 %v832
  %2110 = vmatprep.subr.mxu0 %v846
  %2111 = vmatpush1.msra.mxu0 %v845
  %2112 = vmatprep.mubr.f32.mxu0 %v1383
  %2113 = vmatmul.mubr.f32.gmra.mrb[0].mxu0 %v1381
  %v2114 = vpop.f32.mrb[0].mxu0
  %v2115 = vadd.f32 %v2044, %v2114
  %v2116 = vpop.f32.mrb[0].mxu0
  %v2117 = vadd.f32 %v2046, %v2116
  %2118 = vdwg.mxu0
  %2119 = vmatprep.subr.mxu0 %v859
  %2120 = vmatpush1.msra.mxu0 %v858
  %2121 = vmatprep.subr.mxu0 %v872
  %2122 = vmatpush1.msra.mxu0 %v871
  %2123 = vmatprep.subr.mxu0 %v885
  %2124 = vmatpush1.msra.mxu0 %v884
  %2125 = vmatprep.subr.mxu0 %v898
  %2126 = vmatpush1.msra.mxu0 %v897
  %2127 = vmatprep.subr.mxu0 %v911
  %2128 = vmatpush1.msra.mxu0 %v910
  %2129 = vmatprep.subr.mxu0 %v924
  %2130 = vmatpush1.msra.mxu0 %v923
  %2131 = vmatprep.subr.mxu0 %v937
  %2132 = vmatpush1.msra.mxu0 %v936
  %2133 = vmatprep.subr.mxu0 %v950
  %2134 = vmatpush1.msra.mxu0 %v949
  %2135 = vmatprep.subr.mxu0 %v963
  %2136 = vmatpush1.msra.mxu0 %v962
  %2137 = vmatprep.subr.mxu0 %v976
  %2138 = vmatpush1.msra.mxu0 %v975
  %2139 = vmatprep.subr.mxu0 %v989
  %2140 = vmatpush1.msra.mxu0 %v988
  %2141 = vmatprep.subr.mxu0 %v1002
  %2142 = vmatpush1.msra.mxu0 %v1001
  %2143 = vmatprep.subr.mxu0 %v1015
  %2144 = vmatpush1.msra.mxu0 %v1014
  %2145 = vmatprep.subr.mxu0 %v1028
  %2146 = vmatpush1.msra.mxu0 %v1027
  %2147 = vmatprep.subr.mxu0 %v1041
  %2148 = vmatpush1.msra.mxu0 %v1040
  %2149 = vmatprep.subr.mxu0 %v1054
  %2150 = vmatpush1.msra.mxu0 %v1053
  %2151 = vmatprep.subr.mxu0 %v1067
  %2152 = vmatpush1.msra.mxu0 %v1066
  %2153 = vmatprep.subr.mxu0 %v1080
  %2154 = vmatpush1.msra.mxu0 %v1079
  %2155 = vmatprep.subr.mxu0 %v1093
  %2156 = vmatpush1.msra.mxu0 %v1092
  %2157 = vmatprep.subr.mxu0 %v1106
  %2158 = vmatpush1.msra.mxu0 %v1105
  %2159 = vmatprep.subr.mxu0 %v1119
  %2160 = vmatpush1.msra.mxu0 %v1118
  %2161 = vmatprep.subr.mxu0 %v1132
  %2162 = vmatpush1.msra.mxu0 %v1131
  %2163 = vmatprep.subr.mxu0 %v1145
  %2164 = vmatpush1.msra.mxu0 %v1144
  %2165 = vmatprep.subr.mxu0 %v1158
  %2166 = vmatpush1.msra.mxu0 %v1157
  %2167 = vmatprep.subr.mxu0 %v1171
  %2168 = vmatpush1.msra.mxu0 %v1170
  %2169 = vmatprep.subr.mxu0 %v1184
  %2170 = vmatpush1.msra.mxu0 %v1183
  %2171 = vmatprep.subr.mxu0 %v1197
  %2172 = vmatpush1.msra.mxu0 %v1196
  %2173 = vmatprep.subr.mxu0 %v1210
  %2174 = vmatpush1.msra.mxu0 %v1209
  %2175 = vmatprep.subr.mxu0 %v1223
  %2176 = vmatpush1.msra.mxu0 %v1222
  %2177 = vmatprep.subr.mxu0 %v1236
  %2178 = vmatpush1.msra.mxu0 %v1235
  %2179 = vmatprep.subr.mxu0 %v1249
  %2180 = vmatpush1.msra.mxu0 %v1248
  %2181 = vmatprep.subr.mxu0 %v1262
  %2182 = vmatpush1.msra.mxu0 %v1261
  %2183 = vmatprep.mubr.f32.mxu0 %v1399
  %2184 = vmatmul.mubr.f32.gmra.mrb[0].mxu0 %v1391
  %v2185 = vpop.f32.mrb[0].mxu0
  %v2186 = vadd.f32 %v2115, %v2185
  %v2187 = vpop.f32.mrb[0].mxu0
  %v2188 = vadd.f32 %v2117, %v2187
  %2189 = vdwg.mxu0
  %2190 = vmatprep.subr.mxu0 %v1275
  %2191 = vmatpush1.msra.mxu0 %v1274
  %2192 = vmatprep.subr.mxu0 %v1288
  %2193 = vmatpush1.msra.mxu0 %v1287
  %2194 = vmatprep.subr.mxu0 0.0
  %2195 = vmatpush1.msra.mxu0 0.0
  %2196 = vmatprep.subr.mxu0 0.0
  %2197 = vmatpush1.msra.mxu0 0.0
  %2198 = vmatprep.subr.mxu0 0.0
  %2199 = vmatpush1.msra.mxu0 0.0
  %2200 = vmatprep.subr.mxu0 0.0
  %2201 = vmatpush1.msra.mxu0 0.0
  %2202 = vmatprep.subr.mxu0 0.0
  %2203 = vmatpush1.msra.mxu0 0.0
  %2204 = vmatprep.subr.mxu0 0.0
  %2205 = vmatpush1.msra.mxu0 0.0
  %2206 = vmatprep.subr.mxu0 0.0
  %2207 = vmatpush1.msra.mxu0 0.0
  %2208 = vmatprep.subr.mxu0 0.0
  %2209 = vmatpush1.msra.mxu0 0.0
  %2210 = vmatprep.subr.mxu0 0.0
  %2211 = vmatpush1.msra.mxu0 0.0
  %2212 = vmatprep.subr.mxu0 0.0
  %2213 = vmatpush1.msra.mxu0 0.0
  %2214 = vmatprep.subr.mxu0 0.0
  %2215 = vmatpush1.msra.mxu0 0.0
  %2216 = vmatprep.subr.mxu0 0.0
  %2217 = vmatpush1.msra.mxu0 0.0
  %2218 = vmatprep.subr.mxu0 0.0
  %2219 = vmatpush1.msra.mxu0 0.0
  %2220 = vmatprep.subr.mxu0 0.0
  %2221 = vmatpush1.msra.mxu0 0.0
  %2222 = vmatprep.subr.mxu0 0.0
  %2223 = vmatpush1.msra.mxu0 0.0
  %2224 = vmatprep.subr.mxu0 0.0
  %2225 = vmatpush1.msra.mxu0 0.0
  %2226 = vmatprep.subr.mxu0 0.0
  %2227 = vmatpush1.msra.mxu0 0.0
  %2228 = vmatprep.subr.mxu0 0.0
  %2229 = vmatpush1.msra.mxu0 0.0
  %2230 = vmatprep.subr.mxu0 0.0
  %2231 = vmatpush1.msra.mxu0 0.0
  %2232 = vmatprep.subr.mxu0 0.0
  %2233 = vmatpush1.msra.mxu0 0.0
  %2234 = vmatprep.subr.mxu0 0.0
  %2235 = vmatpush1.msra.mxu0 0.0
  %2236 = vmatprep.subr.mxu0 0.0
  %2237 = vmatpush1.msra.mxu0 0.0
  %2238 = vmatprep.subr.mxu0 0.0
  %2239 = vmatpush1.msra.mxu0 0.0
  %2240 = vmatprep.subr.mxu0 0.0
  %2241 = vmatpush1.msra.mxu0 0.0
  %2242 = vmatprep.subr.mxu0 0.0
  %2243 = vmatpush1.msra.mxu0 0.0
  %2244 = vmatprep.subr.mxu0 0.0
  %2245 = vmatpush1.msra.mxu0 0.0
  %2246 = vmatprep.subr.mxu0 0.0
  %2247 = vmatpush1.msra.mxu0 0.0
  %2248 = vmatprep.subr.mxu0 0.0
  %2249 = vmatpush1.msra.mxu0 0.0
  %2250 = vmatprep.subr.mxu0 0.0
  %2251 = vmatpush1.msra.mxu0 0.0
  %2252 = vmatprep.subr.mxu0 0.0
  %2253 = vmatpush1.msra.mxu0 0.0
  %2254 = vmatprep.mubr.f32.mxu0 0.0
  %2255 = vmatmul.mubr.f32.gmra.mrb[0].mxu0 %v1407
  %v2256 = vpop.f32.mrb[0].mxu0
  %v2257 = vadd.f32 %v2186, %v2256
  %v2258 = vpop.f32.mrb[0].mxu0
  %v2259 = vadd.f32 %v2188, %v2258
  %2260 = vdwg.mxu0
  %2261 = vmatprep.subr.mxu0 %v29
  %2262 = vmatpush1.msra.mxu0 %v28
  %2263 = vmatprep.subr.mxu0 %v42
  %2264 = vmatpush1.msra.mxu0 %v41
  %2265 = vmatprep.subr.mxu0 %v55
  %2266 = vmatpush1.msra.mxu0 %v54
  %2267 = vmatprep.subr.mxu0 %v68
  %2268 = vmatpush1.msra.mxu0 %v67
  %2269 = vmatprep.subr.mxu0 %v81
  %2270 = vmatpush1.msra.mxu0 %v80
  %2271 = vmatprep.subr.mxu0 %v94
  %2272 = vmatpush1.msra.mxu0 %v93
  %2273 = vmatprep.subr.mxu0 %v107
  %2274 = vmatpush1.msra.mxu0 %v106
  %2275 = vmatprep.subr.mxu0 %v120
  %2276 = vmatpush1.msra.mxu0 %v119
  %2277 = vmatprep.subr.mxu0 %v133
  %2278 = vmatpush1.msra.mxu0 %v132
  %2279 = vmatprep.subr.mxu0 %v146
  %2280 = vmatpush1.msra.mxu0 %v145
  %2281 = vmatprep.subr.mxu0 %v159
  %2282 = vmatpush1.msra.mxu0 %v158
  %2283 = vmatprep.subr.mxu0 %v172
  %2284 = vmatpush1.msra.mxu0 %v171
  %2285 = vmatprep.subr.mxu0 %v185
  %2286 = vmatpush1.msra.mxu0 %v184
  %2287 = vmatprep.subr.mxu0 %v198
  %2288 = vmatpush1.msra.mxu0 %v197
  %2289 = vmatprep.subr.mxu0 %v211
  %2290 = vmatpush1.msra.mxu0 %v210
  %2291 = vmatprep.subr.mxu0 %v224
  %2292 = vmatpush1.msra.mxu0 %v223
  %2293 = vmatprep.subr.mxu0 %v237
  %2294 = vmatpush1.msra.mxu0 %v236
  %2295 = vmatprep.subr.mxu0 %v250
  %2296 = vmatpush1.msra.mxu0 %v249
  %2297 = vmatprep.subr.mxu0 %v263
  %2298 = vmatpush1.msra.mxu0 %v262
  %2299 = vmatprep.subr.mxu0 %v276
  %2300 = vmatpush1.msra.mxu0 %v275
  %2301 = vmatprep.subr.mxu0 %v289
  %2302 = vmatpush1.msra.mxu0 %v288
  %2303 = vmatprep.subr.mxu0 %v302
  %2304 = vmatpush1.msra.mxu0 %v301
  %2305 = vmatprep.subr.mxu0 %v315
  %2306 = vmatpush1.msra.mxu0 %v314
  %2307 = vmatprep.subr.mxu0 %v328
  %2308 = vmatpush1.msra.mxu0 %v327
  %2309 = vmatprep.subr.mxu0 %v341
  %2310 = vmatpush1.msra.mxu0 %v340
  %2311 = vmatprep.subr.mxu0 %v354
  %2312 = vmatpush1.msra.mxu0 %v353
  %2313 = vmatprep.subr.mxu0 %v367
  %2314 = vmatpush1.msra.mxu0 %v366
  %2315 = vmatprep.subr.mxu0 %v380
  %2316 = vmatpush1.msra.mxu0 %v379
  %2317 = vmatprep.subr.mxu0 %v393
  %2318 = vmatpush1.msra.mxu0 %v392
  %2319 = vmatprep.subr.mxu0 %v406
  %2320 = vmatpush1.msra.mxu0 %v405
  %2321 = vmatprep.subr.mxu0 %v419
  %2322 = vmatpush1.msra.mxu0 %v418
  %2323 = vmatprep.subr.mxu0 %v432
  %2324 = vmatpush1.msra.mxu0 %v431
  %2325 = vmatprep.mubr.f32.mxu0 %v1382
  %2326 = vmatmul.mubr.f32.gmra.mrb[0].mxu0 %v1374
  %v2327 = vpop.f32.mrb[0].mxu0
  %v2328 = vadd.f32 %v1327, %v2327
  %v2329 = vpop.f32.mrb[0].mxu0
  %v2330 = vadd.f32 %v1331, %v2329
  %2331 = vdwg.mxu0
  %2332 = vmatprep.subr.mxu0 %v445
  %2333 = vmatpush1.msra.mxu0 %v444
  %2334 = vmatprep.subr.mxu0 %v458
  %2335 = vmatpush1.msra.mxu0 %v457
  %2336 = vmatprep.subr.mxu0 %v471
  %2337 = vmatpush1.msra.mxu0 %v470
  %2338 = vmatprep.subr.mxu0 %v484
  %2339 = vmatpush1.msra.mxu0 %v483
  %2340 = vmatprep.subr.mxu0 %v497
  %2341 = vmatpush1.msra.mxu0 %v496
  %2342 = vmatprep.subr.mxu0 %v510
  %2343 = vmatpush1.msra.mxu0 %v509
  %2344 = vmatprep.subr.mxu0 %v523
  %2345 = vmatpush1.msra.mxu0 %v522
  %2346 = vmatprep.subr.mxu0 %v536
  %2347 = vmatpush1.msra.mxu0 %v535
  %2348 = vmatprep.subr.mxu0 %v549
  %2349 = vmatpush1.msra.mxu0 %v548
  %2350 = vmatprep.subr.mxu0 %v562
  %2351 = vmatpush1.msra.mxu0 %v561
  %2352 = vmatprep.subr.mxu0 %v575
  %2353 = vmatpush1.msra.mxu0 %v574
  %2354 = vmatprep.subr.mxu0 %v588
  %2355 = vmatpush1.msra.mxu0 %v587
  %2356 = vmatprep.subr.mxu0 %v601
  %2357 = vmatpush1.msra.mxu0 %v600
  %2358 = vmatprep.subr.mxu0 %v614
  %2359 = vmatpush1.msra.mxu0 %v613
  %2360 = vmatprep.subr.mxu0 %v627
  %2361 = vmatpush1.msra.mxu0 %v626
  %2362 = vmatprep.subr.mxu0 %v640
  %2363 = vmatpush1.msra.mxu0 %v639
  %2364 = vmatprep.subr.mxu0 %v653
  %2365 = vmatpush1.msra.mxu0 %v652
  %2366 = vmatprep.subr.mxu0 %v666
  %2367 = vmatpush1.msra.mxu0 %v665
  %2368 = vmatprep.subr.mxu0 %v679
  %2369 = vmatpush1.msra.mxu0 %v678
  %2370 = vmatprep.subr.mxu0 %v692
  %2371 = vmatpush1.msra.mxu0 %v691
  %2372 = vmatprep.subr.mxu0 %v705
  %2373 = vmatpush1.msra.mxu0 %v704
  %2374 = vmatprep.subr.mxu0 %v718
  %2375 = vmatpush1.msra.mxu0 %v717
  %2376 = vmatprep.subr.mxu0 %v731
  %2377 = vmatpush1.msra.mxu0 %v730
  %2378 = vmatprep.subr.mxu0 %v744
  %2379 = vmatpush1.msra.mxu0 %v743
  %2380 = vmatprep.subr.mxu0 %v757
  %2381 = vmatpush1.msra.mxu0 %v756
  %2382 = vmatprep.subr.mxu0 %v770
  %2383 = vmatpush1.msra.mxu0 %v769
  %2384 = vmatprep.subr.mxu0 %v783
  %2385 = vmatpush1.msra.mxu0 %v782
  %2386 = vmatprep.subr.mxu0 %v796
  %2387 = vmatpush1.msra.mxu0 %v795
  %2388 = vmatprep.subr.mxu0 %v809
  %2389 = vmatpush1.msra.mxu0 %v808
  %2390 = vmatprep.subr.mxu0 %v822
  %2391 = vmatpush1.msra.mxu0 %v821
  %2392 = vmatprep.subr.mxu0 %v835
  %2393 = vmatpush1.msra.mxu0 %v834
  %2394 = vmatprep.subr.mxu0 %v848
  %2395 = vmatpush1.msra.mxu0 %v847
  %2396 = vmatprep.mubr.f32.mxu0 %v1383
  %2397 = vmatmul.mubr.f32.gmra.mrb[0].mxu0 %v1381
  %v2398 = vpop.f32.mrb[0].mxu0
  %v2399 = vadd.f32 %v2328, %v2398
  %v2400 = vpop.f32.mrb[0].mxu0
  %v2401 = vadd.f32 %v2330, %v2400
  %2402 = vdwg.mxu0
  %2403 = vmatprep.subr.mxu0 %v861
  %2404 = vmatpush1.msra.mxu0 %v860
  %2405 = vmatprep.subr.mxu0 %v874
  %2406 = vmatpush1.msra.mxu0 %v873
  %2407 = vmatprep.subr.mxu0 %v887
  %2408 = vmatpush1.msra.mxu0 %v886
  %2409 = vmatprep.subr.mxu0 %v900
  %2410 = vmatpush1.msra.mxu0 %v899
  %2411 = vmatprep.subr.mxu0 %v913
  %2412 = vmatpush1.msra.mxu0 %v912
  %2413 = vmatprep.subr.mxu0 %v926
  %2414 = vmatpush1.msra.mxu0 %v925
  %2415 = vmatprep.subr.mxu0 %v939
  %2416 = vmatpush1.msra.mxu0 %v938
  %2417 = vmatprep.subr.mxu0 %v952
  %2418 = vmatpush1.msra.mxu0 %v951
  %2419 = vmatprep.subr.mxu0 %v965
  %2420 = vmatpush1.msra.mxu0 %v964
  %2421 = vmatprep.subr.mxu0 %v978
  %2422 = vmatpush1.msra.mxu0 %v977
  %2423 = vmatprep.subr.mxu0 %v991
  %2424 = vmatpush1.msra.mxu0 %v990
  %2425 = vmatprep.subr.mxu0 %v1004
  %2426 = vmatpush1.msra.mxu0 %v1003
  %2427 = vmatprep.subr.mxu0 %v1017
  %2428 = vmatpush1.msra.mxu0 %v1016
  %2429 = vmatprep.subr.mxu0 %v1030
  %2430 = vmatpush1.msra.mxu0 %v1029
  %2431 = vmatprep.subr.mxu0 %v1043
  %2432 = vmatpush1.msra.mxu0 %v1042
  %2433 = vmatprep.subr.mxu0 %v1056
  %2434 = vmatpush1.msra.mxu0 %v1055
  %2435 = vmatprep.subr.mxu0 %v1069
  %2436 = vmatpush1.msra.mxu0 %v1068
  %2437 = vmatprep.subr.mxu0 %v1082
  %2438 = vmatpush1.msra.mxu0 %v1081
  %2439 = vmatprep.subr.mxu0 %v1095
  %2440 = vmatpush1.msra.mxu0 %v1094
  %2441 = vmatprep.subr.mxu0 %v1108
  %2442 = vmatpush1.msra.mxu0 %v1107
  %2443 = vmatprep.subr.mxu0 %v1121
  %2444 = vmatpush1.msra.mxu0 %v1120
  %2445 = vmatprep.subr.mxu0 %v1134
  %2446 = vmatpush1.msra.mxu0 %v1133
  %2447 = vmatprep.subr.mxu0 %v1147
  %2448 = vmatpush1.msra.mxu0 %v1146
  %2449 = vmatprep.subr.mxu0 %v1160
  %2450 = vmatpush1.msra.mxu0 %v1159
  %2451 = vmatprep.subr.mxu0 %v1173
  %2452 = vmatpush1.msra.mxu0 %v1172
  %2453 = vmatprep.subr.mxu0 %v1186
  %2454 = vmatpush1.msra.mxu0 %v1185
  %2455 = vmatprep.subr.mxu0 %v1199
  %2456 = vmatpush1.msra.mxu0 %v1198
  %2457 = vmatprep.subr.mxu0 %v1212
  %2458 = vmatpush1.msra.mxu0 %v1211
  %2459 = vmatprep.subr.mxu0 %v1225
  %2460 = vmatpush1.msra.mxu0 %v1224
  %2461 = vmatprep.subr.mxu0 %v1238
  %2462 = vmatpush1.msra.mxu0 %v1237
  %2463 = vmatprep.subr.mxu0 %v1251
  %2464 = vmatpush1.msra.mxu0 %v1250
  %2465 = vmatprep.subr.mxu0 %v1264
  %2466 = vmatpush1.msra.mxu0 %v1263
  %2467 = vmatprep.mubr.f32.mxu0 %v1399
  %2468 = vmatmul.mubr.f32.gmra.mrb[0].mxu0 %v1391
  %v2469 = vpop.f32.mrb[0].mxu0
  %v2470 = vadd.f32 %v2399, %v2469
  %v2471 = vpop.f32.mrb[0].mxu0
  %v2472 = vadd.f32 %v2401, %v2471
  %2473 = vdwg.mxu0
  %2474 = vmatprep.subr.mxu0 %v1277
  %2475 = vmatpush1.msra.mxu0 %v1276
  %2476 = vmatprep.subr.mxu0 %v1290
  %2477 = vmatpush1.msra.mxu0 %v1289
  %2478 = vmatprep.subr.mxu0 0.0
  %2479 = vmatpush1.msra.mxu0 0.0
  %2480 = vmatprep.subr.mxu0 0.0
  %2481 = vmatpush1.msra.mxu0 0.0
  %2482 = vmatprep.subr.mxu0 0.0
  %2483 = vmatpush1.msra.mxu0 0.0
  %2484 = vmatprep.subr.mxu0 0.0
  %2485 = vmatpush1.msra.mxu0 0.0
  %2486 = vmatprep.subr.mxu0 0.0
  %2487 = vmatpush1.msra.mxu0 0.0
  %2488 = vmatprep.subr.mxu0 0.0
  %2489 = vmatpush1.msra.mxu0 0.0
  %2490 = vmatprep.subr.mxu0 0.0
  %2491 = vmatpush1.msra.mxu0 0.0
  %2492 = vmatprep.subr.mxu0 0.0
  %2493 = vmatpush1.msra.mxu0 0.0
  %2494 = vmatprep.subr.mxu0 0.0
  %2495 = vmatpush1.msra.mxu0 0.0
  %2496 = vmatprep.subr.mxu0 0.0
  %2497 = vmatpush1.msra.mxu0 0.0
  %2498 = vmatprep.subr.mxu0 0.0
  %2499 = vmatpush1.msra.mxu0 0.0
  %2500 = vmatprep.subr.mxu0 0.0
  %2501 = vmatpush1.msra.mxu0 0.0
  %2502 = vmatprep.subr.mxu0 0.0
  %2503 = vmatpush1.msra.mxu0 0.0
  %2504 = vmatprep.subr.mxu0 0.0
  %2505 = vmatpush1.msra.mxu0 0.0
  %2506 = vmatprep.subr.mxu0 0.0
  %2507 = vmatpush1.msra.mxu0 0.0
  %2508 = vmatprep.subr.mxu0 0.0
  %2509 = vmatpush1.msra.mxu0 0.0
  %2510 = vmatprep.subr.mxu0 0.0
  %2511 = vmatpush1.msra.mxu0 0.0
  %2512 = vmatprep.subr.mxu0 0.0
  %2513 = vmatpush1.msra.mxu0 0.0
  %2514 = vmatprep.subr.mxu0 0.0
  %2515 = vmatpush1.msra.mxu0 0.0
  %2516 = vmatprep.subr.mxu0 0.0
  %2517 = vmatpush1.msra.mxu0 0.0
  %2518 = vmatprep.subr.mxu0 0.0
  %2519 = vmatpush1.msra.mxu0 0.0
  %2520 = vmatprep.subr.mxu0 0.0
  %2521 = vmatpush1.msra.mxu0 0.0
  %2522 = vmatprep.subr.mxu0 0.0
  %2523 = vmatpush1.msra.mxu0 0.0
  %2524 = vmatprep.subr.mxu0 0.0
  %2525 = vmatpush1.msra.mxu0 0.0
  %2526 = vmatprep.subr.mxu0 0.0
  %2527 = vmatpush1.msra.mxu0 0.0
  %2528 = vmatprep.subr.mxu0 0.0
  %2529 = vmatpush1.msra.mxu0 0.0
  %2530 = vmatprep.subr.mxu0 0.0
  %2531 = vmatpush1.msra.mxu0 0.0
  %2532 = vmatprep.subr.mxu0 0.0
  %2533 = vmatpush1.msra.mxu0 0.0
  %2534 = vmatprep.subr.mxu0 0.0
  %2535 = vmatpush1.msra.mxu0 0.0
  %2536 = vmatprep.subr.mxu0 0.0
  %2537 = vmatpush1.msra.mxu0 0.0
  %2538 = vmatprep.mubr.f32.mxu0 0.0
  %2539 = vmatmul.mubr.f32.gmra.mrb[0].mxu0 %v1407
  %v2540 = vpop.f32.mrb[0].mxu0
  %v2541 = vadd.f32 %v2470, %v2540
  %v2542 = vpop.f32.mrb[0].mxu0
  %v2543 = vadd.f32 %v2472, %v2542
  %2544 = vdwg.mxu0
  %2545 = vmatprep.subr.mxu0 %v31
  %2546 = vmatpush1.msra.mxu0 %v30
  %2547 = vmatprep.subr.mxu0 %v44
  %2548 = vmatpush1.msra.mxu0 %v43
  %2549 = vmatprep.subr.mxu0 %v57
  %2550 = vmatpush1.msra.mxu0 %v56
  %2551 = vmatprep.subr.mxu0 %v70
  %2552 = vmatpush1.msra.mxu0 %v69
  %2553 = vmatprep.subr.mxu0 %v83
  %2554 = vmatpush1.msra.mxu0 %v82
  %2555 = vmatprep.subr.mxu0 %v96
  %2556 = vmatpush1.msra.mxu0 %v95
  %2557 = vmatprep.subr.mxu0 %v109
  %2558 = vmatpush1.msra.mxu0 %v108
  %2559 = vmatprep.subr.mxu0 %v122
  %2560 = vmatpush1.msra.mxu0 %v121
  %2561 = vmatprep.subr.mxu0 %v135
  %2562 = vmatpush1.msra.mxu0 %v134
  %2563 = vmatprep.subr.mxu0 %v148
  %2564 = vmatpush1.msra.mxu0 %v147
  %2565 = vmatprep.subr.mxu0 %v161
  %2566 = vmatpush1.msra.mxu0 %v160
  %2567 = vmatprep.subr.mxu0 %v174
  %2568 = vmatpush1.msra.mxu0 %v173
  %2569 = vmatprep.subr.mxu0 %v187
  %2570 = vmatpush1.msra.mxu0 %v186
  %2571 = vmatprep.subr.mxu0 %v200
  %2572 = vmatpush1.msra.mxu0 %v199
  %2573 = vmatprep.subr.mxu0 %v213
  %2574 = vmatpush1.msra.mxu0 %v212
  %2575 = vmatprep.subr.mxu0 %v226
  %2576 = vmatpush1.msra.mxu0 %v225
  %2577 = vmatprep.subr.mxu0 %v239
  %2578 = vmatpush1.msra.mxu0 %v238
  %2579 = vmatprep.subr.mxu0 %v252
  %2580 = vmatpush1.msra.mxu0 %v251
  %2581 = vmatprep.subr.mxu0 %v265
  %2582 = vmatpush1.msra.mxu0 %v264
  %2583 = vmatprep.subr.mxu0 %v278
  %2584 = vmatpush1.msra.mxu0 %v277
  %2585 = vmatprep.subr.mxu0 %v291
  %2586 = vmatpush1.msra.mxu0 %v290
  %2587 = vmatprep.subr.mxu0 %v304
  %2588 = vmatpush1.msra.mxu0 %v303
  %2589 = vmatprep.subr.mxu0 %v317
  %2590 = vmatpush1.msra.mxu0 %v316
  %2591 = vmatprep.subr.mxu0 %v330
  %2592 = vmatpush1.msra.mxu0 %v329
  %2593 = vmatprep.subr.mxu0 %v343
  %2594 = vmatpush1.msra.mxu0 %v342
  %2595 = vmatprep.subr.mxu0 %v356
  %2596 = vmatpush1.msra.mxu0 %v355
  %2597 = vmatprep.subr.mxu0 %v369
  %2598 = vmatpush1.msra.mxu0 %v368
  %2599 = vmatprep.subr.mxu0 %v382
  %2600 = vmatpush1.msra.mxu0 %v381
  %2601 = vmatprep.subr.mxu0 %v395
  %2602 = vmatpush1.msra.mxu0 %v394
  %2603 = vmatprep.subr.mxu0 %v408
  %2604 = vmatpush1.msra.mxu0 %v407
  %2605 = vmatprep.subr.mxu0 %v421
  %2606 = vmatpush1.msra.mxu0 %v420
  %2607 = vmatprep.subr.mxu0 %v434
  %2608 = vmatpush1.msra.mxu0 %v433
  %2609 = vmatprep.mubr.f32.mxu0 %v1382
  %2610 = vmatmul.mubr.f32.gmra.mrb[0].mxu0 %v1374
  %v2611 = vpop.f32.mrb[0].mxu0
  %v2612 = vadd.f32 %v1335, %v2611
  %v2613 = vpop.f32.mrb[0].mxu0
  %v2614 = vadd.f32 %v1339, %v2613
  %2615 = vdwg.mxu0
  %2616 = vmatprep.subr.mxu0 %v447
  %2617 = vmatpush1.msra.mxu0 %v446
  %2618 = vmatprep.subr.mxu0 %v460
  %2619 = vmatpush1.msra.mxu0 %v459
  %2620 = vmatprep.subr.mxu0 %v473
  %2621 = vmatpush1.msra.mxu0 %v472
  %2622 = vmatprep.subr.mxu0 %v486
  %2623 = vmatpush1.msra.mxu0 %v485
  %2624 = vmatprep.subr.mxu0 %v499
  %2625 = vmatpush1.msra.mxu0 %v498
  %2626 = vmatprep.subr.mxu0 %v512
  %2627 = vmatpush1.msra.mxu0 %v511
  %2628 = vmatprep.subr.mxu0 %v525
  %2629 = vmatpush1.msra.mxu0 %v524
  %2630 = vmatprep.subr.mxu0 %v538
  %2631 = vmatpush1.msra.mxu0 %v537
  %2632 = vmatprep.subr.mxu0 %v551
  %2633 = vmatpush1.msra.mxu0 %v550
  %2634 = vmatprep.subr.mxu0 %v564
  %2635 = vmatpush1.msra.mxu0 %v563
  %2636 = vmatprep.subr.mxu0 %v577
  %2637 = vmatpush1.msra.mxu0 %v576
  %2638 = vmatprep.subr.mxu0 %v590
  %2639 = vmatpush1.msra.mxu0 %v589
  %2640 = vmatprep.subr.mxu0 %v603
  %2641 = vmatpush1.msra.mxu0 %v602
  %2642 = vmatprep.subr.mxu0 %v616
  %2643 = vmatpush1.msra.mxu0 %v615
  %2644 = vmatprep.subr.mxu0 %v629
  %2645 = vmatpush1.msra.mxu0 %v628
  %2646 = vmatprep.subr.mxu0 %v642
  %2647 = vmatpush1.msra.mxu0 %v641
  %2648 = vmatprep.subr.mxu0 %v655
  %2649 = vmatpush1.msra.mxu0 %v654
  %2650 = vmatprep.subr.mxu0 %v668
  %2651 = vmatpush1.msra.mxu0 %v667
  %2652 = vmatprep.subr.mxu0 %v681
  %2653 = vmatpush1.msra.mxu0 %v680
  %2654 = vmatprep.subr.mxu0 %v694
  %2655 = vmatpush1.msra.mxu0 %v693
  %2656 = vmatprep.subr.mxu0 %v707
  %2657 = vmatpush1.msra.mxu0 %v706
  %2658 = vmatprep.subr.mxu0 %v720
  %2659 = vmatpush1.msra.mxu0 %v719
  %2660 = vmatprep.subr.mxu0 %v733
  %2661 = vmatpush1.msra.mxu0 %v732
  %2662 = vmatprep.subr.mxu0 %v746
  %2663 = vmatpush1.msra.mxu0 %v745
  %2664 = vmatprep.subr.mxu0 %v759
  %2665 = vmatpush1.msra.mxu0 %v758
  %2666 = vmatprep.subr.mxu0 %v772
  %2667 = vmatpush1.msra.mxu0 %v771
  %2668 = vmatprep.subr.mxu0 %v785
  %2669 = vmatpush1.msra.mxu0 %v784
  %2670 = vmatprep.subr.mxu0 %v798
  %2671 = vmatpush1.msra.mxu0 %v797
  %2672 = vmatprep.subr.mxu0 %v811
  %2673 = vmatpush1.msra.mxu0 %v810
  %2674 = vmatprep.subr.mxu0 %v824
  %2675 = vmatpush1.msra.mxu0 %v823
  %2676 = vmatprep.subr.mxu0 %v837
  %2677 = vmatpush1.msra.mxu0 %v836
  %2678 = vmatprep.subr.mxu0 %v850
  %2679 = vmatpush1.msra.mxu0 %v849
  %2680 = vmatprep.mubr.f32.mxu0 %v1383
  %2681 = vmatmul.mubr.f32.gmra.mrb[0].mxu0 %v1381
  %v2682 = vpop.f32.mrb[0].mxu0
  %v2683 = vadd.f32 %v2612, %v2682
  %v2684 = vpop.f32.mrb[0].mxu0
  %v2685 = vadd.f32 %v2614, %v2684
  %2686 = vdwg.mxu0
  %2687 = vmatprep.subr.mxu0 %v863
  %2688 = vmatpush1.msra.mxu0 %v862
  %2689 = vmatprep.subr.mxu0 %v876
  %2690 = vmatpush1.msra.mxu0 %v875
  %2691 = vmatprep.subr.mxu0 %v889
  %2692 = vmatpush1.msra.mxu0 %v888
  %2693 = vmatprep.subr.mxu0 %v902
  %2694 = vmatpush1.msra.mxu0 %v901
  %2695 = vmatprep.subr.mxu0 %v915
  %2696 = vmatpush1.msra.mxu0 %v914
  %2697 = vmatprep.subr.mxu0 %v928
  %2698 = vmatpush1.msra.mxu0 %v927
  %2699 = vmatprep.subr.mxu0 %v941
  %2700 = vmatpush1.msra.mxu0 %v940
  %2701 = vmatprep.subr.mxu0 %v954
  %2702 = vmatpush1.msra.mxu0 %v953
  %2703 = vmatprep.subr.mxu0 %v967
  %2704 = vmatpush1.msra.mxu0 %v966
  %2705 = vmatprep.subr.mxu0 %v980
  %2706 = vmatpush1.msra.mxu0 %v979
  %2707 = vmatprep.subr.mxu0 %v993
  %2708 = vmatpush1.msra.mxu0 %v992
  %2709 = vmatprep.subr.mxu0 %v1006
  %2710 = vmatpush1.msra.mxu0 %v1005
  %2711 = vmatprep.subr.mxu0 %v1019
  %2712 = vmatpush1.msra.mxu0 %v1018
  %2713 = vmatprep.subr.mxu0 %v1032
  %2714 = vmatpush1.msra.mxu0 %v1031
  %2715 = vmatprep.subr.mxu0 %v1045
  %2716 = vmatpush1.msra.mxu0 %v1044
  %2717 = vmatprep.subr.mxu0 %v1058
  %2718 = vmatpush1.msra.mxu0 %v1057
  %2719 = vmatprep.subr.mxu0 %v1071
  %2720 = vmatpush1.msra.mxu0 %v1070
  %2721 = vmatprep.subr.mxu0 %v1084
  %2722 = vmatpush1.msra.mxu0 %v1083
  %2723 = vmatprep.subr.mxu0 %v1097
  %2724 = vmatpush1.msra.mxu0 %v1096
  %2725 = vmatprep.subr.mxu0 %v1110
  %2726 = vmatpush1.msra.mxu0 %v1109
  %2727 = vmatprep.subr.mxu0 %v1123
  %2728 = vmatpush1.msra.mxu0 %v1122
  %2729 = vmatprep.subr.mxu0 %v1136
  %2730 = vmatpush1.msra.mxu0 %v1135
  %2731 = vmatprep.subr.mxu0 %v1149
  %2732 = vmatpush1.msra.mxu0 %v1148
  %2733 = vmatprep.subr.mxu0 %v1162
  %2734 = vmatpush1.msra.mxu0 %v1161
  %2735 = vmatprep.subr.mxu0 %v1175
  %2736 = vmatpush1.msra.mxu0 %v1174
  %2737 = vmatprep.subr.mxu0 %v1188
  %2738 = vmatpush1.msra.mxu0 %v1187
  %2739 = vmatprep.subr.mxu0 %v1201
  %2740 = vmatpush1.msra.mxu0 %v1200
  %2741 = vmatprep.subr.mxu0 %v1214
  %2742 = vmatpush1.msra.mxu0 %v1213
  %2743 = vmatprep.subr.mxu0 %v1227
  %2744 = vmatpush1.msra.mxu0 %v1226
  %2745 = vmatprep.subr.mxu0 %v1240
  %2746 = vmatpush1.msra.mxu0 %v1239
  %2747 = vmatprep.subr.mxu0 %v1253
  %2748 = vmatpush1.msra.mxu0 %v1252
  %2749 = vmatprep.subr.mxu0 %v1266
  %2750 = vmatpush1.msra.mxu0 %v1265
  %2751 = vmatprep.mubr.f32.mxu0 %v1399
  %2752 = vmatmul.mubr.f32.gmra.mrb[0].mxu0 %v1391
  %v2753 = vpop.f32.mrb[0].mxu0
  %v2754 = vadd.f32 %v2683, %v2753
  %v2755 = vpop.f32.mrb[0].mxu0
  %v2756 = vadd.f32 %v2685, %v2755
  %2757 = vdwg.mxu0
  %2758 = vmatprep.subr.mxu0 %v1279
  %2759 = vmatpush1.msra.mxu0 %v1278
  %2760 = vmatprep.subr.mxu0 %v1292
  %2761 = vmatpush1.msra.mxu0 %v1291
  %2762 = vmatprep.subr.mxu0 0.0
  %2763 = vmatpush1.msra.mxu0 0.0
  %2764 = vmatprep.subr.mxu0 0.0
  %2765 = vmatpush1.msra.mxu0 0.0
  %2766 = vmatprep.subr.mxu0 0.0
  %2767 = vmatpush1.msra.mxu0 0.0
  %2768 = vmatprep.subr.mxu0 0.0
  %2769 = vmatpush1.msra.mxu0 0.0
  %2770 = vmatprep.subr.mxu0 0.0
  %2771 = vmatpush1.msra.mxu0 0.0
  %2772 = vmatprep.subr.mxu0 0.0
  %2773 = vmatpush1.msra.mxu0 0.0
  %2774 = vmatprep.subr.mxu0 0.0
  %2775 = vmatpush1.msra.mxu0 0.0
  %2776 = vmatprep.subr.mxu0 0.0
  %2777 = vmatpush1.msra.mxu0 0.0
  %2778 = vmatprep.subr.mxu0 0.0
  %2779 = vmatpush1.msra.mxu0 0.0
  %2780 = vmatprep.subr.mxu0 0.0
  %2781 = vmatpush1.msra.mxu0 0.0
  %2782 = vmatprep.subr.mxu0 0.0
  %2783 = vmatpush1.msra.mxu0 0.0
  %2784 = vmatprep.subr.mxu0 0.0
  %2785 = vmatpush1.msra.mxu0 0.0
  %2786 = vmatprep.subr.mxu0 0.0
  %2787 = vmatpush1.msra.mxu0 0.0
  %2788 = vmatprep.subr.mxu0 0.0
  %2789 = vmatpush1.msra.mxu0 0.0
  %2790 = vmatprep.subr.mxu0 0.0
  %2791 = vmatpush1.msra.mxu0 0.0
  %2792 = vmatprep.subr.mxu0 0.0
  %2793 = vmatpush1.msra.mxu0 0.0
  %2794 = vmatprep.subr.mxu0 0.0
  %2795 = vmatpush1.msra.mxu0 0.0
  %2796 = vmatprep.subr.mxu0 0.0
  %2797 = vmatpush1.msra.mxu0 0.0
  %2798 = vmatprep.subr.mxu0 0.0
  %2799 = vmatpush1.msra.mxu0 0.0
  %2800 = vmatprep.subr.mxu0 0.0
  %2801 = vmatpush1.msra.mxu0 0.0
  %2802 = vmatprep.subr.mxu0 0.0
  %2803 = vmatpush1.msra.mxu0 0.0
  %2804 = vmatprep.subr.mxu0 0.0
  %2805 = vmatpush1.msra.mxu0 0.0
  %2806 = vmatprep.subr.mxu0 0.0
  %2807 = vmatpush1.msra.mxu0 0.0
  %2808 = vmatprep.subr.mxu0 0.0
  %2809 = vmatpush1.msra.mxu0 0.0
  %2810 = vmatprep.subr.mxu0 0.0
  %2811 = vmatpush1.msra.mxu0 0.0
  %2812 = vmatprep.subr.mxu0 0.0
  %2813 = vmatpush1.msra.mxu0 0.0
  %2814 = vmatprep.subr.mxu0 0.0
  %2815 = vmatpush1.msra.mxu0 0.0
  %2816 = vmatprep.subr.mxu0 0.0
  %2817 = vmatpush1.msra.mxu0 0.0
  %2818 = vmatprep.subr.mxu0 0.0
  %2819 = vmatpush1.msra.mxu0 0.0
  %2820 = vmatprep.subr.mxu0 0.0
  %2821 = vmatpush1.msra.mxu0 0.0
  %2822 = vmatprep.mubr.f32.mxu0 0.0
  %2823 = vmatmul.mubr.f32.gmra.mrb[0].mxu0 %v1407
  %v2824 = vpop.f32.mrb[0].mxu0
  %v2825 = vadd.f32 %v2754, %v2824
  %v2826 = vpop.f32.mrb[0].mxu0
  %v2827 = vadd.f32 %v2756, %v2826
  %2828 = vdwg.mxu0
  %2829 = vmatprep.subr.mxu0 %v33
  %2830 = vmatpush1.msra.mxu0 %v32
  %2831 = vmatprep.subr.mxu0 %v46
  %2832 = vmatpush1.msra.mxu0 %v45
  %2833 = vmatprep.subr.mxu0 %v59
  %2834 = vmatpush1.msra.mxu0 %v58
  %2835 = vmatprep.subr.mxu0 %v72
  %2836 = vmatpush1.msra.mxu0 %v71
  %2837 = vmatprep.subr.mxu0 %v85
  %2838 = vmatpush1.msra.mxu0 %v84
  %2839 = vmatprep.subr.mxu0 %v98
  %2840 = vmatpush1.msra.mxu0 %v97
  %2841 = vmatprep.subr.mxu0 %v111
  %2842 = vmatpush1.msra.mxu0 %v110
  %2843 = vmatprep.subr.mxu0 %v124
  %2844 = vmatpush1.msra.mxu0 %v123
  %2845 = vmatprep.subr.mxu0 %v137
  %2846 = vmatpush1.msra.mxu0 %v136
  %2847 = vmatprep.subr.mxu0 %v150
  %2848 = vmatpush1.msra.mxu0 %v149
  %2849 = vmatprep.subr.mxu0 %v163
  %2850 = vmatpush1.msra.mxu0 %v162
  %2851 = vmatprep.subr.mxu0 %v176
  %2852 = vmatpush1.msra.mxu0 %v175
  %2853 = vmatprep.subr.mxu0 %v189
  %2854 = vmatpush1.msra.mxu0 %v188
  %2855 = vmatprep.subr.mxu0 %v202
  %2856 = vmatpush1.msra.mxu0 %v201
  %2857 = vmatprep.subr.mxu0 %v215
  %2858 = vmatpush1.msra.mxu0 %v214
  %2859 = vmatprep.subr.mxu0 %v228
  %2860 = vmatpush1.msra.mxu0 %v227
  %2861 = vmatprep.subr.mxu0 %v241
  %2862 = vmatpush1.msra.mxu0 %v240
  %2863 = vmatprep.subr.mxu0 %v254
  %2864 = vmatpush1.msra.mxu0 %v253
  %2865 = vmatprep.subr.mxu0 %v267
  %2866 = vmatpush1.msra.mxu0 %v266
  %2867 = vmatprep.subr.mxu0 %v280
  %2868 = vmatpush1.msra.mxu0 %v279
  %2869 = vmatprep.subr.mxu0 %v293
  %2870 = vmatpush1.msra.mxu0 %v292
  %2871 = vmatprep.subr.mxu0 %v306
  %2872 = vmatpush1.msra.mxu0 %v305
  %2873 = vmatprep.subr.mxu0 %v319
  %2874 = vmatpush1.msra.mxu0 %v318
  %2875 = vmatprep.subr.mxu0 %v332
  %2876 = vmatpush1.msra.mxu0 %v331
  %2877 = vmatprep.subr.mxu0 %v345
  %2878 = vmatpush1.msra.mxu0 %v344
  %2879 = vmatprep.subr.mxu0 %v358
  %2880 = vmatpush1.msra.mxu0 %v357
  %2881 = vmatprep.subr.mxu0 %v371
  %2882 = vmatpush1.msra.mxu0 %v370
  %2883 = vmatprep.subr.mxu0 %v384
  %2884 = vmatpush1.msra.mxu0 %v383
  %2885 = vmatprep.subr.mxu0 %v397
  %2886 = vmatpush1.msra.mxu0 %v396
  %2887 = vmatprep.subr.mxu0 %v410
  %2888 = vmatpush1.msra.mxu0 %v409
  %2889 = vmatprep.subr.mxu0 %v423
  %2890 = vmatpush1.msra.mxu0 %v422
  %2891 = vmatprep.subr.mxu0 %v436
  %2892 = vmatpush1.msra.mxu0 %v435
  %2893 = vmatprep.mubr.f32.mxu0 %v1382
  %2894 = vmatmul.mubr.f32.gmra.mrb[0].mxu0 %v1374
  %v2895 = vpop.f32.mrb[0].mxu0
  %v2896 = vadd.f32 %v1343, %v2895
  %v2897 = vpop.f32.mrb[0].mxu0
  %v2898 = vadd.f32 %v1347, %v2897
  %2899 = vdwg.mxu0
  %2900 = vmatprep.subr.mxu0 %v449
  %2901 = vmatpush1.msra.mxu0 %v448
  %2902 = vmatprep.subr.mxu0 %v462
  %2903 = vmatpush1.msra.mxu0 %v461
  %2904 = vmatprep.subr.mxu0 %v475
  %2905 = vmatpush1.msra.mxu0 %v474
  %2906 = vmatprep.subr.mxu0 %v488
  %2907 = vmatpush1.msra.mxu0 %v487
  %2908 = vmatprep.subr.mxu0 %v501
  %2909 = vmatpush1.msra.mxu0 %v500
  %2910 = vmatprep.subr.mxu0 %v514
  %2911 = vmatpush1.msra.mxu0 %v513
  %2912 = vmatprep.subr.mxu0 %v527
  %2913 = vmatpush1.msra.mxu0 %v526
  %2914 = vmatprep.subr.mxu0 %v540
  %2915 = vmatpush1.msra.mxu0 %v539
  %2916 = vmatprep.subr.mxu0 %v553
  %2917 = vmatpush1.msra.mxu0 %v552
  %2918 = vmatprep.subr.mxu0 %v566
  %2919 = vmatpush1.msra.mxu0 %v565
  %2920 = vmatprep.subr.mxu0 %v579
  %2921 = vmatpush1.msra.mxu0 %v578
  %2922 = vmatprep.subr.mxu0 %v592
  %2923 = vmatpush1.msra.mxu0 %v591
  %2924 = vmatprep.subr.mxu0 %v605
  %2925 = vmatpush1.msra.mxu0 %v604
  %2926 = vmatprep.subr.mxu0 %v618
  %2927 = vmatpush1.msra.mxu0 %v617
  %2928 = vmatprep.subr.mxu0 %v631
  %2929 = vmatpush1.msra.mxu0 %v630
  %2930 = vmatprep.subr.mxu0 %v644
  %2931 = vmatpush1.msra.mxu0 %v643
  %2932 = vmatprep.subr.mxu0 %v657
  %2933 = vmatpush1.msra.mxu0 %v656
  %2934 = vmatprep.subr.mxu0 %v670
  %2935 = vmatpush1.msra.mxu0 %v669
  %2936 = vmatprep.subr.mxu0 %v683
  %2937 = vmatpush1.msra.mxu0 %v682
  %2938 = vmatprep.subr.mxu0 %v696
  %2939 = vmatpush1.msra.mxu0 %v695
  %2940 = vmatprep.subr.mxu0 %v709
  %2941 = vmatpush1.msra.mxu0 %v708
  %2942 = vmatprep.subr.mxu0 %v722
  %2943 = vmatpush1.msra.mxu0 %v721
  %2944 = vmatprep.subr.mxu0 %v735
  %2945 = vmatpush1.msra.mxu0 %v734
  %2946 = vmatprep.subr.mxu0 %v748
  %2947 = vmatpush1.msra.mxu0 %v747
  %2948 = vmatprep.subr.mxu0 %v761
  %2949 = vmatpush1.msra.mxu0 %v760
  %2950 = vmatprep.subr.mxu0 %v774
  %2951 = vmatpush1.msra.mxu0 %v773
  %2952 = vmatprep.subr.mxu0 %v787
  %2953 = vmatpush1.msra.mxu0 %v786
  %2954 = vmatprep.subr.mxu0 %v800
  %2955 = vmatpush1.msra.mxu0 %v799
  %2956 = vmatprep.subr.mxu0 %v813
  %2957 = vmatpush1.msra.mxu0 %v812
  %2958 = vmatprep.subr.mxu0 %v826
  %2959 = vmatpush1.msra.mxu0 %v825
  %2960 = vmatprep.subr.mxu0 %v839
  %2961 = vmatpush1.msra.mxu0 %v838
  %2962 = vmatprep.subr.mxu0 %v852
  %2963 = vmatpush1.msra.mxu0 %v851
  %2964 = vmatprep.mubr.f32.mxu0 %v1383
  %2965 = vmatmul.mubr.f32.gmra.mrb[0].mxu0 %v1381
  %v2966 = vpop.f32.mrb[0].mxu0
  %v2967 = vadd.f32 %v2896, %v2966
  %v2968 = vpop.f32.mrb[0].mxu0
  %v2969 = vadd.f32 %v2898, %v2968
  %2970 = vdwg.mxu0
  %2971 = vmatprep.subr.mxu0 %v865
  %2972 = vmatpush1.msra.mxu0 %v864
  %2973 = vmatprep.subr.mxu0 %v878
  %2974 = vmatpush1.msra.mxu0 %v877
  %2975 = vmatprep.subr.mxu0 %v891
  %2976 = vmatpush1.msra.mxu0 %v890
  %2977 = vmatprep.subr.mxu0 %v904
  %2978 = vmatpush1.msra.mxu0 %v903
  %2979 = vmatprep.subr.mxu0 %v917
  %2980 = vmatpush1.msra.mxu0 %v916
  %2981 = vmatprep.subr.mxu0 %v930
  %2982 = vmatpush1.msra.mxu0 %v929
  %2983 = vmatprep.subr.mxu0 %v943
  %2984 = vmatpush1.msra.mxu0 %v942
  %2985 = vmatprep.subr.mxu0 %v956
  %2986 = vmatpush1.msra.mxu0 %v955
  %2987 = vmatprep.subr.mxu0 %v969
  %2988 = vmatpush1.msra.mxu0 %v968
  %2989 = vmatprep.subr.mxu0 %v982
  %2990 = vmatpush1.msra.mxu0 %v981
  %2991 = vmatprep.subr.mxu0 %v995
  %2992 = vmatpush1.msra.mxu0 %v994
  %2993 = vmatprep.subr.mxu0 %v1008
  %2994 = vmatpush1.msra.mxu0 %v1007
  %2995 = vmatprep.subr.mxu0 %v1021
  %2996 = vmatpush1.msra.mxu0 %v1020
  %2997 = vmatprep.subr.mxu0 %v1034
  %2998 = vmatpush1.msra.mxu0 %v1033
  %2999 = vmatprep.subr.mxu0 %v1047
  %3000 = vmatpush1.msra.mxu0 %v1046
  %3001 = vmatprep.subr.mxu0 %v1060
  %3002 = vmatpush1.msra.mxu0 %v1059
  %3003 = vmatprep.subr.mxu0 %v1073
  %3004 = vmatpush1.msra.mxu0 %v1072
  %3005 = vmatprep.subr.mxu0 %v1086
  %3006 = vmatpush1.msra.mxu0 %v1085
  %3007 = vmatprep.subr.mxu0 %v1099
  %3008 = vmatpush1.msra.mxu0 %v1098
  %3009 = vmatprep.subr.mxu0 %v1112
  %3010 = vmatpush1.msra.mxu0 %v1111
  %3011 = vmatprep.subr.mxu0 %v1125
  %3012 = vmatpush1.msra.mxu0 %v1124
  %3013 = vmatprep.subr.mxu0 %v1138
  %3014 = vmatpush1.msra.mxu0 %v1137
  %3015 = vmatprep.subr.mxu0 %v1151
  %3016 = vmatpush1.msra.mxu0 %v1150
  %3017 = vmatprep.subr.mxu0 %v1164
  %3018 = vmatpush1.msra.mxu0 %v1163
  %3019 = vmatprep.subr.mxu0 %v1177
  %3020 = vmatpush1.msra.mxu0 %v1176
  %3021 = vmatprep.subr.mxu0 %v1190
  %3022 = vmatpush1.msra.mxu0 %v1189
  %3023 = vmatprep.subr.mxu0 %v1203
  %3024 = vmatpush1.msra.mxu0 %v1202
  %3025 = vmatprep.subr.mxu0 %v1216
  %3026 = vmatpush1.msra.mxu0 %v1215
  %3027 = vmatprep.subr.mxu0 %v1229
  %3028 = vmatpush1.msra.mxu0 %v1228
  %3029 = vmatprep.subr.mxu0 %v1242
  %3030 = vmatpush1.msra.mxu0 %v1241
  %3031 = vmatprep.subr.mxu0 %v1255
  %3032 = vmatpush1.msra.mxu0 %v1254
  %3033 = vmatprep.subr.mxu0 %v1268
  %3034 = vmatpush1.msra.mxu0 %v1267
  %3035 = vmatprep.mubr.f32.mxu0 %v1399
  %3036 = vmatmul.mubr.f32.gmra.mrb[0].mxu0 %v1391
  %v3037 = vpop.f32.mrb[0].mxu0
  %v3038 = vadd.f32 %v2967, %v3037
  %v3039 = vpop.f32.mrb[0].mxu0
  %v3040 = vadd.f32 %v2969, %v3039
  %3041 = vdwg.mxu0
  %3042 = vmatprep.subr.mxu0 %v1281
  %3043 = vmatpush1.msra.mxu0 %v1280
  %3044 = vmatprep.subr.mxu0 %v1294
  %3045 = vmatpush1.msra.mxu0 %v1293
  %3046 = vmatprep.subr.mxu0 0.0
  %3047 = vmatpush1.msra.mxu0 0.0
  %3048 = vmatprep.subr.mxu0 0.0
  %3049 = vmatpush1.msra.mxu0 0.0
  %3050 = vmatprep.subr.mxu0 0.0
  %3051 = vmatpush1.msra.mxu0 0.0
  %3052 = vmatprep.subr.mxu0 0.0
  %3053 = vmatpush1.msra.mxu0 0.0
  %3054 = vmatprep.subr.mxu0 0.0
  %3055 = vmatpush1.msra.mxu0 0.0
  %3056 = vmatprep.subr.mxu0 0.0
  %3057 = vmatpush1.msra.mxu0 0.0
  %3058 = vmatprep.subr.mxu0 0.0
  %3059 = vmatpush1.msra.mxu0 0.0
  %3060 = vmatprep.subr.mxu0 0.0
  %3061 = vmatpush1.msra.mxu0 0.0
  %3062 = vmatprep.subr.mxu0 0.0
  %3063 = vmatpush1.msra.mxu0 0.0
  %3064 = vmatprep.subr.mxu0 0.0
  %3065 = vmatpush1.msra.mxu0 0.0
  %3066 = vmatprep.subr.mxu0 0.0
  %3067 = vmatpush1.msra.mxu0 0.0
  %3068 = vmatprep.subr.mxu0 0.0
  %3069 = vmatpush1.msra.mxu0 0.0
  %3070 = vmatprep.subr.mxu0 0.0
  %3071 = vmatpush1.msra.mxu0 0.0
  %3072 = vmatprep.subr.mxu0 0.0
  %3073 = vmatpush1.msra.mxu0 0.0
  %3074 = vmatprep.subr.mxu0 0.0
  %3075 = vmatpush1.msra.mxu0 0.0
  %3076 = vmatprep.subr.mxu0 0.0
  %3077 = vmatpush1.msra.mxu0 0.0
  %3078 = vmatprep.subr.mxu0 0.0
  %3079 = vmatpush1.msra.mxu0 0.0
  %3080 = vmatprep.subr.mxu0 0.0
  %3081 = vmatpush1.msra.mxu0 0.0
  %3082 = vmatprep.subr.mxu0 0.0
  %3083 = vmatpush1.msra.mxu0 0.0
  %3084 = vmatprep.subr.mxu0 0.0
  %3085 = vmatpush1.msra.mxu0 0.0
  %3086 = vmatprep.subr.mxu0 0.0
  %3087 = vmatpush1.msra.mxu0 0.0
  %3088 = vmatprep.subr.mxu0 0.0
  %3089 = vmatpush1.msra.mxu0 0.0
  %3090 = vmatprep.subr.mxu0 0.0
  %3091 = vmatpush1.msra.mxu0 0.0
  %3092 = vmatprep.subr.mxu0 0.0
  %3093 = vmatpush1.msra.mxu0 0.0
  %3094 = vmatprep.subr.mxu0 0.0
  %3095 = vmatpush1.msra.mxu0 0.0
  %3096 = vmatprep.subr.mxu0 0.0
  %3097 = vmatpush1.msra.mxu0 0.0
  %3098 = vmatprep.subr.mxu0 0.0
  %3099 = vmatpush1.msra.mxu0 0.0
  %3100 = vmatprep.subr.mxu0 0.0
  %3101 = vmatpush1.msra.mxu0 0.0
  %3102 = vmatprep.subr.mxu0 0.0
  %3103 = vmatpush1.msra.mxu0 0.0
  %3104 = vmatprep.subr.mxu0 0.0
  %3105 = vmatpush1.msra.mxu0 0.0
  %3106 = vmatprep.mubr.f32.mxu0 0.0
  %3107 = vmatmul.mubr.f32.gmra.mrb[0].mxu0 %v1407
  %v3108 = vpop.f32.mrb[0].mxu0
  %v3109 = vadd.f32 %v3038, %v3108
  %v3110 = vpop.f32.mrb[0].mxu0
  %v3111 = vadd.f32 %v3040, %v3110
  %3112 = vdwg.mxu0
  %3113 = vmatprep.subr.mxu0 0.0
  %3114 = vmatpush1.msra.mxu0 %v34
  %3115 = vmatprep.subr.mxu0 0.0
  %3116 = vmatpush1.msra.mxu0 %v47
  %3117 = vmatprep.subr.mxu0 0.0
  %3118 = vmatpush1.msra.mxu0 %v60
  %3119 = vmatprep.subr.mxu0 0.0
  %3120 = vmatpush1.msra.mxu0 %v73
  %3121 = vmatprep.subr.mxu0 0.0
  %3122 = vmatpush1.msra.mxu0 %v86
  %3123 = vmatprep.subr.mxu0 0.0
  %3124 = vmatpush1.msra.mxu0 %v99
  %3125 = vmatprep.subr.mxu0 0.0
  %3126 = vmatpush1.msra.mxu0 %v112
  %3127 = vmatprep.subr.mxu0 0.0
  %3128 = vmatpush1.msra.mxu0 %v125
  %3129 = vmatprep.subr.mxu0 0.0
  %3130 = vmatpush1.msra.mxu0 %v138
  %3131 = vmatprep.subr.mxu0 0.0
  %3132 = vmatpush1.msra.mxu0 %v151
  %3133 = vmatprep.subr.mxu0 0.0
  %3134 = vmatpush1.msra.mxu0 %v164
  %3135 = vmatprep.subr.mxu0 0.0
  %3136 = vmatpush1.msra.mxu0 %v177
  %3137 = vmatprep.subr.mxu0 0.0
  %3138 = vmatpush1.msra.mxu0 %v190
  %3139 = vmatprep.subr.mxu0 0.0
  %3140 = vmatpush1.msra.mxu0 %v203
  %3141 = vmatprep.subr.mxu0 0.0
  %3142 = vmatpush1.msra.mxu0 %v216
  %3143 = vmatprep.subr.mxu0 0.0
  %3144 = vmatpush1.msra.mxu0 %v229
  %3145 = vmatprep.subr.mxu0 0.0
  %3146 = vmatpush1.msra.mxu0 %v242
  %3147 = vmatprep.subr.mxu0 0.0
  %3148 = vmatpush1.msra.mxu0 %v255
  %3149 = vmatprep.subr.mxu0 0.0
  %3150 = vmatpush1.msra.mxu0 %v268
  %3151 = vmatprep.subr.mxu0 0.0
  %3152 = vmatpush1.msra.mxu0 %v281
  %3153 = vmatprep.subr.mxu0 0.0
  %3154 = vmatpush1.msra.mxu0 %v294
  %3155 = vmatprep.subr.mxu0 0.0
  %3156 = vmatpush1.msra.mxu0 %v307
  %3157 = vmatprep.subr.mxu0 0.0
  %3158 = vmatpush1.msra.mxu0 %v320
  %3159 = vmatprep.subr.mxu0 0.0
  %3160 = vmatpush1.msra.mxu0 %v333
  %3161 = vmatprep.subr.mxu0 0.0
  %3162 = vmatpush1.msra.mxu0 %v346
  %3163 = vmatprep.subr.mxu0 0.0
  %3164 = vmatpush1.msra.mxu0 %v359
  %3165 = vmatprep.subr.mxu0 0.0
  %3166 = vmatpush1.msra.mxu0 %v372
  %3167 = vmatprep.subr.mxu0 0.0
  %3168 = vmatpush1.msra.mxu0 %v385
  %3169 = vmatprep.subr.mxu0 0.0
  %3170 = vmatpush1.msra.mxu0 %v398
  %3171 = vmatprep.subr.mxu0 0.0
  %3172 = vmatpush1.msra.mxu0 %v411
  %3173 = vmatprep.subr.mxu0 0.0
  %3174 = vmatpush1.msra.mxu0 %v424
  %3175 = vmatprep.subr.mxu0 0.0
  %3176 = vmatpush1.msra.mxu0 %v437
  %3177 = vmatprep.mubr.f32.mxu0 %v1382
  %3178 = vmatmul.mubr.f32.gmra.mrb[0].mxu0 %v1374
  %v3179 = vpop.f32.mrb[0].mxu0
  %v3180 = vadd.f32 %v1351, %v3179
  %v3181 = vpop.f32.mrb[0].mxu0
  %3182 = vdwg.mxu0
  %3183 = vmatprep.subr.mxu0 0.0
  %3184 = vmatpush1.msra.mxu0 %v450
  %3185 = vmatprep.subr.mxu0 0.0
  %3186 = vmatpush1.msra.mxu0 %v463
  %3187 = vmatprep.subr.mxu0 0.0
  %3188 = vmatpush1.msra.mxu0 %v476
  %3189 = vmatprep.subr.mxu0 0.0
  %3190 = vmatpush1.msra.mxu0 %v489
  %3191 = vmatprep.subr.mxu0 0.0
  %3192 = vmatpush1.msra.mxu0 %v502
  %3193 = vmatprep.subr.mxu0 0.0
  %3194 = vmatpush1.msra.mxu0 %v515
  %3195 = vmatprep.subr.mxu0 0.0
  %3196 = vmatpush1.msra.mxu0 %v528
  %3197 = vmatprep.subr.mxu0 0.0
  %3198 = vmatpush1.msra.mxu0 %v541
  %3199 = vmatprep.subr.mxu0 0.0
  %3200 = vmatpush1.msra.mxu0 %v554
  %3201 = vmatprep.subr.mxu0 0.0
  %3202 = vmatpush1.msra.mxu0 %v567
  %3203 = vmatprep.subr.mxu0 0.0
  %3204 = vmatpush1.msra.mxu0 %v580
  %3205 = vmatprep.subr.mxu0 0.0
  %3206 = vmatpush1.msra.mxu0 %v593
  %3207 = vmatprep.subr.mxu0 0.0
  %3208 = vmatpush1.msra.mxu0 %v606
  %3209 = vmatprep.subr.mxu0 0.0
  %3210 = vmatpush1.msra.mxu0 %v619
  %3211 = vmatprep.subr.mxu0 0.0
  %3212 = vmatpush1.msra.mxu0 %v632
  %3213 = vmatprep.subr.mxu0 0.0
  %3214 = vmatpush1.msra.mxu0 %v645
  %3215 = vmatprep.subr.mxu0 0.0
  %3216 = vmatpush1.msra.mxu0 %v658
  %3217 = vmatprep.subr.mxu0 0.0
  %3218 = vmatpush1.msra.mxu0 %v671
  %3219 = vmatprep.subr.mxu0 0.0
  %3220 = vmatpush1.msra.mxu0 %v684
  %3221 = vmatprep.subr.mxu0 0.0
  %3222 = vmatpush1.msra.mxu0 %v697
  %3223 = vmatprep.subr.mxu0 0.0
  %3224 = vmatpush1.msra.mxu0 %v710
  %3225 = vmatprep.subr.mxu0 0.0
  %3226 = vmatpush1.msra.mxu0 %v723
  %3227 = vmatprep.subr.mxu0 0.0
  %3228 = vmatpush1.msra.mxu0 %v736
  %3229 = vmatprep.subr.mxu0 0.0
  %3230 = vmatpush1.msra.mxu0 %v749
  %3231 = vmatprep.subr.mxu0 0.0
  %3232 = vmatpush1.msra.mxu0 %v762
  %3233 = vmatprep.subr.mxu0 0.0
  %3234 = vmatpush1.msra.mxu0 %v775
  %3235 = vmatprep.subr.mxu0 0.0
  %3236 = vmatpush1.msra.mxu0 %v788
  %3237 = vmatprep.subr.mxu0 0.0
  %3238 = vmatpush1.msra.mxu0 %v801
  %3239 = vmatprep.subr.mxu0 0.0
  %3240 = vmatpush1.msra.mxu0 %v814
  %3241 = vmatprep.subr.mxu0 0.0
  %3242 = vmatpush1.msra.mxu0 %v827
  %3243 = vmatprep.subr.mxu0 0.0
  %3244 = vmatpush1.msra.mxu0 %v840
  %3245 = vmatprep.subr.mxu0 0.0
  %3246 = vmatpush1.msra.mxu0 %v853
  %3247 = vmatprep.mubr.f32.mxu0 %v1383
  %3248 = vmatmul.mubr.f32.gmra.mrb[0].mxu0 %v1381
  %v3249 = vpop.f32.mrb[0].mxu0
  %v3250 = vadd.f32 %v3180, %v3249
  %v3251 = vpop.f32.mrb[0].mxu0
  %3252 = vdwg.mxu0
  %3253 = vmatprep.subr.mxu0 0.0
  %3254 = vmatpush1.msra.mxu0 %v866
  %3255 = vmatprep.subr.mxu0 0.0
  %3256 = vmatpush1.msra.mxu0 %v879
  %3257 = vmatprep.subr.mxu0 0.0
  %3258 = vmatpush1.msra.mxu0 %v892
  %3259 = vmatprep.subr.mxu0 0.0
  %3260 = vmatpush1.msra.mxu0 %v905
  %3261 = vmatprep.subr.mxu0 0.0
  %3262 = vmatpush1.msra.mxu0 %v918
  %3263 = vmatprep.subr.mxu0 0.0
  %3264 = vmatpush1.msra.mxu0 %v931
  %3265 = vmatprep.subr.mxu0 0.0
  %3266 = vmatpush1.msra.mxu0 %v944
  %3267 = vmatprep.subr.mxu0 0.0
  %3268 = vmatpush1.msra.mxu0 %v957
  %3269 = vmatprep.subr.mxu0 0.0
  %3270 = vmatpush1.msra.mxu0 %v970
  %3271 = vmatprep.subr.mxu0 0.0
  %3272 = vmatpush1.msra.mxu0 %v983
  %3273 = vmatprep.subr.mxu0 0.0
  %3274 = vmatpush1.msra.mxu0 %v996
  %3275 = vmatprep.subr.mxu0 0.0
  %3276 = vmatpush1.msra.mxu0 %v1009
  %3277 = vmatprep.subr.mxu0 0.0
  %3278 = vmatpush1.msra.mxu0 %v1022
  %3279 = vmatprep.subr.mxu0 0.0
  %3280 = vmatpush1.msra.mxu0 %v1035
  %3281 = vmatprep.subr.mxu0 0.0
  %3282 = vmatpush1.msra.mxu0 %v1048
  %3283 = vmatprep.subr.mxu0 0.0
  %3284 = vmatpush1.msra.mxu0 %v1061
  %3285 = vmatprep.subr.mxu0 0.0
  %3286 = vmatpush1.msra.mxu0 %v1074
  %3287 = vmatprep.subr.mxu0 0.0
  %3288 = vmatpush1.msra.mxu0 %v1087
  %3289 = vmatprep.subr.mxu0 0.0
  %3290 = vmatpush1.msra.mxu0 %v1100
  %3291 = vmatprep.subr.mxu0 0.0
  %3292 = vmatpush1.msra.mxu0 %v1113
  %3293 = vmatprep.subr.mxu0 0.0
  %3294 = vmatpush1.msra.mxu0 %v1126
  %3295 = vmatprep.subr.mxu0 0.0
  %3296 = vmatpush1.msra.mxu0 %v1139
  %3297 = vmatprep.subr.mxu0 0.0
  %3298 = vmatpush1.msra.mxu0 %v1152
  %3299 = vmatprep.subr.mxu0 0.0
  %3300 = vmatpush1.msra.mxu0 %v1165
  %3301 = vmatprep.subr.mxu0 0.0
  %3302 = vmatpush1.msra.mxu0 %v1178
  %3303 = vmatprep.subr.mxu0 0.0
  %3304 = vmatpush1.msra.mxu0 %v1191
  %3305 = vmatprep.subr.mxu0 0.0
  %3306 = vmatpush1.msra.mxu0 %v1204
  %3307 = vmatprep.subr.mxu0 0.0
  %3308 = vmatpush1.msra.mxu0 %v1217
  %3309 = vmatprep.subr.mxu0 0.0
  %3310 = vmatpush1.msra.mxu0 %v1230
  %3311 = vmatprep.subr.mxu0 0.0
  %3312 = vmatpush1.msra.mxu0 %v1243
  %3313 = vmatprep.subr.mxu0 0.0
  %3314 = vmatpush1.msra.mxu0 %v1256
  %3315 = vmatprep.subr.mxu0 0.0
  %3316 = vmatpush1.msra.mxu0 %v1269
  %3317 = vmatprep.mubr.f32.mxu0 %v1399
  %3318 = vmatmul.mubr.f32.gmra.mrb[0].mxu0 %v1391
  %v3319 = vpop.f32.mrb[0].mxu0
  %v3320 = vadd.f32 %v3250, %v3319
  %v3321 = vpop.f32.mrb[0].mxu0
  %3322 = vdwg.mxu0
  %3323 = vmatprep.subr.mxu0 0.0
  %3324 = vmatpush1.msra.mxu0 %v1282
  %3325 = vmatprep.subr.mxu0 0.0
  %3326 = vmatpush1.msra.mxu0 %v1295
  %3327 = vmatprep.subr.mxu0 0.0
  %3328 = vmatpush1.msra.mxu0 0.0
  %3329 = vmatprep.subr.mxu0 0.0
  %3330 = vmatpush1.msra.mxu0 0.0
  %3331 = vmatprep.subr.mxu0 0.0
  %3332 = vmatpush1.msra.mxu0 0.0
  %3333 = vmatprep.subr.mxu0 0.0
  %3334 = vmatpush1.msra.mxu0 0.0
  %3335 = vmatprep.subr.mxu0 0.0
  %3336 = vmatpush1.msra.mxu0 0.0
  %3337 = vmatprep.subr.mxu0 0.0
  %3338 = vmatpush1.msra.mxu0 0.0
  %3339 = vmatprep.subr.mxu0 0.0
  %3340 = vmatpush1.msra.mxu0 0.0
  %3341 = vmatprep.subr.mxu0 0.0
  %3342 = vmatpush1.msra.mxu0 0.0
  %3343 = vmatprep.subr.mxu0 0.0
  %3344 = vmatpush1.msra.mxu0 0.0
  %3345 = vmatprep.subr.mxu0 0.0
  %3346 = vmatpush1.msra.mxu0 0.0
  %3347 = vmatprep.subr.mxu0 0.0
  %3348 = vmatpush1.msra.mxu0 0.0
  %3349 = vmatprep.subr.mxu0 0.0
  %3350 = vmatpush1.msra.mxu0 0.0
  %3351 = vmatprep.subr.mxu0 0.0
  %3352 = vmatpush1.msra.mxu0 0.0
  %3353 = vmatprep.subr.mxu0 0.0
  %3354 = vmatpush1.msra.mxu0 0.0
  %3355 = vmatprep.subr.mxu0 0.0
  %3356 = vmatpush1.msra.mxu0 0.0
  %3357 = vmatprep.subr.mxu0 0.0
  %3358 = vmatpush1.msra.mxu0 0.0
  %3359 = vmatprep.subr.mxu0 0.0
  %3360 = vmatpush1.msra.mxu0 0.0
  %3361 = vmatprep.subr.mxu0 0.0
  %3362 = vmatpush1.msra.mxu0 0.0
  %3363 = vmatprep.subr.mxu0 0.0
  %3364 = vmatpush1.msra.mxu0 0.0
  %3365 = vmatprep.subr.mxu0 0.0
  %3366 = vmatpush1.msra.mxu0 0.0
  %3367 = vmatprep.subr.mxu0 0.0
  %3368 = vmatpush1.msra.mxu0 0.0
  %3369 = vmatprep.subr.mxu0 0.0
  %3370 = vmatpush1.msra.mxu0 0.0
  %3371 = vmatprep.subr.mxu0 0.0
  %3372 = vmatpush1.msra.mxu0 0.0
  %3373 = vmatprep.subr.mxu0 0.0
  %3374 = vmatpush1.msra.mxu0 0.0
  %3375 = vmatprep.subr.mxu0 0.0
  %3376 = vmatpush1.msra.mxu0 0.0
  %3377 = vmatprep.subr.mxu0 0.0
  %3378 = vmatpush1.msra.mxu0 0.0
  %3379 = vmatprep.subr.mxu0 0.0
  %3380 = vmatpush1.msra.mxu0 0.0
  %3381 = vmatprep.subr.mxu0 0.0
  %3382 = vmatpush1.msra.mxu0 0.0
  %3383 = vmatprep.subr.mxu0 0.0
  %3384 = vmatpush1.msra.mxu0 0.0
  %3385 = vmatprep.subr.mxu0 0.0
  %3386 = vmatpush1.msra.mxu0 0.0
  %3387 = vmatprep.mubr.f32.mxu0 0.0
  %3388 = vmatmul.mubr.f32.gmra.mrb[0].mxu0 %v1407
  %v3389 = vpop.f32.mrb[0].mxu0
  %v3390 = vadd.f32 %v3320, %v3389
  %v3391 = vpop.f32.mrb[0].mxu0
  %3392 = vdwg.mxu0
  %v3393 = vmax.f32 %v1689, 0.0
  %v3394 = vmax.f32 %v1691, 0.0
  %v3395 = vmax.f32 %v1973, 0.0
  %v3396 = vmax.f32 %v1975, 0.0
  %v3397 = vmax.f32 %v2257, 0.0
  %v3398 = vmax.f32 %v2259, 0.0
  %v3399 = vmax.f32 %v2541, 0.0
  %v3400 = vmax.f32 %v2543, 0.0
  %v3401 = vmax.f32 %v2825, 0.0
  %v3402 = vmax.f32 %v2827, 0.0
  %v3403 = vmax.f32 %v3109, 0.0
  %v3404 = vmax.f32 %v3111, 0.0
  %v3405 = vmax.f32 %v3390, 0.0
  %v3406 = vld [vmem:[%s3] sm:$0xff]
  %v3407 = vld [vmem:[%s3 + $0x8] sm:$0xff]
  %v3408 = vld [vmem:[%s3 + $0x10] sm:$0xff]
  %v3409 = vld [vmem:[%s3 + $0x18] sm:$0xff]
  %v3410 = vld [vmem:[%s3 + $0x20] sm:$0xff]
  %v3411 = vld [vmem:[%s3 + $0x28] sm:$0xff]
  %v3412 = vld [vmem:[%s3 + $0x30] sm:$0xff]
  %v3413 = vld [vmem:[%s3 + $0x38] sm:$0xff]
  %v3414 = vld [vmem:[%s3 + $0x40] sm:$0xff]
  %v3415 = vld [vmem:[%s3 + $0x48] sm:$0xff]
  %v3416 = vld [vmem:[%s3 + $0x50] sm:$0xff]
  %v3417 = vld [vmem:[%s3 + $0x58] sm:$0xff]
  %v3418 = vld [vmem:[%s3 + $0x60] sm:$0xff]
  %v3419 = vld [vmem:[%s3 + $0x68] sm:$0xff]
  %v3420 = vld [vmem:[%s3 + $0x70] sm:$0xff]
  %v3421 = vld [vmem:[%s3 + $0x78] sm:$0xff]
  %v3422 = vld [vmem:[%s3 + $0x80] sm:$0xff]
  %v3423 = vld [vmem:[%s3 + $0x88] sm:$0xff]
  %v3424 = vld [vmem:[%s3 + $0x90] sm:$0xff]
  %v3425 = vld [vmem:[%s3 + $0x98] sm:$0xff]
  %v3426 = vld [vmem:[%s3 + $0xa0] sm:$0xff]
  %v3427 = vld [vmem:[%s3 + $0xa8] sm:$0xff]
  %v3428 = vld [vmem:[%s3 + $0xb0] sm:$0xff]
  %v3429 = vld [vmem:[%s3 + $0xb8] sm:$0xff]
  %v3430 = vld [vmem:[%s3 + $0xc0] sm:$0xff]
  %v3431 = vld [vmem:[%s3 + $0xc8] sm:$0xff]
  %v3432 = vld [vmem:[%s3 + $0xd0] sm:$0xff]
  %v3433 = vld [vmem:[%s3 + $0xd8] sm:$0xff]
  %v3434 = vld [vmem:[%s3 + $0xe0] sm:$0xff]
  %v3435 = vld [vmem:[%s3 + $0xe8] sm:$0xff]
  %v3436 = vld [vmem:[%s3 + $0xf0] sm:$0xff]
  %v3437 = vld [vmem:[%s3 + $0xf8] sm:$0xff]
  %v3438 = vld [vmem:[%s3 + $0x100] sm:$0xff]
  %v3439 = vld [vmem:[%s3 + $0x108] sm:$0xff]
  %v3440 = vld [vmem:[%s3 + $0x110] sm:$0xff]
  %v3441 = vld [vmem:[%s3 + $0x118] sm:$0xff]
  %v3442 = vld [vmem:[%s3 + $0x120] sm:$0xff]
  %v3443 = vld [vmem:[%s3 + $0x128] sm:$0xff]
  %v3444 = vld [vmem:[%s3 + $0x130] sm:$0xff]
  %v3445 = vld [vmem:[%s3 + $0x138] sm:$0xff]
  %v3446 = vld [vmem:[%s3 + $0x140] sm:$0xff]
  %v3447 = vld [vmem:[%s3 + $0x148] sm:$0xff]
  %v3448 = vld [vmem:[%s3 + $0x150] sm:$0xff]
  %v3449 = vld [vmem:[%s3 + $0x158] sm:$0xff]
  %v3450 = vld [vmem:[%s3 + $0x160] sm:$0xff]
  %v3451 = vld [vmem:[%s3 + $0x168] sm:$0xff]
  %v3452 = vld [vmem:[%s3 + $0x170] sm:$0xff]
  %v3453 = vld [vmem:[%s3 + $0x178] sm:$0xff]
  %v3454 = vld [vmem:[%s3 + $0x180] sm:$0xff]
  %v3455 = vld [vmem:[%s3 + $0x188] sm:$0xff]
  %v3456 = vld [vmem:[%s3 + $0x190] sm:$0xff]
  %v3457 = vld [vmem:[%s3 + $0x198] sm:$0xff]
  %v3458 = vld [vmem:[%s3 + $0x1a0] sm:$0xff]
  %v3459 = vld [vmem:[%s3 + $0x1a8] sm:$0xff]
  %v3460 = vld [vmem:[%s3 + $0x1b0] sm:$0xff]
  %v3461 = vld [vmem:[%s3 + $0x1b8] sm:$0xff]
  %v3462 = vld [vmem:[%s3 + $0x1c0] sm:$0xff]
  %v3463 = vld [vmem:[%s3 + $0x1c8] sm:$0xff]
  %v3464 = vld [vmem:[%s3 + $0x1d0] sm:$0xff]
  %v3465 = vld [vmem:[%s3 + $0x1d8] sm:$0xff]
  %v3466 = vld [vmem:[%s3 + $0x1e0] sm:$0xff]
  %v3467 = vld [vmem:[%s3 + $0x1e8] sm:$0xff]
  %v3468 = vld [vmem:[%s3 + $0x1f0] sm:$0xff]
  %v3469 = vld [vmem:[%s3 + $0x1f8] sm:$0xff]
  %v3470 = vld [vmem:[%s3 + $0x200] sm:$0xff]
  %v3471 = vld [vmem:[%s3 + $0x208] sm:$0xff]
  %v3472 = vld [vmem:[%s3 + $0x210] sm:$0xff]
  %v3473 = vld [vmem:[%s3 + $0x218] sm:$0xff]
  %v3474 = vld [vmem:[%s3 + $0x220] sm:$0xff]
  %v3475 = vld [vmem:[%s3 + $0x228] sm:$0xff]
  %v3476 = vld [vmem:[%s3 + $0x230] sm:$0xff]
  %v3477 = vld [vmem:[%s3 + $0x238] sm:$0xff]
  %v3478 = vld [vmem:[%s3 + $0x240] sm:$0xff]
  %v3479 = vld [vmem:[%s3 + $0x248] sm:$0xff]
  %v3480 = vld [vmem:[%s3 + $0x250] sm:$0xff]
  %v3481 = vld [vmem:[%s3 + $0x258] sm:$0xff]
  %v3482 = vld [vmem:[%s3 + $0x260] sm:$0xff]
  %v3483 = vld [vmem:[%s3 + $0x268] sm:$0xff]
  %v3484 = vld [vmem:[%s3 + $0x270] sm:$0xff]
  %v3485 = vld [vmem:[%s3 + $0x278] sm:$0xff]
  %v3486 = vld [vmem:[%s3 + $0x280] sm:$0xff]
  %v3487 = vld [vmem:[%s3 + $0x288] sm:$0xff]
  %v3488 = vld [vmem:[%s3 + $0x290] sm:$0xff]
  %v3489 = vld [vmem:[%s3 + $0x298] sm:$0xff]
  %v3490 = vld [vmem:[%s3 + $0x2a0] sm:$0xff]
  %v3491 = vld [vmem:[%s3 + $0x2a8] sm:$0xff]
  %v3492 = vld [vmem:[%s3 + $0x2b0] sm:$0xff]
  %v3493 = vld [vmem:[%s3 + $0x2b8] sm:$0xff]
  %v3494 = vld [vmem:[%s3 + $0x2c0] sm:$0xff]
  %v3495 = vld [vmem:[%s3 + $0x2c8] sm:$0xff]
  %v3496 = vld [vmem:[%s3 + $0x2d0] sm:$0xff]
  %v3497 = vld [vmem:[%s3 + $0x2d8] sm:$0xff]
  %v3498 = vld [vmem:[%s3 + $0x2e0] sm:$0xff]
  %v3499 = vld [vmem:[%s3 + $0x2e8] sm:$0xff]
  %v3500 = vld [vmem:[%s3 + $0x2f0] sm:$0xff]
  %v3501 = vld [vmem:[%s3 + $0x2f8] sm:$0xff]
  %v3502 = vld [vmem:[%s3 + $0x300] sm:$0xff]
  %v3503 = vld [vmem:[%s3 + $0x308] sm:$0xff]
  %v3504 = vld [vmem:[%s3 + $0x310] sm:$0xff]
  %v3505 = vld [vmem:[%s3 + $0x318] sm:$0xff]
  %v3506 = vld [vmem:[%s3 + $0x320] sm:$0xff]
  %v3507 = vld [vmem:[%s3 + $0x328] sm:$0xff]
  %v3508 = vld [vmem:[%s3 + $0x330] sm:$0xff]
  %v3509 = vld [vmem:[%s3 + $0x338] sm:$0xff]
  %v3510 = vld [vmem:[%s3 + $0x340] sm:$0xff]
  %v3511 = vld [vmem:[%s3 + $0x348] sm:$0xff]
  %v3512 = vld [vmem:[%s3 + $0x350] sm:$0xff]
  %v3513 = vld [vmem:[%s3 + $0x358] sm:$0xff]
  %v3514 = vld [vmem:[%s3 + $0x360] sm:$0xff]
  %v3515 = vld [vmem:[%s3 + $0x368] sm:$0xff]
  %v3516 = vld [vmem:[%s3 + $0x370] sm:$0xff]
  %v3517 = vld [vmem:[%s3 + $0x378] sm:$0xff]
  %v3518 = vld [vmem:[%s3 + $0x380] sm:$0xff]
  %v3519 = vld [vmem:[%s3 + $0x388] sm:$0xff]
  %v3520 = vld [vmem:[%s3 + $0x390] sm:$0xff]
  %v3521 = vld [vmem:[%s3 + $0x398] sm:$0xff]
  %v3522 = vld [vmem:[%s3 + $0x3a0] sm:$0xff]
  %v3523 = vld [vmem:[%s3 + $0x3a8] sm:$0xff]
  %v3524 = vld [vmem:[%s3 + $0x3b0] sm:$0xff]
  %v3525 = vld [vmem:[%s3 + $0x3b8] sm:$0xff]
  %v3526 = vld [vmem:[%s3 + $0x3c0] sm:$0xff]
  %v3527 = vld [vmem:[%s3 + $0x3c8] sm:$0xff]
  %v3528 = vld [vmem:[%s3 + $0x3d0] sm:$0xff]
  %v3529 = vld [vmem:[%s3 + $0x3d8] sm:$0xff]
  %v3530 = vld [vmem:[%s3 + $0x3e0] sm:$0xff]
  %v3531 = vld [vmem:[%s3 + $0x3e8] sm:$0xff]
  %v3532 = vld [vmem:[%s3 + $0x3f0] sm:$0xff]
  %v3533 = vld [vmem:[%s3 + $0x3f8] sm:$0xff]
  %v3534 = vld [vmem:[%s3 + $0x400] sm:$0xff]
  %v3535 = vld [vmem:[%s3 + $0x408] sm:$0xff]
  %v3536 = vld [vmem:[%s3 + $0x410] sm:$0xff]
  %v3537 = vld [vmem:[%s3 + $0x418] sm:$0xff]
  %v3538 = vld [vmem:[%s3 + $0x420] sm:$0xff]
  %v3539 = vld [vmem:[%s3 + $0x428] sm:$0xff]
  %v3540 = vld [vmem:[%s3 + $0x430] sm:$0xff]
  %v3541 = vld [vmem:[%s3 + $0x438] sm:$0xff]
  %v3542 = vld [vmem:[%s3 + $0x440] sm:$0xff]
  %v3543 = vld [vmem:[%s3 + $0x448] sm:$0xff]
  %v3544 = vld [vmem:[%s3 + $0x450] sm:$0xff]
  %v3545 = vld [vmem:[%s3 + $0x458] sm:$0xff]
  %v3546 = vld [vmem:[%s3 + $0x460] sm:$0xff]
  %v3547 = vld [vmem:[%s3 + $0x468] sm:$0xff]
  %v3548 = vld [vmem:[%s3 + $0x470] sm:$0xff]
  %v3549 = vld [vmem:[%s3 + $0x478] sm:$0xff]
  %v3550 = vld [vmem:[%s3 + $0x480] sm:$0xff]
  %v3551 = vld [vmem:[%s3 + $0x488] sm:$0xff]
  %v3552 = vld [vmem:[%s3 + $0x490] sm:$0xff]
  %v3553 = vld [vmem:[%s3 + $0x498] sm:$0xff]
  %v3554 = vld [vmem:[%s3 + $0x4a0] sm:$0xff]
  %v3555 = vld [vmem:[%s3 + $0x4a8] sm:$0xff]
  %v3556 = vld [vmem:[%s3 + $0x4b0] sm:$0xff]
  %v3557 = vld [vmem:[%s3 + $0x4b8] sm:$0xff]
  %v3558 = vld [vmem:[%s3 + $0x4c0] sm:$0xff]
  %v3559 = vld [vmem:[%s3 + $0x4c8] sm:$0xff]
  %v3560 = vld [vmem:[%s3 + $0x4d0] sm:$0xff]
  %v3561 = vld [vmem:[%s3 + $0x4d8] sm:$0xff]
  %v3562 = vld [vmem:[%s3 + $0x4e0] sm:$0xff]
  %v3563 = vld [vmem:[%s3 + $0x4e8] sm:$0xff]
  %v3564 = vld [vmem:[%s3 + $0x4f0] sm:$0xff]
  %v3565 = vld [vmem:[%s3 + $0x4f8] sm:$0xff]
  %v3566 = vld [vmem:[%s3 + $0x500] sm:$0xff]
  %v3567 = vld [vmem:[%s3 + $0x508] sm:$0xff]
  %v3568 = vld [vmem:[%s3 + $0x510] sm:$0xff]
  %v3569 = vld [vmem:[%s3 + $0x518] sm:$0xff]
  %v3570 = vld [vmem:[%s3 + $0x520] sm:$0xff]
  %v3571 = vld [vmem:[%s3 + $0x528] sm:$0xff]
  %v3572 = vld [vmem:[%s3 + $0x530] sm:$0xff]
  %v3573 = vld [vmem:[%s3 + $0x538] sm:$0xff]
  %v3574 = vld [vmem:[%s3 + $0x540] sm:$0xff]
  %v3575 = vld [vmem:[%s3 + $0x548] sm:$0xff]
  %v3576 = vld [vmem:[%s3 + $0x550] sm:$0xff]
  %v3577 = vld [vmem:[%s3 + $0x558] sm:$0xff]
  %v3578 = vld [vmem:[%s3 + $0x560] sm:$0xff]
  %v3579 = vld [vmem:[%s3 + $0x568] sm:$0xff]
  %v3580 = vld [vmem:[%s3 + $0x570] sm:$0xff]
  %v3581 = vld [vmem:[%s3 + $0x578] sm:$0xff]
  %v3582 = vld [vmem:[%s3 + $0x580] sm:$0xff]
  %v3583 = vld [vmem:[%s3 + $0x588] sm:$0xff]
  %v3584 = vld [vmem:[%s3 + $0x590] sm:$0xff]
  %v3585 = vld [vmem:[%s3 + $0x598] sm:$0xff]
  %v3586 = vld [vmem:[%s3 + $0x5a0] sm:$0xff]
  %v3587 = vld [vmem:[%s3 + $0x5a8] sm:$0xff]
  %v3588 = vld [vmem:[%s3 + $0x5b0] sm:$0xff]
  %v3589 = vld [vmem:[%s3 + $0x5b8] sm:$0xff]
  %v3590 = vld [vmem:[%s3 + $0x5c0] sm:$0xff]
  %v3591 = vld [vmem:[%s3 + $0x5c8] sm:$0xff]
  %v3592 = vld [vmem:[%s3 + $0x5d0] sm:$0xff]
  %v3593 = vld [vmem:[%s3 + $0x5d8] sm:$0xff]
  %v3594 = vld [vmem:[%s3 + $0x5e0] sm:$0xff]
  %v3595 = vld [vmem:[%s3 + $0x5e8] sm:$0xff]
  %v3596 = vld [vmem:[%s3 + $0x5f0] sm:$0xff]
  %v3597 = vld [vmem:[%s3 + $0x5f8] sm:$0xff]
  %v3598 = vld [vmem:[%s3 + $0x600] sm:$0xff]
  %v3599 = vld [vmem:[%s3 + $0x608] sm:$0xff]
  %v3600 = vld [vmem:[%s3 + $0x610] sm:$0xff]
  %v3601 = vld [vmem:[%s3 + $0x618] sm:$0xff]
  %v3602 = vld [vmem:[%s3 + $0x620] sm:$0xff]
  %v3603 = vld [vmem:[%s3 + $0x628] sm:$0xff]
  %v3604 = vld [vmem:[%s3 + $0x630] sm:$0xff]
  %v3605 = vld [vmem:[%s3 + $0x638] sm:$0xff]
  %v3606 = vld [vmem:[%s3 + $0x640] sm:$0xff]
  %v3607 = vld [vmem:[%s3 + $0x648] sm:$0xff]
  %v3608 = vld [vmem:[%s3 + $0x650] sm:$0xff]
  %v3609 = vld [vmem:[%s3 + $0x658] sm:$0xff]
  %v3610 = vld [vmem:[%s3 + $0x660] sm:$0xff]
  %v3611 = vld [vmem:[%s3 + $0x668] sm:$0xff]
  %v3612 = vld [vmem:[%s3 + $0x670] sm:$0xff]
  %v3613 = vld [vmem:[%s3 + $0x678] sm:$0xff]
  %v3614 = vld [vmem:[%s3 + $0x680] sm:$0xff]
  %v3615 = vld [vmem:[%s3 + $0x688] sm:$0xff]
  %v3616 = vld [vmem:[%s3 + $0x690] sm:$0xff]
  %v3617 = vld [vmem:[%s3 + $0x698] sm:$0xff]
  %v3618 = vld [vmem:[%s3 + $0x6a0] sm:$0xff]
  %v3619 = vld [vmem:[%s3 + $0x6a8] sm:$0xff]
  %v3620 = vld [vmem:[%s3 + $0x6b0] sm:$0xff]
  %v3621 = vld [vmem:[%s3 + $0x6b8] sm:$0xff]
  %v3622 = vld [vmem:[%s3 + $0x6c0] sm:$0xff]
  %v3623 = vld [vmem:[%s3 + $0x6c8] sm:$0xff]
  %v3624 = vld [vmem:[%s3 + $0x6d0] sm:$0xff]
  %v3625 = vld [vmem:[%s3 + $0x6d8] sm:$0xff]
  %v3626 = vld [vmem:[%s3 + $0x6e0] sm:$0xff]
  %v3627 = vld [vmem:[%s3 + $0x6e8] sm:$0xff]
  %v3628 = vld [vmem:[%s3 + $0x6f0] sm:$0xff]
  %v3629 = vld [vmem:[%s3 + $0x6f8] sm:$0xff]
  %v3630 = vld [vmem:[%s3 + $0x700] sm:$0xff]
  %v3631 = vld [vmem:[%s3 + $0x708] sm:$0xff]
  %v3632 = vld [vmem:[%s3 + $0x710] sm:$0xff]
  %v3633 = vld [vmem:[%s3 + $0x718] sm:$0xff]
  %v3634 = vld [vmem:[%s3 + $0x720] sm:$0xff]
  %v3635 = vld [vmem:[%s3 + $0x728] sm:$0xff]
  %v3636 = vld [vmem:[%s3 + $0x730] sm:$0xff]
  %v3637 = vld [vmem:[%s3 + $0x738] sm:$0xff]
  %v3638 = vld [vmem:[%s3 + $0x740] sm:$0xff]
  %v3639 = vld [vmem:[%s3 + $0x748] sm:$0xff]
  %v3640 = vld [vmem:[%s3 + $0x750] sm:$0xff]
  %v3641 = vld [vmem:[%s3 + $0x758] sm:$0xff]
  %v3642 = vld [vmem:[%s3 + $0x760] sm:$0xff]
  %v3643 = vld [vmem:[%s3 + $0x768] sm:$0xff]
  %v3644 = vld [vmem:[%s3 + $0x770] sm:$0xff]
  %v3645 = vld [vmem:[%s3 + $0x778] sm:$0xff]
  %v3646 = vld [vmem:[%s3 + $0x780] sm:$0xff]
  %v3647 = vld [vmem:[%s3 + $0x788] sm:$0xff]
  %v3648 = vld [vmem:[%s3 + $0x790] sm:$0xff]
  %v3649 = vld [vmem:[%s3 + $0x798] sm:$0xff]
  %v3650 = vld [vmem:[%s3 + $0x7a0] sm:$0xff]
  %v3651 = vld [vmem:[%s3 + $0x7a8] sm:$0xff]
  %v3652 = vld [vmem:[%s3 + $0x7b0] sm:$0xff]
  %v3653 = vld [vmem:[%s3 + $0x7b8] sm:$0xff]
  %v3654 = vld [vmem:[%s3 + $0x7c0] sm:$0xff]
  %v3655 = vld [vmem:[%s3 + $0x7c8] sm:$0xff]
  %v3656 = vld [vmem:[%s3 + $0x7d0] sm:$0xff]
  %v3657 = vld [vmem:[%s3 + $0x7d8] sm:$0xff]
  %v3658 = vld [vmem:[%s3 + $0x7e0] sm:$0xff]
  %v3659 = vld [vmem:[%s3 + $0x7e8] sm:$0xff]
  %v3660 = vld [vmem:[%s3 + $0x7f0] sm:$0xff]
  %v3661 = vld [vmem:[%s3 + $0x7f8] sm:$0xff]
  %v3662 = vld [vmem:[%s3 + $0x800] sm:$0xff]
  %v3663 = vld [vmem:[%s3 + $0x808] sm:$0xff]
  %v3664 = vld [vmem:[%s3 + $0x810] sm:$0xff]
  %v3665 = vld [vmem:[%s3 + $0x818] sm:$0xff]
  %v3666 = vld [vmem:[%s3 + $0x820] sm:$0xff]
  %v3667 = vld [vmem:[%s3 + $0x828] sm:$0xff]
  %v3668 = vld [vmem:[%s3 + $0x830] sm:$0xff]
  %v3669 = vld [vmem:[%s3 + $0x838] sm:$0xff]
  %v3670 = vld [vmem:[%s3 + $0x840] sm:$0xff]
  %v3671 = vld [vmem:[%s3 + $0x848] sm:$0xff]
  %v3672 = vld [vmem:[%s3 + $0x850] sm:$0xff]
  %v3673 = vld [vmem:[%s3 + $0x858] sm:$0xff]
  %v3674 = vld [vmem:[%s3 + $0x860] sm:$0xff]
  %v3675 = vld [vmem:[%s3 + $0x868] sm:$0xff]
  %v3676 = vld [vmem:[%s3 + $0x870] sm:$0xff]
  %v3677 = vld [vmem:[%s3 + $0x878] sm:$0xff]
  %v3678 = vld [vmem:[%s3 + $0x880] sm:$0xff]
  %v3679 = vld [vmem:[%s3 + $0x888] sm:$0xff]
  %v3680 = vld [vmem:[%s3 + $0x890] sm:$0xff]
  %v3681 = vld [vmem:[%s3 + $0x898] sm:$0xff]
  %v3682 = vld [vmem:[%s3 + $0x8a0] sm:$0xff]
  %v3683 = vld [vmem:[%s3 + $0x8a8] sm:$0xff]
  %v3684 = vld [vmem:[%s3 + $0x8b0] sm:$0xff]
  %v3685 = vld [vmem:[%s3 + $0x8b8] sm:$0xff]
  %v3686 = vld [vmem:[%s3 + $0x8c0] sm:$0xff]
  %v3687 = vld [vmem:[%s3 + $0x8c8] sm:$0xff]
  %v3688 = vld [vmem:[%s3 + $0x8d0] sm:$0xff]
  %v3689 = vld [vmem:[%s3 + $0x8d8] sm:$0xff]
  %v3690 = vld [vmem:[%s3 + $0x8e0] sm:$0xff]
  %v3691 = vld [vmem:[%s3 + $0x8e8] sm:$0xff]
  %v3692 = vld [vmem:[%s3 + $0x8f0] sm:$0xff]
  %v3693 = vld [vmem:[%s3 + $0x8f8] sm:$0xff]
  %v3694 = vld [vmem:[%s3 + $0x900] sm:$0xff]
  %v3695 = vld [vmem:[%s3 + $0x908] sm:$0xff]
  %v3696 = vld [vmem:[%s3 + $0x910] sm:$0xff]
  %v3697 = vld [vmem:[%s3 + $0x918] sm:$0xff]
  %v3698 = vld [vmem:[%s3 + $0x920] sm:$0xff]
  %v3699 = vld [vmem:[%s3 + $0x928] sm:$0xff]
  %v3700 = vld [vmem:[%s3 + $0x930] sm:$0xff]
  %v3701 = vld [vmem:[%s3 + $0x938] sm:$0xff]
  %v3702 = vld [vmem:[%s3 + $0x940] sm:$0xff]
  %v3703 = vld [vmem:[%s3 + $0x948] sm:$0xff]
  %v3704 = vld [vmem:[%s3 + $0x950] sm:$0xff]
  %v3705 = vld [vmem:[%s3 + $0x958] sm:$0xff]
  %v3706 = vld [vmem:[%s3 + $0x960] sm:$0xff]
  %v3707 = vld [vmem:[%s3 + $0x968] sm:$0xff]
  %v3708 = vld [vmem:[%s3 + $0x970] sm:$0xff]
  %v3709 = vld [vmem:[%s3 + $0x978] sm:$0xff]
  %v3710 = vld [vmem:[%s3 + $0x980] sm:$0xff]
  %v3711 = vld [vmem:[%s3 + $0x988] sm:$0xff]
  %v3712 = vld [vmem:[%s3 + $0x990] sm:$0xff]
  %v3713 = vld [vmem:[%s3 + $0x998] sm:$0xff]
  %v3714 = vld [vmem:[%s3 + $0x9a0] sm:$0xff]
  %v3715 = vld [vmem:[%s3 + $0x9a8] sm:$0xff]
  %v3716 = vld [vmem:[%s3 + $0x9b0] sm:$0xff]
  %v3717 = vld [vmem:[%s3 + $0x9b8] sm:$0xff]
  %v3718 = vld [vmem:[%s3 + $0x9c0] sm:$0xff]
  %v3719 = vld [vmem:[%s3 + $0x9c8] sm:$0xff]
  %v3720 = vld [vmem:[%s3 + $0x9d0] sm:$0xff]
  %v3721 = vld [vmem:[%s3 + $0x9d8] sm:$0xff]
  %v3722 = vld [vmem:[%s3 + $0x9e0] sm:$0xff]
  %v3723 = vld [vmem:[%s3 + $0x9e8] sm:$0xff]
  %v3724 = vld [vmem:[%s3 + $0x9f0] sm:$0xff]
  %v3725 = vld [vmem:[%s3 + $0x9f8] sm:$0xff]
  %v3726 = vld [vmem:[%s3 + $0xa00] sm:$0xff]
  %v3727 = vld [vmem:[%s3 + $0xa08] sm:$0xff]
  %v3728 = vld [vmem:[%s3 + $0xa10] sm:$0xff]
  %v3729 = vld [vmem:[%s3 + $0xa18] sm:$0xff]
  %v3730 = vld [vmem:[%s3 + $0xa20] sm:$0xff]
  %v3731 = vld [vmem:[%s3 + $0xa28] sm:$0xff]
  %v3732 = vld [vmem:[%s3 + $0xa30] sm:$0xff]
  %v3733 = vld [vmem:[%s3 + $0xa38] sm:$0xff]
  %v3734 = vld [vmem:[%s3 + $0xa40] sm:$0xff]
  %v3735 = vld [vmem:[%s3 + $0xa48] sm:$0xff]
  %v3736 = vld [vmem:[%s3 + $0xa50] sm:$0xff]
  %v3737 = vld [vmem:[%s3 + $0xa58] sm:$0xff]
  %v3738 = vld [vmem:[%s3 + $0xa60] sm:$0xff]
  %v3739 = vld [vmem:[%s3 + $0xa68] sm:$0xff]
  %v3740 = vld [vmem:[%s3 + $0xa70] sm:$0xff]
  %v3741 = vld [vmem:[%s3 + $0xa78] sm:$0xff]
  %v3742 = vld [vmem:[%s3 + $0xa80] sm:$0xff]
  %v3743 = vld [vmem:[%s3 + $0xa88] sm:$0xff]
  %v3744 = vld [vmem:[%s3 + $0xa90] sm:$0xff]
  %v3745 = vld [vmem:[%s3 + $0xa98] sm:$0xff]
  %v3746 = vld [vmem:[%s3 + $0xaa0] sm:$0xff]
  %v3747 = vld [vmem:[%s3 + $0xaa8] sm:$0xff]
  %v3748 = vld [vmem:[%s3 + $0xab0] sm:$0xff]
  %v3749 = vld [vmem:[%s3 + $0xab8] sm:$0xff]
  %v3750 = vld [vmem:[%s3 + $0xac0] sm:$0xff]
  %v3751 = vld [vmem:[%s3 + $0xac8] sm:$0xff]
  %v3752 = vld [vmem:[%s3 + $0xad0] sm:$0xff]
  %v3753 = vld [vmem:[%s3 + $0xad8] sm:$0xff]
  %v3754 = vld [vmem:[%s3 + $0xae0] sm:$0xff]
  %v3755 = vld [vmem:[%s3 + $0xae8] sm:$0xff]
  %v3756 = vld [vmem:[%s3 + $0xaf0] sm:$0xff]
  %v3757 = vld [vmem:[%s3 + $0xaf8] sm:$0xff]
  %v3758 = vld [vmem:[%s3 + $0xb00] sm:$0xff]
  %v3759 = vld [vmem:[%s3 + $0xb08] sm:$0xff]
  %v3760 = vld [vmem:[%s3 + $0xb10] sm:$0xff]
  %v3761 = vld [vmem:[%s3 + $0xb18] sm:$0xff]
  %v3762 = vld [vmem:[%s3 + $0xb20] sm:$0xff]
  %v3763 = vld [vmem:[%s3 + $0xb28] sm:$0xff]
  %v3764 = vld [vmem:[%s3 + $0xb30] sm:$0xff]
  %v3765 = vld [vmem:[%s3 + $0xb38] sm:$0xff]
  %v3766 = vld [vmem:[%s3 + $0xb40] sm:$0xff]
  %v3767 = vld [vmem:[%s3 + $0xb48] sm:$0xff]
  %v3768 = vld [vmem:[%s3 + $0xb50] sm:$0xff]
  %v3769 = vld [vmem:[%s3 + $0xb58] sm:$0xff]
  %v3770 = vld [vmem:[%s3 + $0xb60] sm:$0xff]
  %v3771 = vld [vmem:[%s3 + $0xb68] sm:$0xff]
  %v3772 = vld [vmem:[%s3 + $0xb70] sm:$0xff]
  %v3773 = vld [vmem:[%s3 + $0xb78] sm:$0xff]
  %v3774 = vld [vmem:[%s3 + $0xb80] sm:$0xff]
  %v3775 = vld [vmem:[%s3 + $0xb88] sm:$0xff]
  %v3776 = vld [vmem:[%s3 + $0xb90] sm:$0xff]
  %v3777 = vld [vmem:[%s3 + $0xb98] sm:$0xff]
  %v3778 = vld [vmem:[%s3 + $0xba0] sm:$0xff]
  %v3779 = vld [vmem:[%s3 + $0xba8] sm:$0xff]
  %v3780 = vld [vmem:[%s3 + $0xbb0] sm:$0xff]
  %v3781 = vld [vmem:[%s3 + $0xbb8] sm:$0xff]
  %v3782 = vld [vmem:[%s3 + $0xbc0] sm:$0xff]
  %v3783 = vld [vmem:[%s3 + $0xbc8] sm:$0xff]
  %v3784 = vld [vmem:[%s3 + $0xbd0] sm:$0xff]
  %v3785 = vld [vmem:[%s3 + $0xbd8] sm:$0xff]
  %v3786 = vld [vmem:[%s3 + $0xbe0] sm:$0xff]
  %v3787 = vld [vmem:[%s3 + $0xbe8] sm:$0xff]
  %v3788 = vld [vmem:[%s3 + $0xbf0] sm:$0xff]
  %v3789 = vld [vmem:[%s3 + $0xbf8] sm:$0xff]
  %v3790 = vld [vmem:[%s3 + $0xc00] sm:$0xff]
  %v3791 = vld [vmem:[%s3 + $0xc08] sm:$0xff]
  %v3792 = vld [vmem:[%s3 + $0xc10] sm:$0xff]
  %v3793 = vld [vmem:[%s3 + $0xc18] sm:$0xff]
  %v3794 = vld [vmem:[%s3 + $0xc20] sm:$0xff]
  %v3795 = vld [vmem:[%s3 + $0xc28] sm:$0xff]
  %v3796 = vld [vmem:[%s3 + $0xc30] sm:$0xff]
  %v3797 = vld [vmem:[%s3 + $0xc38] sm:$0xff]
  %v3798 = vld [vmem:[%s3 + $0xc40] sm:$0xff]
  %v3799 = vld [vmem:[%s3 + $0xc48] sm:$0xff]
  %v3800 = vld [vmem:[%s3 + $0xc50] sm:$0xff]
  %v3801 = vld [vmem:[%s3 + $0xc58] sm:$0xff]
  %v3802 = vld [vmem:[%s3 + $0xc60] sm:$0xff]
  %v3803 = vld [vmem:[%s3 + $0xc68] sm:$0xff]
  %v3804 = vld [vmem:[%s3 + $0xc70] sm:$0xff]
  %v3805 = vld [vmem:[%s3 + $0xc78] sm:$0xff]
  %v3806 = vld [vmem:[%s3 + $0xc80] sm:$0xff]
  %v3807 = vld [vmem:[%s3 + $0xc88] sm:$0xff]
  %v3808 = vld [vmem:[%s3 + $0xc90] sm:$0xff]
  %v3809 = vld [vmem:[%s3 + $0xc98] sm:$0xff]
  %v3810 = vld [vmem:[%s3 + $0xca0] sm:$0xff]
  %v3811 = vld [vmem:[%s3 + $0xca8] sm:$0xff]
  %v3812 = vld [vmem:[%s3 + $0xcb0] sm:$0xff]
  %v3813 = vld [vmem:[%s3 + $0xcb8] sm:$0xff]
  %v3814 = vld [vmem:[%s3 + $0xcc0] sm:$0xff]
  %v3815 = vld [vmem:[%s3 + $0xcc8] sm:$0xff]
  %v3816 = vld [vmem:[%s3 + $0xcd0] sm:$0xff]
  %v3817 = vld [vmem:[%s3 + $0xcd8] sm:$0xff]
  %v3818 = vld [vmem:[%s3 + $0xce0] sm:$0xff]
  %v3819 = vld [vmem:[%s3 + $0xce8] sm:$0xff]
  %v3820 = vld [vmem:[%s3 + $0xcf0] sm:$0xff]
  %v3821 = vld [vmem:[%s3 + $0xcf8] sm:$0xff]
  %v3822 = vld [vmem:[%s3 + $0xd00] sm:$0xff]
  %v3823 = vld [vmem:[%s3 + $0xd08] sm:$0xff]
  %v3824 = vld [vmem:[%s3 + $0xd10] sm:$0xff]
  %v3825 = vld [vmem:[%s3 + $0xd18] sm:$0xff]
  %v3826 = vld [vmem:[%s3 + $0xd20] sm:$0xff]
  %v3827 = vld [vmem:[%s3 + $0xd28] sm:$0xff]
  %v3828 = vld [vmem:[%s3 + $0xd30] sm:$0xff]
  %v3829 = vld [vmem:[%s3 + $0xd38] sm:$0xff]
  %v3830 = vld [vmem:[%s3 + $0xd40] sm:$0xff]
  %v3831 = vld [vmem:[%s3 + $0xd48] sm:$0xff]
  %v3832 = vld [vmem:[%s3 + $0xd50] sm:$0xff]
  %v3833 = vld [vmem:[%s3 + $0xd58] sm:$0xff]
  %v3834 = vld [vmem:[%s3 + $0xd60] sm:$0xff]
  %v3835 = vld [vmem:[%s3 + $0xd68] sm:$0xff]
  %v3836 = vld [vmem:[%s3 + $0xd70] sm:$0xff]
  %v3837 = vld [vmem:[%s3 + $0xd78] sm:$0xff]
  %v3838 = vld [vmem:[%s3 + $0xd80] sm:$0xff]
  %v3839 = vld [vmem:[%s3 + $0xd88] sm:$0xff]
  %v3840 = vld [vmem:[%s3 + $0xd90] sm:$0xff]
  %v3841 = vld [vmem:[%s3 + $0xd98] sm:$0xff]
  %v3842 = vld [vmem:[%s3 + $0xda0] sm:$0xff]
  %v3843 = vld [vmem:[%s3 + $0xda8] sm:$0xff]
  %v3844 = vld [vmem:[%s3 + $0xdb0] sm:$0xff]
  %v3845 = vld [vmem:[%s3 + $0xdb8] sm:$0xff]
  %v3846 = vld [vmem:[%s3 + $0xdc0] sm:$0xff]
  %v3847 = vld [vmem:[%s3 + $0xdc8] sm:$0xff]
  %v3848 = vld [vmem:[%s3 + $0xdd0] sm:$0xff]
  %v3849 = vld [vmem:[%s3 + $0xdd8] sm:$0xff]
  %v3850 = vld [vmem:[%s3 + $0xde0] sm:$0xff]
  %v3851 = vld [vmem:[%s3 + $0xde8] sm:$0xff]
  %v3852 = vld [vmem:[%s3 + $0xdf0] sm:$0xff]
  %v3853 = vld [vmem:[%s3 + $0xdf8] sm:$0xff]
  %v3854 = vld [vmem:[%s3 + $0xe00] sm:$0xff]
  %v3855 = vld [vmem:[%s3 + $0xe08] sm:$0xff]
  %v3856 = vld [vmem:[%s3 + $0xe10] sm:$0xff]
  %v3857 = vld [vmem:[%s3 + $0xe18] sm:$0xff]
  %v3858 = vld [vmem:[%s3 + $0xe20] sm:$0xff]
  %v3859 = vld [vmem:[%s3 + $0xe28] sm:$0xff]
  %v3860 = vld [vmem:[%s3 + $0xe30] sm:$0xff]
  %v3861 = vld [vmem:[%s3 + $0xe38] sm:$0xff]
  %v3862 = vld [vmem:[%s3 + $0xe40] sm:$0xff]
  %v3863 = vld [vmem:[%s3 + $0xe48] sm:$0xff]
  %v3864 = vld [vmem:[%s3 + $0xe50] sm:$0xff]
  %v3865 = vld [vmem:[%s3 + $0xe58] sm:$0xff]
  %v3866 = vld [vmem:[%s3 + $0xe60] sm:$0xff]
  %v3867 = vld [vmem:[%s3 + $0xe68] sm:$0xff]
  %v3868 = vld [vmem:[%s3 + $0xe70] sm:$0xff]
  %v3869 = vld [vmem:[%s3 + $0xe78] sm:$0xff]
  %v3870 = vld [vmem:[%s3 + $0xe80] sm:$0xff]
  %v3871 = vld [vmem:[%s3 + $0xe88] sm:$0xff]
  %v3872 = vld [vmem:[%s3 + $0xe90] sm:$0xff]
  %v3873 = vld [vmem:[%s3 + $0xe98] sm:$0xff]
  %v3874 = vld [vmem:[%s3 + $0xea0] sm:$0xff]
  %v3875 = vld [vmem:[%s3 + $0xea8] sm:$0xff]
  %v3876 = vld [vmem:[%s3 + $0xeb0] sm:$0xff]
  %v3877 = vld [vmem:[%s3 + $0xeb8] sm:$0xff]
  %v3878 = vld [vmem:[%s3 + $0xec0] sm:$0xff]
  %v3879 = vld [vmem:[%s3 + $0xec8] sm:$0xff]
  %v3880 = vld [vmem:[%s3 + $0xed0] sm:$0xff]
  %v3881 = vld [vmem:[%s3 + $0xed8] sm:$0xff]
  %v3882 = vld [vmem:[%s3 + $0xee0] sm:$0xff]
  %v3883 = vld [vmem:[%s3 + $0xee8] sm:$0xff]
  %v3884 = vld [vmem:[%s3 + $0xef0] sm:$0xff]
  %v3885 = vld [vmem:[%s3 + $0xef8] sm:$0xff]
  %v3886 = vld [vmem:[%s3 + $0xf00] sm:$0xff]
  %v3887 = vld [vmem:[%s3 + $0xf08] sm:$0xff]
  %v3888 = vld [vmem:[%s3 + $0xf10] sm:$0xff]
  %v3889 = vld [vmem:[%s3 + $0xf18] sm:$0xff]
  %v3890 = vld [vmem:[%s3 + $0xf20] sm:$0xff]
  %v3891 = vld [vmem:[%s3 + $0xf28] sm:$0xff]
  %v3892 = vld [vmem:[%s3 + $0xf30] sm:$0xff]
  %v3893 = vld [vmem:[%s3 + $0xf38] sm:$0xff]
  %v3894 = vld [vmem:[%s3 + $0xf40] sm:$0xff]
  %v3895 = vld [vmem:[%s3 + $0xf48] sm:$0xff]
  %v3896 = vld [vmem:[%s3 + $0xf50] sm:$0xff]
  %v3897 = vld [vmem:[%s3 + $0xf58] sm:$0xff]
  %v3898 = vld [vmem:[%s3 + $0xf60] sm:$0xff]
  %v3899 = vld [vmem:[%s3 + $0xf68] sm:$0xff]
  %v3900 = vld [vmem:[%s3 + $0xf70] sm:$0xff]
  %v3901 = vld [vmem:[%s3 + $0xf78] sm:$0xff]
  %v3902 = vld [vmem:[%s3 + $0xf80] sm:$0xff]
  %v3903 = vld [vmem:[%s3 + $0xf88] sm:$0xff]
  %v3904 = vld [vmem:[%s3 + $0xf90] sm:$0xff]
  %v3905 = vld [vmem:[%s3 + $0xf98] sm:$0xff]
  %v3906 = vld [vmem:[%s3 + $0xfa0] sm:$0xff]
  %v3907 = vld [vmem:[%s3 + $0xfa8] sm:$0xff]
  %v3908 = vld [vmem:[%s3 + $0xfb0] sm:$0xff]
  %v3909 = vld [vmem:[%s3 + $0xfb8] sm:$0xff]
  %v3910 = vld [vmem:[%s3 + $0xfc0] sm:$0xff]
  %v3911 = vld [vmem:[%s3 + $0xfc8] sm:$0xff]
  %v3912 = vld [vmem:[%s3 + $0xfd0] sm:$0xff]
  %v3913 = vld [vmem:[%s3 + $0xfd8] sm:$0xff]
  %v3914 = vld [vmem:[%s3 + $0xfe0] sm:$0xff]
  %v3915 = vld [vmem:[%s3 + $0xfe8] sm:$0xff]
  %v3916 = vld [vmem:[%s3 + $0xff0] sm:$0xff]
  %v3917 = vld [vmem:[%s3 + $0xff8] sm:$0xff]
  %v3918 = vld [vmem:[%s3 + $0x1000] sm:$0xff]
  %v3919 = vld [vmem:[%s3 + $0x1008] sm:$0xff]
  %v3920 = vld [vmem:[%s3 + $0x1010] sm:$0xff]
  %v3921 = vld [vmem:[%s3 + $0x1018] sm:$0xff]
  %v3922 = vld [vmem:[%s3 + $0x1020] sm:$0xff]
  %v3923 = vld [vmem:[%s3 + $0x1028] sm:$0xff]
  %v3924 = vld [vmem:[%s3 + $0x1030] sm:$0xff]
  %v3925 = vld [vmem:[%s3 + $0x1038] sm:$0xff]
  %v3926 = vld [vmem:[%s3 + $0x1040] sm:$0xff]
  %v3927 = vld [vmem:[%s3 + $0x1048] sm:$0xff]
  %v3928 = vld [vmem:[%s3 + $0x1050] sm:$0xff]
  %v3929 = vld [vmem:[%s3 + $0x1058] sm:$0xff]
  %v3930 = vld [vmem:[%s3 + $0x1060] sm:$0xff]
  %v3931 = vld [vmem:[%s3 + $0x1068] sm:$0xff]
  %v3932 = vld [vmem:[%s3 + $0x1070] sm:$0xff]
  %v3933 = vld [vmem:[%s3 + $0x1078] sm:$0xff]
  %v3934 = vld [vmem:[%s3 + $0x1080] sm:$0xff]
  %v3935 = vld [vmem:[%s3 + $0x1088] sm:$0xff]
  %v3936 = vld [vmem:[%s3 + $0x1090] sm:$0xff]
  %v3937 = vld [vmem:[%s3 + $0x1098] sm:$0xff]
  %v3938 = vld [vmem:[%s3 + $0x10a0] sm:$0xff]
  %v3939 = vld [vmem:[%s3 + $0x10a8] sm:$0xff]
  %v3940 = vld [vmem:[%s3 + $0x10b0] sm:$0xff]
  %v3941 = vld [vmem:[%s3 + $0x10b8] sm:$0xff]
  %v3942 = vld [vmem:[%s3 + $0x10c0] sm:$0xff]
  %v3943 = vld [vmem:[%s3 + $0x10c8] sm:$0xff]
  %v3944 = vld [vmem:[%s3 + $0x10d0] sm:$0xff]
  %v3945 = vld [vmem:[%s3 + $0x10d8] sm:$0xff]
  %v3946 = vld [vmem:[%s3 + $0x10e0] sm:$0xff]
  %v3947 = vld [vmem:[%s3 + $0x10e8] sm:$0xff]
  %v3948 = vld [vmem:[%s3 + $0x10f0] sm:$0xff]
  %v3949 = vld [vmem:[%s3 + $0x10f8] sm:$0xff]
  %v3950 = vld [vmem:[%s3 + $0x1100] sm:$0xff]
  %v3951 = vld [vmem:[%s3 + $0x1108] sm:$0xff]
  %v3952 = vld [vmem:[%s3 + $0x1110] sm:$0xff]
  %v3953 = vld [vmem:[%s3 + $0x1118] sm:$0xff]
  %v3954 = vld [vmem:[%s3 + $0x1120] sm:$0xff]
  %v3955 = vld [vmem:[%s3 + $0x1128] sm:$0xff]
  %v3956 = vld [vmem:[%s3 + $0x1130] sm:$0xff]
  %v3957 = vld [vmem:[%s3 + $0x1138] sm:$0xff]
  %v3958 = vld [vmem:[%s3 + $0x1140] sm:$0xff]
  %v3959 = vld [vmem:[%s3 + $0x1148] sm:$0xff]
  %v3960 = vld [vmem:[%s3 + $0x1150] sm:$0xff]
  %v3961 = vld [vmem:[%s3 + $0x1158] sm:$0xff]
  %v3962 = vld [vmem:[%s3 + $0x1160] sm:$0xff]
  %v3963 = vld [vmem:[%s3 + $0x1168] sm:$0xff]
  %v3964 = vld [vmem:[%s3 + $0x1170] sm:$0xff]
  %v3965 = vld [vmem:[%s3 + $0x1178] sm:$0xff]
  %v3966 = vld [vmem:[%s3 + $0x1180] sm:$0xff]
  %v3967 = vld [vmem:[%s3 + $0x1188] sm:$0xff]
  %v3968 = vld [vmem:[%s3 + $0x1190] sm:$0xff]
  %v3969 = vld [vmem:[%s3 + $0x1198] sm:$0xff]
  %v3970 = vld [vmem:[%s3 + $0x11a0] sm:$0xff]
  %v3971 = vld [vmem:[%s3 + $0x11a8] sm:$0xff]
  %v3972 = vld [vmem:[%s3 + $0x11b0] sm:$0xff]
  %v3973 = vld [vmem:[%s3 + $0x11b8] sm:$0xff]
  %v3974 = vld [vmem:[%s3 + $0x11c0] sm:$0xff]
  %v3975 = vld [vmem:[%s3 + $0x11c8] sm:$0xff]
  %v3976 = vld [vmem:[%s3 + $0x11d0] sm:$0xff]
  %v3977 = vld [vmem:[%s3 + $0x11d8] sm:$0xff]
  %v3978 = vld [vmem:[%s3 + $0x11e0] sm:$0xff]
  %v3979 = vld [vmem:[%s3 + $0x11e8] sm:$0xff]
  %v3980 = vld [vmem:[%s3 + $0x11f0] sm:$0xff]
  %v3981 = vld [vmem:[%s3 + $0x11f8] sm:$0xff]
  %v3982 = vld [vmem:[%s3 + $0x1200] sm:$0xff]
  %v3983 = vld [vmem:[%s3 + $0x1208] sm:$0xff]
  %v3984 = vld [vmem:[%s3 + $0x1210] sm:$0xff]
  %v3985 = vld [vmem:[%s3 + $0x1218] sm:$0xff]
  %v3986 = vld [vmem:[%s3 + $0x1220] sm:$0xff]
  %v3987 = vld [vmem:[%s3 + $0x1228] sm:$0xff]
  %v3988 = vld [vmem:[%s3 + $0x1230] sm:$0xff]
  %v3989 = vld [vmem:[%s3 + $0x1238] sm:$0xff]
  %v3990 = vld [vmem:[%s3 + $0x1240] sm:$0xff]
  %v3991 = vld [vmem:[%s3 + $0x1248] sm:$0xff]
  %v3992 = vld [vmem:[%s3 + $0x1250] sm:$0xff]
  %v3993 = vld [vmem:[%s3 + $0x1258] sm:$0xff]
  %v3994 = vld [vmem:[%s3 + $0x1260] sm:$0xff]
  %v3995 = vld [vmem:[%s3 + $0x1268] sm:$0xff]
  %v3996 = vld [vmem:[%s3 + $0x1270] sm:$0xff]
  %v3997 = vld [vmem:[%s3 + $0x1278] sm:$0xff]
  %v3998 = vld [vmem:[%s3 + $0x1280] sm:$0xff]
  %v3999 = vld [vmem:[%s3 + $0x1288] sm:$0xff]
  %v4000 = vld [vmem:[%s3 + $0x1290] sm:$0xff]
  %v4001 = vld [vmem:[%s3 + $0x1298] sm:$0xff]
  %v4002 = vld [vmem:[%s3 + $0x12a0] sm:$0xff]
  %v4003 = vld [vmem:[%s3 + $0x12a8] sm:$0xff]
  %v4004 = vld [vmem:[%s3 + $0x12b0] sm:$0xff]
  %v4005 = vld [vmem:[%s3 + $0x12b8] sm:$0xff]
  %v4006 = vld [vmem:[%s3 + $0x12c0] sm:$0xff]
  %v4007 = vld [vmem:[%s3 + $0x12c8] sm:$0xff]
  %v4008 = vld [vmem:[%s3 + $0x12d0] sm:$0xff]
  %v4009 = vld [vmem:[%s3 + $0x12d8] sm:$0xff]
  %v4010 = vld [vmem:[%s3 + $0x12e0] sm:$0xff]
  %v4011 = vld [vmem:[%s3 + $0x12e8] sm:$0xff]
  %v4012 = vld [vmem:[%s3 + $0x12f0] sm:$0xff]
  %v4013 = vld [vmem:[%s3 + $0x12f8] sm:$0xff]
  %v4014 = vld [vmem:[%s3 + $0x1300] sm:$0xff]
  %v4015 = vld [vmem:[%s3 + $0x1308] sm:$0xff]
  %v4016 = vld [vmem:[%s3 + $0x1310] sm:$0xff]
  %v4017 = vld [vmem:[%s3 + $0x1318] sm:$0xff]
  %v4018 = vld [vmem:[%s3 + $0x1320] sm:$0xff]
  %v4019 = vld [vmem:[%s3 + $0x1328] sm:$0xff]
  %v4020 = vld [vmem:[%s3 + $0x1330] sm:$0xff]
  %v4021 = vld [vmem:[%s3 + $0x1338] sm:$0xff]
  %v4022 = vld [vmem:[%s3 + $0x1340] sm:$0xff]
  %v4023 = vld [vmem:[%s3 + $0x1348] sm:$0xff]
  %v4024 = vld [vmem:[%s3 + $0x1350] sm:$0xff]
  %v4025 = vld [vmem:[%s3 + $0x1358] sm:$0xff]
  %v4026 = vld [vmem:[%s3 + $0x1360] sm:$0xff]
  %v4027 = vld [vmem:[%s3 + $0x1368] sm:$0xff]
  %v4028 = vld [vmem:[%s3 + $0x1370] sm:$0xff]
  %v4029 = vld [vmem:[%s3 + $0x1378] sm:$0xff]
  %v4030 = vld [vmem:[%s3 + $0x1380] sm:$0xff]
  %v4031 = vld [vmem:[%s3 + $0x1388] sm:$0xff]
  %v4032 = vld [vmem:[%s3 + $0x1390] sm:$0xff]
  %v4033 = vld [vmem:[%s3 + $0x1398] sm:$0xff]
  %v4034 = vld [vmem:[%s3 + $0x13a0] sm:$0xff]
  %v4035 = vld [vmem:[%s3 + $0x13a8] sm:$0xff]
  %v4036 = vld [vmem:[%s3 + $0x13b0] sm:$0xff]
  %v4037 = vld [vmem:[%s3 + $0x13b8] sm:$0xff]
  %v4038 = vld [vmem:[%s3 + $0x13c0] sm:$0xff]
  %v4039 = vld [vmem:[%s3 + $0x13c8] sm:$0xff]
  %v4040 = vld [vmem:[%s3 + $0x13d0] sm:$0xff]
  %v4041 = vld [vmem:[%s3 + $0x13d8] sm:$0xff]
  %v4042 = vld [vmem:[%s3 + $0x13e0] sm:$0xff]
  %v4043 = vld [vmem:[%s3 + $0x13e8] sm:$0xff]
  %v4044 = vld [vmem:[%s3 + $0x13f0] sm:$0xff]
  %v4045 = vld [vmem:[%s3 + $0x13f8] sm:$0xff]
  %v4046 = vld [vmem:[%s3 + $0x1400] sm:$0xff]
  %v4047 = vld [vmem:[%s3 + $0x1408] sm:$0xff]
  %v4048 = vld [vmem:[%s3 + $0x1410] sm:$0xff]
  %v4049 = vld [vmem:[%s3 + $0x1418] sm:$0xff]
  %v4050 = vld [vmem:[%s3 + $0x1420] sm:$0xff]
  %v4051 = vld [vmem:[%s3 + $0x1428] sm:$0xff]
  %v4052 = vld [vmem:[%s3 + $0x1430] sm:$0xff]
  %v4053 = vld [vmem:[%s3 + $0x1438] sm:$0xff]
  %v4054 = vld [vmem:[%s3 + $0x1440] sm:$0xff]
  %v4055 = vld [vmem:[%s3 + $0x1448] sm:$0xff]
  %v4056 = vld [vmem:[%s3 + $0x1450] sm:$0xff]
  %v4057 = vld [vmem:[%s3 + $0x1458] sm:$0xff]
  %v4058 = vld [vmem:[%s3 + $0x1460] sm:$0xff]
  %v4059 = vld [vmem:[%s3 + $0x1468] sm:$0xff]
  %v4060 = vld [vmem:[%s3 + $0x1470] sm:$0xff]
  %v4061 = vld [vmem:[%s3 + $0x1478] sm:$0xff]
  %v4062 = vld [vmem:[%s3 + $0x1480] sm:$0xff]
  %v4063 = vld [vmem:[%s3 + $0x1488] sm:$0xff]
  %v4064 = vld [vmem:[%s3 + $0x1490] sm:$0xff]
  %v4065 = vld [vmem:[%s3 + $0x1498] sm:$0xff]
  %v4066 = vld [vmem:[%s3 + $0x14a0] sm:$0xff]
  %v4067 = vld [vmem:[%s3 + $0x14a8] sm:$0xff]
  %v4068 = vld [vmem:[%s3 + $0x14b0] sm:$0xff]
  %v4069 = vld [vmem:[%s3 + $0x14b8] sm:$0xff]
  %v4070 = vld [vmem:[%s3 + $0x14c0] sm:$0xff]
  %v4071 = vld [vmem:[%s3 + $0x14c8] sm:$0xff]
  %v4072 = vld [vmem:[%s3 + $0x14d0] sm:$0xff]
  %v4073 = vld [vmem:[%s3 + $0x14d8] sm:$0xff]
  %v4074 = vld [vmem:[%s3 + $0x14e0] sm:$0xff]
  %v4075 = vld [vmem:[%s3 + $0x14e8] sm:$0xff]
  %v4076 = vld [vmem:[%s3 + $0x14f0] sm:$0xff]
  %v4077 = vld [vmem:[%s3 + $0x14f8] sm:$0xff]
  %v4078 = vld [vmem:[%s3 + $0x1500] sm:$0xff]
  %v4079 = vld [vmem:[%s3 + $0x1508] sm:$0xff]
  %v4080 = vld [vmem:[%s3 + $0x1510] sm:$0xff]
  %v4081 = vld [vmem:[%s3 + $0x1518] sm:$0xff]
  %v4082 = vld [vmem:[%s3 + $0x1520] sm:$0xff]
  %v4083 = vld [vmem:[%s3 + $0x1528] sm:$0xff]
  %v4084 = vld [vmem:[%s3 + $0x1530] sm:$0xff]
  %v4085 = vld [vmem:[%s3 + $0x1538] sm:$0xff]
  %v4086 = vld [vmem:[%s3 + $0x1540] sm:$0xff]
  %v4087 = vld [vmem:[%s3 + $0x1548] sm:$0xff]
  %v4088 = vld [vmem:[%s3 + $0x1550] sm:$0xff]
  %v4089 = vld [vmem:[%s3 + $0x1558] sm:$0xff]
  %v4090 = vld [vmem:[%s3 + $0x1560] sm:$0xff]
  %v4091 = vld [vmem:[%s3 + $0x1568] sm:$0xff]
  %v4092 = vld [vmem:[%s3 + $0x1570] sm:$0xff]
  %v4093 = vld [vmem:[%s3 + $0x1578] sm:$0xff]
  %v4094 = vld [vmem:[%s3 + $0x1580] sm:$0xff]
  %v4095 = vld [vmem:[%s3 + $0x1588] sm:$0xff]
  %v4096 = vld [vmem:[%s3 + $0x1590] sm:$0xff]
  %v4097 = vld [vmem:[%s3 + $0x1598] sm:$0xff]
  %v4098 = vld [vmem:[%s3 + $0x15a0] sm:$0xff]
  %v4099 = vld [vmem:[%s3 + $0x15a8] sm:$0xff]
  %v4100 = vld [vmem:[%s3 + $0x15b0] sm:$0xff]
  %v4101 = vld [vmem:[%s3 + $0x15b8] sm:$0xff]
  %v4102 = vld [vmem:[%s3 + $0x15c0] sm:$0xff]
  %v4103 = vld [vmem:[%s3 + $0x15c8] sm:$0xff]
  %v4104 = vld [vmem:[%s3 + $0x15d0] sm:$0xff]
  %v4105 = vld [vmem:[%s3 + $0x15d8] sm:$0xff]
  %v4106 = vld [vmem:[%s3 + $0x15e0] sm:$0xff]
  %v4107 = vld [vmem:[%s3 + $0x15e8] sm:$0xff]
  %v4108 = vld [vmem:[%s3 + $0x15f0] sm:$0xff]
  %v4109 = vld [vmem:[%s3 + $0x15f8] sm:$0xff]
  %v4110 = vld [vmem:[%s3 + $0x1600] sm:$0xff]
  %v4111 = vld [vmem:[%s3 + $0x1608] sm:$0xff]
  %v4112 = vld [vmem:[%s3 + $0x1610] sm:$0xff]
  %v4113 = vld [vmem:[%s3 + $0x1618] sm:$0xff]
  %v4114 = vld [vmem:[%s3 + $0x1620] sm:$0xff]
  %v4115 = vld [vmem:[%s3 + $0x1628] sm:$0xff]
  %v4116 = vld [vmem:[%s3 + $0x1630] sm:$0xff]
  %v4117 = vld [vmem:[%s3 + $0x1638] sm:$0xff]
  %v4118 = vld [vmem:[%s3 + $0x1640] sm:$0xff]
  %v4119 = vld [vmem:[%s3 + $0x1648] sm:$0xff]
  %v4120 = vld [vmem:[%s3 + $0x1650] sm:$0xff]
  %v4121 = vld [vmem:[%s3 + $0x1658] sm:$0xff]
  %v4122 = vld [vmem:[%s3 + $0x1660] sm:$0xff]
  %v4123 = vld [vmem:[%s3 + $0x1668] sm:$0xff]
  %v4124 = vld [vmem:[%s3 + $0x1670] sm:$0xff]
  %v4125 = vld [vmem:[%s3 + $0x1678] sm:$0xff]
  %v4126 = vld [vmem:[%s3 + $0x1680] sm:$0xff]
  %v4127 = vld [vmem:[%s3 + $0x1688] sm:$0xff]
  %v4128 = vld [vmem:[%s3 + $0x1690] sm:$0xff]
  %v4129 = vld [vmem:[%s3 + $0x1698] sm:$0xff]
  %v4130 = vld [vmem:[%s3 + $0x16a0] sm:$0xff]
  %v4131 = vld [vmem:[%s3 + $0x16a8] sm:$0xff]
  %v4132 = vld [vmem:[%s3 + $0x16b0] sm:$0xff]
  %v4133 = vld [vmem:[%s3 + $0x16b8] sm:$0xff]
  %v4134 = vld [vmem:[%s3 + $0x16c0] sm:$0xff]
  %v4135 = vld [vmem:[%s3 + $0x16c8] sm:$0xff]
  %v4136 = vld [vmem:[%s3 + $0x16d0] sm:$0xff]
  %v4137 = vld [vmem:[%s3 + $0x16d8] sm:$0xff]
  %v4138 = vld [vmem:[%s3 + $0x16e0] sm:$0xff]
  %v4139 = vld [vmem:[%s3 + $0x16e8] sm:$0xff]
  %v4140 = vld [vmem:[%s3 + $0x16f0] sm:$0xff]
  %v4141 = vld [vmem:[%s3 + $0x16f8] sm:$0xff]
  %v4142 = vld [vmem:[%s3 + $0x1700] sm:$0xff]
  %v4143 = vld [vmem:[%s3 + $0x1708] sm:$0xff]
  %v4144 = vld [vmem:[%s3 + $0x1710] sm:$0xff]
  %v4145 = vld [vmem:[%s3 + $0x1718] sm:$0xff]
  %v4146 = vld [vmem:[%s3 + $0x1720] sm:$0xff]
  %v4147 = vld [vmem:[%s3 + $0x1728] sm:$0xff]
  %v4148 = vld [vmem:[%s3 + $0x1730] sm:$0xff]
  %v4149 = vld [vmem:[%s3 + $0x1738] sm:$0xff]
  %v4150 = vld [vmem:[%s3 + $0x1740] sm:$0xff]
  %v4151 = vld [vmem:[%s3 + $0x1748] sm:$0xff]
  %v4152 = vld [vmem:[%s3 + $0x1750] sm:$0xff]
  %v4153 = vld [vmem:[%s3 + $0x1758] sm:$0xff]
  %v4154 = vld [vmem:[%s3 + $0x1760] sm:$0xff]
  %v4155 = vld [vmem:[%s3 + $0x1768] sm:$0xff]
  %v4156 = vld [vmem:[%s3 + $0x1770] sm:$0xff]
  %v4157 = vld [vmem:[%s3 + $0x1778] sm:$0xff]
  %v4158 = vld [vmem:[%s3 + $0x1780] sm:$0xff]
  %v4159 = vld [vmem:[%s3 + $0x1788] sm:$0xff]
  %v4160 = vld [vmem:[%s3 + $0x1790] sm:$0xff]
  %v4161 = vld [vmem:[%s3 + $0x1798] sm:$0xff]
  %v4162 = vld [vmem:[%s3 + $0x17a0] sm:$0xff]
  %v4163 = vld [vmem:[%s3 + $0x17a8] sm:$0xff]
  %v4164 = vld [vmem:[%s3 + $0x17b0] sm:$0xff]
  %v4165 = vld [vmem:[%s3 + $0x17b8] sm:$0xff]
  %v4166 = vld [vmem:[%s3 + $0x17c0] sm:$0xff]
  %v4167 = vld [vmem:[%s3 + $0x17c8] sm:$0xff]
  %v4168 = vld [vmem:[%s3 + $0x17d0] sm:$0xff]
  %v4169 = vld [vmem:[%s3 + $0x17d8] sm:$0xff]
  %v4170 = vld [vmem:[%s3 + $0x17e0] sm:$0xff]
  %v4171 = vld [vmem:[%s3 + $0x17e8] sm:$0xff]
  %v4172 = vld [vmem:[%s3 + $0x17f0] sm:$0xff]
  %v4173 = vld [vmem:[%s3 + $0x17f8] sm:$0xff]
  %v4174 = vld [vmem:[%s3 + $0x1800] sm:$0xff]
  %v4175 = vld [vmem:[%s3 + $0x1808] sm:$0xff]
  %v4176 = vld [vmem:[%s3 + $0x1810] sm:$0xff]
  %v4177 = vld [vmem:[%s3 + $0x1818] sm:$0xff]
  %v4178 = vld [vmem:[%s3 + $0x1820] sm:$0xff]
  %v4179 = vld [vmem:[%s3 + $0x1828] sm:$0xff]
  %v4180 = vld [vmem:[%s3 + $0x1830] sm:$0xff]
  %v4181 = vld [vmem:[%s3 + $0x1838] sm:$0xff]
  %v4182 = vld [vmem:[%s3 + $0x1840] sm:$0xff]
  %v4183 = vld [vmem:[%s3 + $0x1848] sm:$0xff]
  %v4184 = vld [vmem:[%s3 + $0x1850] sm:$0xff]
  %v4185 = vld [vmem:[%s3 + $0x1858] sm:$0xff]
  %v4186 = vld [vmem:[%s3 + $0x1860] sm:$0xff]
  %v4187 = vld [vmem:[%s3 + $0x1868] sm:$0xff]
  %v4188 = vld [vmem:[%s3 + $0x1870] sm:$0xff]
  %v4189 = vld [vmem:[%s3 + $0x1878] sm:$0xff]
  %v4190 = vld [vmem:[%s3 + $0x1880] sm:$0xff]
  %v4191 = vld [vmem:[%s3 + $0x1888] sm:$0xff]
  %v4192 = vld [vmem:[%s3 + $0x1890] sm:$0xff]
  %v4193 = vld [vmem:[%s3 + $0x1898] sm:$0xff]
  %v4194 = vld [vmem:[%s3 + $0x18a0] sm:$0xff]
  %v4195 = vld [vmem:[%s3 + $0x18a8] sm:$0xff]
  %v4196 = vld [vmem:[%s3 + $0x18b0] sm:$0xff]
  %v4197 = vld [vmem:[%s3 + $0x18b8] sm:$0xff]
  %v4198 = vld [vmem:[%s3 + $0x18c0] sm:$0xff]
  %v4199 = vld [vmem:[%s3 + $0x18c8] sm:$0xff]
  %v4200 = vld [vmem:[%s3 + $0x18d0] sm:$0xff]
  %v4201 = vld [vmem:[%s3 + $0x18d8] sm:$0xff]
  %v4202 = vld [vmem:[%s3 + $0x18e0] sm:$0xff]
  %v4203 = vld [vmem:[%s3 + $0x18e8] sm:$0xff]
  %v4204 = vld [vmem:[%s3 + $0x18f0] sm:$0xff]
  %v4205 = vld [vmem:[%s3 + $0x18f8] sm:$0xff]
  %v4206 = vld [vmem:[%s3 + $0x1900] sm:$0xff]
  %v4207 = vld [vmem:[%s3 + $0x1908] sm:$0xff]
  %v4208 = vld [vmem:[%s3 + $0x1910] sm:$0xff]
  %v4209 = vld [vmem:[%s3 + $0x1918] sm:$0xff]
  %v4210 = vld [vmem:[%s3 + $0x1920] sm:$0xff]
  %v4211 = vld [vmem:[%s3 + $0x1928] sm:$0xff]
  %v4212 = vld [vmem:[%s3 + $0x1930] sm:$0xff]
  %v4213 = vld [vmem:[%s3 + $0x1938] sm:$0xff]
  %v4214 = vld [vmem:[%s3 + $0x1940] sm:$0xff]
  %v4215 = vld [vmem:[%s3 + $0x1948] sm:$0xff]
  %v4216 = vld [vmem:[%s3 + $0x1950] sm:$0xff]
  %v4217 = vld [vmem:[%s3 + $0x1958] sm:$0xff]
  %v4218 = vld [vmem:[%s3 + $0x1960] sm:$0xff]
  %v4219 = vld [vmem:[%s3 + $0x1968] sm:$0xff]
  %v4220 = vld [vmem:[%s3 + $0x1970] sm:$0xff]
  %v4221 = vld [vmem:[%s3 + $0x1978] sm:$0xff]
  %v4222 = vld [vmem:[%s3 + $0x1980] sm:$0xff]
  %v4223 = vld [vmem:[%s3 + $0x1988] sm:$0xff]
  %v4224 = vld [vmem:[%s3 + $0x1990] sm:$0xff]
  %v4225 = vld [vmem:[%s3 + $0x1998] sm:$0xff]
  %v4226 = vld [vmem:[%s3 + $0x19a0] sm:$0xff]
  %v4227 = vld [vmem:[%s3 + $0x19a8] sm:$0xff]
  %v4228 = vld [vmem:[%s3 + $0x19b0] sm:$0xff]
  %v4229 = vld [vmem:[%s3 + $0x19b8] sm:$0xff]
  %v4230 = vld [vmem:[%s3 + $0x19c0] sm:$0xff]
  %v4231 = vld [vmem:[%s3 + $0x19c8] sm:$0xff]
  %v4232 = vld [vmem:[%s3 + $0x19d0] sm:$0xff]
  %v4233 = vld [vmem:[%s3 + $0x19d8] sm:$0xff]
  %v4234 = vld [vmem:[%s3 + $0x19e0] sm:$0xff]
  %v4235 = vld [vmem:[%s3 + $0x19e8] sm:$0xff]
  %v4236 = vld [vmem:[%s3 + $0x19f0] sm:$0xff]
  %v4237 = vld [vmem:[%s3 + $0x19f8] sm:$0xff]
  %v4238 = vld [vmem:[%s3 + $0x1a00] sm:$0xff]
  %v4239 = vld [vmem:[%s3 + $0x1a08] sm:$0xff]
  %v4240 = vld [vmem:[%s3 + $0x1a10] sm:$0xff]
  %v4241 = vld [vmem:[%s3 + $0x1a18] sm:$0xff]
  %v4242 = vld [vmem:[%s3 + $0x1a20] sm:$0xff]
  %v4243 = vld [vmem:[%s3 + $0x1a28] sm:$0xff]
  %v4244 = vld [vmem:[%s3 + $0x1a30] sm:$0xff]
  %v4245 = vld [vmem:[%s3 + $0x1a38] sm:$0xff]
  %v4246 = vld [vmem:[%s3 + $0x1a40] sm:$0xff]
  %v4247 = vld [vmem:[%s3 + $0x1a48] sm:$0xff]
  %v4248 = vld [vmem:[%s3 + $0x1a50] sm:$0xff]
  %v4249 = vld [vmem:[%s3 + $0x1a58] sm:$0xff]
  %v4250 = vld [vmem:[%s3 + $0x1a60] sm:$0xff]
  %v4251 = vld [vmem:[%s3 + $0x1a68] sm:$0xff]
  %v4252 = vld [vmem:[%s3 + $0x1a70] sm:$0xff]
  %v4253 = vld [vmem:[%s3 + $0x1a78] sm:$0xff]
  %v4254 = vld [vmem:[%s3 + $0x1a80] sm:$0xff]
  %v4255 = vld [vmem:[%s3 + $0x1a88] sm:$0xff]
  %v4256 = vld [vmem:[%s3 + $0x1a90] sm:$0xff]
  %v4257 = vld [vmem:[%s3 + $0x1a98] sm:$0xff]
  %v4258 = vld [vmem:[%s3 + $0x1aa0] sm:$0xff]
  %v4259 = vld [vmem:[%s3 + $0x1aa8] sm:$0xff]
  %v4260 = vld [vmem:[%s3 + $0x1ab0] sm:$0xff]
  %v4261 = vld [vmem:[%s3 + $0x1ab8] sm:$0xff]
  %v4262 = vld [vmem:[%s3 + $0x1ac0] sm:$0xff]
  %v4263 = vld [vmem:[%s3 + $0x1ac8] sm:$0xff]
  %v4264 = vld [vmem:[%s3 + $0x1ad0] sm:$0xff]
  %v4265 = vld [vmem:[%s3 + $0x1ad8] sm:$0xff]
  %v4266 = vld [vmem:[%s3 + $0x1ae0] sm:$0xff]
  %v4267 = vld [vmem:[%s3 + $0x1ae8] sm:$0xff]
  %v4268 = vld [vmem:[%s3 + $0x1af0] sm:$0xff]
  %v4269 = vld [vmem:[%s3 + $0x1af8] sm:$0xff]
  %v4270 = vld [vmem:[%s3 + $0x1b00] sm:$0xff]
  %v4271 = vld [vmem:[%s3 + $0x1b08] sm:$0xff]
  %v4272 = vld [vmem:[%s3 + $0x1b10] sm:$0xff]
  %v4273 = vld [vmem:[%s3 + $0x1b18] sm:$0xff]
  %v4274 = vld [vmem:[%s3 + $0x1b20] sm:$0xff]
  %v4275 = vld [vmem:[%s3 + $0x1b28] sm:$0xff]
  %v4276 = vld [vmem:[%s3 + $0x1b30] sm:$0xff]
  %v4277 = vld [vmem:[%s3 + $0x1b38] sm:$0xff]
  %v4278 = vld [vmem:[%s3 + $0x1b40] sm:$0xff]
  %v4279 = vld [vmem:[%s3 + $0x1b48] sm:$0xff]
  %v4280 = vld [vmem:[%s3 + $0x1b50] sm:$0xff]
  %v4281 = vld [vmem:[%s3 + $0x1b58] sm:$0xff]
  %v4282 = vld [vmem:[%s3 + $0x1b60] sm:$0xff]
  %v4283 = vld [vmem:[%s3 + $0x1b68] sm:$0xff]
  %v4284 = vld [vmem:[%s3 + $0x1b70] sm:$0xff]
  %v4285 = vld [vmem:[%s3 + $0x1b78] sm:$0xff]
  %v4286 = vld [vmem:[%s3 + $0x1b80] sm:$0xff]
  %v4287 = vld [vmem:[%s3 + $0x1b88] sm:$0xff]
  %v4288 = vld [vmem:[%s3 + $0x1b90] sm:$0xff]
  %v4289 = vld [vmem:[%s3 + $0x1b98] sm:$0xff]
  %v4290 = vld [vmem:[%s3 + $0x1ba0] sm:$0xff]
  %v4291 = vld [vmem:[%s3 + $0x1ba8] sm:$0xff]
  %v4292 = vld [vmem:[%s3 + $0x1bb0] sm:$0xff]
  %v4293 = vld [vmem:[%s3 + $0x1bb8] sm:$0xff]
  %v4294 = vld [vmem:[%s3 + $0x1bc0] sm:$0xff]
  %v4295 = vld [vmem:[%s3 + $0x1bc8] sm:$0xff]
  %v4296 = vld [vmem:[%s3 + $0x1bd0] sm:$0xff]
  %v4297 = vld [vmem:[%s3 + $0x1bd8] sm:$0xff]
  %v4298 = vld [vmem:[%s3 + $0x1be0] sm:$0xff]
  %v4299 = vld [vmem:[%s3 + $0x1be8] sm:$0xff]
  %v4300 = vld [vmem:[%s3 + $0x1bf0] sm:$0xff]
  %v4301 = vld [vmem:[%s3 + $0x1bf8] sm:$0xff]
  %v4302 = vld [vmem:[%s3 + $0x1c00] sm:$0xff]
  %v4303 = vld [vmem:[%s3 + $0x1c08] sm:$0xff]
  %v4304 = vld [vmem:[%s3 + $0x1c10] sm:$0xff]
  %v4305 = vld [vmem:[%s3 + $0x1c18] sm:$0xff]
  %v4306 = vld [vmem:[%s3 + $0x1c20] sm:$0xff]
  %v4307 = vld [vmem:[%s3 + $0x1c28] sm:$0xff]
  %v4308 = vld [vmem:[%s3 + $0x1c30] sm:$0xff]
  %v4309 = vld [vmem:[%s3 + $0x1c38] sm:$0xff]
  %v4310 = vld [vmem:[%s3 + $0x1c40] sm:$0xff]
  %v4311 = vld [vmem:[%s3 + $0x1c48] sm:$0xff]
  %v4312 = vld [vmem:[%s3 + $0x1c50] sm:$0xff]
  %v4313 = vld [vmem:[%s3 + $0x1c58] sm:$0xff]
  %v4314 = vld [vmem:[%s3 + $0x1c60] sm:$0xff]
  %v4315 = vld [vmem:[%s3 + $0x1c68] sm:$0xff]
  %v4316 = vld [vmem:[%s3 + $0x1c70] sm:$0xff]
  %v4317 = vld [vmem:[%s3 + $0x1c78] sm:$0xff]
  %v4318 = vld [vmem:[%s3 + $0x1c80] sm:$0xff]
  %v4319 = vld [vmem:[%s3 + $0x1c88] sm:$0xff]
  %v4320 = vld [vmem:[%s3 + $0x1c90] sm:$0xff]
  %v4321 = vld [vmem:[%s3 + $0x1c98] sm:$0xff]
  %v4322 = vld [vmem:[%s3 + $0x1ca0] sm:$0xff]
  %v4323 = vld [vmem:[%s3 + $0x1ca8] sm:$0xff]
  %v4324 = vld [vmem:[%s3 + $0x1cb0] sm:$0xff]
  %v4325 = vld [vmem:[%s3 + $0x1cb8] sm:$0xff]
  %v4326 = vld [vmem:[%s3 + $0x1cc0] sm:$0xff]
  %v4327 = vld [vmem:[%s3 + $0x1cc8] sm:$0xff]
  %v4328 = vld [vmem:[%s3 + $0x1cd0] sm:$0xff]
  %v4329 = vld [vmem:[%s3 + $0x1cd8] sm:$0xff]
  %v4330 = vld [vmem:[%s3 + $0x1ce0] sm:$0xff]
  %v4331 = vld [vmem:[%s3 + $0x1ce8] sm:$0xff]
  %v4332 = vld [vmem:[%s3 + $0x1cf0] sm:$0xff]
  %v4333 = vld [vmem:[%s3 + $0x1cf8] sm:$0xff]
  %v4334 = vld [vmem:[%s3 + $0x1d00] sm:$0xff]
  %v4335 = vld [vmem:[%s3 + $0x1d08] sm:$0xff]
  %v4336 = vld [vmem:[%s3 + $0x1d10] sm:$0xff]
  %v4337 = vld [vmem:[%s3 + $0x1d18] sm:$0xff]
  %v4338 = vld [vmem:[%s3 + $0x1d20] sm:$0xff]
  %v4339 = vld [vmem:[%s3 + $0x1d28] sm:$0xff]
  %v4340 = vld [vmem:[%s3 + $0x1d30] sm:$0xff]
  %v4341 = vld [vmem:[%s3 + $0x1d38] sm:$0xff]
  %v4342 = vld [vmem:[%s3 + $0x1d40] sm:$0xff]
  %v4343 = vld [vmem:[%s3 + $0x1d48] sm:$0xff]
  %v4344 = vld [vmem:[%s3 + $0x1d50] sm:$0xff]
  %v4345 = vld [vmem:[%s3 + $0x1d58] sm:$0xff]
  %v4346 = vld [vmem:[%s3 + $0x1d60] sm:$0xff]
  %v4347 = vld [vmem:[%s3 + $0x1d68] sm:$0xff]
  %v4348 = vld [vmem:[%s3 + $0x1d70] sm:$0xff]
  %v4349 = vld [vmem:[%s3 + $0x1d78] sm:$0xff]
  %v4350 = vld [vmem:[%s3 + $0x1d80] sm:$0xff]
  %v4351 = vld [vmem:[%s3 + $0x1d88] sm:$0xff]
  %v4352 = vld [vmem:[%s3 + $0x1d90] sm:$0xff]
  %v4353 = vld [vmem:[%s3 + $0x1d98] sm:$0xff]
  %v4354 = vld [vmem:[%s3 + $0x1da0] sm:$0xff]
  %v4355 = vld [vmem:[%s3 + $0x1da8] sm:$0xff]
  %v4356 = vld [vmem:[%s3 + $0x1db0] sm:$0xff]
  %v4357 = vld [vmem:[%s3 + $0x1db8] sm:$0xff]
  %v4358 = vld [vmem:[%s3 + $0x1dc0] sm:$0xff]
  %v4359 = vld [vmem:[%s3 + $0x1dc8] sm:$0xff]
  %v4360 = vld [vmem:[%s3 + $0x1dd0] sm:$0xff]
  %v4361 = vld [vmem:[%s3 + $0x1dd8] sm:$0xff]
  %v4362 = vld [vmem:[%s3 + $0x1de0] sm:$0xff]
  %v4363 = vld [vmem:[%s3 + $0x1de8] sm:$0xff]
  %v4364 = vld [vmem:[%s3 + $0x1df0] sm:$0xff]
  %v4365 = vld [vmem:[%s3 + $0x1df8] sm:$0xff]
  %v4366 = vld [vmem:[%s3 + $0x1e00] sm:$0xff]
  %v4367 = vld [vmem:[%s3 + $0x1e08] sm:$0xff]
  %v4368 = vld [vmem:[%s3 + $0x1e10] sm:$0xff]
  %v4369 = vld [vmem:[%s3 + $0x1e18] sm:$0xff]
  %v4370 = vld [vmem:[%s3 + $0x1e20] sm:$0xff]
  %v4371 = vld [vmem:[%s3 + $0x1e28] sm:$0xff]
  %v4372 = vld [vmem:[%s3 + $0x1e30] sm:$0xff]
  %v4373 = vld [vmem:[%s3 + $0x1e38] sm:$0xff]
  %v4374 = vld [vmem:[%s3 + $0x1e40] sm:$0xff]
  %v4375 = vld [vmem:[%s3 + $0x1e48] sm:$0xff]
  %v4376 = vld [vmem:[%s3 + $0x1e50] sm:$0xff]
  %v4377 = vld [vmem:[%s3 + $0x1e58] sm:$0xff]
  %v4378 = vld [vmem:[%s3 + $0x1e60] sm:$0xff]
  %v4379 = vld [vmem:[%s3 + $0x1e68] sm:$0xff]
  %v4380 = vld [vmem:[%s3 + $0x1e70] sm:$0xff]
  %v4381 = vld [vmem:[%s3 + $0x1e78] sm:$0xff]
  %v4382 = vld [vmem:[%s3 + $0x1e80] sm:$0xff]
  %v4383 = vld [vmem:[%s3 + $0x1e88] sm:$0xff]
  %v4384 = vld [vmem:[%s3 + $0x1e90] sm:$0xff]
  %v4385 = vld [vmem:[%s3 + $0x1e98] sm:$0xff]
  %v4386 = vld [vmem:[%s3 + $0x1ea0] sm:$0xff]
  %v4387 = vld [vmem:[%s3 + $0x1ea8] sm:$0xff]
  %v4388 = vld [vmem:[%s3 + $0x1eb0] sm:$0xff]
  %v4389 = vld [vmem:[%s3 + $0x1eb8] sm:$0xff]
  %v4390 = vld [vmem:[%s3 + $0x1ec0] sm:$0xff]
  %v4391 = vld [vmem:[%s3 + $0x1ec8] sm:$0xff]
  %v4392 = vld [vmem:[%s3 + $0x1ed0] sm:$0xff]
  %v4393 = vld [vmem:[%s3 + $0x1ed8] sm:$0xff]
  %v4394 = vld [vmem:[%s3 + $0x1ee0] sm:$0xff]
  %v4395 = vld [vmem:[%s3 + $0x1ee8] sm:$0xff]
  %v4396 = vld [vmem:[%s3 + $0x1ef0] sm:$0xff]
  %v4397 = vld [vmem:[%s3 + $0x1ef8] sm:$0xff]
  %v4398 = vld [vmem:[%s3 + $0x1f00] sm:$0xff]
  %v4399 = vld [vmem:[%s3 + $0x1f08] sm:$0xff]
  %v4400 = vld [vmem:[%s3 + $0x1f10] sm:$0xff]
  %v4401 = vld [vmem:[%s3 + $0x1f18] sm:$0xff]
  %v4402 = vld [vmem:[%s3 + $0x1f20] sm:$0xff]
  %v4403 = vld [vmem:[%s3 + $0x1f28] sm:$0xff]
  %v4404 = vld [vmem:[%s3 + $0x1f30] sm:$0xff]
  %v4405 = vld [vmem:[%s3 + $0x1f38] sm:$0xff]
  %v4406 = vld [vmem:[%s3 + $0x1f40] sm:$0xff]
  %v4407 = vld [vmem:[%s3 + $0x1f48] sm:$0xff]
  %v4408 = vld [vmem:[%s3 + $0x1f50] sm:$0xff]
  %v4409 = vld [vmem:[%s3 + $0x1f58] sm:$0xff]
  %v4410 = vld [vmem:[%s3 + $0x1f60] sm:$0xff]
  %v4411 = vld [vmem:[%s3 + $0x1f68] sm:$0xff]
  %v4412 = vld [vmem:[%s3 + $0x1f70] sm:$0xff]
  %v4413 = vld [vmem:[%s3 + $0x1f78] sm:$0xff]
  %v4414 = vld [vmem:[%s3 + $0x1f80] sm:$0xff]
  %v4415 = vld [vmem:[%s3 + $0x1f88] sm:$0xff]
  %v4416 = vld [vmem:[%s3 + $0x1f90] sm:$0xff]
  %v4417 = vld [vmem:[%s3 + $0x1f98] sm:$0xff]
  %v4418 = vld [vmem:[%s3 + $0x1fa0] sm:$0xff]
  %v4419 = vld [vmem:[%s3 + $0x1fa8] sm:$0xff]
  %v4420 = vld [vmem:[%s3 + $0x1fb0] sm:$0xff]
  %v4421 = vld [vmem:[%s3 + $0x1fb8] sm:$0xff]
  %v4422 = vld [vmem:[%s3 + $0x1fc0] sm:$0xff]
  %v4423 = vld [vmem:[%s3 + $0x1fc8] sm:$0xff]
  %v4424 = vld [vmem:[%s3 + $0x1fd0] sm:$0xff]
  %v4425 = vld [vmem:[%s3 + $0x1fd8] sm:$0xff]
  %v4426 = vld [vmem:[%s3 + $0x1fe0] sm:$0xff]
  %v4427 = vld [vmem:[%s3 + $0x1fe8] sm:$0xff]
  %v4428 = vld [vmem:[%s3 + $0x1ff0] sm:$0xff]
  %v4429 = vld [vmem:[%s3 + $0x1ff8] sm:$0xff]
  %v4430 = vld [vmem:[%s3 + $0x2000] sm:$0xff]
  %v4431 = vld [vmem:[%s3 + $0x2008] sm:$0xff]
  %v4432 = vld [vmem:[%s3 + $0x2010] sm:$0xff]
  %v4433 = vld [vmem:[%s3 + $0x2018] sm:$0xff]
  %v4434 = vld [vmem:[%s3 + $0x2020] sm:$0xff]
  %v4435 = vld [vmem:[%s3 + $0x2028] sm:$0xff]
  %v4436 = vld [vmem:[%s3 + $0x2030] sm:$0xff]
  %v4437 = vld [vmem:[%s3 + $0x2038] sm:$0xff]
  %v4438 = vld [vmem:[%s3 + $0x2040] sm:$0xff]
  %v4439 = vld [vmem:[%s3 + $0x2048] sm:$0xff]
  %v4440 = vld [vmem:[%s3 + $0x2050] sm:$0xff]
  %v4441 = vld [vmem:[%s3 + $0x2058] sm:$0xff]
  %v4442 = vld [vmem:[%s3 + $0x2060] sm:$0xff]
  %v4443 = vld [vmem:[%s3 + $0x2068] sm:$0xff]
  %v4444 = vld [vmem:[%s3 + $0x2070] sm:$0xff]
  %v4445 = vld [vmem:[%s3 + $0x2078] sm:$0xff]
  %v4446 = vld [vmem:[%s3 + $0x2080] sm:$0xff]
  %v4447 = vld [vmem:[%s3 + $0x2088] sm:$0xff]
  %v4448 = vld [vmem:[%s3 + $0x2090] sm:$0xff]
  %v4449 = vld [vmem:[%s3 + $0x2098] sm:$0xff]
  %v4450 = vld [vmem:[%s3 + $0x20a0] sm:$0xff]
  %v4451 = vld [vmem:[%s3 + $0x20a8] sm:$0xff]
  %v4452 = vld [vmem:[%s3 + $0x20b0] sm:$0xff]
  %v4453 = vld [vmem:[%s3 + $0x20b8] sm:$0xff]
  %v4454 = vld [vmem:[%s3 + $0x20c0] sm:$0xff]
  %v4455 = vld [vmem:[%s3 + $0x20c8] sm:$0xff]
  %v4456 = vld [vmem:[%s3 + $0x20d0] sm:$0xff]
  %v4457 = vld [vmem:[%s3 + $0x20d8] sm:$0xff]
  %v4458 = vld [vmem:[%s3 + $0x20e0] sm:$0xff]
  %v4459 = vld [vmem:[%s3 + $0x20e8] sm:$0xff]
  %v4460 = vld [vmem:[%s3 + $0x20f0] sm:$0xff]
  %v4461 = vld [vmem:[%s3 + $0x20f8] sm:$0xff]
  %v4462 = vld [vmem:[%s3 + $0x2100] sm:$0xff]
  %v4463 = vld [vmem:[%s3 + $0x2108] sm:$0xff]
  %v4464 = vld [vmem:[%s3 + $0x2110] sm:$0xff]
  %v4465 = vld [vmem:[%s3 + $0x2118] sm:$0xff]
  %v4466 = vld [vmem:[%s3 + $0x2120] sm:$0xff]
  %v4467 = vld [vmem:[%s3 + $0x2128] sm:$0xff]
  %v4468 = vld [vmem:[%s3 + $0x2130] sm:$0xff]
  %v4469 = vld [vmem:[%s3 + $0x2138] sm:$0xff]
  %v4470 = vld [vmem:[%s3 + $0x2140] sm:$0xff]
  %v4471 = vld [vmem:[%s3 + $0x2148] sm:$0xff]
  %v4472 = vld [vmem:[%s3 + $0x2150] sm:$0xff]
  %v4473 = vld [vmem:[%s3 + $0x2158] sm:$0xff]
  %v4474 = vld [vmem:[%s3 + $0x2160] sm:$0xff]
  %v4475 = vld [vmem:[%s3 + $0x2168] sm:$0xff]
  %v4476 = vld [vmem:[%s3 + $0x2170] sm:$0xff]
  %v4477 = vld [vmem:[%s3 + $0x2178] sm:$0xff]
  %v4478 = vld [vmem:[%s3 + $0x2180] sm:$0xff]
  %v4479 = vld [vmem:[%s3 + $0x2188] sm:$0xff]
  %v4480 = vld [vmem:[%s3 + $0x2190] sm:$0xff]
  %v4481 = vld [vmem:[%s3 + $0x2198] sm:$0xff]
  %v4482 = vld [vmem:[%s3 + $0x21a0] sm:$0xff]
  %v4483 = vld [vmem:[%s3 + $0x21a8] sm:$0xff]
  %v4484 = vld [vmem:[%s3 + $0x21b0] sm:$0xff]
  %v4485 = vld [vmem:[%s3 + $0x21b8] sm:$0xff]
  %v4486 = vld [vmem:[%s3 + $0x21c0] sm:$0xff]
  %v4487 = vld [vmem:[%s3 + $0x21c8] sm:$0xff]
  %v4488 = vld [vmem:[%s3 + $0x21d0] sm:$0xff]
  %v4489 = vld [vmem:[%s3 + $0x21d8] sm:$0xff]
  %v4490 = vld [vmem:[%s3 + $0x21e0] sm:$0xff]
  %v4491 = vld [vmem:[%s3 + $0x21e8] sm:$0xff]
  %v4492 = vld [vmem:[%s3 + $0x21f0] sm:$0xff]
  %v4493 = vld [vmem:[%s3 + $0x21f8] sm:$0xff]
  %v4494 = vld [vmem:[%s3 + $0x2200] sm:$0xff]
  %v4495 = vld [vmem:[%s3 + $0x2208] sm:$0xff]
  %v4496 = vld [vmem:[%s3 + $0x2210] sm:$0xff]
  %v4497 = vld [vmem:[%s3 + $0x2218] sm:$0xff]
  %v4498 = vld [vmem:[%s3 + $0x2220] sm:$0xff]
  %v4499 = vld [vmem:[%s3 + $0x2228] sm:$0xff]
  %v4500 = vld [vmem:[%s3 + $0x2230] sm:$0xff]
  %v4501 = vld [vmem:[%s3 + $0x2238] sm:$0xff]
  %v4502 = vld [vmem:[%s3 + $0x2240] sm:$0xff]
  %v4503 = vld [vmem:[%s3 + $0x2248] sm:$0xff]
  %v4504 = vld [vmem:[%s3 + $0x2250] sm:$0xff]
  %v4505 = vld [vmem:[%s3 + $0x2258] sm:$0xff]
  %v4506 = vld [vmem:[%s3 + $0x2260] sm:$0xff]
  %v4507 = vld [vmem:[%s3 + $0x2268] sm:$0xff]
  %v4508 = vld [vmem:[%s3 + $0x2270] sm:$0xff]
  %v4509 = vld [vmem:[%s3 + $0x2278] sm:$0xff]
  %v4510 = vld [vmem:[%s3 + $0x2280] sm:$0xff]
  %v4511 = vld [vmem:[%s3 + $0x2288] sm:$0xff]
  %v4512 = vld [vmem:[%s3 + $0x2290] sm:$0xff]
  %v4513 = vld [vmem:[%s3 + $0x2298] sm:$0xff]
  %v4514 = vld [vmem:[%s3 + $0x22a0] sm:$0xff]
  %v4515 = vld [vmem:[%s3 + $0x22a8] sm:$0xff]
  %v4516 = vld [vmem:[%s3 + $0x22b0] sm:$0xff]
  %v4517 = vld [vmem:[%s3 + $0x22b8] sm:$0xff]
  %v4518 = vld [vmem:[%s3 + $0x22c0] sm:$0xff]
  %v4519 = vld [vmem:[%s3 + $0x22c8] sm:$0xff]
  %v4520 = vld [vmem:[%s3 + $0x22d0] sm:$0xff]
  %v4521 = vld [vmem:[%s3 + $0x22d8] sm:$0xff]
  %v4522 = vld [vmem:[%s3 + $0x22e0] sm:$0xff]
  %v4523 = vld [vmem:[%s3 + $0x22e8] sm:$0xff]
  %v4524 = vld [vmem:[%s3 + $0x22f0] sm:$0xff]
  %v4525 = vld [vmem:[%s3 + $0x22f8] sm:$0xff]
  %v4526 = vld [vmem:[%s3 + $0x2300] sm:$0xff]
  %v4527 = vld [vmem:[%s3 + $0x2308] sm:$0xff]
  %v4528 = vld [vmem:[%s3 + $0x2310] sm:$0xff]
  %v4529 = vld [vmem:[%s3 + $0x2318] sm:$0xff]
  %v4530 = vld [vmem:[%s3 + $0x2320] sm:$0xff]
  %v4531 = vld [vmem:[%s3 + $0x2328] sm:$0xff]
  %v4532 = vld [vmem:[%s3 + $0x2330] sm:$0xff]
  %v4533 = vld [vmem:[%s3 + $0x2338] sm:$0xff]
  %v4534 = vld [vmem:[%s3 + $0x2340] sm:$0xff]
  %v4535 = vld [vmem:[%s3 + $0x2348] sm:$0xff]
  %v4536 = vld [vmem:[%s3 + $0x2350] sm:$0xff]
  %v4537 = vld [vmem:[%s3 + $0x2358] sm:$0xff]
  %v4538 = vld [vmem:[%s3 + $0x2360] sm:$0xff]
  %v4539 = vld [vmem:[%s3 + $0x2368] sm:$0xff]
  %v4540 = vld [vmem:[%s3 + $0x2370] sm:$0xff]
  %v4541 = vld [vmem:[%s3 + $0x2378] sm:$0xff]
  %v4542 = vld [vmem:[%s3 + $0x2380] sm:$0xff]
  %v4543 = vld [vmem:[%s3 + $0x2388] sm:$0xff]
  %v4544 = vld [vmem:[%s3 + $0x2390] sm:$0xff]
  %v4545 = vld [vmem:[%s3 + $0x2398] sm:$0xff]
  %v4546 = vld [vmem:[%s3 + $0x23a0] sm:$0xff]
  %v4547 = vld [vmem:[%s3 + $0x23a8] sm:$0xff]
  %v4548 = vld [vmem:[%s3 + $0x23b0] sm:$0xff]
  %v4549 = vld [vmem:[%s3 + $0x23b8] sm:$0xff]
  %v4550 = vld [vmem:[%s3 + $0x23c0] sm:$0xff]
  %v4551 = vld [vmem:[%s3 + $0x23c8] sm:$0xff]
  %v4552 = vld [vmem:[%s3 + $0x23d0] sm:$0xff]
  %v4553 = vld [vmem:[%s3 + $0x23d8] sm:$0xff]
  %v4554 = vld [vmem:[%s3 + $0x23e0] sm:$0xff]
  %v4555 = vld [vmem:[%s3 + $0x23e8] sm:$0xff]
  %v4556 = vld [vmem:[%s3 + $0x23f0] sm:$0xff]
  %v4557 = vld [vmem:[%s3 + $0x23f8] sm:$0xff]
  %v4558 = vld [vmem:[%s3 + $0x2400] sm:$0xff]
  %v4559 = vld [vmem:[%s3 + $0x2408] sm:$0xff]
  %v4560 = vld [vmem:[%s3 + $0x2410] sm:$0xff]
  %v4561 = vld [vmem:[%s3 + $0x2418] sm:$0xff]
  %v4562 = vld [vmem:[%s3 + $0x2420] sm:$0xff]
  %v4563 = vld [vmem:[%s3 + $0x2428] sm:$0xff]
  %v4564 = vld [vmem:[%s3 + $0x2430] sm:$0xff]
  %v4565 = vld [vmem:[%s3 + $0x2438] sm:$0xff]
  %v4566 = vld [vmem:[%s3 + $0x2440] sm:$0xff]
  %v4567 = vld [vmem:[%s3 + $0x2448] sm:$0xff]
  %v4568 = vld [vmem:[%s3 + $0x2450] sm:$0xff]
  %v4569 = vld [vmem:[%s3 + $0x2458] sm:$0xff]
  %v4570 = vld [vmem:[%s3 + $0x2460] sm:$0xff]
  %v4571 = vld [vmem:[%s3 + $0x2468] sm:$0xff]
  %v4572 = vld [vmem:[%s3 + $0x2470] sm:$0xff]
  %v4573 = vld [vmem:[%s3 + $0x2478] sm:$0xff]
  %v4574 = vld [vmem:[%s3 + $0x2480] sm:$0xff]
  %v4575 = vld [vmem:[%s3 + $0x2488] sm:$0xff]
  %v4576 = vld [vmem:[%s3 + $0x2490] sm:$0xff]
  %v4577 = vld [vmem:[%s3 + $0x2498] sm:$0xff]
  %v4578 = vld [vmem:[%s3 + $0x24a0] sm:$0xff]
  %v4579 = vld [vmem:[%s3 + $0x24a8] sm:$0xff]
  %v4580 = vld [vmem:[%s3 + $0x24b0] sm:$0xff]
  %v4581 = vld [vmem:[%s3 + $0x24b8] sm:$0xff]
  %v4582 = vld [vmem:[%s3 + $0x24c0] sm:$0xff]
  %v4583 = vld [vmem:[%s3 + $0x24c8] sm:$0xff]
  %v4584 = vld [vmem:[%s3 + $0x24d0] sm:$0xff]
  %v4585 = vld [vmem:[%s3 + $0x24d8] sm:$0xff]
  %v4586 = vld [vmem:[%s3 + $0x24e0] sm:$0xff]
  %v4587 = vld [vmem:[%s3 + $0x24e8] sm:$0xff]
  %v4588 = vld [vmem:[%s3 + $0x24f0] sm:$0xff]
  %v4589 = vld [vmem:[%s3 + $0x24f8] sm:$0xff]
  %v4590 = vld [vmem:[%s3 + $0x2500] sm:$0xff]
  %v4591 = vld [vmem:[%s3 + $0x2508] sm:$0xff]
  %v4592 = vld [vmem:[%s3 + $0x2510] sm:$0xff]
  %v4593 = vld [vmem:[%s3 + $0x2518] sm:$0xff]
  %v4594 = vld [vmem:[%s3 + $0x2520] sm:$0xff]
  %v4595 = vld [vmem:[%s3 + $0x2528] sm:$0xff]
  %v4596 = vld [vmem:[%s3 + $0x2530] sm:$0xff]
  %v4597 = vld [vmem:[%s3 + $0x2538] sm:$0xff]
  %v4598 = vld [vmem:[%s3 + $0x2540] sm:$0xff]
  %v4599 = vld [vmem:[%s3 + $0x2548] sm:$0xff]
  %v4600 = vld [vmem:[%s3 + $0x2550] sm:$0xff]
  %v4601 = vld [vmem:[%s3 + $0x2558] sm:$0xff]
  %v4602 = vld [vmem:[%s3 + $0x2560] sm:$0xff]
  %v4603 = vld [vmem:[%s3 + $0x2568] sm:$0xff]
  %v4604 = vld [vmem:[%s3 + $0x2570] sm:$0xff]
  %v4605 = vld [vmem:[%s3 + $0x2578] sm:$0xff]
  %v4606 = vld [vmem:[%s3 + $0x2580] sm:$0xff]
  %v4607 = vld [vmem:[%s3 + $0x2588] sm:$0xff]
  %v4608 = vld [vmem:[%s3 + $0x2590] sm:$0xff]
  %v4609 = vld [vmem:[%s3 + $0x2598] sm:$0xff]
  %v4610 = vld [vmem:[%s3 + $0x25a0] sm:$0xff]
  %v4611 = vld [vmem:[%s3 + $0x25a8] sm:$0xff]
  %v4612 = vld [vmem:[%s3 + $0x25b0] sm:$0xff]
  %v4613 = vld [vmem:[%s3 + $0x25b8] sm:$0xff]
  %v4614 = vld [vmem:[%s3 + $0x25c0] sm:$0xff]
  %v4615 = vld [vmem:[%s3 + $0x25c8] sm:$0xff]
  %v4616 = vld [vmem:[%s3 + $0x25d0] sm:$0xff]
  %v4617 = vld [vmem:[%s3 + $0x25d8] sm:$0xff]
  %v4618 = vld [vmem:[%s3 + $0x25e0] sm:$0xff]
  %v4619 = vld [vmem:[%s3 + $0x25e8] sm:$0xff]
  %v4620 = vld [vmem:[%s3 + $0x25f0] sm:$0xff]
  %v4621 = vld [vmem:[%s3 + $0x25f8] sm:$0xff]
  %v4622 = vld [vmem:[%s3 + $0x2600] sm:$0xff]
  %v4623 = vld [vmem:[%s3 + $0x2608] sm:$0xff]
  %v4624 = vld [vmem:[%s3 + $0x2610] sm:$0xff]
  %v4625 = vld [vmem:[%s3 + $0x2618] sm:$0xff]
  %v4626 = vld [vmem:[%s3 + $0x2620] sm:$0xff]
  %v4627 = vld [vmem:[%s3 + $0x2628] sm:$0xff]
  %v4628 = vld [vmem:[%s3 + $0x2630] sm:$0xff]
  %v4629 = vld [vmem:[%s3 + $0x2638] sm:$0xff]
  %v4630 = vld [vmem:[%s3 + $0x2640] sm:$0xff]
  %v4631 = vld [vmem:[%s3 + $0x2648] sm:$0xff]
  %v4632 = vld [vmem:[%s3 + $0x2650] sm:$0xff]
  %v4633 = vld [vmem:[%s3 + $0x2658] sm:$0xff]
  %v4634 = vld [vmem:[%s3 + $0x2660] sm:$0xff]
  %v4635 = vld [vmem:[%s3 + $0x2668] sm:$0xff]
  %v4636 = vld [vmem:[%s3 + $0x2670] sm:$0xff]
  %v4637 = vld [vmem:[%s3 + $0x2678] sm:$0xff]
  %v4638 = vld [vmem:[%s3 + $0x2680] sm:$0xff]
  %v4639 = vld [vmem:[%s3 + $0x2688] sm:$0xff]
  %v4640 = vld [vmem:[%s3 + $0x2690] sm:$0xff]
  %v4641 = vld [vmem:[%s3 + $0x2698] sm:$0xff]
  %v4642 = vld [vmem:[%s3 + $0x26a0] sm:$0xff]
  %v4643 = vld [vmem:[%s3 + $0x26a8] sm:$0xff]
  %v4644 = vld [vmem:[%s3 + $0x26b0] sm:$0xff]
  %v4645 = vld [vmem:[%s3 + $0x26b8] sm:$0xff]
  %v4646 = vld [vmem:[%s3 + $0x26c0] sm:$0xff]
  %v4647 = vld [vmem:[%s3 + $0x26c8] sm:$0xff]
  %v4648 = vld [vmem:[%s3 + $0x26d0] sm:$0xff]
  %v4649 = vld [vmem:[%s3 + $0x26d8] sm:$0xff]
  %v4650 = vld [vmem:[%s3 + $0x26e0] sm:$0xff]
  %v4651 = vld [vmem:[%s3 + $0x26e8] sm:$0xff]
  %v4652 = vld [vmem:[%s3 + $0x26f0] sm:$0xff]
  %v4653 = vld [vmem:[%s3 + $0x26f8] sm:$0xff]
  %v4654 = vld [vmem:[%s3 + $0x2700] sm:$0xff]
  %v4655 = vld [vmem:[%s3 + $0x2708] sm:$0xff]
  %v4656 = vld [vmem:[%s3 + $0x2710] sm:$0xff]
  %v4657 = vld [vmem:[%s3 + $0x2718] sm:$0xff]
  %v4658 = vld [vmem:[%s3 + $0x2720] sm:$0xff]
  %v4659 = vld [vmem:[%s3 + $0x2728] sm:$0xff]
  %v4660 = vld [vmem:[%s3 + $0x2730] sm:$0xff]
  %v4661 = vld [vmem:[%s3 + $0x2738] sm:$0xff]
  %v4662 = vld [vmem:[%s3 + $0x2740] sm:$0xff]
  %v4663 = vld [vmem:[%s3 + $0x2748] sm:$0xff]
  %v4664 = vld [vmem:[%s3 + $0x2750] sm:$0xff]
  %v4665 = vld [vmem:[%s3 + $0x2758] sm:$0xff]
  %v4666 = vld [vmem:[%s3 + $0x2760] sm:$0xff]
  %v4667 = vld [vmem:[%s3 + $0x2768] sm:$0xff]
  %v4668 = vld [vmem:[%s3 + $0x2770] sm:$0xff]
  %v4669 = vld [vmem:[%s3 + $0x2778] sm:$0xff]
  %v4670 = vld [vmem:[%s3 + $0x2780] sm:$0xff]
  %v4671 = vld [vmem:[%s3 + $0x2788] sm:$0xff]
  %v4672 = vld [vmem:[%s3 + $0x2790] sm:$0xff]
  %v4673 = vld [vmem:[%s3 + $0x2798] sm:$0xff]
  %v4674 = vld [vmem:[%s3 + $0x27a0] sm:$0xff]
  %v4675 = vld [vmem:[%s3 + $0x27a8] sm:$0xff]
  %v4676 = vld [vmem:[%s3 + $0x27b0] sm:$0xff]
  %v4677 = vld [vmem:[%s3 + $0x27b8] sm:$0xff]
  %v4678 = vld [vmem:[%s3 + $0x27c0] sm:$0xff]
  %v4679 = vld [vmem:[%s3 + $0x27c8] sm:$0xff]
  %v4680 = vld [vmem:[%s3 + $0x27d0] sm:$0xff]
  %v4681 = vld [vmem:[%s3 + $0x27d8] sm:$0xff]
  %v4682 = vld [vmem:[%s3 + $0x27e0] sm:$0xff]
  %v4683 = vld [vmem:[%s3 + $0x27e8] sm:$0xff]
  %v4684 = vld [vmem:[%s3 + $0x27f0] sm:$0xff]
  %v4685 = vld [vmem:[%s3 + $0x27f8] sm:$0xff]
  %v4686 = vld [vmem:[%s3 + $0x2800] sm:$0xff]
  %v4687 = vld [vmem:[%s3 + $0x2808] sm:$0xff]
  %v4688 = vld [vmem:[%s3 + $0x2810] sm:$0xff]
  %v4689 = vld [vmem:[%s3 + $0x2818] sm:$0xff]
  %v4690 = vld [vmem:[%s3 + $0x2820] sm:$0xff]
  %v4691 = vld [vmem:[%s3 + $0x2828] sm:$0xff]
  %v4692 = vld [vmem:[%s3 + $0x2830] sm:$0xff]
  %v4693 = vld [vmem:[%s3 + $0x2838] sm:$0xff]
  %v4694 = vld [vmem:[%s3 + $0x2840] sm:$0xff]
  %v4695 = vld [vmem:[%s3 + $0x2848] sm:$0xff]
  %v4696 = vld [vmem:[%s3 + $0x2850] sm:$0xff]
  %v4697 = vld [vmem:[%s3 + $0x2858] sm:$0xff]
  %v4698 = vld [vmem:[%s3 + $0x2860] sm:$0xff]
  %v4699 = vld [vmem:[%s3 + $0x2868] sm:$0xff]
  %v4700 = vld [vmem:[%s3 + $0x2870] sm:$0xff]
  %v4701 = vld [vmem:[%s3 + $0x2878] sm:$0xff]
  %v4702 = vld [vmem:[%s3 + $0x2880] sm:$0xff]
  %v4703 = vld [vmem:[%s3 + $0x2888] sm:$0xff]
  %v4704 = vld [vmem:[%s3 + $0x2890] sm:$0xff]
  %v4705 = vld [vmem:[%s3 + $0x2898] sm:$0xff]
  %v4706 = vld [vmem:[%s3 + $0x28a0] sm:$0xff]
  %v4707 = vld [vmem:[%s3 + $0x28a8] sm:$0xff]
  %v4708 = vld [vmem:[%s3 + $0x28b0] sm:$0xff]
  %v4709 = vld [vmem:[%s3 + $0x28b8] sm:$0xff]
  %v4710 = vld [vmem:[%s3 + $0x28c0] sm:$0xff]
  %v4711 = vld [vmem:[%s3 + $0x28c8] sm:$0xff]
  %v4712 = vld [vmem:[%s3 + $0x28d0] sm:$0xff]
  %v4713 = vld [vmem:[%s3 + $0x28d8] sm:$0xff]
  %v4714 = vld [vmem:[%s3 + $0x28e0] sm:$0xff]
  %v4715 = vld [vmem:[%s3 + $0x28e8] sm:$0xff]
  %v4716 = vld [vmem:[%s3 + $0x28f0] sm:$0xff]
  %v4717 = vld [vmem:[%s3 + $0x28f8] sm:$0xff]
  %v4718 = vld [vmem:[%s3 + $0x2900] sm:$0xff]
  %v4719 = vld [vmem:[%s3 + $0x2908] sm:$0xff]
  %v4720 = vld [vmem:[%s3 + $0x2910] sm:$0xff]
  %v4721 = vld [vmem:[%s3 + $0x2918] sm:$0xff]
  %v4722 = vld [vmem:[%s3 + $0x2920] sm:$0xff]
  %v4723 = vld [vmem:[%s3 + $0x2928] sm:$0xff]
  %v4724 = vld [vmem:[%s3 + $0x2930] sm:$0xff]
  %v4725 = vld [vmem:[%s3 + $0x2938] sm:$0xff]
  %v4726 = vld [vmem:[%s3 + $0x2940] sm:$0xff]
  %v4727 = vld [vmem:[%s3 + $0x2948] sm:$0xff]
  %v4728 = vld [vmem:[%s3 + $0x2950] sm:$0xff]
  %v4729 = vld [vmem:[%s3 + $0x2958] sm:$0xff]
  %v4730 = vld [vmem:[%s3 + $0x2960] sm:$0xff]
  %v4731 = vld [vmem:[%s3 + $0x2968] sm:$0xff]
  %v4732 = vld [vmem:[%s3 + $0x2970] sm:$0xff]
  %v4733 = vld [vmem:[%s3 + $0x2978] sm:$0xff]
  %v4734 = vld [vmem:[%s3 + $0x2980] sm:$0xff]
  %v4735 = vld [vmem:[%s3 + $0x2988] sm:$0xff]
  %v4736 = vld [vmem:[%s3 + $0x2990] sm:$0xff]
  %v4737 = vld [vmem:[%s3 + $0x2998] sm:$0xff]
  %v4738 = vld [vmem:[%s3 + $0x29a0] sm:$0xff]
  %v4739 = vld [vmem:[%s3 + $0x29a8] sm:$0xff]
  %v4740 = vld [vmem:[%s3 + $0x29b0] sm:$0xff]
  %v4741 = vld [vmem:[%s3 + $0x29b8] sm:$0xff]
  %v4742 = vld [vmem:[%s3 + $0x29c0] sm:$0xff]
  %v4743 = vld [vmem:[%s3 + $0x29c8] sm:$0xff]
  %v4744 = vld [vmem:[%s3 + $0x29d0] sm:$0xff]
  %v4745 = vld [vmem:[%s3 + $0x29d8] sm:$0xff]
  %v4746 = vld [vmem:[%s3 + $0x29e0] sm:$0xff]
  %v4747 = vld [vmem:[%s3 + $0x29e8] sm:$0xff]
  %v4748 = vld [vmem:[%s3 + $0x29f0] sm:$0xff]
  %v4749 = vld [vmem:[%s3 + $0x29f8] sm:$0xff]
  %v4750 = vld [vmem:[%s3 + $0x2a00] sm:$0xff]
  %v4751 = vld [vmem:[%s3 + $0x2a08] sm:$0xff]
  %v4752 = vld [vmem:[%s3 + $0x2a10] sm:$0xff]
  %v4753 = vld [vmem:[%s3 + $0x2a18] sm:$0xff]
  %v4754 = vld [vmem:[%s3 + $0x2a20] sm:$0xff]
  %v4755 = vld [vmem:[%s3 + $0x2a28] sm:$0xff]
  %v4756 = vld [vmem:[%s3 + $0x2a30] sm:$0xff]
  %v4757 = vld [vmem:[%s3 + $0x2a38] sm:$0xff]
  %v4758 = vld [vmem:[%s3 + $0x2a40] sm:$0xff]
  %v4759 = vld [vmem:[%s3 + $0x2a48] sm:$0xff]
  %v4760 = vld [vmem:[%s3 + $0x2a50] sm:$0xff]
  %v4761 = vld [vmem:[%s3 + $0x2a58] sm:$0xff]
  %v4762 = vld [vmem:[%s3 + $0x2a60] sm:$0xff]
  %v4763 = vld [vmem:[%s3 + $0x2a68] sm:$0xff]
  %v4764 = vld [vmem:[%s3 + $0x2a70] sm:$0xff]
  %v4765 = vld [vmem:[%s3 + $0x2a78] sm:$0xff]
  %v4766 = vld [vmem:[%s3 + $0x2a80] sm:$0xff]
  %v4767 = vld [vmem:[%s3 + $0x2a88] sm:$0xff]
  %v4768 = vld [vmem:[%s3 + $0x2a90] sm:$0xff]
  %v4769 = vld [vmem:[%s3 + $0x2a98] sm:$0xff]
  %v4770 = vld [vmem:[%s3 + $0x2aa0] sm:$0xff]
  %v4771 = vld [vmem:[%s3 + $0x2aa8] sm:$0xff]
  %v4772 = vld [vmem:[%s3 + $0x2ab0] sm:$0xff]
  %v4773 = vld [vmem:[%s3 + $0x2ab8] sm:$0xff]
  %v4774 = vld [vmem:[%s3 + $0x2ac0] sm:$0xff]
  %v4775 = vld [vmem:[%s3 + $0x2ac8] sm:$0xff]
  %v4776 = vld [vmem:[%s3 + $0x2ad0] sm:$0xff]
  %v4777 = vld [vmem:[%s3 + $0x2ad8] sm:$0xff]
  %vm4778 = vcmask 261120
  %v4780 = vsel %vm4778, %v3405, 0
  %4782 = vmatprep.subr.mxu0 %v3407
  %4783 = vmatpush1.msra.mxu0 %v3406
  %4784 = vmatprep.subr.mxu0 %v3414
  %4785 = vmatpush1.msra.mxu0 %v3413
  %4786 = vmatprep.subr.mxu0 %v3421
  %4787 = vmatpush1.msra.mxu0 %v3420
  %4788 = vmatprep.subr.mxu0 %v3428
  %4789 = vmatpush1.msra.mxu0 %v3427
  %4790 = vmatprep.subr.mxu0 %v3435
  %4791 = vmatpush1.msra.mxu0 %v3434
  %4792 = vmatprep.subr.mxu0 %v3442
  %4793 = vmatpush1.msra.mxu0 %v3441
  %4794 = vmatprep.subr.mxu0 %v3449
  %4795 = vmatpush1.msra.mxu0 %v3448
  %4796 = vmatprep.subr.mxu0 %v3456
  %4797 = vmatpush1.msra.mxu0 %v3455
  %4798 = vmatprep.subr.mxu0 %v3463
  %4799 = vmatpush1.msra.mxu0 %v3462
  %4800 = vmatprep.subr.mxu0 %v3470
  %4801 = vmatpush1.msra.mxu0 %v3469
  %4802 = vmatprep.subr.mxu0 %v3477
  %4803 = vmatpush1.msra.mxu0 %v3476
  %4804 = vmatprep.subr.mxu0 %v3484
  %4805 = vmatpush1.msra.mxu0 %v3483
  %4806 = vmatprep.subr.mxu0 %v3491
  %4807 = vmatpush1.msra.mxu0 %v3490
  %4808 = vmatprep.subr.mxu0 %v3498
  %4809 = vmatpush1.msra.mxu0 %v3497
  %4810 = vmatprep.subr.mxu0 %v3505
  %4811 = vmatpush1.msra.mxu0 %v3504
  %4812 = vmatprep.subr.mxu0 %v3512
  %4813 = vmatpush1.msra.mxu0 %v3511
  %4814 = vmatprep.subr.mxu0 %v3519
  %4815 = vmatpush1.msra.mxu0 %v3518
  %4816 = vmatprep.subr.mxu0 %v3526
  %4817 = vmatpush1.msra.mxu0 %v3525
  %4818 = vmatprep.subr.mxu0 %v3533
  %4819 = vmatpush1.msra.mxu0 %v3532
  %4820 = vmatprep.subr.mxu0 %v3540
  %4821 = vmatpush1.msra.mxu0 %v3539
  %4822 = vmatprep.subr.mxu0 %v3547
  %4823 = vmatpush1.msra.mxu0 %v3546
  %4824 = vmatprep.subr.mxu0 %v3554
  %4825 = vmatpush1.msra.mxu0 %v3553
  %4826 = vmatprep.subr.mxu0 %v3561
  %4827 = vmatpush1.msra.mxu0 %v3560
  %4828 = vmatprep.subr.mxu0 %v3568
  %4829 = vmatpush1.msra.mxu0 %v3567
  %4830 = vmatprep.subr.mxu0 %v3575
  %4831 = vmatpush1.msra.mxu0 %v3574
  %4832 = vmatprep.subr.mxu0 %v3582
  %4833 = vmatpush1.msra.mxu0 %v3581
  %4834 = vmatprep.subr.mxu0 %v3589
  %4835 = vmatpush1.msra.mxu0 %v3588
  %4836 = vmatprep.subr.mxu0 %v3596
  %4837 = vmatpush1.msra.mxu0 %v3595
  %4838 = vmatprep.subr.mxu0 %v3603
  %4839 = vmatpush1.msra.mxu0 %v3602
  %4840 = vmatprep.subr.mxu0 %v3610
  %4841 = vmatpush1.msra.mxu0 %v3609
  %4842 = vmatprep.subr.mxu0 %v3617
  %4843 = vmatpush1.msra.mxu0 %v3616
  %4844 = vmatprep.subr.mxu0 %v3624
  %4845 = vmatpush1.msra.mxu0 %v3623
  %4846 = vmatprep.mubr.f32.mxu0 %v3394
  %4847 = vmatmul.mubr.f32.gmra.mrb[0].mxu0 %v3393
  %v4848 = vpop.f32.mrb[0].mxu0
  %v4849 = vadd.f32 0.0, %v4848
  %v4850 = vpop.f32.mrb[0].mxu0
  %v4851 = vadd.f32 0.0, %v4850
  %4852 = vdwg.mxu0
  %4853 = vmatprep.subr.mxu0 %v3631
  %4854 = vmatpush1.msra.mxu0 %v3630
  %4855 = vmatprep.subr.mxu0 %v3638
  %4856 = vmatpush1.msra.mxu0 %v3637
  %4857 = vmatprep.subr.mxu0 %v3645
  %4858 = vmatpush1.msra.mxu0 %v3644
  %4859 = vmatprep.subr.mxu0 %v3652
  %4860 = vmatpush1.msra.mxu0 %v3651
  %4861 = vmatprep.subr.mxu0 %v3659
  %4862 = vmatpush1.msra.mxu0 %v3658
  %4863 = vmatprep.subr.mxu0 %v3666
  %4864 = vmatpush1.msra.mxu0 %v3665
  %4865 = vmatprep.subr.mxu0 %v3673
  %4866 = vmatpush1.msra.mxu0 %v3672
  %4867 = vmatprep.subr.mxu0 %v3680
  %4868 = vmatpush1.msra.mxu0 %v3679
  %4869 = vmatprep.subr.mxu0 %v3687
  %4870 = vmatpush1.msra.mxu0 %v3686
  %4871 = vmatprep.subr.mxu0 %v3694
  %4872 = vmatpush1.msra.mxu0 %v3693
  %4873 = vmatprep.subr.mxu0 %v3701
  %4874 = vmatpush1.msra.mxu0 %v3700
  %4875 = vmatprep.subr.mxu0 %v3708
  %4876 = vmatpush1.msra.mxu0 %v3707
  %4877 = vmatprep.subr.mxu0 %v3715
  %4878 = vmatpush1.msra.mxu0 %v3714
  %4879 = vmatprep.subr.mxu0 %v3722
  %4880 = vmatpush1.msra.mxu0 %v3721
  %4881 = vmatprep.subr.mxu0 %v3729
  %4882 = vmatpush1.msra.mxu0 %v3728
  %4883 = vmatprep.subr.mxu0 %v3736
  %4884 = vmatpush1.msra.mxu0 %v3735
  %4885 = vmatprep.subr.mxu0 %v3743
  %4886 = vmatpush1.msra.mxu0 %v3742
  %4887 = vmatprep.subr.mxu0 %v3750
  %4888 = vmatpush1.msra.mxu0 %v3749
  %4889 = vmatprep.subr.mxu0 %v3757
  %4890 = vmatpush1.msra.mxu0 %v3756
  %4891 = vmatprep.subr.mxu0 %v3764
  %4892 = vmatpush1.msra.mxu0 %v3763
  %4893 = vmatprep.subr.mxu0 %v3771
  %4894 = vmatpush1.msra.mxu0 %v3770
  %4895 = vmatprep.subr.mxu0 %v3778
  %4896 = vmatpush1.msra.mxu0 %v3777
  %4897 = vmatprep.subr.mxu0 %v3785
  %4898 = vmatpush1.msra.mxu0 %v3784
  %4899 = vmatprep.subr.mxu0 %v3792
  %4900 = vmatpush1.msra.mxu0 %v3791
  %4901 = vmatprep.subr.mxu0 %v3799
  %4902 = vmatpush1.msra.mxu0 %v3798
  %4903 = vmatprep.subr.mxu0 %v3806
  %4904 = vmatpush1.msra.mxu0 %v3805
  %4905 = vmatprep.subr.mxu0 %v3813
  %4906 = vmatpush1.msra.mxu0 %v3812
  %4907 = vmatprep.subr.mxu0 %v3820
  %4908 = vmatpush1.msra.mxu0 %v3819
  %4909 = vmatprep.subr.mxu0 %v3827
  %4910 = vmatpush1.msra.mxu0 %v3826
  %4911 = vmatprep.subr.mxu0 %v3834
  %4912 = vmatpush1.msra.mxu0 %v3833
  %4913 = vmatprep.subr.mxu0 %v3841
  %4914 = vmatpush1.msra.mxu0 %v3840
  %4915 = vmatprep.subr.mxu0 %v3848
  %4916 = vmatpush1.msra.mxu0 %v3847
  %4917 = vmatprep.mubr.f32.mxu0 %v3396
  %4918 = vmatmul.mubr.f32.gmra.mrb[0].mxu0 %v3395
  %v4919 = vpop.f32.mrb[0].mxu0
  %v4920 = vadd.f32 %v4849, %v4919
  %v4921 = vpop.f32.mrb[0].mxu0
  %v4922 = vadd.f32 %v4851, %v4921
  %4923 = vdwg.mxu0
  %4924 = vmatprep.subr.mxu0 %v3855
  %4925 = vmatpush1.msra.mxu0 %v3854
  %4926 = vmatprep.subr.mxu0 %v3862
  %4927 = vmatpush1.msra.mxu0 %v3861
  %4928 = vmatprep.subr.mxu0 %v3869
  %4929 = vmatpush1.msra.mxu0 %v3868
  %4930 = vmatprep.subr.mxu0 %v3876
  %4931 = vmatpush1.msra.mxu0 %v3875
  %4932 = vmatprep.subr.mxu0 %v3883
  %4933 = vmatpush1.msra.mxu0 %v3882
  %4934 = vmatprep.subr.mxu0 %v3890
  %4935 = vmatpush1.msra.mxu0 %v3889
  %4936 = vmatprep.subr.mxu0 %v3897
  %4937 = vmatpush1.msra.mxu0 %v3896
  %4938 = vmatprep.subr.mxu0 %v3904
  %4939 = vmatpush1.msra.mxu0 %v3903
  %4940 = vmatprep.subr.mxu0 %v3911
  %4941 = vmatpush1.msra.mxu0 %v3910
  %4942 = vmatprep.subr.mxu0 %v3918
  %4943 = vmatpush1.msra.mxu0 %v3917
  %4944 = vmatprep.subr.mxu0 %v3925
  %4945 = vmatpush1.msra.mxu0 %v3924
  %4946 = vmatprep.subr.mxu0 %v3932
  %4947 = vmatpush1.msra.mxu0 %v3931
  %4948 = vmatprep.subr.mxu0 %v3939
  %4949 = vmatpush1.msra.mxu0 %v3938
  %4950 = vmatprep.subr.mxu0 %v3946
  %4951 = vmatpush1.msra.mxu0 %v3945
  %4952 = vmatprep.subr.mxu0 %v3953
  %4953 = vmatpush1.msra.mxu0 %v3952
  %4954 = vmatprep.subr.mxu0 %v3960
  %4955 = vmatpush1.msra.mxu0 %v3959
  %4956 = vmatprep.subr.mxu0 %v3967
  %4957 = vmatpush1.msra.mxu0 %v3966
  %4958 = vmatprep.subr.mxu0 %v3974
  %4959 = vmatpush1.msra.mxu0 %v3973
  %4960 = vmatprep.subr.mxu0 %v3981
  %4961 = vmatpush1.msra.mxu0 %v3980
  %4962 = vmatprep.subr.mxu0 %v3988
  %4963 = vmatpush1.msra.mxu0 %v3987
  %4964 = vmatprep.subr.mxu0 %v3995
  %4965 = vmatpush1.msra.mxu0 %v3994
  %4966 = vmatprep.subr.mxu0 %v4002
  %4967 = vmatpush1.msra.mxu0 %v4001
  %4968 = vmatprep.subr.mxu0 %v4009
  %4969 = vmatpush1.msra.mxu0 %v4008
  %4970 = vmatprep.subr.mxu0 %v4016
  %4971 = vmatpush1.msra.mxu0 %v4015
  %4972 = vmatprep.subr.mxu0 %v4023
  %4973 = vmatpush1.msra.mxu0 %v4022
  %4974 = vmatprep.subr.mxu0 %v4030
  %4975 = vmatpush1.msra.mxu0 %v4029
  %4976 = vmatprep.subr.mxu0 %v4037
  %4977 = vmatpush1.msra.mxu0 %v4036
  %4978 = vmatprep.subr.mxu0 %v4044
  %4979 = vmatpush1.msra.mxu0 %v4043
  %4980 = vmatprep.subr.mxu0 %v4051
  %4981 = vmatpush1.msra.mxu0 %v4050
  %4982 = vmatprep.subr.mxu0 %v4058
  %4983 = vmatpush1.msra.mxu0 %v4057
  %4984 = vmatprep.subr.mxu0 %v4065
  %4985 = vmatpush1.msra.mxu0 %v4064
  %4986 = vmatprep.subr.mxu0 %v4072
  %4987 = vmatpush1.msra.mxu0 %v4071
  %4988 = vmatprep.mubr.f32.mxu0 %v3398
  %4989 = vmatmul.mubr.f32.gmra.mrb[0].mxu0 %v3397
  %v4990 = vpop.f32.mrb[0].mxu0
  %v4991 = vadd.f32 %v4920, %v4990
  %v4992 = vpop.f32.mrb[0].mxu0
  %v4993 = vadd.f32 %v4922, %v4992
  %4994 = vdwg.mxu0
  %4995 = vmatprep.subr.mxu0 %v4079
  %4996 = vmatpush1.msra.mxu0 %v4078
  %4997 = vmatprep.subr.mxu0 %v4086
  %4998 = vmatpush1.msra.mxu0 %v4085
  %4999 = vmatprep.subr.mxu0 %v4093
  %5000 = vmatpush1.msra.mxu0 %v4092
  %5001 = vmatprep.subr.mxu0 %v4100
  %5002 = vmatpush1.msra.mxu0 %v4099
  %5003 = vmatprep.subr.mxu0 %v4107
  %5004 = vmatpush1.msra.mxu0 %v4106
  %5005 = vmatprep.subr.mxu0 %v4114
  %5006 = vmatpush1.msra.mxu0 %v4113
  %5007 = vmatprep.subr.mxu0 %v4121
  %5008 = vmatpush1.msra.mxu0 %v4120
  %5009 = vmatprep.subr.mxu0 %v4128
  %5010 = vmatpush1.msra.mxu0 %v4127
  %5011 = vmatprep.subr.mxu0 %v4135
  %5012 = vmatpush1.msra.mxu0 %v4134
  %5013 = vmatprep.subr.mxu0 %v4142
  %5014 = vmatpush1.msra.mxu0 %v4141
  %5015 = vmatprep.subr.mxu0 %v4149
  %5016 = vmatpush1.msra.mxu0 %v4148
  %5017 = vmatprep.subr.mxu0 %v4156
  %5018 = vmatpush1.msra.mxu0 %v4155
  %5019 = vmatprep.subr.mxu0 %v4163
  %5020 = vmatpush1.msra.mxu0 %v4162
  %5021 = vmatprep.subr.mxu0 %v4170
  %5022 = vmatpush1.msra.mxu0 %v4169
  %5023 = vmatprep.subr.mxu0 %v4177
  %5024 = vmatpush1.msra.mxu0 %v4176
  %5025 = vmatprep.subr.mxu0 %v4184
  %5026 = vmatpush1.msra.mxu0 %v4183
  %5027 = vmatprep.subr.mxu0 %v4191
  %5028 = vmatpush1.msra.mxu0 %v4190
  %5029 = vmatprep.subr.mxu0 %v4198
  %5030 = vmatpush1.msra.mxu0 %v4197
  %5031 = vmatprep.subr.mxu0 %v4205
  %5032 = vmatpush1.msra.mxu0 %v4204
  %5033 = vmatprep.subr.mxu0 %v4212
  %5034 = vmatpush1.msra.mxu0 %v4211
  %5035 = vmatprep.subr.mxu0 %v4219
  %5036 = vmatpush1.msra.mxu0 %v4218
  %5037 = vmatprep.subr.mxu0 %v4226
  %5038 = vmatpush1.msra.mxu0 %v4225
  %5039 = vmatprep.subr.mxu0 %v4233
  %5040 = vmatpush1.msra.mxu0 %v4232
  %5041 = vmatprep.subr.mxu0 %v4240
  %5042 = vmatpush1.msra.mxu0 %v4239
  %5043 = vmatprep.subr.mxu0 %v4247
  %5044 = vmatpush1.msra.mxu0 %v4246
  %5045 = vmatprep.subr.mxu0 %v4254
  %5046 = vmatpush1.msra.mxu0 %v4253
  %5047 = vmatprep.subr.mxu0 %v4261
  %5048 = vmatpush1.msra.mxu0 %v4260
  %5049 = vmatprep.subr.mxu0 %v4268
  %5050 = vmatpush1.msra.mxu0 %v4267
  %5051 = vmatprep.subr.mxu0 %v4275
  %5052 = vmatpush1.msra.mxu0 %v4274
  %5053 = vmatprep.subr.mxu0 %v4282
  %5054 = vmatpush1.msra.mxu0 %v4281
  %5055 = vmatprep.subr.mxu0 %v4289
  %5056 = vmatpush1.msra.mxu0 %v4288
  %5057 = vmatprep.subr.mxu0 %v4296
  %5058 = vmatpush1.msra.mxu0 %v4295
  %5059 = vmatprep.mubr.f32.mxu0 %v3400
  %5060 = vmatmul.mubr.f32.gmra.mrb[0].mxu0 %v3399
  %v5061 = vpop.f32.mrb[0].mxu0
  %v5062 = vadd.f32 %v4991, %v5061
  %v5063 = vpop.f32.mrb[0].mxu0
  %v5064 = vadd.f32 %v4993, %v5063
  %5065 = vdwg.mxu0
  %5066 = vmatprep.subr.mxu0 %v4303
  %5067 = vmatpush1.msra.mxu0 %v4302
  %5068 = vmatprep.subr.mxu0 %v4310
  %5069 = vmatpush1.msra.mxu0 %v4309
  %5070 = vmatprep.subr.mxu0 %v4317
  %5071 = vmatpush1.msra.mxu0 %v4316
  %5072 = vmatprep.subr.mxu0 %v4324
  %5073 = vmatpush1.msra.mxu0 %v4323
  %5074 = vmatprep.subr.mxu0 %v4331
  %5075 = vmatpush1.msra.mxu0 %v4330
  %5076 = vmatprep.subr.mxu0 %v4338
  %5077 = vmatpush1.msra.mxu0 %v4337
  %5078 = vmatprep.subr.mxu0 %v4345
  %5079 = vmatpush1.msra.mxu0 %v4344
  %5080 = vmatprep.subr.mxu0 %v4352
  %5081 = vmatpush1.msra.mxu0 %v4351
  %5082 = vmatprep.subr.mxu0 %v4359
  %5083 = vmatpush1.msra.mxu0 %v4358
  %5084 = vmatprep.subr.mxu0 %v4366
  %5085 = vmatpush1.msra.mxu0 %v4365
  %5086 = vmatprep.subr.mxu0 %v4373
  %5087 = vmatpush1.msra.mxu0 %v4372
  %5088 = vmatprep.subr.mxu0 %v4380
  %5089 = vmatpush1.msra.mxu0 %v4379
  %5090 = vmatprep.subr.mxu0 %v4387
  %5091 = vmatpush1.msra.mxu0 %v4386
  %5092 = vmatprep.subr.mxu0 %v4394
  %5093 = vmatpush1.msra.mxu0 %v4393
  %5094 = vmatprep.subr.mxu0 %v4401
  %5095 = vmatpush1.msra.mxu0 %v4400
  %5096 = vmatprep.subr.mxu0 %v4408
  %5097 = vmatpush1.msra.mxu0 %v4407
  %5098 = vmatprep.subr.mxu0 %v4415
  %5099 = vmatpush1.msra.mxu0 %v4414
  %5100 = vmatprep.subr.mxu0 %v4422
  %5101 = vmatpush1.msra.mxu0 %v4421
  %5102 = vmatprep.subr.mxu0 %v4429
  %5103 = vmatpush1.msra.mxu0 %v4428
  %5104 = vmatprep.subr.mxu0 %v4436
  %5105 = vmatpush1.msra.mxu0 %v4435
  %5106 = vmatprep.subr.mxu0 %v4443
  %5107 = vmatpush1.msra.mxu0 %v4442
  %5108 = vmatprep.subr.mxu0 %v4450
  %5109 = vmatpush1.msra.mxu0 %v4449
  %5110 = vmatprep.subr.mxu0 %v4457
  %5111 = vmatpush1.msra.mxu0 %v4456
  %5112 = vmatprep.subr.mxu0 %v4464
  %5113 = vmatpush1.msra.mxu0 %v4463
  %5114 = vmatprep.subr.mxu0 %v4471
  %5115 = vmatpush1.msra.mxu0 %v4470
  %5116 = vmatprep.subr.mxu0 %v4478
  %5117 = vmatpush1.msra.mxu0 %v4477
  %5118 = vmatprep.subr.mxu0 %v4485
  %5119 = vmatpush1.msra.mxu0 %v4484
  %5120 = vmatprep.subr.mxu0 %v4492
  %5121 = vmatpush1.msra.mxu0 %v4491
  %5122 = vmatprep.subr.mxu0 %v4499
  %5123 = vmatpush1.msra.mxu0 %v4498
  %5124 = vmatprep.subr.mxu0 %v4506
  %5125 = vmatpush1.msra.mxu0 %v4505
  %5126 = vmatprep.subr.mxu0 %v4513
  %5127 = vmatpush1.msra.mxu0 %v4512
  %5128 = vmatprep.subr.mxu0 %v4520
  %5129 = vmatpush1.msra.mxu0 %v4519
  %5130 = vmatprep.mubr.f32.mxu0 %v3402
  %5131 = vmatmul.mubr.f32.gmra.mrb[0].mxu0 %v3401
  %v5132 = vpop.f32.mrb[0].mxu0
  %v5133 = vadd.f32 %v5062, %v5132
  %v5134 = vpop.f32.mrb[0].mxu0
  %v5135 = vadd.f32 %v5064, %v5134
  %5136 = vdwg.mxu0
  %5137 = vmatprep.subr.mxu0 %v4527
  %5138 = vmatpush1.msra.mxu0 %v4526
  %5139 = vmatprep.subr.mxu0 %v4534
  %5140 = vmatpush1.msra.mxu0 %v4533
  %5141 = vmatprep.subr.mxu0 %v4541
  %5142 = vmatpush1.msra.mxu0 %v4540
  %5143 = vmatprep.subr.mxu0 %v4548
  %5144 = vmatpush1.msra.mxu0 %v4547
  %5145 = vmatprep.subr.mxu0 %v4555
  %5146 = vmatpush1.msra.mxu0 %v4554
  %5147 = vmatprep.subr.mxu0 %v4562
  %5148 = vmatpush1.msra.mxu0 %v4561
  %5149 = vmatprep.subr.mxu0 %v4569
  %5150 = vmatpush1.msra.mxu0 %v4568
  %5151 = vmatprep.subr.mxu0 %v4576
  %5152 = vmatpush1.msra.mxu0 %v4575
  %5153 = vmatprep.subr.mxu0 %v4583
  %5154 = vmatpush1.msra.mxu0 %v4582
  %5155 = vmatprep.subr.mxu0 %v4590
  %5156 = vmatpush1.msra.mxu0 %v4589
  %5157 = vmatprep.subr.mxu0 %v4597
  %5158 = vmatpush1.msra.mxu0 %v4596
  %5159 = vmatprep.subr.mxu0 %v4604
  %5160 = vmatpush1.msra.mxu0 %v4603
  %5161 = vmatprep.subr.mxu0 %v4611
  %5162 = vmatpush1.msra.mxu0 %v4610
  %5163 = vmatprep.subr.mxu0 %v4618
  %5164 = vmatpush1.msra.mxu0 %v4617
  %5165 = vmatprep.subr.mxu0 %v4625
  %5166 = vmatpush1.msra.mxu0 %v4624
  %5167 = vmatprep.subr.mxu0 %v4632
  %5168 = vmatpush1.msra.mxu0 %v4631
  %5169 = vmatprep.subr.mxu0 %v4639
  %5170 = vmatpush1.msra.mxu0 %v4638
  %5171 = vmatprep.subr.mxu0 %v4646
  %5172 = vmatpush1.msra.mxu0 %v4645
  %5173 = vmatprep.subr.mxu0 %v4653
  %5174 = vmatpush1.msra.mxu0 %v4652
  %5175 = vmatprep.subr.mxu0 %v4660
  %5176 = vmatpush1.msra.mxu0 %v4659
  %5177 = vmatprep.subr.mxu0 %v4667
  %5178 = vmatpush1.msra.mxu0 %v4666
  %5179 = vmatprep.subr.mxu0 %v4674
  %5180 = vmatpush1.msra.mxu0 %v4673
  %5181 = vmatprep.subr.mxu0 %v4681
  %5182 = vmatpush1.msra.mxu0 %v4680
  %5183 = vmatprep.subr.mxu0 %v4688
  %5184 = vmatpush1.msra.mxu0 %v4687
  %5185 = vmatprep.subr.mxu0 %v4695
  %5186 = vmatpush1.msra.mxu0 %v4694
  %5187 = vmatprep.subr.mxu0 %v4702
  %5188 = vmatpush1.msra.mxu0 %v4701
  %5189 = vmatprep.subr.mxu0 %v4709
  %5190 = vmatpush1.msra.mxu0 %v4708
  %5191 = vmatprep.subr.mxu0 %v4716
  %5192 = vmatpush1.msra.mxu0 %v4715
  %5193 = vmatprep.subr.mxu0 %v4723
  %5194 = vmatpush1.msra.mxu0 %v4722
  %5195 = vmatprep.subr.mxu0 %v4730
  %5196 = vmatpush1.msra.mxu0 %v4729
  %5197 = vmatprep.subr.mxu0 %v4737
  %5198 = vmatpush1.msra.mxu0 %v4736
  %5199 = vmatprep.subr.mxu0 %v4744
  %5200 = vmatpush1.msra.mxu0 %v4743
  %5201 = vmatprep.mubr.f32.mxu0 %v3404
  %5202 = vmatmul.mubr.f32.gmra.mrb[0].mxu0 %v3403
  %v5203 = vpop.f32.mrb[0].mxu0
  %v5204 = vadd.f32 %v5133, %v5203
  %v5205 = vpop.f32.mrb[0].mxu0
  %v5206 = vadd.f32 %v5135, %v5205
  %5207 = vdwg.mxu0
  %5208 = vmatprep.subr.mxu0 %v4751
  %5209 = vmatpush1.msra.mxu0 %v4750
  %5210 = vmatprep.subr.mxu0 %v4758
  %5211 = vmatpush1.msra.mxu0 %v4757
  %5212 = vmatprep.subr.mxu0 %v4765
  %5213 = vmatpush1.msra.mxu0 %v4764
  %5214 = vmatprep.subr.mxu0 %v4772
  %5215 = vmatpush1.msra.mxu0 %v4771
  %5216 = vmatprep.subr.mxu0 0.0
  %5217 = vmatpush1.msra.mxu0 0.0
  %5218 = vmatprep.subr.mxu0 0.0
  %5219 = vmatpush1.msra.mxu0 0.0
  %5220 = vmatprep.subr.mxu0 0.0
  %5221 = vmatpush1.msra.mxu0 0.0
  %5222 = vmatprep.subr.mxu0 0.0
  %5223 = vmatpush1.msra.mxu0 0.0
  %5224 = vmatprep.subr.mxu0 0.0
  %5225 = vmatpush1.msra.mxu0 0.0
  %5226 = vmatprep.subr.mxu0 0.0
  %5227 = vmatpush1.msra.mxu0 0.0
  %5228 = vmatprep.subr.mxu0 0.0
  %5229 = vmatpush1.msra.mxu0 0.0
  %5230 = vmatprep.subr.mxu0 0.0
  %5231 = vmatpush1.msra.mxu0 0.0
  %5232 = vmatprep.subr.mxu0 0.0
  %5233 = vmatpush1.msra.mxu0 0.0
  %5234 = vmatprep.subr.mxu0 0.0
  %5235 = vmatpush1.msra.mxu0 0.0
  %5236 = vmatprep.subr.mxu0 0.0
  %5237 = vmatpush1.msra.mxu0 0.0
  %5238 = vmatprep.subr.mxu0 0.0
  %5239 = vmatpush1.msra.mxu0 0.0
  %5240 = vmatprep.subr.mxu0 0.0
  %5241 = vmatpush1.msra.mxu0 0.0
  %5242 = vmatprep.subr.mxu0 0.0
  %5243 = vmatpush1.msra.mxu0 0.0
  %5244 = vmatprep.subr.mxu0 0.0
  %5245 = vmatpush1.msra.mxu0 0.0
  %5246 = vmatprep.subr.mxu0 0.0
  %5247 = vmatpush1.msra.mxu0 0.0
  %5248 = vmatprep.subr.mxu0 0.0
  %5249 = vmatpush1.msra.mxu0 0.0
  %5250 = vmatprep.subr.mxu0 0.0
  %5251 = vmatpush1.msra.mxu0 0.0
  %5252 = vmatprep.subr.mxu0 0.0
  %5253 = vmatpush1.msra.mxu0 0.0
  %5254 = vmatprep.subr.mxu0 0.0
  %5255 = vmatpush1.msra.mxu0 0.0
  %5256 = vmatprep.subr.mxu0 0.0
  %5257 = vmatpush1.msra.mxu0 0.0
  %5258 = vmatprep.subr.mxu0 0.0
  %5259 = vmatpush1.msra.mxu0 0.0
  %5260 = vmatprep.subr.mxu0 0.0
  %5261 = vmatpush1.msra.mxu0 0.0
  %5262 = vmatprep.subr.mxu0 0.0
  %5263 = vmatpush1.msra.mxu0 0.0
  %5264 = vmatprep.subr.mxu0 0.0
  %5265 = vmatpush1.msra.mxu0 0.0
  %5266 = vmatprep.subr.mxu0 0.0
  %5267 = vmatpush1.msra.mxu0 0.0
  %5268 = vmatprep.subr.mxu0 0.0
  %5269 = vmatpush1.msra.mxu0 0.0
  %5270 = vmatprep.subr.mxu0 0.0
  %5271 = vmatpush1.msra.mxu0 0.0
  %5272 = vmatprep.mubr.f32.mxu0 0.0
  %5273 = vmatmul.mubr.f32.gmra.mrb[0].mxu0 %v4780
  %v5274 = vpop.f32.mrb[0].mxu0
  %v5275 = vadd.f32 %v5204, %v5274
  %v5276 = vpop.f32.mrb[0].mxu0
  %v5277 = vadd.f32 %v5206, %v5276
  %5278 = vdwg.mxu0
  %5279 = vmatprep.subr.mxu0 %v3409
  %5280 = vmatpush1.msra.mxu0 %v3408
  %5281 = vmatprep.subr.mxu0 %v3416
  %5282 = vmatpush1.msra.mxu0 %v3415
  %5283 = vmatprep.subr.mxu0 %v3423
  %5284 = vmatpush1.msra.mxu0 %v3422
  %5285 = vmatprep.subr.mxu0 %v3430
  %5286 = vmatpush1.msra.mxu0 %v3429
  %5287 = vmatprep.subr.mxu0 %v3437
  %5288 = vmatpush1.msra.mxu0 %v3436
  %5289 = vmatprep.subr.mxu0 %v3444
  %5290 = vmatpush1.msra.mxu0 %v3443
  %5291 = vmatprep.subr.mxu0 %v3451
  %5292 = vmatpush1.msra.mxu0 %v3450
  %5293 = vmatprep.subr.mxu0 %v3458
  %5294 = vmatpush1.msra.mxu0 %v3457
  %5295 = vmatprep.subr.mxu0 %v3465
  %5296 = vmatpush1.msra.mxu0 %v3464
  %5297 = vmatprep.subr.mxu0 %v3472
  %5298 = vmatpush1.msra.mxu0 %v3471
  %5299 = vmatprep.subr.mxu0 %v3479
  %5300 = vmatpush1.msra.mxu0 %v3478
  %5301 = vmatprep.subr.mxu0 %v3486
  %5302 = vmatpush1.msra.mxu0 %v3485
  %5303 = vmatprep.subr.mxu0 %v3493
  %5304 = vmatpush1.msra.mxu0 %v3492
  %5305 = vmatprep.subr.mxu0 %v3500
  %5306 = vmatpush1.msra.mxu0 %v3499
  %5307 = vmatprep.subr.mxu0 %v3507
  %5308 = vmatpush1.msra.mxu0 %v3506
  %5309 = vmatprep.subr.mxu0 %v3514
  %5310 = vmatpush1.msra.mxu0 %v3513
  %5311 = vmatprep.subr.mxu0 %v3521
  %5312 = vmatpush1.msra.mxu0 %v3520
  %5313 = vmatprep.subr.mxu0 %v3528
  %5314 = vmatpush1.msra.mxu0 %v3527
  %5315 = vmatprep.subr.mxu0 %v3535
  %5316 = vmatpush1.msra.mxu0 %v3534
  %5317 = vmatprep.subr.mxu0 %v3542
  %5318 = vmatpush1.msra.mxu0 %v3541
  %5319 = vmatprep.subr.mxu0 %v3549
  %5320 = vmatpush1.msra.mxu0 %v3548
  %5321 = vmatprep.subr.mxu0 %v3556
  %5322 = vmatpush1.msra.mxu0 %v3555
  %5323 = vmatprep.subr.mxu0 %v3563
  %5324 = vmatpush1.msra.mxu0 %v3562
  %5325 = vmatprep.subr.mxu0 %v3570
  %5326 = vmatpush1.msra.mxu0 %v3569
  %5327 = vmatprep.subr.mxu0 %v3577
  %5328 = vmatpush1.msra.mxu0 %v3576
  %5329 = vmatprep.subr.mxu0 %v3584
  %5330 = vmatpush1.msra.mxu0 %v3583
  %5331 = vmatprep.subr.mxu0 %v3591
  %5332 = vmatpush1.msra.mxu0 %v3590
  %5333 = vmatprep.subr.mxu0 %v3598
  %5334 = vmatpush1.msra.mxu0 %v3597
  %5335 = vmatprep.subr.mxu0 %v3605
  %5336 = vmatpush1.msra.mxu0 %v3604
  %5337 = vmatprep.subr.mxu0 %v3612
  %5338 = vmatpush1.msra.mxu0 %v3611
  %5339 = vmatprep.subr.mxu0 %v3619
  %5340 = vmatpush1.msra.mxu0 %v3618
  %5341 = vmatprep.subr.mxu0 %v3626
  %5342 = vmatpush1.msra.mxu0 %v3625
  %5343 = vmatprep.mubr.f32.mxu0 %v3394
  %5344 = vmatmul.mubr.f32.gmra.mrb[0].mxu0 %v3393
  %v5345 = vpop.f32.mrb[0].mxu0
  %v5346 = vadd.f32 0.0, %v5345
  %v5347 = vpop.f32.mrb[0].mxu0
  %v5348 = vadd.f32 0.0, %v5347
  %5349 = vdwg.mxu0
  %5350 = vmatprep.subr.mxu0 %v3633
  %5351 = vmatpush1.msra.mxu0 %v3632
  %5352 = vmatprep.subr.mxu0 %v3640
  %5353 = vmatpush1.msra.mxu0 %v3639
  %5354 = vmatprep.subr.mxu0 %v3647
  %5355 = vmatpush1.msra.mxu0 %v3646
  %5356 = vmatprep.subr.mxu0 %v3654
  %5357 = vmatpush1.msra.mxu0 %v3653
  %5358 = vmatprep.subr.mxu0 %v3661
  %5359 = vmatpush1.msra.mxu0 %v3660
  %5360 = vmatprep.subr.mxu0 %v3668
  %5361 = vmatpush1.msra.mxu0 %v3667
  %5362 = vmatprep.subr.mxu0 %v3675
  %5363 = vmatpush1.msra.mxu0 %v3674
  %5364 = vmatprep.subr.mxu0 %v3682
  %5365 = vmatpush1.msra.mxu0 %v3681
  %5366 = vmatprep.subr.mxu0 %v3689
  %5367 = vmatpush1.msra.mxu0 %v3688
  %5368 = vmatprep.subr.mxu0 %v3696
  %5369 = vmatpush1.msra.mxu0 %v3695
  %5370 = vmatprep.subr.mxu0 %v3703
  %5371 = vmatpush1.msra.mxu0 %v3702
  %5372 = vmatprep.subr.mxu0 %v3710
  %5373 = vmatpush1.msra.mxu0 %v3709
  %5374 = vmatprep.subr.mxu0 %v3717
  %5375 = vmatpush1.msra.mxu0 %v3716
  %5376 = vmatprep.subr.mxu0 %v3724
  %5377 = vmatpush1.msra.mxu0 %v3723
  %5378 = vmatprep.subr.mxu0 %v3731
  %5379 = vmatpush1.msra.mxu0 %v3730
  %5380 = vmatprep.subr.mxu0 %v3738
  %5381 = vmatpush1.msra.mxu0 %v3737
  %5382 = vmatprep.subr.mxu0 %v3745
  %5383 = vmatpush1.msra.mxu0 %v3744
  %5384 = vmatprep.subr.mxu0 %v3752
  %5385 = vmatpush1.msra.mxu0 %v3751
  %5386 = vmatprep.subr.mxu0 %v3759
  %5387 = vmatpush1.msra.mxu0 %v3758
  %5388 = vmatprep.subr.mxu0 %v3766
  %5389 = vmatpush1.msra.mxu0 %v3765
  %5390 = vmatprep.subr.mxu0 %v3773
  %5391 = vmatpush1.msra.mxu0 %v3772
  %5392 = vmatprep.subr.mxu0 %v3780
  %5393 = vmatpush1.msra.mxu0 %v3779
  %5394 = vmatprep.subr.mxu0 %v3787
  %5395 = vmatpush1.msra.mxu0 %v3786
  %5396 = vmatprep.subr.mxu0 %v3794
  %5397 = vmatpush1.msra.mxu0 %v3793
  %5398 = vmatprep.subr.mxu0 %v3801
  %5399 = vmatpush1.msra.mxu0 %v3800
  %5400 = vmatprep.subr.mxu0 %v3808
  %5401 = vmatpush1.msra.mxu0 %v3807
  %5402 = vmatprep.subr.mxu0 %v3815
  %5403 = vmatpush1.msra.mxu0 %v3814
  %5404 = vmatprep.subr.mxu0 %v3822
  %5405 = vmatpush1.msra.mxu0 %v3821
  %5406 = vmatprep.subr.mxu0 %v3829
  %5407 = vmatpush1.msra.mxu0 %v3828
  %5408 = vmatprep.subr.mxu0 %v3836
  %5409 = vmatpush1.msra.mxu0 %v3835
  %5410 = vmatprep.subr.mxu0 %v3843
  %5411 = vmatpush1.msra.mxu0 %v3842
  %5412 = vmatprep.subr.mxu0 %v3850
  %5413 = vmatpush1.msra.mxu0 %v3849
  %5414 = vmatprep.mubr.f32.mxu0 %v3396
  %5415 = vmatmul.mubr.f32.gmra.mrb[0].mxu0 %v3395
  %v5416 = vpop.f32.mrb[0].mxu0
  %v5417 = vadd.f32 %v5346, %v5416
  %v5418 = vpop.f32.mrb[0].mxu0
  %v5419 = vadd.f32 %v5348, %v5418
  %5420 = vdwg.mxu0
  %5421 = vmatprep.subr.mxu0 %v3857
  %5422 = vmatpush1.msra.mxu0 %v3856
  %5423 = vmatprep.subr.mxu0 %v3864
  %5424 = vmatpush1.msra.mxu0 %v3863
  %5425 = vmatprep.subr.mxu0 %v3871
  %5426 = vmatpush1.msra.mxu0 %v3870
  %5427 = vmatprep.subr.mxu0 %v3878
  %5428 = vmatpush1.msra.mxu0 %v3877
  %5429 = vmatprep.subr.mxu0 %v3885
  %5430 = vmatpush1.msra.mxu0 %v3884
  %5431 = vmatprep.subr.mxu0 %v3892
  %5432 = vmatpush1.msra.mxu0 %v3891
  %5433 = vmatprep.subr.mxu0 %v3899
  %5434 = vmatpush1.msra.mxu0 %v3898
  %5435 = vmatprep.subr.mxu0 %v3906
  %5436 = vmatpush1.msra.mxu0 %v3905
  %5437 = vmatprep.subr.mxu0 %v3913
  %5438 = vmatpush1.msra.mxu0 %v3912
  %5439 = vmatprep.subr.mxu0 %v3920
  %5440 = vmatpush1.msra.mxu0 %v3919
  %5441 = vmatprep.subr.mxu0 %v3927
  %5442 = vmatpush1.msra.mxu0 %v3926
  %5443 = vmatprep.subr.mxu0 %v3934
  %5444 = vmatpush1.msra.mxu0 %v3933
  %5445 = vmatprep.subr.mxu0 %v3941
  %5446 = vmatpush1.msra.mxu0 %v3940
  %5447 = vmatprep.subr.mxu0 %v3948
  %5448 = vmatpush1.msra.mxu0 %v3947
  %5449 = vmatprep.subr.mxu0 %v3955
  %5450 = vmatpush1.msra.mxu0 %v3954
  %5451 = vmatprep.subr.mxu0 %v3962
  %5452 = vmatpush1.msra.mxu0 %v3961
  %5453 = vmatprep.subr.mxu0 %v3969
  %5454 = vmatpush1.msra.mxu0 %v3968
  %5455 = vmatprep.subr.mxu0 %v3976
  %5456 = vmatpush1.msra.mxu0 %v3975
  %5457 = vmatprep.subr.mxu0 %v3983
  %5458 = vmatpush1.msra.mxu0 %v3982
  %5459 = vmatprep.subr.mxu0 %v3990
  %5460 = vmatpush1.msra.mxu0 %v3989
  %5461 = vmatprep.subr.mxu0 %v3997
  %5462 = vmatpush1.msra.mxu0 %v3996
  %5463 = vmatprep.subr.mxu0 %v4004
  %5464 = vmatpush1.msra.mxu0 %v4003
  %5465 = vmatprep.subr.mxu0 %v4011
  %5466 = vmatpush1.msra.mxu0 %v4010
  %5467 = vmatprep.subr.mxu0 %v4018
  %5468 = vmatpush1.msra.mxu0 %v4017
  %5469 = vmatprep.subr.mxu0 %v4025
  %5470 = vmatpush1.msra.mxu0 %v4024
  %5471 = vmatprep.subr.mxu0 %v4032
  %5472 = vmatpush1.msra.mxu0 %v4031
  %5473 = vmatprep.subr.mxu0 %v4039
  %5474 = vmatpush1.msra.mxu0 %v4038
  %5475 = vmatprep.subr.mxu0 %v4046
  %5476 = vmatpush1.msra.mxu0 %v4045
  %5477 = vmatprep.subr.mxu0 %v4053
  %5478 = vmatpush1.msra.mxu0 %v4052
  %5479 = vmatprep.subr.mxu0 %v4060
  %5480 = vmatpush1.msra.mxu0 %v4059
  %5481 = vmatprep.subr.mxu0 %v4067
  %5482 = vmatpush1.msra.mxu0 %v4066
  %5483 = vmatprep.subr.mxu0 %v4074
  %5484 = vmatpush1.msra.mxu0 %v4073
  %5485 = vmatprep.mubr.f32.mxu0 %v3398
  %5486 = vmatmul.mubr.f32.gmra.mrb[0].mxu0 %v3397
  %v5487 = vpop.f32.mrb[0].mxu0
  %v5488 = vadd.f32 %v5417, %v5487
  %v5489 = vpop.f32.mrb[0].mxu0
  %v5490 = vadd.f32 %v5419, %v5489
  %5491 = vdwg.mxu0
  %5492 = vmatprep.subr.mxu0 %v4081
  %5493 = vmatpush1.msra.mxu0 %v4080
  %5494 = vmatprep.subr.mxu0 %v4088
  %5495 = vmatpush1.msra.mxu0 %v4087
  %5496 = vmatprep.subr.mxu0 %v4095
  %5497 = vmatpush1.msra.mxu0 %v4094
  %5498 = vmatprep.subr.mxu0 %v4102
  %5499 = vmatpush1.msra.mxu0 %v4101
  %5500 = vmatprep.subr.mxu0 %v4109
  %5501 = vmatpush1.msra.mxu0 %v4108
  %5502 = vmatprep.subr.mxu0 %v4116
  %5503 = vmatpush1.msra.mxu0 %v4115
  %5504 = vmatprep.subr.mxu0 %v4123
  %5505 = vmatpush1.msra.mxu0 %v4122
  %5506 = vmatprep.subr.mxu0 %v4130
  %5507 = vmatpush1.msra.mxu0 %v4129
  %5508 = vmatprep.subr.mxu0 %v4137
  %5509 = vmatpush1.msra.mxu0 %v4136
  %5510 = vmatprep.subr.mxu0 %v4144
  %5511 = vmatpush1.msra.mxu0 %v4143
  %5512 = vmatprep.subr.mxu0 %v4151
  %5513 = vmatpush1.msra.mxu0 %v4150
  %5514 = vmatprep.subr.mxu0 %v4158
  %5515 = vmatpush1.msra.mxu0 %v4157
  %5516 = vmatprep.subr.mxu0 %v4165
  %5517 = vmatpush1.msra.mxu0 %v4164
  %5518 = vmatprep.subr.mxu0 %v4172
  %5519 = vmatpush1.msra.mxu0 %v4171
  %5520 = vmatprep.subr.mxu0 %v4179
  %5521 = vmatpush1.msra.mxu0 %v4178
  %5522 = vmatprep.subr.mxu0 %v4186
  %5523 = vmatpush1.msra.mxu0 %v4185
  %5524 = vmatprep.subr.mxu0 %v4193
  %5525 = vmatpush1.msra.mxu0 %v4192
  %5526 = vmatprep.subr.mxu0 %v4200
  %5527 = vmatpush1.msra.mxu0 %v4199
  %5528 = vmatprep.subr.mxu0 %v4207
  %5529 = vmatpush1.msra.mxu0 %v4206
  %5530 = vmatprep.subr.mxu0 %v4214
  %5531 = vmatpush1.msra.mxu0 %v4213
  %5532 = vmatprep.subr.mxu0 %v4221
  %5533 = vmatpush1.msra.mxu0 %v4220
  %5534 = vmatprep.subr.mxu0 %v4228
  %5535 = vmatpush1.msra.mxu0 %v4227
  %5536 = vmatprep.subr.mxu0 %v4235
  %5537 = vmatpush1.msra.mxu0 %v4234
  %5538 = vmatprep.subr.mxu0 %v4242
  %5539 = vmatpush1.msra.mxu0 %v4241
  %5540 = vmatprep.subr.mxu0 %v4249
  %5541 = vmatpush1.msra.mxu0 %v4248
  %5542 = vmatprep.subr.mxu0 %v4256
  %5543 = vmatpush1.msra.mxu0 %v4255
  %5544 = vmatprep.subr.mxu0 %v4263
  %5545 = vmatpush1.msra.mxu0 %v4262
  %5546 = vmatprep.subr.mxu0 %v4270
  %5547 = vmatpush1.msra.mxu0 %v4269
  %5548 = vmatprep.subr.mxu0 %v4277
  %5549 = vmatpush1.msra.mxu0 %v4276
  %5550 = vmatprep.subr.mxu0 %v4284
  %5551 = vmatpush1.msra.mxu0 %v4283
  %5552 = vmatprep.subr.mxu0 %v4291
  %5553 = vmatpush1.msra.mxu0 %v4290
  %5554 = vmatprep.subr.mxu0 %v4298
  %5555 = vmatpush1.msra.mxu0 %v4297
  %5556 = vmatprep.mubr.f32.mxu0 %v3400
  %5557 = vmatmul.mubr.f32.gmra.mrb[0].mxu0 %v3399
  %v5558 = vpop.f32.mrb[0].mxu0
  %v5559 = vadd.f32 %v5488, %v5558
  %v5560 = vpop.f32.mrb[0].mxu0
  %v5561 = vadd.f32 %v5490, %v5560
  %5562 = vdwg.mxu0
  %5563 = vmatprep.subr.mxu0 %v4305
  %5564 = vmatpush1.msra.mxu0 %v4304
  %5565 = vmatprep.subr.mxu0 %v4312
  %5566 = vmatpush1.msra.mxu0 %v4311
  %5567 = vmatprep.subr.mxu0 %v4319
  %5568 = vmatpush1.msra.mxu0 %v4318
  %5569 = vmatprep.subr.mxu0 %v4326
  %5570 = vmatpush1.msra.mxu0 %v4325
  %5571 = vmatprep.subr.mxu0 %v4333
  %5572 = vmatpush1.msra.mxu0 %v4332
  %5573 = vmatprep.subr.mxu0 %v4340
  %5574 = vmatpush1.msra.mxu0 %v4339
  %5575 = vmatprep.subr.mxu0 %v4347
  %5576 = vmatpush1.msra.mxu0 %v4346
  %5577 = vmatprep.subr.mxu0 %v4354
  %5578 = vmatpush1.msra.mxu0 %v4353
  %5579 = vmatprep.subr.mxu0 %v4361
  %5580 = vmatpush1.msra.mxu0 %v4360
  %5581 = vmatprep.subr.mxu0 %v4368
  %5582 = vmatpush1.msra.mxu0 %v4367
  %5583 = vmatprep.subr.mxu0 %v4375
  %5584 = vmatpush1.msra.mxu0 %v4374
  %5585 = vmatprep.subr.mxu0 %v4382
  %5586 = vmatpush1.msra.mxu0 %v4381
  %5587 = vmatprep.subr.mxu0 %v4389
  %5588 = vmatpush1.msra.mxu0 %v4388
  %5589 = vmatprep.subr.mxu0 %v4396
  %5590 = vmatpush1.msra.mxu0 %v4395
  %5591 = vmatprep.subr.mxu0 %v4403
  %5592 = vmatpush1.msra.mxu0 %v4402
  %5593 = vmatprep.subr.mxu0 %v4410
  %5594 = vmatpush1.msra.mxu0 %v4409
  %5595 = vmatprep.subr.mxu0 %v4417
  %5596 = vmatpush1.msra.mxu0 %v4416
  %5597 = vmatprep.subr.mxu0 %v4424
  %5598 = vmatpush1.msra.mxu0 %v4423
  %5599 = vmatprep.subr.mxu0 %v4431
  %5600 = vmatpush1.msra.mxu0 %v4430
  %5601 = vmatprep.subr.mxu0 %v4438
  %5602 = vmatpush1.msra.mxu0 %v4437
  %5603 = vmatprep.subr.mxu0 %v4445
  %5604 = vmatpush1.msra.mxu0 %v4444
  %5605 = vmatprep.subr.mxu0 %v4452
  %5606 = vmatpush1.msra.mxu0 %v4451
  %5607 = vmatprep.subr.mxu0 %v4459
  %5608 = vmatpush1.msra.mxu0 %v4458
  %5609 = vmatprep.subr.mxu0 %v4466
  %5610 = vmatpush1.msra.mxu0 %v4465
  %5611 = vmatprep.subr.mxu0 %v4473
  %5612 = vmatpush1.msra.mxu0 %v4472
  %5613 = vmatprep.subr.mxu0 %v4480
  %5614 = vmatpush1.msra.mxu0 %v4479
  %5615 = vmatprep.subr.mxu0 %v4487
  %5616 = vmatpush1.msra.mxu0 %v4486
  %5617 = vmatprep.subr.mxu0 %v4494
  %5618 = vmatpush1.msra.mxu0 %v4493
  %5619 = vmatprep.subr.mxu0 %v4501
  %5620 = vmatpush1.msra.mxu0 %v4500
  %5621 = vmatprep.subr.mxu0 %v4508
  %5622 = vmatpush1.msra.mxu0 %v4507
  %5623 = vmatprep.subr.mxu0 %v4515
  %5624 = vmatpush1.msra.mxu0 %v4514
  %5625 = vmatprep.subr.mxu0 %v4522
  %5626 = vmatpush1.msra.mxu0 %v4521
  %5627 = vmatprep.mubr.f32.mxu0 %v3402
  %5628 = vmatmul.mubr.f32.gmra.mrb[0].mxu0 %v3401
  %v5629 = vpop.f32.mrb[0].mxu0
  %v5630 = vadd.f32 %v5559, %v5629
  %v5631 = vpop.f32.mrb[0].mxu0
  %v5632 = vadd.f32 %v5561, %v5631
  %5633 = vdwg.mxu0
  %5634 = vmatprep.subr.mxu0 %v4529
  %5635 = vmatpush1.msra.mxu0 %v4528
  %5636 = vmatprep.subr.mxu0 %v4536
  %5637 = vmatpush1.msra.mxu0 %v4535
  %5638 = vmatprep.subr.mxu0 %v4543
  %5639 = vmatpush1.msra.mxu0 %v4542
  %5640 = vmatprep.subr.mxu0 %v4550
  %5641 = vmatpush1.msra.mxu0 %v4549
  %5642 = vmatprep.subr.mxu0 %v4557
  %5643 = vmatpush1.msra.mxu0 %v4556
  %5644 = vmatprep.subr.mxu0 %v4564
  %5645 = vmatpush1.msra.mxu0 %v4563
  %5646 = vmatprep.subr.mxu0 %v4571
  %5647 = vmatpush1.msra.mxu0 %v4570
  %5648 = vmatprep.subr.mxu0 %v4578
  %5649 = vmatpush1.msra.mxu0 %v4577
  %5650 = vmatprep.subr.mxu0 %v4585
  %5651 = vmatpush1.msra.mxu0 %v4584
  %5652 = vmatprep.subr.mxu0 %v4592
  %5653 = vmatpush1.msra.mxu0 %v4591
  %5654 = vmatprep.subr.mxu0 %v4599
  %5655 = vmatpush1.msra.mxu0 %v4598
  %5656 = vmatprep.subr.mxu0 %v4606
  %5657 = vmatpush1.msra.mxu0 %v4605
  %5658 = vmatprep.subr.mxu0 %v4613
  %5659 = vmatpush1.msra.mxu0 %v4612
  %5660 = vmatprep.subr.mxu0 %v4620
  %5661 = vmatpush1.msra.mxu0 %v4619
  %5662 = vmatprep.subr.mxu0 %v4627
  %5663 = vmatpush1.msra.mxu0 %v4626
  %5664 = vmatprep.subr.mxu0 %v4634
  %5665 = vmatpush1.msra.mxu0 %v4633
  %5666 = vmatprep.subr.mxu0 %v4641
  %5667 = vmatpush1.msra.mxu0 %v4640
  %5668 = vmatprep.subr.mxu0 %v4648
  %5669 = vmatpush1.msra.mxu0 %v4647
  %5670 = vmatprep.subr.mxu0 %v4655
  %5671 = vmatpush1.msra.mxu0 %v4654
  %5672 = vmatprep.subr.mxu0 %v4662
  %5673 = vmatpush1.msra.mxu0 %v4661
  %5674 = vmatprep.subr.mxu0 %v4669
  %5675 = vmatpush1.msra.mxu0 %v4668
  %5676 = vmatprep.subr.mxu0 %v4676
  %5677 = vmatpush1.msra.mxu0 %v4675
  %5678 = vmatprep.subr.mxu0 %v4683
  %5679 = vmatpush1.msra.mxu0 %v4682
  %5680 = vmatprep.subr.mxu0 %v4690
  %5681 = vmatpush1.msra.mxu0 %v4689
  %5682 = vmatprep.subr.mxu0 %v4697
  %5683 = vmatpush1.msra.mxu0 %v4696
  %5684 = vmatprep.subr.mxu0 %v4704
  %5685 = vmatpush1.msra.mxu0 %v4703
  %5686 = vmatprep.subr.mxu0 %v4711
  %5687 = vmatpush1.msra.mxu0 %v4710
  %5688 = vmatprep.subr.mxu0 %v4718
  %5689 = vmatpush1.msra.mxu0 %v4717
  %5690 = vmatprep.subr.mxu0 %v4725
  %5691 = vmatpush1.msra.mxu0 %v4724
  %5692 = vmatprep.subr.mxu0 %v4732
  %5693 = vmatpush1.msra.mxu0 %v4731
  %5694 = vmatprep.subr.mxu0 %v4739
  %5695 = vmatpush1.msra.mxu0 %v4738
  %5696 = vmatprep.subr.mxu0 %v4746
  %5697 = vmatpush1.msra.mxu0 %v4745
  %5698 = vmatprep.mubr.f32.mxu0 %v3404
  %5699 = vmatmul.mubr.f32.gmra.mrb[0].mxu0 %v3403
  %v5700 = vpop.f32.mrb[0].mxu0
  %v5701 = vadd.f32 %v5630, %v5700
  %v5702 = vpop.f32.mrb[0].mxu0
  %v5703 = vadd.f32 %v5632, %v5702
  %5704 = vdwg.mxu0
  %5705 = vmatprep.subr.mxu0 %v4753
  %5706 = vmatpush1.msra.mxu0 %v4752
  %5707 = vmatprep.subr.mxu0 %v4760
  %5708 = vmatpush1.msra.mxu0 %v4759
  %5709 = vmatprep.subr.mxu0 %v4767
  %5710 = vmatpush1.msra.mxu0 %v4766
  %5711 = vmatprep.subr.mxu0 %v4774
  %5712 = vmatpush1.msra.mxu0 %v4773
  %5713 = vmatprep.subr.mxu0 0.0
  %5714 = vmatpush1.msra.mxu0 0.0
  %5715 = vmatprep.subr.mxu0 0.0
  %5716 = vmatpush1.msra.mxu0 0.0
  %5717 = vmatprep.subr.mxu0 0.0
  %5718 = vmatpush1.msra.mxu0 0.0
  %5719 = vmatprep.subr.mxu0 0.0
  %5720 = vmatpush1.msra.mxu0 0.0
  %5721 = vmatprep.subr.mxu0 0.0
  %5722 = vmatpush1.msra.mxu0 0.0
  %5723 = vmatprep.subr.mxu0 0.0
  %5724 = vmatpush1.msra.mxu0 0.0
  %5725 = vmatprep.subr.mxu0 0.0
  %5726 = vmatpush1.msra.mxu0 0.0
  %5727 = vmatprep.subr.mxu0 0.0
  %5728 = vmatpush1.msra.mxu0 0.0
  %5729 = vmatprep.subr.mxu0 0.0
  %5730 = vmatpush1.msra.mxu0 0.0
  %5731 = vmatprep.subr.mxu0 0.0
  %5732 = vmatpush1.msra.mxu0 0.0
  %5733 = vmatprep.subr.mxu0 0.0
  %5734 = vmatpush1.msra.mxu0 0.0
  %5735 = vmatprep.subr.mxu0 0.0
  %5736 = vmatpush1.msra.mxu0 0.0
  %5737 = vmatprep.subr.mxu0 0.0
  %5738 = vmatpush1.msra.mxu0 0.0
  %5739 = vmatprep.subr.mxu0 0.0
  %5740 = vmatpush1.msra.mxu0 0.0
  %5741 = vmatprep.subr.mxu0 0.0
  %5742 = vmatpush1.msra.mxu0 0.0
  %5743 = vmatprep.subr.mxu0 0.0
  %5744 = vmatpush1.msra.mxu0 0.0
  %5745 = vmatprep.subr.mxu0 0.0
  %5746 = vmatpush1.msra.mxu0 0.0
  %5747 = vmatprep.subr.mxu0 0.0
  %5748 = vmatpush1.msra.mxu0 0.0
  %5749 = vmatprep.subr.mxu0 0.0
  %5750 = vmatpush1.msra.mxu0 0.0
  %5751 = vmatprep.subr.mxu0 0.0
  %5752 = vmatpush1.msra.mxu0 0.0
  %5753 = vmatprep.subr.mxu0 0.0
  %5754 = vmatpush1.msra.mxu0 0.0
  %5755 = vmatprep.subr.mxu0 0.0
  %5756 = vmatpush1.msra.mxu0 0.0
  %5757 = vmatprep.subr.mxu0 0.0
  %5758 = vmatpush1.msra.mxu0 0.0
  %5759 = vmatprep.subr.mxu0 0.0
  %5760 = vmatpush1.msra.mxu0 0.0
  %5761 = vmatprep.subr.mxu0 0.0
  %5762 = vmatpush1.msra.mxu0 0.0
  %5763 = vmatprep.subr.mxu0 0.0
  %5764 = vmatpush1.msra.mxu0 0.0
  %5765 = vmatprep.subr.mxu0 0.0
  %5766 = vmatpush1.msra.mxu0 0.0
  %5767 = vmatprep.subr.mxu0 0.0
  %5768 = vmatpush1.msra.mxu0 0.0
  %5769 = vmatprep.mubr.f32.mxu0 0.0
  %5770 = vmatmul.mubr.f32.gmra.mrb[0].mxu0 %v4780
  %v5771 = vpop.f32.mrb[0].mxu0
  %v5772 = vadd.f32 %v5701, %v5771
  %v5773 = vpop.f32.mrb[0].mxu0
  %v5774 = vadd.f32 %v5703, %v5773
  %5775 = vdwg.mxu0
  %5776 = vmatprep.subr.mxu0 %v3411
  %5777 = vmatpush1.msra.mxu0 %v3410
  %5778 = vmatprep.subr.mxu0 %v3418
  %5779 = vmatpush1.msra.mxu0 %v3417
  %5780 = vmatprep.subr.mxu0 %v3425
  %5781 = vmatpush1.msra.mxu0 %v3424
  %5782 = vmatprep.subr.mxu0 %v3432
  %5783 = vmatpush1.msra.mxu0 %v3431
  %5784 = vmatprep.subr.mxu0 %v3439
  %5785 = vmatpush1.msra.mxu0 %v3438
  %5786 = vmatprep.subr.mxu0 %v3446
  %5787 = vmatpush1.msra.mxu0 %v3445
  %5788 = vmatprep.subr.mxu0 %v3453
  %5789 = vmatpush1.msra.mxu0 %v3452
  %5790 = vmatprep.subr.mxu0 %v3460
  %5791 = vmatpush1.msra.mxu0 %v3459
  %5792 = vmatprep.subr.mxu0 %v3467
  %5793 = vmatpush1.msra.mxu0 %v3466
  %5794 = vmatprep.subr.mxu0 %v3474
  %5795 = vmatpush1.msra.mxu0 %v3473
  %5796 = vmatprep.subr.mxu0 %v3481
  %5797 = vmatpush1.msra.mxu0 %v3480
  %5798 = vmatprep.subr.mxu0 %v3488
  %5799 = vmatpush1.msra.mxu0 %v3487
  %5800 = vmatprep.subr.mxu0 %v3495
  %5801 = vmatpush1.msra.mxu0 %v3494
  %5802 = vmatprep.subr.mxu0 %v3502
  %5803 = vmatpush1.msra.mxu0 %v3501
  %5804 = vmatprep.subr.mxu0 %v3509
  %5805 = vmatpush1.msra.mxu0 %v3508
  %5806 = vmatprep.subr.mxu0 %v3516
  %5807 = vmatpush1.msra.mxu0 %v3515
  %5808 = vmatprep.subr.mxu0 %v3523
  %5809 = vmatpush1.msra.mxu0 %v3522
  %5810 = vmatprep.subr.mxu0 %v3530
  %5811 = vmatpush1.msra.mxu0 %v3529
  %5812 = vmatprep.subr.mxu0 %v3537
  %5813 = vmatpush1.msra.mxu0 %v3536
  %5814 = vmatprep.subr.mxu0 %v3544
  %5815 = vmatpush1.msra.mxu0 %v3543
  %5816 = vmatprep.subr.mxu0 %v3551
  %5817 = vmatpush1.msra.mxu0 %v3550
  %5818 = vmatprep.subr.mxu0 %v3558
  %5819 = vmatpush1.msra.mxu0 %v3557
  %5820 = vmatprep.subr.mxu0 %v3565
  %5821 = vmatpush1.msra.mxu0 %v3564
  %5822 = vmatprep.subr.mxu0 %v3572
  %5823 = vmatpush1.msra.mxu0 %v3571
  %5824 = vmatprep.subr.mxu0 %v3579
  %5825 = vmatpush1.msra.mxu0 %v3578
  %5826 = vmatprep.subr.mxu0 %v3586
  %5827 = vmatpush1.msra.mxu0 %v3585
  %5828 = vmatprep.subr.mxu0 %v3593
  %5829 = vmatpush1.msra.mxu0 %v3592
  %5830 = vmatprep.subr.mxu0 %v3600
  %5831 = vmatpush1.msra.mxu0 %v3599
  %5832 = vmatprep.subr.mxu0 %v3607
  %5833 = vmatpush1.msra.mxu0 %v3606
  %5834 = vmatprep.subr.mxu0 %v3614
  %5835 = vmatpush1.msra.mxu0 %v3613
  %5836 = vmatprep.subr.mxu0 %v3621
  %5837 = vmatpush1.msra.mxu0 %v3620
  %5838 = vmatprep.subr.mxu0 %v3628
  %5839 = vmatpush1.msra.mxu0 %v3627
  %5840 = vmatprep.mubr.f32.mxu0 %v3394
  %5841 = vmatmul.mubr.f32.gmra.mrb[0].mxu0 %v3393
  %v5842 = vpop.f32.mrb[0].mxu0
  %v5843 = vadd.f32 0.0, %v5842
  %v5844 = vpop.f32.mrb[0].mxu0
  %v5845 = vadd.f32 0.0, %v5844
  %5846 = vdwg.mxu0
  %5847 = vmatprep.subr.mxu0 %v3635
  %5848 = vmatpush1.msra.mxu0 %v3634
  %5849 = vmatprep.subr.mxu0 %v3642
  %5850 = vmatpush1.msra.mxu0 %v3641
  %5851 = vmatprep.subr.mxu0 %v3649
  %5852 = vmatpush1.msra.mxu0 %v3648
  %5853 = vmatprep.subr.mxu0 %v3656
  %5854 = vmatpush1.msra.mxu0 %v3655
  %5855 = vmatprep.subr.mxu0 %v3663
  %5856 = vmatpush1.msra.mxu0 %v3662
  %5857 = vmatprep.subr.mxu0 %v3670
  %5858 = vmatpush1.msra.mxu0 %v3669
  %5859 = vmatprep.subr.mxu0 %v3677
  %5860 = vmatpush1.msra.mxu0 %v3676
  %5861 = vmatprep.subr.mxu0 %v3684
  %5862 = vmatpush1.msra.mxu0 %v3683
  %5863 = vmatprep.subr.mxu0 %v3691
  %5864 = vmatpush1.msra.mxu0 %v3690
  %5865 = vmatprep.subr.mxu0 %v3698
  %5866 = vmatpush1.msra.mxu0 %v3697
  %5867 = vmatprep.subr.mxu0 %v3705
  %5868 = vmatpush1.msra.mxu0 %v3704
  %5869 = vmatprep.subr.mxu0 %v3712
  %5870 = vmatpush1.msra.mxu0 %v3711
  %5871 = vmatprep.subr.mxu0 %v3719
  %5872 = vmatpush1.msra.mxu0 %v3718
  %5873 = vmatprep.subr.mxu0 %v3726
  %5874 = vmatpush1.msra.mxu0 %v3725
  %5875 = vmatprep.subr.mxu0 %v3733
  %5876 = vmatpush1.msra.mxu0 %v3732
  %5877 = vmatprep.subr.mxu0 %v3740
  %5878 = vmatpush1.msra.mxu0 %v3739
  %5879 = vmatprep.subr.mxu0 %v3747
  %5880 = vmatpush1.msra.mxu0 %v3746
  %5881 = vmatprep.subr.mxu0 %v3754
  %5882 = vmatpush1.msra.mxu0 %v3753
  %5883 = vmatprep.subr.mxu0 %v3761
  %5884 = vmatpush1.msra.mxu0 %v3760
  %5885 = vmatprep.subr.mxu0 %v3768
  %5886 = vmatpush1.msra.mxu0 %v3767
  %5887 = vmatprep.subr.mxu0 %v3775
  %5888 = vmatpush1.msra.mxu0 %v3774
  %5889 = vmatprep.subr.mxu0 %v3782
  %5890 = vmatpush1.msra.mxu0 %v3781
  %5891 = vmatprep.subr.mxu0 %v3789
  %5892 = vmatpush1.msra.mxu0 %v3788
  %5893 = vmatprep.subr.mxu0 %v3796
  %5894 = vmatpush1.msra.mxu0 %v3795
  %5895 = vmatprep.subr.mxu0 %v3803
  %5896 = vmatpush1.msra.mxu0 %v3802
  %5897 = vmatprep.subr.mxu0 %v3810
  %5898 = vmatpush1.msra.mxu0 %v3809
  %5899 = vmatprep.subr.mxu0 %v3817
  %5900 = vmatpush1.msra.mxu0 %v3816
  %5901 = vmatprep.subr.mxu0 %v3824
  %5902 = vmatpush1.msra.mxu0 %v3823
  %5903 = vmatprep.subr.mxu0 %v3831
  %5904 = vmatpush1.msra.mxu0 %v3830
  %5905 = vmatprep.subr.mxu0 %v3838
  %5906 = vmatpush1.msra.mxu0 %v3837
  %5907 = vmatprep.subr.mxu0 %v3845
  %5908 = vmatpush1.msra.mxu0 %v3844
  %5909 = vmatprep.subr.mxu0 %v3852
  %5910 = vmatpush1.msra.mxu0 %v3851
  %5911 = vmatprep.mubr.f32.mxu0 %v3396
  %5912 = vmatmul.mubr.f32.gmra.mrb[0].mxu0 %v3395
  %v5913 = vpop.f32.mrb[0].mxu0
  %v5914 = vadd.f32 %v5843, %v5913
  %v5915 = vpop.f32.mrb[0].mxu0
  %v5916 = vadd.f32 %v5845, %v5915
  %5917 = vdwg.mxu0
  %5918 = vmatprep.subr.mxu0 %v3859
  %5919 = vmatpush1.msra.mxu0 %v3858
  %5920 = vmatprep.subr.mxu0 %v3866
  %5921 = vmatpush1.msra.mxu0 %v3865
  %5922 = vmatprep.subr.mxu0 %v3873
  %5923 = vmatpush1.msra.mxu0 %v3872
  %5924 = vmatprep.subr.mxu0 %v3880
  %5925 = vmatpush1.msra.mxu0 %v3879
  %5926 = vmatprep.subr.mxu0 %v3887
  %5927 = vmatpush1.msra.mxu0 %v3886
  %5928 = vmatprep.subr.mxu0 %v3894
  %5929 = vmatpush1.msra.mxu0 %v3893
  %5930 = vmatprep.subr.mxu0 %v3901
  %5931 = vmatpush1.msra.mxu0 %v3900
  %5932 = vmatprep.subr.mxu0 %v3908
  %5933 = vmatpush1.msra.mxu0 %v3907
  %5934 = vmatprep.subr.mxu0 %v3915
  %5935 = vmatpush1.msra.mxu0 %v3914
  %5936 = vmatprep.subr.mxu0 %v3922
  %5937 = vmatpush1.msra.mxu0 %v3921
  %5938 = vmatprep.subr.mxu0 %v3929
  %5939 = vmatpush1.msra.mxu0 %v3928
  %5940 = vmatprep.subr.mxu0 %v3936
  %5941 = vmatpush1.msra.mxu0 %v3935
  %5942 = vmatprep.subr.mxu0 %v3943
  %5943 = vmatpush1.msra.mxu0 %v3942
  %5944 = vmatprep.subr.mxu0 %v3950
  %5945 = vmatpush1.msra.mxu0 %v3949
  %5946 = vmatprep.subr.mxu0 %v3957
  %5947 = vmatpush1.msra.mxu0 %v3956
  %5948 = vmatprep.subr.mxu0 %v3964
  %5949 = vmatpush1.msra.mxu0 %v3963
  %5950 = vmatprep.subr.mxu0 %v3971
  %5951 = vmatpush1.msra.mxu0 %v3970
  %5952 = vmatprep.subr.mxu0 %v3978
  %5953 = vmatpush1.msra.mxu0 %v3977
  %5954 = vmatprep.subr.mxu0 %v3985
  %5955 = vmatpush1.msra.mxu0 %v3984
  %5956 = vmatprep.subr.mxu0 %v3992
  %5957 = vmatpush1.msra.mxu0 %v3991
  %5958 = vmatprep.subr.mxu0 %v3999
  %5959 = vmatpush1.msra.mxu0 %v3998
  %5960 = vmatprep.subr.mxu0 %v4006
  %5961 = vmatpush1.msra.mxu0 %v4005
  %5962 = vmatprep.subr.mxu0 %v4013
  %5963 = vmatpush1.msra.mxu0 %v4012
  %5964 = vmatprep.subr.mxu0 %v4020
  %5965 = vmatpush1.msra.mxu0 %v4019
  %5966 = vmatprep.subr.mxu0 %v4027
  %5967 = vmatpush1.msra.mxu0 %v4026
  %5968 = vmatprep.subr.mxu0 %v4034
  %5969 = vmatpush1.msra.mxu0 %v4033
  %5970 = vmatprep.subr.mxu0 %v4041
  %5971 = vmatpush1.msra.mxu0 %v4040
  %5972 = vmatprep.subr.mxu0 %v4048
  %5973 = vmatpush1.msra.mxu0 %v4047
  %5974 = vmatprep.subr.mxu0 %v4055
  %5975 = vmatpush1.msra.mxu0 %v4054
  %5976 = vmatprep.subr.mxu0 %v4062
  %5977 = vmatpush1.msra.mxu0 %v4061
  %5978 = vmatprep.subr.mxu0 %v4069
  %5979 = vmatpush1.msra.mxu0 %v4068
  %5980 = vmatprep.subr.mxu0 %v4076
  %5981 = vmatpush1.msra.mxu0 %v4075
  %5982 = vmatprep.mubr.f32.mxu0 %v3398
  %5983 = vmatmul.mubr.f32.gmra.mrb[0].mxu0 %v3397
  %v5984 = vpop.f32.mrb[0].mxu0
  %v5985 = vadd.f32 %v5914, %v5984
  %v5986 = vpop.f32.mrb[0].mxu0
  %v5987 = vadd.f32 %v5916, %v5986
  %5988 = vdwg.mxu0
  %5989 = vmatprep.subr.mxu0 %v4083
  %5990 = vmatpush1.msra.mxu0 %v4082
  %5991 = vmatprep.subr.mxu0 %v4090
  %5992 = vmatpush1.msra.mxu0 %v4089
  %5993 = vmatprep.subr.mxu0 %v4097
  %5994 = vmatpush1.msra.mxu0 %v4096
  %5995 = vmatprep.subr.mxu0 %v4104
  %5996 = vmatpush1.msra.mxu0 %v4103
  %5997 = vmatprep.subr.mxu0 %v4111
  %5998 = vmatpush1.msra.mxu0 %v4110
  %5999 = vmatprep.subr.mxu0 %v4118
  %6000 = vmatpush1.msra.mxu0 %v4117
  %6001 = vmatprep.subr.mxu0 %v4125
  %6002 = vmatpush1.msra.mxu0 %v4124
  %6003 = vmatprep.subr.mxu0 %v4132
  %6004 = vmatpush1.msra.mxu0 %v4131
  %6005 = vmatprep.subr.mxu0 %v4139
  %6006 = vmatpush1.msra.mxu0 %v4138
  %6007 = vmatprep.subr.mxu0 %v4146
  %6008 = vmatpush1.msra.mxu0 %v4145
  %6009 = vmatprep.subr.mxu0 %v4153
  %6010 = vmatpush1.msra.mxu0 %v4152
  %6011 = vmatprep.subr.mxu0 %v4160
  %6012 = vmatpush1.msra.mxu0 %v4159
  %6013 = vmatprep.subr.mxu0 %v4167
  %6014 = vmatpush1.msra.mxu0 %v4166
  %6015 = vmatprep.subr.mxu0 %v4174
  %6016 = vmatpush1.msra.mxu0 %v4173
  %6017 = vmatprep.subr.mxu0 %v4181
  %6018 = vmatpush1.msra.mxu0 %v4180
  %6019 = vmatprep.subr.mxu0 %v4188
  %6020 = vmatpush1.msra.mxu0 %v4187
  %6021 = vmatprep.subr.mxu0 %v4195
  %6022 = vmatpush1.msra.mxu0 %v4194
  %6023 = vmatprep.subr.mxu0 %v4202
  %6024 = vmatpush1.msra.mxu0 %v4201
  %6025 = vmatprep.subr.mxu0 %v4209
  %6026 = vmatpush1.msra.mxu0 %v4208
  %6027 = vmatprep.subr.mxu0 %v4216
  %6028 = vmatpush1.msra.mxu0 %v4215
  %6029 = vmatprep.subr.mxu0 %v4223
  %6030 = vmatpush1.msra.mxu0 %v4222
  %6031 = vmatprep.subr.mxu0 %v4230
  %6032 = vmatpush1.msra.mxu0 %v4229
  %6033 = vmatprep.subr.mxu0 %v4237
  %6034 = vmatpush1.msra.mxu0 %v4236
  %6035 = vmatprep.subr.mxu0 %v4244
  %6036 = vmatpush1.msra.mxu0 %v4243
  %6037 = vmatprep.subr.mxu0 %v4251
  %6038 = vmatpush1.msra.mxu0 %v4250
  %6039 = vmatprep.subr.mxu0 %v4258
  %6040 = vmatpush1.msra.mxu0 %v4257
  %6041 = vmatprep.subr.mxu0 %v4265
  %6042 = vmatpush1.msra.mxu0 %v4264
  %6043 = vmatprep.subr.mxu0 %v4272
  %6044 = vmatpush1.msra.mxu0 %v4271
  %6045 = vmatprep.subr.mxu0 %v4279
  %6046 = vmatpush1.msra.mxu0 %v4278
  %6047 = vmatprep.subr.mxu0 %v4286
  %6048 = vmatpush1.msra.mxu0 %v4285
  %6049 = vmatprep.subr.mxu0 %v4293
  %6050 = vmatpush1.msra.mxu0 %v4292
  %6051 = vmatprep.subr.mxu0 %v4300
  %6052 = vmatpush1.msra.mxu0 %v4299
  %6053 = vmatprep.mubr.f32.mxu0 %v3400
  %6054 = vmatmul.mubr.f32.gmra.mrb[0].mxu0 %v3399
  %v6055 = vpop.f32.mrb[0].mxu0
  %v6056 = vadd.f32 %v5985, %v6055
  %v6057 = vpop.f32.mrb[0].mxu0
  %v6058 = vadd.f32 %v5987, %v6057
  %6059 = vdwg.mxu0
  %6060 = vmatprep.subr.mxu0 %v4307
  %6061 = vmatpush1.msra.mxu0 %v4306
  %6062 = vmatprep.subr.mxu0 %v4314
  %6063 = vmatpush1.msra.mxu0 %v4313
  %6064 = vmatprep.subr.mxu0 %v4321
  %6065 = vmatpush1.msra.mxu0 %v4320
  %6066 = vmatprep.subr.mxu0 %v4328
  %6067 = vmatpush1.msra.mxu0 %v4327
  %6068 = vmatprep.subr.mxu0 %v4335
  %6069 = vmatpush1.msra.mxu0 %v4334
  %6070 = vmatprep.subr.mxu0 %v4342
  %6071 = vmatpush1.msra.mxu0 %v4341
  %6072 = vmatprep.subr.mxu0 %v4349
  %6073 = vmatpush1.msra.mxu0 %v4348
  %6074 = vmatprep.subr.mxu0 %v4356
  %6075 = vmatpush1.msra.mxu0 %v4355
  %6076 = vmatprep.subr.mxu0 %v4363
  %6077 = vmatpush1.msra.mxu0 %v4362
  %6078 = vmatprep.subr.mxu0 %v4370
  %6079 = vmatpush1.msra.mxu0 %v4369
  %6080 = vmatprep.subr.mxu0 %v4377
  %6081 = vmatpush1.msra.mxu0 %v4376
  %6082 = vmatprep.subr.mxu0 %v4384
  %6083 = vmatpush1.msra.mxu0 %v4383
  %6084 = vmatprep.subr.mxu0 %v4391
  %6085 = vmatpush1.msra.mxu0 %v4390
  %6086 = vmatprep.subr.mxu0 %v4398
  %6087 = vmatpush1.msra.mxu0 %v4397
  %6088 = vmatprep.subr.mxu0 %v4405
  %6089 = vmatpush1.msra.mxu0 %v4404
  %6090 = vmatprep.subr.mxu0 %v4412
  %6091 = vmatpush1.msra.mxu0 %v4411
  %6092 = vmatprep.subr.mxu0 %v4419
  %6093 = vmatpush1.msra.mxu0 %v4418
  %6094 = vmatprep.subr.mxu0 %v4426
  %6095 = vmatpush1.msra.mxu0 %v4425
  %6096 = vmatprep.subr.mxu0 %v4433
  %6097 = vmatpush1.msra.mxu0 %v4432
  %6098 = vmatprep.subr.mxu0 %v4440
  %6099 = vmatpush1.msra.mxu0 %v4439
  %6100 = vmatprep.subr.mxu0 %v4447
  %6101 = vmatpush1.msra.mxu0 %v4446
  %6102 = vmatprep.subr.mxu0 %v4454
  %6103 = vmatpush1.msra.mxu0 %v4453
  %6104 = vmatprep.subr.mxu0 %v4461
  %6105 = vmatpush1.msra.mxu0 %v4460
  %6106 = vmatprep.subr.mxu0 %v4468
  %6107 = vmatpush1.msra.mxu0 %v4467
  %6108 = vmatprep.subr.mxu0 %v4475
  %6109 = vmatpush1.msra.mxu0 %v4474
  %6110 = vmatprep.subr.mxu0 %v4482
  %6111 = vmatpush1.msra.mxu0 %v4481
  %6112 = vmatprep.subr.mxu0 %v4489
  %6113 = vmatpush1.msra.mxu0 %v4488
  %6114 = vmatprep.subr.mxu0 %v4496
  %6115 = vmatpush1.msra.mxu0 %v4495
  %6116 = vmatprep.subr.mxu0 %v4503
  %6117 = vmatpush1.msra.mxu0 %v4502
  %6118 = vmatprep.subr.mxu0 %v4510
  %6119 = vmatpush1.msra.mxu0 %v4509
  %6120 = vmatprep.subr.mxu0 %v4517
  %6121 = vmatpush1.msra.mxu0 %v4516
  %6122 = vmatprep.subr.mxu0 %v4524
  %6123 = vmatpush1.msra.mxu0 %v4523
  %6124 = vmatprep.mubr.f32.mxu0 %v3402
  %6125 = vmatmul.mubr.f32.gmra.mrb[0].mxu0 %v3401
  %v6126 = vpop.f32.mrb[0].mxu0
  %v6127 = vadd.f32 %v6056, %v6126
  %v6128 = vpop.f32.mrb[0].mxu0
  %v6129 = vadd.f32 %v6058, %v6128
  %6130 = vdwg.mxu0
  %6131 = vmatprep.subr.mxu0 %v4531
  %6132 = vmatpush1.msra.mxu0 %v4530
  %6133 = vmatprep.subr.mxu0 %v4538
  %6134 = vmatpush1.msra.mxu0 %v4537
  %6135 = vmatprep.subr.mxu0 %v4545
  %6136 = vmatpush1.msra.mxu0 %v4544
  %6137 = vmatprep.subr.mxu0 %v4552
  %6138 = vmatpush1.msra.mxu0 %v4551
  %6139 = vmatprep.subr.mxu0 %v4559
  %6140 = vmatpush1.msra.mxu0 %v4558
  %6141 = vmatprep.subr.mxu0 %v4566
  %6142 = vmatpush1.msra.mxu0 %v4565
  %6143 = vmatprep.subr.mxu0 %v4573
  %6144 = vmatpush1.msra.mxu0 %v4572
  %6145 = vmatprep.subr.mxu0 %v4580
  %6146 = vmatpush1.msra.mxu0 %v4579
  %6147 = vmatprep.subr.mxu0 %v4587
  %6148 = vmatpush1.msra.mxu0 %v4586
  %6149 = vmatprep.subr.mxu0 %v4594
  %6150 = vmatpush1.msra.mxu0 %v4593
  %6151 = vmatprep.subr.mxu0 %v4601
  %6152 = vmatpush1.msra.mxu0 %v4600
  %6153 = vmatprep.subr.mxu0 %v4608
  %6154 = vmatpush1.msra.mxu0 %v4607
  %6155 = vmatprep.subr.mxu0 %v4615
  %6156 = vmatpush1.msra.mxu0 %v4614
  %6157 = vmatprep.subr.mxu0 %v4622
  %6158 = vmatpush1.msra.mxu0 %v4621
  %6159 = vmatprep.subr.mxu0 %v4629
  %6160 = vmatpush1.msra.mxu0 %v4628
  %6161 = vmatprep.subr.mxu0 %v4636
  %6162 = vmatpush1.msra.mxu0 %v4635
  %6163 = vmatprep.subr.mxu0 %v4643
  %6164 = vmatpush1.msra.mxu0 %v4642
  %6165 = vmatprep.subr.mxu0 %v4650
  %6166 = vmatpush1.msra.mxu0 %v4649
  %6167 = vmatprep.subr.mxu0 %v4657
  %6168 = vmatpush1.msra.mxu0 %v4656
  %6169 = vmatprep.subr.mxu0 %v4664
  %6170 = vmatpush1.msra.mxu0 %v4663
  %6171 = vmatprep.subr.mxu0 %v4671
  %6172 = vmatpush1.msra.mxu0 %v4670
  %6173 = vmatprep.subr.mxu0 %v4678
  %6174 = vmatpush1.msra.mxu0 %v4677
  %6175 = vmatprep.subr.mxu0 %v4685
  %6176 = vmatpush1.msra.mxu0 %v4684
  %6177 = vmatprep.subr.mxu0 %v4692
  %6178 = vmatpush1.msra.mxu0 %v4691
  %6179 = vmatprep.subr.mxu0 %v4699
  %6180 = vmatpush1.msra.mxu0 %v4698
  %6181 = vmatprep.subr.mxu0 %v4706
  %6182 = vmatpush1.msra.mxu0 %v4705
  %6183 = vmatprep.subr.mxu0 %v4713
  %6184 = vmatpush1.msra.mxu0 %v4712
  %6185 = vmatprep.subr.mxu0 %v4720
  %6186 = vmatpush1.msra.mxu0 %v4719
  %6187 = vmatprep.subr.mxu0 %v4727
  %6188 = vmatpush1.msra.mxu0 %v4726
  %6189 = vmatprep.subr.mxu0 %v4734
  %6190 = vmatpush1.msra.mxu0 %v4733
  %6191 = vmatprep.subr.mxu0 %v4741
  %6192 = vmatpush1.msra.mxu0 %v4740
  %6193 = vmatprep.subr.mxu0 %v4748
  %6194 = vmatpush1.msra.mxu0 %v4747
  %6195 = vmatprep.mubr.f32.mxu0 %v3404
  %6196 = vmatmul.mubr.f32.gmra.mrb[0].mxu0 %v3403
  %v6197 = vpop.f32.mrb[0].mxu0
  %v6198 = vadd.f32 %v6127, %v6197
  %v6199 = vpop.f32.mrb[0].mxu0
  %v6200 = vadd.f32 %v6129, %v6199
  %6201 = vdwg.mxu0
  %6202 = vmatprep.subr.mxu0 %v4755
  %6203 = vmatpush1.msra.mxu0 %v4754
  %6204 = vmatprep.subr.mxu0 %v4762
  %6205 = vmatpush1.msra.mxu0 %v4761
  %6206 = vmatprep.subr.mxu0 %v4769
  %6207 = vmatpush1.msra.mxu0 %v4768
  %6208 = vmatprep.subr.mxu0 %v4776
  %6209 = vmatpush1.msra.mxu0 %v4775
  %6210 = vmatprep.subr.mxu0 0.0
  %6211 = vmatpush1.msra.mxu0 0.0
  %6212 = vmatprep.subr.mxu0 0.0
  %6213 = vmatpush1.msra.mxu0 0.0
  %6214 = vmatprep.subr.mxu0 0.0
  %6215 = vmatpush1.msra.mxu0 0.0
  %6216 = vmatprep.subr.mxu0 0.0
  %6217 = vmatpush1.msra.mxu0 0.0
  %6218 = vmatprep.subr.mxu0 0.0
  %6219 = vmatpush1.msra.mxu0 0.0
  %6220 = vmatprep.subr.mxu0 0.0
  %6221 = vmatpush1.msra.mxu0 0.0
  %6222 = vmatprep.subr.mxu0 0.0
  %6223 = vmatpush1.msra.mxu0 0.0
  %6224 = vmatprep.subr.mxu0 0.0
  %6225 = vmatpush1.msra.mxu0 0.0
  %6226 = vmatprep.subr.mxu0 0.0
  %6227 = vmatpush1.msra.mxu0 0.0
  %6228 = vmatprep.subr.mxu0 0.0
  %6229 = vmatpush1.msra.mxu0 0.0
  %6230 = vmatprep.subr.mxu0 0.0
  %6231 = vmatpush1.msra.mxu0 0.0
  %6232 = vmatprep.subr.mxu0 0.0
  %6233 = vmatpush1.msra.mxu0 0.0
  %6234 = vmatprep.subr.mxu0 0.0
  %6235 = vmatpush1.msra.mxu0 0.0
  %6236 = vmatprep.subr.mxu0 0.0
  %6237 = vmatpush1.msra.mxu0 0.0
  %6238 = vmatprep.subr.mxu0 0.0
  %6239 = vmatpush1.msra.mxu0 0.0
  %6240 = vmatprep.subr.mxu0 0.0
  %6241 = vmatpush1.msra.mxu0 0.0
  %6242 = vmatprep.subr.mxu0 0.0
  %6243 = vmatpush1.msra.mxu0 0.0
  %6244 = vmatprep.subr.mxu0 0.0
  %6245 = vmatpush1.msra.mxu0 0.0
  %6246 = vmatprep.subr.mxu0 0.0
  %6247 = vmatpush1.msra.mxu0 0.0
  %6248 = vmatprep.subr.mxu0 0.0
  %6249 = vmatpush1.msra.mxu0 0.0
  %6250 = vmatprep.subr.mxu0 0.0
  %6251 = vmatpush1.msra.mxu0 0.0
  %6252 = vmatprep.subr.mxu0 0.0
  %6253 = vmatpush1.msra.mxu0 0.0
  %6254 = vmatprep.subr.mxu0 0.0
  %6255 = vmatpush1.msra.mxu0 0.0
  %6256 = vmatprep.subr.mxu0 0.0
  %6257 = vmatpush1.msra.mxu0 0.0
  %6258 = vmatprep.subr.mxu0 0.0
  %6259 = vmatpush1.msra.mxu0 0.0
  %6260 = vmatprep.subr.mxu0 0.0
  %6261 = vmatpush1.msra.mxu0 0.0
  %6262 = vmatprep.subr.mxu0 0.0
  %6263 = vmatpush1.msra.mxu0 0.0
  %6264 = vmatprep.subr.mxu0 0.0
  %6265 = vmatpush1.msra.mxu0 0.0
  %6266 = vmatprep.mubr.f32.mxu0 0.0
  %6267 = vmatmul.mubr.f32.gmra.mrb[0].mxu0 %v4780
  %v6268 = vpop.f32.mrb[0].mxu0
  %v6269 = vadd.f32 %v6198, %v6268
  %v6270 = vpop.f32.mrb[0].mxu0
  %v6271 = vadd.f32 %v6200, %v6270
  %6272 = vdwg.mxu0
  %6273 = vmatprep.subr.mxu0 0.0
  %6274 = vmatpush1.msra.mxu0 %v3412
  %6275 = vmatprep.subr.mxu0 0.0
  %6276 = vmatpush1.msra.mxu0 %v3419
  %6277 = vmatprep.subr.mxu0 0.0
  %6278 = vmatpush1.msra.mxu0 %v3426
  %6279 = vmatprep.subr.mxu0 0.0
  %6280 = vmatpush1.msra.mxu0 %v3433
  %6281 = vmatprep.subr.mxu0 0.0
  %6282 = vmatpush1.msra.mxu0 %v3440
  %6283 = vmatprep.subr.mxu0 0.0
  %6284 = vmatpush1.msra.mxu0 %v3447
  %6285 = vmatprep.subr.mxu0 0.0
  %6286 = vmatpush1.msra.mxu0 %v3454
  %6287 = vmatprep.subr.mxu0 0.0
  %6288 = vmatpush1.msra.mxu0 %v3461
  %6289 = vmatprep.subr.mxu0 0.0
  %6290 = vmatpush1.msra.mxu0 %v3468
  %6291 = vmatprep.subr.mxu0 0.0
  %6292 = vmatpush1.msra.mxu0 %v3475
  %6293 = vmatprep.subr.mxu0 0.0
  %6294 = vmatpush1.msra.mxu0 %v3482
  %6295 = vmatprep.subr.mxu0 0.0
  %6296 = vmatpush1.msra.mxu0 %v3489
  %6297 = vmatprep.subr.mxu0 0.0
  %6298 = vmatpush1.msra.mxu0 %v3496
  %6299 = vmatprep.subr.mxu0 0.0
  %6300 = vmatpush1.msra.mxu0 %v3503
  %6301 = vmatprep.subr.mxu0 0.0
  %6302 = vmatpush1.msra.mxu0 %v3510
  %6303 = vmatprep.subr.mxu0 0.0
  %6304 = vmatpush1.msra.mxu0 %v3517
  %6305 = vmatprep.subr.mxu0 0.0
  %6306 = vmatpush1.msra.mxu0 %v3524
  %6307 = vmatprep.subr.mxu0 0.0
  %6308 = vmatpush1.msra.mxu0 %v3531
  %6309 = vmatprep.subr.mxu0 0.0
  %6310 = vmatpush1.msra.mxu0 %v3538
  %6311 = vmatprep.subr.mxu0 0.0
  %6312 = vmatpush1.msra.mxu0 %v3545
  %6313 = vmatprep.subr.mxu0 0.0
  %6314 = vmatpush1.msra.mxu0 %v3552
  %6315 = vmatprep.subr.mxu0 0.0
  %6316 = vmatpush1.msra.mxu0 %v3559
  %6317 = vmatprep.subr.mxu0 0.0
  %6318 = vmatpush1.msra.mxu0 %v3566
  %6319 = vmatprep.subr.mxu0 0.0
  %6320 = vmatpush1.msra.mxu0 %v3573
  %6321 = vmatprep.subr.mxu0 0.0
  %6322 = vmatpush1.msra.mxu0 %v3580
  %6323 = vmatprep.subr.mxu0 0.0
  %6324 = vmatpush1.msra.mxu0 %v3587
  %6325 = vmatprep.subr.mxu0 0.0
  %6326 = vmatpush1.msra.mxu0 %v3594
  %6327 = vmatprep.subr.mxu0 0.0
  %6328 = vmatpush1.msra.mxu0 %v3601
  %6329 = vmatprep.subr.mxu0 0.0
  %6330 = vmatpush1.msra.mxu0 %v3608
  %6331 = vmatprep.subr.mxu0 0.0
  %6332 = vmatpush1.msra.mxu0 %v3615
  %6333 = vmatprep.subr.mxu0 0.0
  %6334 = vmatpush1.msra.mxu0 %v3622
  %6335 = vmatprep.subr.mxu0 0.0
  %6336 = vmatpush1.msra.mxu0 %v3629
  %6337 = vmatprep.mubr.f32.mxu0 %v3394
  %6338 = vmatmul.mubr.f32.gmra.mrb[0].mxu0 %v3393
  %v6339 = vpop.f32.mrb[0].mxu0
  %v6340 = vadd.f32 0.0, %v6339
  %v6341 = vpop.f32.mrb[0].mxu0
  %6342 = vdwg.mxu0
  %6343 = vmatprep.subr.mxu0 0.0
  %6344 = vmatpush1.msra.mxu0 %v3636
  %6345 = vmatprep.subr.mxu0 0.0
  %6346 = vmatpush1.msra.mxu0 %v3643
  %6347 = vmatprep.subr.mxu0 0.0
  %6348 = vmatpush1.msra.mxu0 %v3650
  %6349 = vmatprep.subr.mxu0 0.0
  %6350 = vmatpush1.msra.mxu0 %v3657
  %6351 = vmatprep.subr.mxu0 0.0
  %6352 = vmatpush1.msra.mxu0 %v3664
  %6353 = vmatprep.subr.mxu0 0.0
  %6354 = vmatpush1.msra.mxu0 %v3671
  %6355 = vmatprep.subr.mxu0 0.0
  %6356 = vmatpush1.msra.mxu0 %v3678
  %6357 = vmatprep.subr.mxu0 0.0
  %6358 = vmatpush1.msra.mxu0 %v3685
  %6359 = vmatprep.subr.mxu0 0.0
  %6360 = vmatpush1.msra.mxu0 %v3692
  %6361 = vmatprep.subr.mxu0 0.0
  %6362 = vmatpush1.msra.mxu0 %v3699
  %6363 = vmatprep.subr.mxu0 0.0
  %6364 = vmatpush1.msra.mxu0 %v3706
  %6365 = vmatprep.subr.mxu0 0.0
  %6366 = vmatpush1.msra.mxu0 %v3713
  %6367 = vmatprep.subr.mxu0 0.0
  %6368 = vmatpush1.msra.mxu0 %v3720
  %6369 = vmatprep.subr.mxu0 0.0
  %6370 = vmatpush1.msra.mxu0 %v3727
  %6371 = vmatprep.subr.mxu0 0.0
  %6372 = vmatpush1.msra.mxu0 %v3734
  %6373 = vmatprep.subr.mxu0 0.0
  %6374 = vmatpush1.msra.mxu0 %v3741
  %6375 = vmatprep.subr.mxu0 0.0
  %6376 = vmatpush1.msra.mxu0 %v3748
  %6377 = vmatprep.subr.mxu0 0.0
  %6378 = vmatpush1.msra.mxu0 %v3755
  %6379 = vmatprep.subr.mxu0 0.0
  %6380 = vmatpush1.msra.mxu0 %v3762
  %6381 = vmatprep.subr.mxu0 0.0
  %6382 = vmatpush1.msra.mxu0 %v3769
  %6383 = vmatprep.subr.mxu0 0.0
  %6384 = vmatpush1.msra.mxu0 %v3776
  %6385 = vmatprep.subr.mxu0 0.0
  %6386 = vmatpush1.msra.mxu0 %v3783
  %6387 = vmatprep.subr.mxu0 0.0
  %6388 = vmatpush1.msra.mxu0 %v3790
  %6389 = vmatprep.subr.mxu0 0.0
  %6390 = vmatpush1.msra.mxu0 %v3797
  %6391 = vmatprep.subr.mxu0 0.0
  %6392 = vmatpush1.msra.mxu0 %v3804
  %6393 = vmatprep.subr.mxu0 0.0
  %6394 = vmatpush1.msra.mxu0 %v3811
  %6395 = vmatprep.subr.mxu0 0.0
  %6396 = vmatpush1.msra.mxu0 %v3818
  %6397 = vmatprep.subr.mxu0 0.0
  %6398 = vmatpush1.msra.mxu0 %v3825
  %6399 = vmatprep.subr.mxu0 0.0
  %6400 = vmatpush1.msra.mxu0 %v3832
  %6401 = vmatprep.subr.mxu0 0.0
  %6402 = vmatpush1.msra.mxu0 %v3839
  %6403 = vmatprep.subr.mxu0 0.0
  %6404 = vmatpush1.msra.mxu0 %v3846
  %6405 = vmatprep.subr.mxu0 0.0
  %6406 = vmatpush1.msra.mxu0 %v3853
  %6407 = vmatprep.mubr.f32.mxu0 %v3396
  %6408 = vmatmul.mubr.f32.gmra.mrb[0].mxu0 %v3395
  %v6409 = vpop.f32.mrb[0].mxu0
  %v6410 = vadd.f32 %v6340, %v6409
  %v6411 = vpop.f32.mrb[0].mxu0
  %6412 = vdwg.mxu0
  %6413 = vmatprep.subr.mxu0 0.0
  %6414 = vmatpush1.msra.mxu0 %v3860
  %6415 = vmatprep.subr.mxu0 0.0
  %6416 = vmatpush1.msra.mxu0 %v3867
  %6417 = vmatprep.subr.mxu0 0.0
  %6418 = vmatpush1.msra.mxu0 %v3874
  %6419 = vmatprep.subr.mxu0 0.0
  %6420 = vmatpush1.msra.mxu0 %v3881
  %6421 = vmatprep.subr.mxu0 0.0
  %6422 = vmatpush1.msra.mxu0 %v3888
  %6423 = vmatprep.subr.mxu0 0.0
  %6424 = vmatpush1.msra.mxu0 %v3895
  %6425 = vmatprep.subr.mxu0 0.0
  %6426 = vmatpush1.msra.mxu0 %v3902
  %6427 = vmatprep.subr.mxu0 0.0
  %6428 = vmatpush1.msra.mxu0 %v3909
  %6429 = vmatprep.subr.mxu0 0.0
  %6430 = vmatpush1.msra.mxu0 %v3916
  %6431 = vmatprep.subr.mxu0 0.0
  %6432 = vmatpush1.msra.mxu0 %v3923
  %6433 = vmatprep.subr.mxu0 0.0
  %6434 = vmatpush1.msra.mxu0 %v3930
  %6435 = vmatprep.subr.mxu0 0.0
  %6436 = vmatpush1.msra.mxu0 %v3937
  %6437 = vmatprep.subr.mxu0 0.0
  %6438 = vmatpush1.msra.mxu0 %v3944
  %6439 = vmatprep.subr.mxu0 0.0
  %6440 = vmatpush1.msra.mxu0 %v3951
  %6441 = vmatprep.subr.mxu0 0.0
  %6442 = vmatpush1.msra.mxu0 %v3958
  %6443 = vmatprep.subr.mxu0 0.0
  %6444 = vmatpush1.msra.mxu0 %v3965
  %6445 = vmatprep.subr.mxu0 0.0
  %6446 = vmatpush1.msra.mxu0 %v3972
  %6447 = vmatprep.subr.mxu0 0.0
  %6448 = vmatpush1.msra.mxu0 %v3979
  %6449 = vmatprep.subr.mxu0 0.0
  %6450 = vmatpush1.msra.mxu0 %v3986
  %6451 = vmatprep.subr.mxu0 0.0
  %6452 = vmatpush1.msra.mxu0 %v3993
  %6453 = vmatprep.subr.mxu0 0.0
  %6454 = vmatpush1.msra.mxu0 %v4000
  %6455 = vmatprep.subr.mxu0 0.0
  %6456 = vmatpush1.msra.mxu0 %v4007
  %6457 = vmatprep.subr.mxu0 0.0
  %6458 = vmatpush1.msra.mxu0 %v4014
  %6459 = vmatprep.subr.mxu0 0.0
  %6460 = vmatpush1.msra.mxu0 %v4021
  %6461 = vmatprep.subr.mxu0 0.0
  %6462 = vmatpush1.msra.mxu0 %v4028
  %6463 = vmatprep.subr.mxu0 0.0
  %6464 = vmatpush1.msra.mxu0 %v4035
  %6465 = vmatprep.subr.mxu0 0.0
  %6466 = vmatpush1.msra.mxu0 %v4042
  %6467 = vmatprep.subr.mxu0 0.0
  %6468 = vmatpush1.msra.mxu0 %v4049
  %6469 = vmatprep.subr.mxu0 0.0
  %6470 = vmatpush1.msra.mxu0 %v4056
  %6471 = vmatprep.subr.mxu0 0.0
  %6472 = vmatpush1.msra.mxu0 %v4063
  %6473 = vmatprep.subr.mxu0 0.0
  %6474 = vmatpush1.msra.mxu0 %v4070
  %6475 = vmatprep.subr.mxu0 0.0
  %6476 = vmatpush1.msra.mxu0 %v4077
  %6477 = vmatprep.mubr.f32.mxu0 %v3398
  %6478 = vmatmul.mubr.f32.gmra.mrb[0].mxu0 %v3397
  %v6479 = vpop.f32.mrb[0].mxu0
  %v6480 = vadd.f32 %v6410, %v6479
  %v6481 = vpop.f32.mrb[0].mxu0
  %6482 = vdwg.mxu0
  %6483 = vmatprep.subr.mxu0 0.0
  %6484 = vmatpush1.msra.mxu0 %v4084
  %6485 = vmatprep.subr.mxu0 0.0
  %6486 = vmatpush1.msra.mxu0 %v4091
  %6487 = vmatprep.subr.mxu0 0.0
  %6488 = vmatpush1.msra.mxu0 %v4098
  %6489 = vmatprep.subr.mxu0 0.0
  %6490 = vmatpush1.msra.mxu0 %v4105
  %6491 = vmatprep.subr.mxu0 0.0
  %6492 = vmatpush1.msra.mxu0 %v4112
  %6493 = vmatprep.subr.mxu0 0.0
  %6494 = vmatpush1.msra.mxu0 %v4119
  %6495 = vmatprep.subr.mxu0 0.0
  %6496 = vmatpush1.msra.mxu0 %v4126
  %6497 = vmatprep.subr.mxu0 0.0
  %6498 = vmatpush1.msra.mxu0 %v4133
  %6499 = vmatprep.subr.mxu0 0.0
  %6500 = vmatpush1.msra.mxu0 %v4140
  %6501 = vmatprep.subr.mxu0 0.0
  %6502 = vmatpush1.msra.mxu0 %v4147
  %6503 = vmatprep.subr.mxu0 0.0
  %6504 = vmatpush1.msra.mxu0 %v4154
  %6505 = vmatprep.subr.mxu0 0.0
  %6506 = vmatpush1.msra.mxu0 %v4161
  %6507 = vmatprep.subr.mxu0 0.0
  %6508 = vmatpush1.msra.mxu0 %v4168
  %6509 = vmatprep.subr.mxu0 0.0
  %6510 = vmatpush1.msra.mxu0 %v4175
  %6511 = vmatprep.subr.mxu0 0.0
  %6512 = vmatpush1.msra.mxu0 %v4182
  %6513 = vmatprep.subr.mxu0 0.0
  %6514 = vmatpush1.msra.mxu0 %v4189
  %6515 = vmatprep.subr.mxu0 0.0
  %6516 = vmatpush1.msra.mxu0 %v4196
  %6517 = vmatprep.subr.mxu0 0.0
  %6518 = vmatpush1.msra.mxu0 %v4203
  %6519 = vmatprep.subr.mxu0 0.0
  %6520 = vmatpush1.msra.mxu0 %v4210
  %6521 = vmatprep.subr.mxu0 0.0
  %6522 = vmatpush1.msra.mxu0 %v4217
  %6523 = vmatprep.subr.mxu0 0.0
  %6524 = vmatpush1.msra.mxu0 %v4224
  %6525 = vmatprep.subr.mxu0 0.0
  %6526 = vmatpush1.msra.mxu0 %v4231
  %6527 = vmatprep.subr.mxu0 0.0
  %6528 = vmatpush1.msra.mxu0 %v4238
  %6529 = vmatprep.subr.mxu0 0.0
  %6530 = vmatpush1.msra.mxu0 %v4245
  %6531 = vmatprep.subr.mxu0 0.0
  %6532 = vmatpush1.msra.mxu0 %v4252
  %6533 = vmatprep.subr.mxu0 0.0
  %6534 = vmatpush1.msra.mxu0 %v4259
  %6535 = vmatprep.subr.mxu0 0.0
  %6536 = vmatpush1.msra.mxu0 %v4266
  %6537 = vmatprep.subr.mxu0 0.0
  %6538 = vmatpush1.msra.mxu0 %v4273
  %6539 = vmatprep.subr.mxu0 0.0
  %6540 = vmatpush1.msra.mxu0 %v4280
  %6541 = vmatprep.subr.mxu0 0.0
  %6542 = vmatpush1.msra.mxu0 %v4287
  %6543 = vmatprep.subr.mxu0 0.0
  %6544 = vmatpush1.msra.mxu0 %v4294
  %6545 = vmatprep.subr.mxu0 0.0
  %6546 = vmatpush1.msra.mxu0 %v4301
  %6547 = vmatprep.mubr.f32.mxu0 %v3400
  %6548 = vmatmul.mubr.f32.gmra.mrb[0].mxu0 %v3399
  %v6549 = vpop.f32.mrb[0].mxu0
  %v6550 = vadd.f32 %v6480, %v6549
  %v6551 = vpop.f32.mrb[0].mxu0
  %6552 = vdwg.mxu0
  %6553 = vmatprep.subr.mxu0 0.0
  %6554 = vmatpush1.msra.mxu0 %v4308
  %6555 = vmatprep.subr.mxu0 0.0
  %6556 = vmatpush1.msra.mxu0 %v4315
  %6557 = vmatprep.subr.mxu0 0.0
  %6558 = vmatpush1.msra.mxu0 %v4322
  %6559 = vmatprep.subr.mxu0 0.0
  %6560 = vmatpush1.msra.mxu0 %v4329
  %6561 = vmatprep.subr.mxu0 0.0
  %6562 = vmatpush1.msra.mxu0 %v4336
  %6563 = vmatprep.subr.mxu0 0.0
  %6564 = vmatpush1.msra.mxu0 %v4343
  %6565 = vmatprep.subr.mxu0 0.0
  %6566 = vmatpush1.msra.mxu0 %v4350
  %6567 = vmatprep.subr.mxu0 0.0
  %6568 = vmatpush1.msra.mxu0 %v4357
  %6569 = vmatprep.subr.mxu0 0.0
  %6570 = vmatpush1.msra.mxu0 %v4364
  %6571 = vmatprep.subr.mxu0 0.0
  %6572 = vmatpush1.msra.mxu0 %v4371
  %6573 = vmatprep.subr.mxu0 0.0
  %6574 = vmatpush1.msra.mxu0 %v4378
  %6575 = vmatprep.subr.mxu0 0.0
  %6576 = vmatpush1.msra.mxu0 %v4385
  %6577 = vmatprep.subr.mxu0 0.0
  %6578 = vmatpush1.msra.mxu0 %v4392
  %6579 = vmatprep.subr.mxu0 0.0
  %6580 = vmatpush1.msra.mxu0 %v4399
  %6581 = vmatprep.subr.mxu0 0.0
  %6582 = vmatpush1.msra.mxu0 %v4406
  %6583 = vmatprep.subr.mxu0 0.0
  %6584 = vmatpush1.msra.mxu0 %v4413
  %6585 = vmatprep.subr.mxu0 0.0
  %6586 = vmatpush1.msra.mxu0 %v4420
  %6587 = vmatprep.subr.mxu0 0.0
  %6588 = vmatpush1.msra.mxu0 %v4427
  %6589 = vmatprep.subr.mxu0 0.0
  %6590 = vmatpush1.msra.mxu0 %v4434
  %6591 = vmatprep.subr.mxu0 0.0
  %6592 = vmatpush1.msra.mxu0 %v4441
  %6593 = vmatprep.subr.mxu0 0.0
  %6594 = vmatpush1.msra.mxu0 %v4448
  %6595 = vmatprep.subr.mxu0 0.0
  %6596 = vmatpush1.msra.mxu0 %v4455
  %6597 = vmatprep.subr.mxu0 0.0
  %6598 = vmatpush1.msra.mxu0 %v4462
  %6599 = vmatprep.subr.mxu0 0.0
  %6600 = vmatpush1.msra.mxu0 %v4469
  %6601 = vmatprep.subr.mxu0 0.0
  %6602 = vmatpush1.msra.mxu0 %v4476
  %6603 = vmatprep.subr.mxu0 0.0
  %6604 = vmatpush1.msra.mxu0 %v4483
  %6605 = vmatprep.subr.mxu0 0.0
  %6606 = vmatpush1.msra.mxu0 %v4490
  %6607 = vmatprep.subr.mxu0 0.0
  %6608 = vmatpush1.msra.mxu0 %v4497
  %6609 = vmatprep.subr.mxu0 0.0
  %6610 = vmatpush1.msra.mxu0 %v4504
  %6611 = vmatprep.subr.mxu0 0.0
  %6612 = vmatpush1.msra.mxu0 %v4511
  %6613 = vmatprep.subr.mxu0 0.0
  %6614 = vmatpush1.msra.mxu0 %v4518
  %6615 = vmatprep.subr.mxu0 0.0
  %6616 = vmatpush1.msra.mxu0 %v4525
  %6617 = vmatprep.mubr.f32.mxu0 %v3402
  %6618 = vmatmul.mubr.f32.gmra.mrb[0].mxu0 %v3401
  %v6619 = vpop.f32.mrb[0].mxu0
  %v6620 = vadd.f32 %v6550, %v6619
  %v6621 = vpop.f32.mrb[0].mxu0
  %6622 = vdwg.mxu0
  %6623 = vmatprep.subr.mxu0 0.0
  %6624 = vmatpush1.msra.mxu0 %v4532
  %6625 = vmatprep.subr.mxu0 0.0
  %6626 = vmatpush1.msra.mxu0 %v4539
  %6627 = vmatprep.subr.mxu0 0.0
  %6628 = vmatpush1.msra.mxu0 %v4546
  %6629 = vmatprep.subr.mxu0 0.0
  %6630 = vmatpush1.msra.mxu0 %v4553
  %6631 = vmatprep.subr.mxu0 0.0
  %6632 = vmatpush1.msra.mxu0 %v4560
  %6633 = vmatprep.subr.mxu0 0.0
  %6634 = vmatpush1.msra.mxu0 %v4567
  %6635 = vmatprep.subr.mxu0 0.0
  %6636 = vmatpush1.msra.mxu0 %v4574
  %6637 = vmatprep.subr.mxu0 0.0
  %6638 = vmatpush1.msra.mxu0 %v4581
  %6639 = vmatprep.subr.mxu0 0.0
  %6640 = vmatpush1.msra.mxu0 %v4588
  %6641 = vmatprep.subr.mxu0 0.0
  %6642 = vmatpush1.msra.mxu0 %v4595
  %6643 = vmatprep.subr.mxu0 0.0
  %6644 = vmatpush1.msra.mxu0 %v4602
  %6645 = vmatprep.subr.mxu0 0.0
  %6646 = vmatpush1.msra.mxu0 %v4609
  %6647 = vmatprep.subr.mxu0 0.0
  %6648 = vmatpush1.msra.mxu0 %v4616
  %6649 = vmatprep.subr.mxu0 0.0
  %6650 = vmatpush1.msra.mxu0 %v4623
  %6651 = vmatprep.subr.mxu0 0.0
  %6652 = vmatpush1.msra.mxu0 %v4630
  %6653 = vmatprep.subr.mxu0 0.0
  %6654 = vmatpush1.msra.mxu0 %v4637
  %6655 = vmatprep.subr.mxu0 0.0
  %6656 = vmatpush1.msra.mxu0 %v4644
  %6657 = vmatprep.subr.mxu0 0.0
  %6658 = vmatpush1.msra.mxu0 %v4651
  %6659 = vmatprep.subr.mxu0 0.0
  %6660 = vmatpush1.msra.mxu0 %v4658
  %6661 = vmatprep.subr.mxu0 0.0
  %6662 = vmatpush1.msra.mxu0 %v4665
  %6663 = vmatprep.subr.mxu0 0.0
  %6664 = vmatpush1.msra.mxu0 %v4672
  %6665 = vmatprep.subr.mxu0 0.0
  %6666 = vmatpush1.msra.mxu0 %v4679
  %6667 = vmatprep.subr.mxu0 0.0
  %6668 = vmatpush1.msra.mxu0 %v4686
  %6669 = vmatprep.subr.mxu0 0.0
  %6670 = vmatpush1.msra.mxu0 %v4693
  %6671 = vmatprep.subr.mxu0 0.0
  %6672 = vmatpush1.msra.mxu0 %v4700
  %6673 = vmatprep.subr.mxu0 0.0
  %6674 = vmatpush1.msra.mxu0 %v4707
  %6675 = vmatprep.subr.mxu0 0.0
  %6676 = vmatpush1.msra.mxu0 %v4714
  %6677 = vmatprep.subr.mxu0 0.0
  %6678 = vmatpush1.msra.mxu0 %v4721
  %6679 = vmatprep.subr.mxu0 0.0
  %6680 = vmatpush1.msra.mxu0 %v4728
  %6681 = vmatprep.subr.mxu0 0.0
  %6682 = vmatpush1.msra.mxu0 %v4735
  %6683 = vmatprep.subr.mxu0 0.0
  %6684 = vmatpush1.msra.mxu0 %v4742
  %6685 = vmatprep.subr.mxu0 0.0
  %6686 = vmatpush1.msra.mxu0 %v4749
  %6687 = vmatprep.mubr.f32.mxu0 %v3404
  %6688 = vmatmul.mubr.f32.gmra.mrb[0].mxu0 %v3403
  %v6689 = vpop.f32.mrb[0].mxu0
  %v6690 = vadd.f32 %v6620, %v6689
  %v6691 = vpop.f32.mrb[0].mxu0
  %6692 = vdwg.mxu0
  %6693 = vmatprep.subr.mxu0 0.0
  %6694 = vmatpush1.msra.mxu0 %v4756
  %6695 = vmatprep.subr.mxu0 0.0
  %6696 = vmatpush1.msra.mxu0 %v4763
  %6697 = vmatprep.subr.mxu0 0.0
  %6698 = vmatpush1.msra.mxu0 %v4770
  %6699 = vmatprep.subr.mxu0 0.0
  %6700 = vmatpush1.msra.mxu0 %v4777
  %6701 = vmatprep.subr.mxu0 0.0
  %6702 = vmatpush1.msra.mxu0 0.0
  %6703 = vmatprep.subr.mxu0 0.0
  %6704 = vmatpush1.msra.mxu0 0.0
  %6705 = vmatprep.subr.mxu0 0.0
  %6706 = vmatpush1.msra.mxu0 0.0
  %6707 = vmatprep.subr.mxu0 0.0
  %6708 = vmatpush1.msra.mxu0 0.0
  %6709 = vmatprep.subr.mxu0 0.0
  %6710 = vmatpush1.msra.mxu0 0.0
  %6711 = vmatprep.subr.mxu0 0.0
  %6712 = vmatpush1.msra.mxu0 0.0
  %6713 = vmatprep.subr.mxu0 0.0
  %6714 = vmatpush1.msra.mxu0 0.0
  %6715 = vmatprep.subr.mxu0 0.0
  %6716 = vmatpush1.msra.mxu0 0.0
  %6717 = vmatprep.subr.mxu0 0.0
  %6718 = vmatpush1.msra.mxu0 0.0
  %6719 = vmatprep.subr.mxu0 0.0
  %6720 = vmatpush1.msra.mxu0 0.0
  %6721 = vmatprep.subr.mxu0 0.0
  %6722 = vmatpush1.msra.mxu0 0.0
  %6723 = vmatprep.subr.mxu0 0.0
  %6724 = vmatpush1.msra.mxu0 0.0
  %6725 = vmatprep.subr.mxu0 0.0
  %6726 = vmatpush1.msra.mxu0 0.0
  %6727 = vmatprep.subr.mxu0 0.0
  %6728 = vmatpush1.msra.mxu0 0.0
  %6729 = vmatprep.subr.mxu0 0.0
  %6730 = vmatpush1.msra.mxu0 0.0
  %6731 = vmatprep.subr.mxu0 0.0
  %6732 = vmatpush1.msra.mxu0 0.0
  %6733 = vmatprep.subr.mxu0 0.0
  %6734 = vmatpush1.msra.mxu0 0.0
  %6735 = vmatprep.subr.mxu0 0.0
  %6736 = vmatpush1.msra.mxu0 0.0
  %6737 = vmatprep.subr.mxu0 0.0
  %6738 = vmatpush1.msra.mxu0 0.0
  %6739 = vmatprep.subr.mxu0 0.0
  %6740 = vmatpush1.msra.mxu0 0.0
  %6741 = vmatprep.subr.mxu0 0.0
  %6742 = vmatpush1.msra.mxu0 0.0
  %6743 = vmatprep.subr.mxu0 0.0
  %6744 = vmatpush1.msra.mxu0 0.0
  %6745 = vmatprep.subr.mxu0 0.0
  %6746 = vmatpush1.msra.mxu0 0.0
  %6747 = vmatprep.subr.mxu0 0.0
  %6748 = vmatpush1.msra.mxu0 0.0
  %6749 = vmatprep.subr.mxu0 0.0
  %6750 = vmatpush1.msra.mxu0 0.0
  %6751 = vmatprep.subr.mxu0 0.0
  %6752 = vmatpush1.msra.mxu0 0.0
  %6753 = vmatprep.subr.mxu0 0.0
  %6754 = vmatpush1.msra.mxu0 0.0
  %6755 = vmatprep.subr.mxu0 0.0
  %6756 = vmatpush1.msra.mxu0 0.0
  %6757 = vmatprep.mubr.f32.mxu0 0.0
  %6758 = vmatmul.mubr.f32.gmra.mrb[0].mxu0 %v4780
  %v6759 = vpop.f32.mrb[0].mxu0
  %v6760 = vadd.f32 %v6690, %v6759
  %v6761 = vpop.f32.mrb[0].mxu0
  %6762 = vdwg.mxu0
  %v6763 = vlaneseq
  %v6764 = vshrl.u32 %v6763, 7
  %s6765 = smul.u32 0, 2
  %v6766 = vstv %s6765
  %v6767 = vadd.s32 %v6766, %v6764
  %vm6768 = vcmp.lt.s32.totalorder %v6767, 2
  %v6769 = vsel %vm6768, 1, 0
  %vm6770 = vcmp.eq.s32.totalorder %v6769, 1
  %v6771 = vsel %vm6770, %v5275, 0.0
  %v6772 = vsel %vm6770, %v5277, 0.0
  %v6773 = vsel %vm6770, %v5772, 0.0
  %v6774 = vsel %vm6770, %v5774, 0.0
  %v6775 = vsel %vm6770, %v6269, 0.0
  %v6776 = vsel %vm6770, %v6271, 0.0
  %v6777 = vsel %vm6770, %v6760, 0.0
  %v6785 = vcombine.low %v6771, %v6772
  %v6786 = vcombine.low %v6773, %v6774
  %v6788 = vunpack.c.l.s4 1983009808
  %v6789 = vunpack.c.0.s8 %v6788
  %v6790 = vlaneseq
  %v6791 = vshrl.u32 %v6790, 7
  %v6792 = vsub.s32 %v6789, %v6791
  %v6793 = vrot.slane %v6785, %v6792
  %v6795 = vunpack.c.l.s4 1983009808
  %v6796 = vunpack.c.0.s8 %v6795
  %v6797 = vlaneseq
  %v6798 = vshrl.u32 %v6797, 7
  %v6799 = vsub.s32 %v6796, %v6798
  %v6800 = vrot.slane %v6786, %v6799
  %v6801 = vcombine.low %v6793, %v6800
  %v6802 = vcombine.low %v6775, %v6776
  %v6804 = vunpack.c.l.s4 1983009808
  %v6805 = vunpack.c.0.s8 %v6804
  %v6806 = vlaneseq
  %v6807 = vshrl.u32 %v6806, 7
  %v6808 = vsub.s32 %v6805, %v6807
  %v6809 = vrot.slane %v6802, %v6808
  %v6811 = vunpack.c.l.s4 1983009808
  %v6812 = vunpack.c.0.s8 %v6811
  %v6813 = vlaneseq
  %v6814 = vshrl.u32 %v6813, 7
  %v6815 = vsub.s32 %v6812, %v6814
  %v6816 = vrot.slane %v6777, %v6815
  %v6817 = vcombine.low %v6809, %v6816
  %6820 = vst [vmem:[%s4] sm:$0xff] %v6801
  %vm6821 = vcmask 1041408
  %vm6822 = vcmask 1043458
  %vm6823 = vmor %vm6822, %vm6821
  %vm6824 = vcmask 128004
  %vm6825 = vmor %vm6824, %vm6823
  %6826 = vst.msk [vmem:[%s4 + $0x8] sm:$0x3f] %vm6825, %v6817
  %v6827 = vsel %vm6821, %v6771, 0.0
  %v6828 = vrot.slane %v6827, 4
  %v6829 = vadd.f32 %v6827, %v6828
  %v6830 = vrot.slane %v6829, 2
  %v6831 = vadd.f32 %v6829, %v6830
  %v6832 = vrot.slane %v6831, 1
  %v6833 = vadd.f32 %v6831, %v6832
  %v6834 = vsel %vm6821, %v6772, 0.0
  %v6835 = vrot.slane %v6834, 4
  %v6836 = vadd.f32 %v6834, %v6835
  %v6837 = vrot.slane %v6836, 2
  %v6838 = vadd.f32 %v6836, %v6837
  %v6839 = vrot.slane %v6838, 1
  %v6840 = vadd.f32 %v6838, %v6839
  %v6841 = vsel %vm6821, %v6773, 0.0
  %v6842 = vrot.slane %v6841, 4
  %v6843 = vadd.f32 %v6841, %v6842
  %v6844 = vrot.slane %v6843, 2
  %v6845 = vadd.f32 %v6843, %v6844
  %v6846 = vrot.slane %v6845, 1
  %v6847 = vadd.f32 %v6845, %v6846
  %v6848 = vsel %vm6821, %v6774, 0.0
  %v6849 = vrot.slane %v6848, 4
  %v6850 = vadd.f32 %v6848, %v6849
  %v6851 = vrot.slane %v6850, 2
  %v6852 = vadd.f32 %v6850, %v6851
  %v6853 = vrot.slane %v6852, 1
  %v6854 = vadd.f32 %v6852, %v6853
  %v6855 = vsel %vm6821, %v6775, 0.0
  %v6856 = vrot.slane %v6855, 4
  %v6857 = vadd.f32 %v6855, %v6856
  %v6858 = vrot.slane %v6857, 2
  %v6859 = vadd.f32 %v6857, %v6858
  %v6860 = vrot.slane %v6859, 1
  %v6861 = vadd.f32 %v6859, %v6860
  %v6862 = vsel %vm6821, %v6776, 0.0
  %v6863 = vrot.slane %v6862, 4
  %v6864 = vadd.f32 %v6862, %v6863
  %v6865 = vrot.slane %v6864, 2
  %v6866 = vadd.f32 %v6864, %v6865
  %v6867 = vrot.slane %v6866, 1
  %v6868 = vadd.f32 %v6866, %v6867
  %vm6869 = vcmask 123904
  %v6870 = vsel %vm6869, %v6777, 0.0
  %v6871 = vrot.slane %v6870, 4
  %v6872 = vadd.f32 %v6870, %v6871
  %v6873 = vrot.slane %v6872, 2
  %v6874 = vadd.f32 %v6872, %v6873
  %v6875 = vrot.slane %v6874, 1
  %v6876 = vadd.f32 %v6874, %v6875
  %v6884 = vcombine.low %v6833, %v6840
  %v6885 = vcombine.low %v6847, %v6854
  %v6886 = vcombine.low %v6861, %v6868
  %v6888 = vunpack.c.l.s4 1966171168
  %v6889 = vunpack.c.0.s8 %v6888
  %v6890 = vlaneseq
  %v6891 = vshrl.u32 %v6890, 7
  %v6892 = vsub.s32 %v6889, %v6891
  %v6893 = vrot.slane %v6884, %v6892
  %v6895 = vunpack.c.l.s4 1966171168
  %v6896 = vunpack.c.0.s8 %v6895
  %v6897 = vlaneseq
  %v6898 = vshrl.u32 %v6897, 7
  %v6899 = vsub.s32 %v6896, %v6898
  %v6900 = vrot.slane %v6885, %v6899
  %v6902 = vunpack.c.l.s4 1966171168
  %v6903 = vunpack.c.0.s8 %v6902
  %v6904 = vlaneseq
  %v6905 = vshrl.u32 %v6904, 7
  %v6906 = vsub.s32 %v6903, %v6905
  %v6907 = vrot.slane %v6886, %v6906
  %v6909 = vunpack.c.l.s4 1966171168
  %v6910 = vunpack.c.0.s8 %v6909
  %v6911 = vlaneseq
  %v6912 = vshrl.u32 %v6911, 7
  %v6913 = vsub.s32 %v6910, %v6912
  %v6914 = vrot.slane %v6876, %v6913
  %v6915 = vcombine.low %v6893, %v6900
  %v6916 = vcombine.low %v6907, %v6914
  %v6918 = vunpack.c.l.s4 1966171168
  %v6919 = vunpack.c.0.s8 %v6918
  %v6920 = vlaneseq
  %v6921 = vshrl.u32 %v6920, 7
  %v6922 = vsub.s32 %v6919, %v6921
  %v6923 = vrot.slane %v6915, %v6922
  %v6925 = vunpack.c.l.s4 1966171168
  %v6926 = vunpack.c.0.s8 %v6925
  %v6927 = vlaneseq
  %v6928 = vshrl.u32 %v6927, 7
  %v6929 = vsub.s32 %v6926, %v6928
  %v6930 = vrot.slane %v6916, %v6929
  %v6931 = vcombine.low %v6923, %v6930
  %v6933 = vlaneseq
  %vm6934 = vcmp.ge.s32.totalorder %v6933, 0
  %vm6935 = vcmp.lt.s32.totalorder %v6933, 784
  %vm6936 = vmand %vm6934, %vm6935
  %6937 = vst.msk [vmem:[%s5] sm:$0x7f] %vm6936, %v6931
  %v6938 = vmul.f32 %v6771, %v6771
  %v6939 = vmul.f32 %v6772, %v6772
  %v6940 = vmul.f32 %v6773, %v6773
  %v6941 = vmul.f32 %v6774, %v6774
  %v6942 = vmul.f32 %v6775, %v6775
  %v6943 = vmul.f32 %v6776, %v6776
  %v6944 = vmul.f32 %v6777, %v6777
  %v6945 = vsel %vm6821, %v6938, 0.0
  %v6946 = vrot.slane %v6945, 4
  %v6947 = vadd.f32 %v6945, %v6946
  %v6948 = vrot.slane %v6947, 2
  %v6949 = vadd.f32 %v6947, %v6948
  %v6950 = vrot.slane %v6949, 1
  %v6951 = vadd.f32 %v6949, %v6950
  %v6952 = vsel %vm6821, %v6939, 0.0
  %v6953 = vrot.slane %v6952, 4
  %v6954 = vadd.f32 %v6952, %v6953
  %v6955 = vrot.slane %v6954, 2
  %v6956 = vadd.f32 %v6954, %v6955
  %v6957 = vrot.slane %v6956, 1
  %v6958 = vadd.f32 %v6956, %v6957
  %v6959 = vsel %vm6821, %v6940, 0.0
  %v6960 = vrot.slane %v6959, 4
  %v6961 = vadd.f32 %v6959, %v6960
  %v6962 = vrot.slane %v6961, 2
  %v6963 = vadd.f32 %v6961, %v6962
  %v6964 = vrot.slane %v6963, 1
  %v6965 = vadd.f32 %v6963, %v6964
  %v6966 = vsel %vm6821, %v6941, 0.0
  %v6967 = vrot.slane %v6966, 4
  %v6968 = vadd.f32 %v6966, %v6967
  %v6969 = vrot.slane %v6968, 2
  %v6970 = vadd.f32 %v6968, %v6969
  %v6971 = vrot.slane %v6970, 1
  %v6972 = vadd.f32 %v6970, %v6971
  %v6973 = vsel %vm6821, %v6942, 0.0
  %v6974 = vrot.slane %v6973, 4
  %v6975 = vadd.f32 %v6973, %v6974
  %v6976 = vrot.slane %v6975, 2
  %v6977 = vadd.f32 %v6975, %v6976
  %v6978 = vrot.slane %v6977, 1
  %v6979 = vadd.f32 %v6977, %v6978
  %v6980 = vsel %vm6821, %v6943, 0.0
  %v6981 = vrot.slane %v6980, 4
  %v6982 = vadd.f32 %v6980, %v6981
  %v6983 = vrot.slane %v6982, 2
  %v6984 = vadd.f32 %v6982, %v6983
  %v6985 = vrot.slane %v6984, 1
  %v6986 = vadd.f32 %v6984, %v6985
  %v6987 = vsel %vm6869, %v6944, 0.0
  %v6988 = vrot.slane %v6987, 4
  %v6989 = vadd.f32 %v6987, %v6988
  %v6990 = vrot.slane %v6989, 2
  %v6991 = vadd.f32 %v6989, %v6990
  %v6992 = vrot.slane %v6991, 1
  %v6993 = vadd.f32 %v6991, %v6992
  %v7001 = vcombine.low %v6951, %v6958
  %v7002 = vcombine.low %v6965, %v6972
  %v7003 = vcombine.low %v6979, %v6986
  %v7005 = vunpack.c.l.s4 1966171168
  %v7006 = vunpack.c.0.s8 %v7005
  %v7007 = vlaneseq
  %v7008 = vshrl.u32 %v7007, 7
  %v7009 = vsub.s32 %v7006, %v7008
  %v7010 = vrot.slane %v7001, %v7009
  %v7012 = vunpack.c.l.s4 1966171168
  %v7013 = vunpack.c.0.s8 %v7012
  %v7014 = vlaneseq
  %v7015 = vshrl.u32 %v7014, 7
  %v7016 = vsub.s32 %v7013, %v7015
  %v7017 = vrot.slane %v7002, %v7016
  %v7019 = vunpack.c.l.s4 1966171168
  %v7020 = vunpack.c.0.s8 %v7019
  %v7021 = vlaneseq
  %v7022 = vshrl.u32 %v7021, 7
  %v7023 = vsub.s32 %v7020, %v7022
  %v7024 = vrot.slane %v7003, %v7023
  %v7026 = vunpack.c.l.s4 1966171168
  %v7027 = vunpack.c.0.s8 %v7026
  %v7028 = vlaneseq
  %v7029 = vshrl.u32 %v7028, 7
  %v7030 = vsub.s32 %v7027, %v7029
  %v7031 = vrot.slane %v6993, %v7030
  %v7032 = vcombine.low %v7010, %v7017
  %v7033 = vcombine.low %v7024, %v7031
  %v7035 = vunpack.c.l.s4 1966171168
  %v7036 = vunpack.c.0.s8 %v7035
  %v7037 = vlaneseq
  %v7038 = vshrl.u32 %v7037, 7
  %v7039 = vsub.s32 %v7036, %v7038
  %v7040 = vrot.slane %v7032, %v7039
  %v7042 = vunpack.c.l.s4 1966171168
  %v7043 = vunpack.c.0.s8 %v7042
  %v7044 = vlaneseq
  %v7045 = vshrl.u32 %v7044, 7
  %v7046 = vsub.s32 %v7043, %v7045
  %v7047 = vrot.slane %v7033, %v7046
  %v7048 = vcombine.low %v7040, %v7047
  %7050 = vst.msk [vmem:[%s6] sm:$0x7f] %vm6936, %v7048
  // Predicated region
  $region18: #{encoder_forward.2} parent=0 // pred_check
    _
  $region19: #{encoder_forward.2} parent=0 // pred_check_branch
    %7052 = sbr.rel (0) target = $region21
  $region20: #{encoder_forward.2} parent=0 // pred_region
    _
  $region21: #{encoder_forward.2} parent=0 // pred_fallthru
    _
  // Predicated region
  $region22: #{encoder_forward.2} parent=0 // pred_check
    _
  $region23: #{encoder_forward.2} parent=0 // pred_check_branch
    %7054 = sbr.rel (0) target = $region25
  $region24: #{encoder_forward.2} parent=0 // pred_region
    _
  $region25: #{encoder_forward.2} parent=0 // pred_fallthru
    _
  // Predicated region
  $region26: #{encoder_forward.2} parent=0 // pred_check
    _
  $region27: #{encoder_forward.2} parent=0 // pred_check_branch
    %7056 = sbr.rel (0) target = $region29
  $region28: #{encoder_forward.2} parent=0 // pred_region
    _
  $region29: #{encoder_forward.2} parent=0 // pred_fallthru
    _
  // Predicated region
  $region30: #{encoder_forward.2} parent=0 // pred_check
    _
  $region31: #{encoder_forward.2} parent=0 // pred_check_branch
    %7058 = sbr.rel (0) target = $region33
  $region32: #{encoder_forward.2} parent=0 // pred_region
    _
  $region33: #{encoder_forward.2} parent=0 // pred_fallthru
    _
  // Predicated region
  $region34: #{encoder_forward.2} parent=0 // pred_check
    _
  $region35: #{encoder_forward.2} parent=0 // pred_check_branch
    %7060 = sbr.rel (0) target = $region37
  $region36: #{encoder_forward.2} parent=0 // pred_region
    _
  $region37: #{encoder_forward.2} parent=0 // pred_fallthru
    _
  // Predicated region
  $region38: #{encoder_forward.2} parent=0 // pred_check
    _
  $region39: #{encoder_forward.2} parent=0 // pred_check_branch
    %7062 = sbr.rel (0) target = $region41
  $region40: #{encoder_forward.2} parent=0 // pred_region
    _
  $region41: #{encoder_forward.2} parent=0 // pred_fallthru
    _

</llo_original>
